<compile_context>
chip_gen: v7x
topology: tpu7x:2x2x1
jax: 0.10.0
libtpu: 0.0.40
codegen_flags: <defaults>
</compile_context>

<pallas_src>
import math
import functools

import jax
import jax.numpy as jnp
from jax import lax
from jax.experimental import pallas as pl
from jax.experimental.pallas import tpu as pltpu

# Whole-array, single-buffered VMEM residency (used for weights).
VMEM_SPEC = pl.BlockSpec(memory_space=pltpu.MemorySpace.VMEM)


def _round_up(n, m):
    return ((n + m - 1) // m) * m


@functools.lru_cache(maxsize=None)
def _vmem_limit_bytes():
    """Per-generation scoped-VMEM budget (~60% of physical, capped)."""
    cap = 128 * 1024 * 1024
    try:
        cap = int(getattr(pltpu.get_tpu_info(), 'vmem_capacity_bytes', cap))
    except Exception:
        pass
    # v7x: 64 MiB/TC -> ~38 MiB budget; v5e/v6e: 128 MiB -> 64 MiB budget.
    return int(max(32 * 1024 * 1024, min(64 * 1024 * 1024, cap * 0.6)))


def _choose_block_s(S, B, Ep, Ah, Fp, nhead, vmem_bytes):
    """S-block for the fused encoder layer, sized from the VMEM budget."""
    # rough live f32 bytes per unit of S inside the fused kernel
    per_s = 4 * B * (6 * Ep + 8 * Ah + 2 * Fp) + 8 * nhead * B * B
    budget = max(vmem_bytes // 4, per_s)       # leave room for resident weights
    bs = min(S, max(1, budget // per_s), max(1, 512 // max(B, 1)))
    if bs >= S and S >= 2:
        bs = S // 2                            # keep >=2 grid steps for megacore
    bs = max(1, min(bs, S))
    while S % bs:
        bs -= 1
    return bs


# --------------------------------------------------------------------------
# Positional encoding table (plain JAX, same formula as the PyTorch buffer).
# --------------------------------------------------------------------------
def positional_encoding(max_len, d_model):
    position = jnp.arange(max_len, dtype=jnp.float32)[:, None]
    div_term = jnp.exp(
        jnp.arange(0, d_model, 2, dtype=jnp.float32) * (-math.log(10000.0) / d_model)
    )
    ang = position * div_term
    pe = jnp.zeros((max_len, d_model), jnp.float32)
    pe = pe.at[:, 0::2].set(jnp.sin(ang))
    pe = pe.at[:, 1::2].set(jnp.cos(ang))
    return pe


# --------------------------------------------------------------------------
# Kernel 1: one nn.TransformerEncoderLayer (post-norm, relu), fused, gridded
# over S.  Attention is over axis 1 (the batch axis), matching the reference.
# Feature dim padded to Ep (x128); per-head dim padded to 128 so all head
# slices are vreg-aligned; LayerNorm normalizes over the true E columns and
# its zero-padded gamma/beta keep padded columns at exactly 0.
# --------------------------------------------------------------------------
def _layer_norm(x, w, b, valid, n_valid, eps=1e-5):
    inv_n = 1.0 / float(n_valid)
    mu = jnp.sum(x, axis=-1, keepdims=True) * inv_n        # padded cols of x are 0
    xc = (x - mu) * valid                                  # mask pad cols out of var
    var = jnp.sum(xc * xc, axis=-1, keepdims=True) * inv_n
    return (x - mu) * lax.rsqrt(var + eps) * w + b         # w,b zero-padded -> pad cols stay 0


def _transformer_layer_kernel(x_ref, wqkv_ref, bqkv_ref, wo_ref, bo_ref,
                              ln1w_ref, ln1b_ref, w1_ref, b1_ref,
                              w2_ref, b2_ref, ln2w_ref, ln2b_ref,
                              o_ref, *, nhead, e_true):
    tS, B, Ep = x_ref.shape
    Ah = wqkv_ref.shape[1] // 3            # nhead * Dhp (Dhp multiple of 128)
    Dhp = Ah // nhead
    dh_true = e_true // nhead
    scale = 1.0 / math.sqrt(dh_true)
    R = tS * B

    x2 = x_ref[...].reshape(R, Ep)
    x2b = x2.astype(jnp.bfloat16)

    # Fused QKV projection (bf16 operands, f32 accumulation).
    qkv = jnp.dot(x2b, wqkv_ref[...], preferred_element_type=jnp.float32) + bqkv_ref[...]

    # Heads are contiguous 128-aligned column blocks -> aligned (free) lane
    # slices, stacked into the leading batch axis of one batched MXU stream.
    def head_batch(base):
        parts = [qkv[:, base + h * Dhp: base + (h + 1) * Dhp].reshape(tS, B, Dhp)
                 for h in range(nhead)]
        return jnp.concatenate(parts, axis=0)              # (nhead*tS, B, Dhp)

    qb = head_batch(0)
    kb = head_batch(Ah)
    vb = head_batch(2 * Ah)

    # Attention over the B axis, batched over (head, s).  Larger tS blocks
    # amortize the tiny BxB matmuls (small-B latency concern from review).
    s = jnp.einsum('nld,nmd->nlm', qb, kb,
                   preferred_element_type=jnp.float32) * scale
    s = s - jnp.max(s, axis=-1, keepdims=True)
    p = jnp.exp(s)
    # NOTE: approx reciprocal (EUP) — tiny relative error vs exact divide.
    p = p * pl.reciprocal(jnp.sum(p, axis=-1, keepdims=True), approx=True)
    ab = jnp.einsum('nlm,nmd->nld', p, vb,
                    preferred_element_type=jnp.float32)    # (nhead*tS, B, Dhp)

    # Merge heads back: lane-dense 128-wide pieces, PyTorch head-concat order.
    attn = jnp.concatenate([ab[h * tS:(h + 1) * tS] for h in range(nhead)],
                           axis=-1).reshape(R, Ah)
    attn = (jnp.dot(attn.astype(jnp.bfloat16), wo_ref[...],
                    preferred_element_type=jnp.float32) + bo_ref[...])

    valid = (lax.broadcasted_iota(jnp.int32, (1, Ep), 1) < e_true).astype(jnp.float32)

    # post-norm residual blocks (norm_first=False, relu, eval dropout = id)
    y = _layer_norm(x2 + attn, ln1w_ref[...], ln1b_ref[...], valid, e_true)
    ff = jnp.maximum(
        jnp.dot(y.astype(jnp.bfloat16), w1_ref[...],
                preferred_element_type=jnp.float32) + b1_ref[...], 0.0)
    ff = (jnp.dot(ff.astype(jnp.bfloat16), w2_ref[...],
                  preferred_element_type=jnp.float32) + b2_ref[...])
    z = _layer_norm(y + ff, ln2w_ref[...], ln2b_ref[...], valid, e_true)
    o_ref[...] = z.reshape(tS, B, Ep)


def transformer_layer(x_sbe, p, nhead, e_true):
    S, B, Ep = x_sbe.shape
    Ah = p['wo_t'].shape[0]
    Fp = p['w1_t'].shape[1]
    vmem = _vmem_limit_bytes()
    bs = _choose_block_s(S, B, Ep, Ah, Fp, nhead, vmem)
    grid = (S // bs,)

    weight_order = ['wqkv_t', 'bqkv', 'wo_t', 'bo', 'ln1_w', 'ln1_b',
                    'w1_t', 'b1', 'w2_t', 'b2', 'ln2_w', 'ln2_b']
    in_specs = ([pl.BlockSpec((bs, B, Ep), lambda i: (i, 0, 0))]
                + [VMEM_SPEC] * len(weight_order))

    return pl.pallas_call(
        functools.partial(_transformer_layer_kernel, nhead=nhead, e_true=e_true),
        out_shape=jax.ShapeDtypeStruct((S, B, Ep), jnp.float32),
        grid=grid,
        in_specs=in_specs,
        out_specs=pl.BlockSpec((bs, B, Ep), lambda i: (i, 0, 0)),
        compiler_params=pltpu.CompilerParams(
            dimension_semantics=("parallel",),
            vmem_limit_bytes=vmem),
    )(x_sbe, *[p[nm] for nm in weight_order])


# --------------------------------------------------------------------------
# Kernel 2: bidirectional LSTM over time-major (S, bB, Ep), gridded over an
# 8-padded batch axis.  Per-sequence length masking reproduces
# pack_padded_sequence / pad_packed_sequence.  PyTorch gate order: i, f, g, o.
# Hidden size padded to Hp (x128); padded h/c columns provably stay 0; all
# gate slices and per-timestep stores are lane- and sublane-dense.
# The input projection is hoisted out of the loop into one bf16 matmul per
# direction (stored in a bf16 VMEM scratch); the fwd+bwd recurrent matmuls are
# fused into a single batched einsum per step.
# --------------------------------------------------------------------------
def _bilstm_kernel(len_ref, x_ref, wxf_ref, wxb_ref, whh_ref, bf_ref, bb_ref,
                   of_ref, ob_ref, gxf_ref, gxb_ref):
    S, bB, Ep = x_ref.shape
    Hp = whh_ref.shape[1]
    G = 4 * Hp

    # Hoisted input projection: one big MXU matmul per direction (bf16 in, f32 acc).
    x2 = x_ref[...].reshape(S * bB, Ep).astype(jnp.bfloat16)
    gxf_ref[...] = (jnp.dot(x2, wxf_ref[...], preferred_element_type=jnp.float32)
                    + bf_ref[...]).astype(jnp.bfloat16).reshape(S, bB, G)
    gxb_ref[...] = (jnp.dot(x2, wxb_ref[...], preferred_element_type=jnp.float32)
                    + bb_ref[...]).astype(jnp.bfloat16).reshape(S, bB, G)

    whh = whh_ref[...]                      # (2, Hp, G) f32 — recurrence kept f32
    lens = len_ref[...]                     # (bB, 1) int32
    # TODO(synk): lengths could live in SMEM via scalar prefetch; the compare
    # below is a single VPU op on an already-resident vreg, so left as-is.

    h0 = jnp.zeros((2, bB, Hp), jnp.float32)
    c0 = jnp.zeros((2, bB, Hp), jnp.float32)

    def body(t, carry):
        h, c = carry
        tb = S - 1 - t

        gx = jnp.concatenate([gxf_ref[t].astype(jnp.float32)[None],
                              gxb_ref[tb].astype(jnp.float32)[None]], axis=0)  # (2,bB,G)
        # fwd + bwd recurrent matmuls fused into one batched einsum
        gates = gx + jnp.einsum('dbh,dhg->dbg', h, whh,
                                preferred_element_type=jnp.float32)
        i_g = jax.nn.sigmoid(gates[:, :, 0 * Hp:1 * Hp])
        f_g = jax.nn.sigmoid(gates[:, :, 1 * Hp:2 * Hp])
        g_g = jnp.tanh(gates[:, :, 2 * Hp:3 * Hp])
        o_g = jax.nn.sigmoid(gates[:, :, 3 * Hp:4 * Hp])
        c_new = f_g * c + i_g * g_g
        h_new = o_g * jnp.tanh(c_new)

        m_f = (lens > t).astype(jnp.float32)                # (bB, 1)
        m_b = (lens > tb).astype(jnp.float32)
        m = jnp.concatenate([m_f[None], m_b[None]], axis=0)  # (2, bB, 1)
        h = m * h_new + (1.0 - m) * h
        c = m * c_new + (1.0 - m) * c

        of_ref[t] = h[0] * m_f                               # dense (bB, Hp) store
        ob_ref[tb] = h[1] * m_b
        return (h, c)

    lax.fori_loop(0, S, body, (h0, c0))


def bilstm(x_sbe, lengths, p):
    S, B, Ep = x_sbe.shape
    Hp = p['whh'].shape[1]
    vmem = _vmem_limit_bytes()
    # batch block: multiple of 8 (sublane-dense stores); smaller on low-VMEM gens
    bB = 8 if (B <= 8 or vmem < 48 * 1024 * 1024) else 16
    Bp = _round_up(B, bB)
    if Bp != B:
        x_sbe = jnp.pad(x_sbe, ((0, 0), (0, Bp - B), (0, 0)))
        lengths = jnp.pad(lengths, (0, Bp - B))
    lens2d = lengths.reshape(Bp, 1).astype(jnp.int32)
    grid = (Bp // bB,)

    out_f, out_b = pl.pallas_call(
        _bilstm_kernel,
        out_shape=(jax.ShapeDtypeStruct((S, Bp, Hp), jnp.float32),
                   jax.ShapeDtypeStruct((S, Bp, Hp), jnp.float32)),
        grid=grid,
        in_specs=[pl.BlockSpec((bB, 1), lambda i: (i, 0)),
                  pl.BlockSpec((S, bB, Ep), lambda i: (0, i, 0)),
                  VMEM_SPEC, VMEM_SPEC, VMEM_SPEC, VMEM_SPEC, VMEM_SPEC],
        out_specs=(pl.BlockSpec((S, bB, Hp), lambda i: (0, i, 0)),
                   pl.BlockSpec((S, bB, Hp), lambda i: (0, i, 0))),
        scratch_shapes=[pltpu.VMEM((S, bB, 4 * Hp), jnp.bfloat16),
                        pltpu.VMEM((S, bB, 4 * Hp), jnp.bfloat16)],
        compiler_params=pltpu.CompilerParams(
            dimension_semantics=("parallel",),
            vmem_limit_bytes=vmem),
    )(lens2d, x_sbe, p['wih_f_t'], p['wih_b_t'], p['whh'], p['b_f'], p['b_b'])
    return out_f, out_b          # (S, Bp, Hp) each; padded cols/rows are exactly 0


# --------------------------------------------------------------------------
# Kernel 3: hidden2tag linear layer.  Rows padded to the tile size (grid =
# Mp // bm, "parallel"); tag dim padded to 128 lanes; bf16 operands, f32 acc.
# --------------------------------------------------------------------------
def _linear_kernel(x_ref, w_ref, b_ref, o_ref):
    xb = x_ref[...].astype(jnp.bfloat16)
    o_ref[...] = (jnp.dot(xb, w_ref[...], preferred_element_type=jnp.float32)
                  + b_ref[...])


def linear(x, w_t, b, block_m=256):
    M, K = x.shape
    Np = w_t.shape[1]
    bm = min(block_m, _round_up(M, 8))
    Mp = _round_up(M, bm)
    if Mp != M:
        x = jnp.pad(x, ((0, Mp - M), (0, 0)))
    out = pl.pallas_call(
        _linear_kernel,
        out_shape=jax.ShapeDtypeStruct((Mp, Np), jnp.float32),
        grid=(Mp // bm,),
        in_specs=[pl.BlockSpec((bm, K), lambda i: (i, 0)), VMEM_SPEC, VMEM_SPEC],
        out_specs=pl.BlockSpec((bm, Np), lambda i: (i, 0)),
        compiler_params=pltpu.CompilerParams(
            dimension_semantics=("parallel",),
            vmem_limit_bytes=_vmem_limit_bytes()),
    )(x, w_t, b)
    return out[:M]


# --------------------------------------------------------------------------
# Parameter init (deterministic).  Dense "PyTorch-shaped" weights are drawn,
# then embedded into lane-padded, pre-transposed layouts:
#   E -> Ep (x128), per-head Dh -> Dhp (x128), nhid -> Fp, hidden H -> Hp,
#   tagset -> Np.  All pad positions are zero, so padded activation columns
#   stay exactly 0 through the whole network.  Matmul weights stored bf16.
# --------------------------------------------------------------------------
def init_params(key, cfg):
    E, ninp, nhid, nhead = cfg['embed_dim'], cfg['ninp'], cfg['nhid'], cfg['nhead']
    assert E % nhead == 0, "nhead must divide embed_dim"
    Dh = E // nhead
    Dhp = _round_up(Dh, 128)
    Ah = nhead * Dhp
    Ep = _round_up(E, 128)
    Fp = _round_up(nhid, 128)

    def nrm(k, shape, scale=0.1):
        return scale * jax.random.normal(k, shape, jnp.float32)

    keys = iter(jax.random.split(key, 128))
    params = {}
    emb = nrm(next(keys), (cfg['vocab_size'], E), 1.0)
    params['embedding'] = jnp.zeros((cfg['vocab_size'], Ep), jnp.float32).at[:, :E].set(emb)
    pe = positional_encoding(cfg['max_len'], E)
    params['pe'] = jnp.zeros((cfg['max_len'], Ep), jnp.float32).at[:, :E].set(pe)

    layers = []
    for _ in range(cfg['nlayers']):
        lp = {}
        # MultiheadAttention in_proj (rows: [q|k|v] x heads) -> padded, transposed
        w_in = nrm(next(keys), (3 * E, E))
        b_in = nrm(next(keys), (3 * E,))
        wqkv = jnp.zeros((Ep, 3 * Ah), jnp.float32)
        bqkv = jnp.zeros((1, 3 * Ah), jnp.float32)
        for a in range(3):
            for h in range(nhead):
                rows = w_in[a * E + h * Dh: a * E + (h + 1) * Dh, :]     # (Dh, E)
                c0 = a * Ah + h * Dhp
                wqkv = wqkv.at[:E, c0:c0 + Dh].set(rows.T)
                bqkv = bqkv.at[0, c0:c0 + Dh].set(
                    b_in[a * E + h * Dh: a * E + (h + 1) * Dh])
        lp['wqkv_t'] = wqkv.astype(jnp.bfloat16)
        lp['bqkv'] = bqkv

        w_out = nrm(next(keys), (E, E))                 # out_proj.weight
        b_out = nrm(next(keys), (E,))
        wo = jnp.zeros((Ah, Ep), jnp.float32)
        for h in range(nhead):
            wo = wo.at[h * Dhp:h * Dhp + Dh, :E].set(w_out[:, h * Dh:(h + 1) * Dh].T)
        lp['wo_t'] = wo.astype(jnp.bfloat16)
        lp['bo'] = jnp.zeros((1, Ep), jnp.float32).at[0, :E].set(b_out)

        lp['ln1_w'] = jnp.zeros((1, Ep), jnp.float32).at[0, :E].set(1.0)
        lp['ln1_b'] = jnp.zeros((1, Ep), jnp.float32)
        w1 = nrm(next(keys), (nhid, E)); b1 = nrm(next(keys), (nhid,))
        w2 = nrm(next(keys), (E, nhid)); b2 = nrm(next(keys), (E,))
        lp['w1_t'] = jnp.zeros((Ep, Fp), jnp.float32).at[:E, :nhid].set(w1.T).astype(jnp.bfloat16)
        lp['b1'] = jnp.zeros((1, Fp), jnp.float32).at[0, :nhid].set(b1)
        lp['w2_t'] = jnp.zeros((Fp, Ep), jnp.float32).at[:nhid, :E].set(w2.T).astype(jnp.bfloat16)
        lp['b2'] = jnp.zeros((1, Ep), jnp.float32).at[0, :E].set(b2)
        lp['ln2_w'] = jnp.zeros((1, Ep), jnp.float32).at[0, :E].set(1.0)
        lp['ln2_b'] = jnp.zeros((1, Ep), jnp.float32)
        layers.append(lp)
    params['layers'] = layers

    # Bidirectional LSTM: hidden H -> Hp (x128); gate g occupies [g*Hp, g*Hp+H).
    H = ninp
    Hp = _round_up(H, 128)
    lstm = {}
    whh_all = jnp.zeros((2, Hp, 4 * Hp), jnp.float32)
    for d_idx, d in enumerate(('f', 'b')):              # forward / reverse
        w_ih = nrm(next(keys), (4 * H, E))
        w_hh = nrm(next(keys), (4 * H, H))
        bias = nrm(next(keys), (4 * H,)) + nrm(next(keys), (4 * H,))   # b_ih + b_hh
        wx = jnp.zeros((Ep, 4 * Hp), jnp.float32)
        bp = jnp.zeros((1, 4 * Hp), jnp.float32)
        for g in range(4):                              # PyTorch gate order i, f, g, o
            wx = wx.at[:E, g * Hp:g * Hp + H].set(w_ih[g * H:(g + 1) * H, :].T)
            whh_all = whh_all.at[d_idx, :H, g * Hp:g * Hp + H].set(
                w_hh[g * H:(g + 1) * H, :].T)
            bp = bp.at[0, g * Hp:g * Hp + H].set(bias[g * H:(g + 1) * H])
        lstm[f'wih_{d}_t'] = wx.astype(jnp.bfloat16)
        lstm[f'b_{d}'] = bp
    lstm['whh'] = whh_all
    params['lstm'] = lstm

    # hidden2tag: input features are the padded concat (2*Hp); tags -> Np (x128)
    T = cfg['tagset_size']
    Np = _round_up(T, 128)
    w = nrm(next(keys), (T, 2 * H))
    b = nrm(next(keys), (T,))
    w_t = jnp.zeros((2 * Hp, Np), jnp.float32)
    w_t = w_t.at[:H, :T].set(w[:, :H].T)
    w_t = w_t.at[Hp:Hp + H, :T].set(w[:, H:2 * H].T)
    params['h2t_w_t'] = w_t.astype(jnp.bfloat16)
    params['h2t_b'] = jnp.zeros((1, Np), jnp.float32).at[0, :T].set(b)
    return params


# --------------------------------------------------------------------------
# Full forward pass (eval mode).
# --------------------------------------------------------------------------
def forward(params, src, seq_lengths, cfg):
    emb = params['embedding'][src]                      # (B, S, Ep) gather (glue)
    B, S, Ep = emb.shape
    # wdrop: identity.  Positional encoding quirk: indexed by the batch dim.
    emb = emb + params['pe'][:B][:, None, :]
    # dropout inside PositionalEncoding: identity (eval)

    x = jnp.transpose(emb, (1, 0, 2))                   # (S, B, Ep) time-major
    for lp in params['layers']:
        x = transformer_layer(x, lp, cfg['nhead'], cfg['embed_dim'])

    out_f, out_b = bilstm(x, seq_lengths, params['lstm'])   # (S, Bp, Hp) each
    Bp, Hp = out_f.shape[1], out_f.shape[2]
    # keep the (all-zero) padded hidden columns -> lane-dense classifier K dim
    lstm_out = jnp.concatenate([out_f, out_b], axis=-1)     # (S, Bp, 2*Hp)
    rows = jnp.transpose(lstm_out, (1, 0, 2)).reshape(Bp * S, 2 * Hp)
    # trigdrop: identity (eval)
    tags = linear(rows, params['h2t_w_t'], params['h2t_b'])
    return tags[:B * S, :cfg['tagset_size']]            # (B*S, tagset_size)


if __name__ == "__main__":
    cfg = dict(vocab_size=50, embed_dim=32, ninp=32, nhead=4, nhid=64,
               nlayers=2, tagset_size=6, max_len=64)
    key = jax.random.PRNGKey(0)
    pkey, dkey = jax.random.split(key)
    params = init_params(pkey, cfg)

    B, S = 4, 16
    src = jax.random.randint(dkey, (B, S), 0, cfg['vocab_size'], dtype=jnp.int32)
    # pack_padded_sequence(enforce_sorted=True) requires descending lengths and
    # the reference's view(bsize*slen, -1) requires max(len) == slen.
    seq_lengths = jnp.array([16, 13, 10, 7], dtype=jnp.int32)

    fwd = jax.jit(functools.partial(forward, cfg=cfg))
    out = fwd(params, src, seq_lengths)
    out = jax.block_until_ready(out)

    assert out.shape == (B * S, cfg['tagset_size']), out.shape
    assert bool(jnp.all(jnp.isfinite(out)))
    print("KERNEL_OK")
</pallas_src>

<mosaic_0001>
module attributes {stable_mosaic.version = 11 : i64} {
  func.func @_transformer_layer_kernel(%arg0: i32, %arg1: memref<8x4x128xf32, #tpu.memory_space<vmem>>, %arg2: memref<128x1536xbf16, #tpu.memory_space<vmem>>, %arg3: memref<1x1536xf32, #tpu.memory_space<vmem>>, %arg4: memref<512x128xbf16, #tpu.memory_space<vmem>>, %arg5: memref<1x128xf32, #tpu.memory_space<vmem>>, %arg6: memref<1x128xf32, #tpu.memory_space<vmem>>, %arg7: memref<1x128xf32, #tpu.memory_space<vmem>>, %arg8: memref<128x128xbf16, #tpu.memory_space<vmem>>, %arg9: memref<1x128xf32, #tpu.memory_space<vmem>>, %arg10: memref<128x128xbf16, #tpu.memory_space<vmem>>, %arg11: memref<1x128xf32, #tpu.memory_space<vmem>>, %arg12: memref<1x128xf32, #tpu.memory_space<vmem>>, %arg13: memref<1x128xf32, #tpu.memory_space<vmem>>, %arg14: memref<8x4x128xf32, #tpu.memory_space<vmem>>) attributes {dimension_semantics = [#tpu.dimension_semantics<parallel>], iteration_bounds = array<i64: 2>, scalar_prefetch = 0 : i64, scratch_operands = 0 : i64, tpu.core_type = #tpu.core_type<tc>, window_params = [{transform_indices = @transform_0, window_bounds = array<i64: 8, 4, 128>}, {pipeline_mode = #tpu.pipeline_mode<synchronous>, transform_indices = @transform_1, window_bounds = array<i64: 128, 1536>}, {pipeline_mode = #tpu.pipeline_mode<synchronous>, transform_indices = @transform_2, window_bounds = array<i64: 1, 1536>}, {pipeline_mode = #tpu.pipeline_mode<synchronous>, transform_indices = @transform_3, window_bounds = array<i64: 512, 128>}, {pipeline_mode = #tpu.pipeline_mode<synchronous>, transform_indices = @transform_4, window_bounds = array<i64: 1, 128>}, {pipeline_mode = #tpu.pipeline_mode<synchronous>, transform_indices = @transform_5, window_bounds = array<i64: 1, 128>}, {pipeline_mode = #tpu.pipeline_mode<synchronous>, transform_indices = @transform_6, window_bounds = array<i64: 1, 128>}, {pipeline_mode = #tpu.pipeline_mode<synchronous>, transform_indices = @transform_7, window_bounds = array<i64: 128, 128>}, {pipeline_mode = #tpu.pipeline_mode<synchronous>, transform_indices = @transform_8, window_bounds = array<i64: 1, 128>}, {pipeline_mode = #tpu.pipeline_mode<synchronous>, transform_indices = @transform_9, window_bounds = array<i64: 128, 128>}, {pipeline_mode = #tpu.pipeline_mode<synchronous>, transform_indices = @transform_10, window_bounds = array<i64: 1, 128>}, {pipeline_mode = #tpu.pipeline_mode<synchronous>, transform_indices = @transform_11, window_bounds = array<i64: 1, 128>}, {pipeline_mode = #tpu.pipeline_mode<synchronous>, transform_indices = @transform_12, window_bounds = array<i64: 1, 128>}, {transform_indices = @transform_13, window_bounds = array<i64: 8, 4, 128>}]} {
    %c0 = arith.constant 0 : index
    %c0_0 = arith.constant 0 : index
    %c0_1 = arith.constant 0 : index
    %0 = vector.load %arg1[%c0, %c0_0, %c0_1] : memref<8x4x128xf32, #tpu.memory_space<vmem>>, vector<8x4x128xf32>
    %1 = vector.shape_cast %0 : vector<8x4x128xf32> to vector<32x128xf32>
    %2 = arith.truncf %1 : vector<32x128xf32> to vector<32x128xbf16>
    %c0_2 = arith.constant 0 : index
    %c0_3 = arith.constant 0 : index
    %3 = vector.load %arg2[%c0_2, %c0_3] : memref<128x1536xbf16, #tpu.memory_space<vmem>>, vector<128x1536xbf16>
    %cst = arith.constant dense<0.000000e+00> : vector<32x1536xf32>
    %4 = tpu.matmul %2, %3, %cst {dimension_numbers = #tpu.dot_dimension_numbers<[1], [0], [0], [1], [0, 0, 1, 1], [], []>} : vector<32x128xbf16>, vector<128x1536xbf16>, vector<32x1536xf32> -> vector<32x1536xf32>
    %c0_4 = arith.constant 0 : index
    %c0_5 = arith.constant 0 : index
    %5 = vector.load %arg3[%c0_4, %c0_5] : memref<1x1536xf32, #tpu.memory_space<vmem>>, vector<1x1536xf32>
    %6 = vector.broadcast %5 : vector<1x1536xf32> to vector<32x1536xf32>
    %7 = arith.addf %4, %6 : vector<32x1536xf32>
    %8 = vector.extract_strided_slice %7 {offsets = [0, 0], sizes = [32, 128], strides = [1, 1]} : vector<32x1536xf32> to vector<32x128xf32>
    %9 = vector.shape_cast %8 : vector<32x128xf32> to vector<8x4x128xf32>
    %10 = vector.extract_strided_slice %7 {offsets = [0, 128], sizes = [32, 128], strides = [1, 1]} : vector<32x1536xf32> to vector<32x128xf32>
    %11 = vector.shape_cast %10 : vector<32x128xf32> to vector<8x4x128xf32>
    %12 = vector.extract_strided_slice %7 {offsets = [0, 256], sizes = [32, 128], strides = [1, 1]} : vector<32x1536xf32> to vector<32x128xf32>
    %13 = vector.shape_cast %12 : vector<32x128xf32> to vector<8x4x128xf32>
    %14 = vector.extract_strided_slice %7 {offsets = [0, 384], sizes = [32, 128], strides = [1, 1]} : vector<32x1536xf32> to vector<32x128xf32>
    %15 = vector.shape_cast %14 : vector<32x128xf32> to vector<8x4x128xf32>
    %16 = tpu.concatenate %9, %11, %13, %15 in 0 : vector<8x4x128xf32>, vector<8x4x128xf32>, vector<8x4x128xf32>, vector<8x4x128xf32> -> vector<32x4x128xf32>
    %17 = vector.extract_strided_slice %7 {offsets = [0, 512], sizes = [32, 128], strides = [1, 1]} : vector<32x1536xf32> to vector<32x128xf32>
    %18 = vector.shape_cast %17 : vector<32x128xf32> to vector<8x4x128xf32>
    %19 = vector.extract_strided_slice %7 {offsets = [0, 640], sizes = [32, 128], strides = [1, 1]} : vector<32x1536xf32> to vector<32x128xf32>
    %20 = vector.shape_cast %19 : vector<32x128xf32> to vector<8x4x128xf32>
    %21 = vector.extract_strided_slice %7 {offsets = [0, 768], sizes = [32, 128], strides = [1, 1]} : vector<32x1536xf32> to vector<32x128xf32>
    %22 = vector.shape_cast %21 : vector<32x128xf32> to vector<8x4x128xf32>
    %23 = vector.extract_strided_slice %7 {offsets = [0, 896], sizes = [32, 128], strides = [1, 1]} : vector<32x1536xf32> to vector<32x128xf32>
    %24 = vector.shape_cast %23 : vector<32x128xf32> to vector<8x4x128xf32>
    %25 = tpu.concatenate %18, %20, %22, %24 in 0 : vector<8x4x128xf32>, vector<8x4x128xf32>, vector<8x4x128xf32>, vector<8x4x128xf32> -> vector<32x4x128xf32>
    %26 = vector.extract_strided_slice %7 {offsets = [0, 1024], sizes = [32, 128], strides = [1, 1]} : vector<32x1536xf32> to vector<32x128xf32>
    %27 = vector.shape_cast %26 : vector<32x128xf32> to vector<8x4x128xf32>
    %28 = vector.extract_strided_slice %7 {offsets = [0, 1152], sizes = [32, 128], strides = [1, 1]} : vector<32x1536xf32> to vector<32x128xf32>
    %29 = vector.shape_cast %28 : vector<32x128xf32> to vector<8x4x128xf32>
    %30 = vector.extract_strided_slice %7 {offsets = [0, 1280], sizes = [32, 128], strides = [1, 1]} : vector<32x1536xf32> to vector<32x128xf32>
    %31 = vector.shape_cast %30 : vector<32x128xf32> to vector<8x4x128xf32>
    %32 = vector.extract_strided_slice %7 {offsets = [0, 1408], sizes = [32, 128], strides = [1, 1]} : vector<32x1536xf32> to vector<32x128xf32>
    %33 = vector.shape_cast %32 : vector<32x128xf32> to vector<8x4x128xf32>
    %34 = tpu.concatenate %27, %29, %31, %33 in 0 : vector<8x4x128xf32>, vector<8x4x128xf32>, vector<8x4x128xf32>, vector<8x4x128xf32> -> vector<32x4x128xf32>
    "tpu.trace_start"() <{level = 10 : i32, message = "nld,nmd->nlm"}> : () -> ()
    %cst_6 = arith.constant dense<0.000000e+00> : vector<32x4x4xf32>
    %35 = tpu.matmul %16, %25, %cst_6 {dimension_numbers = #tpu.dot_dimension_numbers<[2], [2], [1], [1], [0, 0, 0, 1, 1, 1], [0], [0]>} : vector<32x4x128xf32>, vector<32x4x128xf32>, vector<32x4x4xf32> -> vector<32x4x4xf32>
    "tpu.trace_stop"() : () -> ()
    %cst_7 = arith.constant 0.353553385 : f32
    %36 = vector.broadcast %cst_7 : f32 to vector<32x4x4xf32>
    %37 = arith.mulf %35, %36 : vector<32x4x4xf32>
    %cst_8 = arith.constant dense<0xFF800000> : vector<32x4xf32>
    %38 = vector.multi_reduction <maximumf>, %37, %cst_8 [2] : vector<32x4x4xf32> to vector<32x4xf32>
    %39 = vector.shape_cast %38 : vector<32x4xf32> to vector<32x4x1xf32>
    %40 = vector.broadcast %39 : vector<32x4x1xf32> to vector<32x4x4xf32>
    %41 = arith.subf %37, %40 : vector<32x4x4xf32>
    %42 = math.exp %41 : vector<32x4x4xf32>
    %cst_9 = arith.constant dense<0.000000e+00> : vector<32x4xf32>
    %43 = vector.multi_reduction <add>, %42, %cst_9 [2] : vector<32x4x4xf32> to vector<32x4xf32>
    %44 = vector.shape_cast %43 : vector<32x4xf32> to vector<32x4x1xf32>
    %45 = tpu.reciprocal %44 {approx = true} : vector<32x4x1xf32> -> vector<32x4x1xf32>
    %46 = vector.broadcast %45 : vector<32x4x1xf32> to vector<32x4x4xf32>
    %47 = arith.mulf %42, %46 : vector<32x4x4xf32>
    "tpu.trace_start"() <{level = 10 : i32, message = "nlm,nmd->nld"}> : () -> ()
    %cst_10 = arith.constant dense<0.000000e+00> : vector<32x4x128xf32>
    %48 = tpu.matmul %47, %34, %cst_10 {dimension_numbers = #tpu.dot_dimension_numbers<[2], [1], [1], [2], [0, 0, 0, 1, 1, 2], [0], [0]>} : vector<32x4x4xf32>, vector<32x4x128xf32>, vector<32x4x128xf32> -> vector<32x4x128xf32>
    "tpu.trace_stop"() : () -> ()
    %49 = vector.extract_strided_slice %48 {offsets = [0, 0, 0], sizes = [8, 4, 128], strides = [1, 1, 1]} : vector<32x4x128xf32> to vector<8x4x128xf32>
    %50 = vector.extract_strided_slice %48 {offsets = [8, 0, 0], sizes = [8, 4, 128], strides = [1, 1, 1]} : vector<32x4x128xf32> to vector<8x4x128xf32>
    %51 = vector.extract_strided_slice %48 {offsets = [16, 0, 0], sizes = [8, 4, 128], strides = [1, 1, 1]} : vector<32x4x128xf32> to vector<8x4x128xf32>
    %52 = vector.extract_strided_slice %48 {offsets = [24, 0, 0], sizes = [8, 4, 128], strides = [1, 1, 1]} : vector<32x4x128xf32> to vector<8x4x128xf32>
    %53 = tpu.concatenate %49, %50, %51, %52 in 2 : vector<8x4x128xf32>, vector<8x4x128xf32>, vector<8x4x128xf32>, vector<8x4x128xf32> -> vector<8x4x512xf32>
    %54 = vector.shape_cast %53 : vector<8x4x512xf32> to vector<32x512xf32>
    %55 = arith.truncf %54 : vector<32x512xf32> to vector<32x512xbf16>
    %c0_11 = arith.constant 0 : index
    %c0_12 = arith.constant 0 : index
    %56 = vector.load %arg4[%c0_11, %c0_12] : memref<512x128xbf16, #tpu.memory_space<vmem>>, vector<512x128xbf16>
    %cst_13 = arith.constant dense<0.000000e+00> : vector<32x128xf32>
    %57 = tpu.matmul %55, %56, %cst_13 {dimension_numbers = #tpu.dot_dimension_numbers<[1], [0], [0], [1], [0, 0, 1, 1], [], []>} : vector<32x512xbf16>, vector<512x128xbf16>, vector<32x128xf32> -> vector<32x128xf32>
    %c0_14 = arith.constant 0 : index
    %c0_15 = arith.constant 0 : index
    %58 = vector.load %arg5[%c0_14, %c0_15] : memref<1x128xf32, #tpu.memory_space<vmem>>, vector<1x128xf32>
    %59 = vector.broadcast %58 : vector<1x128xf32> to vector<32x128xf32>
    %60 = arith.addf %57, %59 : vector<32x128xf32>
    %61 = tpu.iota {dimensions = array<i32: 1>} : vector<1x128xi32>
    %c32_i32 = arith.constant 32 : i32
    %62 = vector.broadcast %c32_i32 : i32 to vector<1x128xi32>
    %63 = arith.cmpi slt, %61, %62 : vector<1x128xi32>
    %64 = arith.extui %63 : vector<1x128xi1> to vector<1x128xi32>
    %65 = arith.sitofp %64 : vector<1x128xi32> to vector<1x128xf32>
    %66 = arith.addf %1, %60 : vector<32x128xf32>
    %c0_16 = arith.constant 0 : index
    %c0_17 = arith.constant 0 : index
    %67 = vector.load %arg6[%c0_16, %c0_17] : memref<1x128xf32, #tpu.memory_space<vmem>>, vector<1x128xf32>
    %c0_18 = arith.constant 0 : index
    %c0_19 = arith.constant 0 : index
    %68 = vector.load %arg7[%c0_18, %c0_19] : memref<1x128xf32, #tpu.memory_space<vmem>>, vector<1x128xf32>
    %cst_20 = arith.constant dense<0.000000e+00> : vector<32xf32>
    %69 = vector.multi_reduction <add>, %66, %cst_20 [1] : vector<32x128xf32> to vector<32xf32>
    %70 = vector.shape_cast %69 : vector<32xf32> to vector<32x1xf32>
    %cst_21 = arith.constant 3.125000e-02 : f32
    %71 = vector.broadcast %cst_21 : f32 to vector<32x1xf32>
    %72 = arith.mulf %70, %71 : vector<32x1xf32>
    %73 = vector.broadcast %72 : vector<32x1xf32> to vector<32x128xf32>
    %74 = arith.subf %66, %73 : vector<32x128xf32>
    %75 = vector.broadcast %65 : vector<1x128xf32> to vector<32x128xf32>
    %76 = arith.mulf %74, %75 : vector<32x128xf32>
    %77 = arith.mulf %76, %76 : vector<32x128xf32>
    %cst_22 = arith.constant dense<0.000000e+00> : vector<32xf32>
    %78 = vector.multi_reduction <add>, %77, %cst_22 [1] : vector<32x128xf32> to vector<32xf32>
    %79 = vector.shape_cast %78 : vector<32xf32> to vector<32x1xf32>
    %cst_23 = arith.constant 3.125000e-02 : f32
    %80 = vector.broadcast %cst_23 : f32 to vector<32x1xf32>
    %81 = arith.mulf %79, %80 : vector<32x1xf32>
    %82 = vector.broadcast %72 : vector<32x1xf32> to vector<32x128xf32>
    %83 = arith.subf %66, %82 : vector<32x128xf32>
    %cst_24 = arith.constant 9.99999974E-6 : f32
    %84 = vector.broadcast %cst_24 : f32 to vector<32x1xf32>
    %85 = arith.addf %81, %84 : vector<32x1xf32>
    %86 = math.rsqrt %85 : vector<32x1xf32>
    %87 = vector.broadcast %86 : vector<32x1xf32> to vector<32x128xf32>
    %88 = arith.mulf %83, %87 : vector<32x128xf32>
    %89 = vector.broadcast %67 : vector<1x128xf32> to vector<32x128xf32>
    %90 = arith.mulf %88, %89 : vector<32x128xf32>
    %91 = vector.broadcast %68 : vector<1x128xf32> to vector<32x128xf32>
    %92 = arith.addf %90, %91 : vector<32x128xf32>
    %93 = arith.truncf %92 : vector<32x128xf32> to vector<32x128xbf16>
    %c0_25 = arith.constant 0 : index
    %c0_26 = arith.constant 0 : index
    %94 = vector.load %arg8[%c0_25, %c0_26] : memref<128x128xbf16, #tpu.memory_space<vmem>>, vector<128x128xbf16>
    %cst_27 = arith.constant dense<0.000000e+00> : vector<32x128xf32>
    %95 = tpu.matmul %93, %94, %cst_27 {dimension_numbers = #tpu.dot_dimension_numbers<[1], [0], [0], [1], [0, 0, 1, 1], [], []>} : vector<32x128xbf16>, vector<128x128xbf16>, vector<32x128xf32> -> vector<32x128xf32>
    %c0_28 = arith.constant 0 : index
    %c0_29 = arith.constant 0 : index
    %96 = vector.load %arg9[%c0_28, %c0_29] : memref<1x128xf32, #tpu.memory_space<vmem>>, vector<1x128xf32>
    %97 = vector.broadcast %96 : vector<1x128xf32> to vector<32x128xf32>
    %98 = arith.addf %95, %97 : vector<32x128xf32>
    %cst_30 = arith.constant 0.000000e+00 : f32
    %99 = vector.broadcast %cst_30 : f32 to vector<32x128xf32>
    %100 = arith.maximumf %98, %99 : vector<32x128xf32>
    %101 = arith.truncf %100 : vector<32x128xf32> to vector<32x128xbf16>
    %c0_31 = arith.constant 0 : index
    %c0_32 = arith.constant 0 : index
    %102 = vector.load %arg10[%c0_31, %c0_32] : memref<128x128xbf16, #tpu.memory_space<vmem>>, vector<128x128xbf16>
    %cst_33 = arith.constant dense<0.000000e+00> : vector<32x128xf32>
    %103 = tpu.matmul %101, %102, %cst_33 {dimension_numbers = #tpu.dot_dimension_numbers<[1], [0], [0], [1], [0, 0, 1, 1], [], []>} : vector<32x128xbf16>, vector<128x128xbf16>, vector<32x128xf32> -> vector<32x128xf32>
    %c0_34 = arith.constant 0 : index
    %c0_35 = arith.constant 0 : index
    %104 = vector.load %arg11[%c0_34, %c0_35] : memref<1x128xf32, #tpu.memory_space<vmem>>, vector<1x128xf32>
    %105 = vector.broadcast %104 : vector<1x128xf32> to vector<32x128xf32>
    %106 = arith.addf %103, %105 : vector<32x128xf32>
    %107 = arith.addf %92, %106 : vector<32x128xf32>
    %c0_36 = arith.constant 0 : index
    %c0_37 = arith.constant 0 : index
    %108 = vector.load %arg12[%c0_36, %c0_37] : memref<1x128xf32, #tpu.memory_space<vmem>>, vector<1x128xf32>
    %c0_38 = arith.constant 0 : index
    %c0_39 = arith.constant 0 : index
    %109 = vector.load %arg13[%c0_38, %c0_39] : memref<1x128xf32, #tpu.memory_space<vmem>>, vector<1x128xf32>
    %cst_40 = arith.constant dense<0.000000e+00> : vector<32xf32>
    %110 = vector.multi_reduction <add>, %107, %cst_40 [1] : vector<32x128xf32> to vector<32xf32>
    %111 = vector.shape_cast %110 : vector<32xf32> to vector<32x1xf32>
    %cst_41 = arith.constant 3.125000e-02 : f32
    %112 = vector.broadcast %cst_41 : f32 to vector<32x1xf32>
    %113 = arith.mulf %111, %112 : vector<32x1xf32>
    %114 = vector.broadcast %113 : vector<32x1xf32> to vector<32x128xf32>
    %115 = arith.subf %107, %114 : vector<32x128xf32>
    %116 = vector.broadcast %65 : vector<1x128xf32> to vector<32x128xf32>
    %117 = arith.mulf %115, %116 : vector<32x128xf32>
    %118 = arith.mulf %117, %117 : vector<32x128xf32>
    %cst_42 = arith.constant dense<0.000000e+00> : vector<32xf32>
    %119 = vector.multi_reduction <add>, %118, %cst_42 [1] : vector<32x128xf32> to vector<32xf32>
    %120 = vector.shape_cast %119 : vector<32xf32> to vector<32x1xf32>
    %cst_43 = arith.constant 3.125000e-02 : f32
    %121 = vector.broadcast %cst_43 : f32 to vector<32x1xf32>
    %122 = arith.mulf %120, %121 : vector<32x1xf32>
    %123 = vector.broadcast %113 : vector<32x1xf32> to vector<32x128xf32>
    %124 = arith.subf %107, %123 : vector<32x128xf32>
    %cst_44 = arith.constant 9.99999974E-6 : f32
    %125 = vector.broadcast %cst_44 : f32 to vector<32x1xf32>
    %126 = arith.addf %122, %125 : vector<32x1xf32>
    %127 = math.rsqrt %126 : vector<32x1xf32>
    %128 = vector.broadcast %127 : vector<32x1xf32> to vector<32x128xf32>
    %129 = arith.mulf %124, %128 : vector<32x128xf32>
    %130 = vector.broadcast %108 : vector<1x128xf32> to vector<32x128xf32>
    %131 = arith.mulf %129, %130 : vector<32x128xf32>
    %132 = vector.broadcast %109 : vector<1x128xf32> to vector<32x128xf32>
    %133 = arith.addf %131, %132 : vector<32x128xf32>
    %134 = vector.shape_cast %133 : vector<32x128xf32> to vector<8x4x128xf32>
    %c0_45 = arith.constant 0 : index
    %c0_46 = arith.constant 0 : index
    %c0_47 = arith.constant 0 : index
    %135 = vector.load %arg14[%c0_45, %c0_46, %c0_47] : memref<8x4x128xf32, #tpu.memory_space<vmem>>, vector<8x4x128xf32>
    tpu.vector_store %arg14[%c0_45, %c0_46, %c0_47], %134 {strides = array<i32>} : memref<8x4x128xf32, #tpu.memory_space<vmem>>, vector<8x4x128xf32>,
    return
  }
  func.func @transform_0(%arg0: i32) -> (i32, i32, i32) {
    %c0_i32 = arith.constant 0 : i32
    %c0_i32_0 = arith.constant 0 : i32
    %c0_i32_1 = arith.constant 0 : i32
    return %arg0, %c0_i32, %c0_i32_0 : i32, i32, i32
  }
  func.func @transform_1(%arg0: i32) -> (i32, i32) {
    %c0_i32 = arith.constant 0 : i32
    %c0_i32_0 = arith.constant 0 : i32
    %c0_i32_1 = arith.constant 0 : i32
    return %c0_i32, %c0_i32_0 : i32, i32
  }
  func.func @transform_2(%arg0: i32) -> (i32, i32) {
    %c0_i32 = arith.constant 0 : i32
    %c0_i32_0 = arith.constant 0 : i32
    %c0_i32_1 = arith.constant 0 : i32
    return %c0_i32, %c0_i32_0 : i32, i32
  }
  func.func @transform_3(%arg0: i32) -> (i32, i32) {
    %c0_i32 = arith.constant 0 : i32
    %c0_i32_0 = arith.constant 0 : i32
    %c0_i32_1 = arith.constant 0 : i32
    return %c0_i32, %c0_i32_0 : i32, i32
  }
  func.func @transform_4(%arg0: i32) -> (i32, i32) {
    %c0_i32 = arith.constant 0 : i32
    %c0_i32_0 = arith.constant 0 : i32
    %c0_i32_1 = arith.constant 0 : i32
    return %c0_i32, %c0_i32_0 : i32, i32
  }
  func.func @transform_5(%arg0: i32) -> (i32, i32) {
    %c0_i32 = arith.constant 0 : i32
    %c0_i32_0 = arith.constant 0 : i32
    %c0_i32_1 = arith.constant 0 : i32
    return %c0_i32, %c0_i32_0 : i32, i32
  }
  func.func @transform_6(%arg0: i32) -> (i32, i32) {
    %c0_i32 = arith.constant 0 : i32
    %c0_i32_0 = arith.constant 0 : i32
    %c0_i32_1 = arith.constant 0 : i32
    return %c0_i32, %c0_i32_0 : i32, i32
  }
  func.func @transform_7(%arg0: i32) -> (i32, i32) {
    %c0_i32 = arith.constant 0 : i32
    %c0_i32_0 = arith.constant 0 : i32
    %c0_i32_1 = arith.constant 0 : i32
    return %c0_i32, %c0_i32_0 : i32, i32
  }
  func.func @transform_8(%arg0: i32) -> (i32, i32) {
    %c0_i32 = arith.constant 0 : i32
    %c0_i32_0 = arith.constant 0 : i32
    %c0_i32_1 = arith.constant 0 : i32
    return %c0_i32, %c0_i32_0 : i32, i32
  }
  func.func @transform_9(%arg0: i32) -> (i32, i32) {
    %c0_i32 = arith.constant 0 : i32
    %c0_i32_0 = arith.constant 0 : i32
    %c0_i32_1 = arith.constant 0 : i32
    return %c0_i32, %c0_i32_0 : i32, i32
  }
  func.func @transform_10(%arg0: i32) -> (i32, i32) {
    %c0_i32 = arith.constant 0 : i32
    %c0_i32_0 = arith.constant 0 : i32
    %c0_i32_1 = arith.constant 0 : i32
    return %c0_i32, %c0_i32_0 : i32, i32
  }
  func.func @transform_11(%arg0: i32) -> (i32, i32) {
    %c0_i32 = arith.constant 0 : i32
    %c0_i32_0 = arith.constant 0 : i32
    %c0_i32_1 = arith.constant 0 : i32
    return %c0_i32, %c0_i32_0 : i32, i32
  }
  func.func @transform_12(%arg0: i32) -> (i32, i32) {
    %c0_i32 = arith.constant 0 : i32
    %c0_i32_0 = arith.constant 0 : i32
    %c0_i32_1 = arith.constant 0 : i32
    return %c0_i32, %c0_i32_0 : i32, i32
  }
  func.func @transform_13(%arg0: i32) -> (i32, i32, i32) {
    %c0_i32 = arith.constant 0 : i32
    %c0_i32_0 = arith.constant 0 : i32
    %c0_i32_1 = arith.constant 0 : i32
    return %arg0, %c0_i32, %c0_i32_0 : i32, i32, i32
  }
}

module attributes {stable_mosaic.version = 11 : i64} {
  func.func @_bilstm_kernel(%arg0: i32, %arg1: memref<8x1xi32, #tpu.memory_space<vmem>>, %arg2: memref<16x8x128xf32, #tpu.memory_space<vmem>>, %arg3: memref<128x512xbf16, #tpu.memory_space<vmem>>, %arg4: memref<128x512xbf16, #tpu.memory_space<vmem>>, %arg5: memref<2x128x512xf32, #tpu.memory_space<vmem>>, %arg6: memref<1x512xf32, #tpu.memory_space<vmem>>, %arg7: memref<1x512xf32, #tpu.memory_space<vmem>>, %arg8: memref<16x8x128xf32, #tpu.memory_space<vmem>>, %arg9: memref<16x8x128xf32, #tpu.memory_space<vmem>>, %arg10: memref<16x8x512xbf16, #tpu.memory_space<vmem>>, %arg11: memref<16x8x512xbf16, #tpu.memory_space<vmem>>) attributes {dimension_semantics = [#tpu.dimension_semantics<parallel>], iteration_bounds = array<i64: 1>, scalar_prefetch = 0 : i64, scratch_operands = 2 : i64, tpu.core_type = #tpu.core_type<tc>, window_params = [{transform_indices = @transform_0, window_bounds = array<i64: 8, 1>}, {transform_indices = @transform_1, window_bounds = array<i64: 16, 8, 128>}, {pipeline_mode = #tpu.pipeline_mode<synchronous>, transform_indices = @transform_2, window_bounds = array<i64: 128, 512>}, {pipeline_mode = #tpu.pipeline_mode<synchronous>, transform_indices = @transform_3, window_bounds = array<i64: 128, 512>}, {pipeline_mode = #tpu.pipeline_mode<synchronous>, transform_indices = @transform_4, window_bounds = array<i64: 2, 128, 512>}, {pipeline_mode = #tpu.pipeline_mode<synchronous>, transform_indices = @transform_5, window_bounds = array<i64: 1, 512>}, {pipeline_mode = #tpu.pipeline_mode<synchronous>, transform_indices = @transform_6, window_bounds = array<i64: 1, 512>}, {transform_indices = @transform_7, window_bounds = array<i64: 16, 8, 128>}, {transform_indices = @transform_8, window_bounds = array<i64: 16, 8, 128>}]} {
    %c0 = arith.constant 0 : index
    %c0_0 = arith.constant 0 : index
    %c0_1 = arith.constant 0 : index
    %0 = vector.load %arg2[%c0, %c0_0, %c0_1] : memref<16x8x128xf32, #tpu.memory_space<vmem>>, vector<16x8x128xf32>
    %1 = vector.shape_cast %0 : vector<16x8x128xf32> to vector<128x128xf32>
    %2 = arith.truncf %1 : vector<128x128xf32> to vector<128x128xbf16>
    %c0_2 = arith.constant 0 : index
    %c0_3 = arith.constant 0 : index
    %3 = vector.load %arg3[%c0_2, %c0_3] : memref<128x512xbf16, #tpu.memory_space<vmem>>, vector<128x512xbf16>
    %cst = arith.constant dense<0.000000e+00> : vector<128x512xf32>
    %4 = tpu.matmul %2, %3, %cst {dimension_numbers = #tpu.dot_dimension_numbers<[1], [0], [0], [1], [0, 0, 1, 1], [], []>} : vector<128x128xbf16>, vector<128x512xbf16>, vector<128x512xf32> -> vector<128x512xf32>
    %c0_4 = arith.constant 0 : index
    %c0_5 = arith.constant 0 : index
    %5 = vector.load %arg6[%c0_4, %c0_5] : memref<1x512xf32, #tpu.memory_space<vmem>>, vector<1x512xf32>
    %6 = vector.broadcast %5 : vector<1x512xf32> to vector<128x512xf32>
    %7 = arith.addf %4, %6 : vector<128x512xf32>
    %8 = arith.truncf %7 : vector<128x512xf32> to vector<128x512xbf16>
    %9 = vector.shape_cast %8 : vector<128x512xbf16> to vector<16x8x512xbf16>
    %c0_6 = arith.constant 0 : index
    %c0_7 = arith.constant 0 : index
    %c0_8 = arith.constant 0 : index
    %10 = vector.load %arg10[%c0_6, %c0_7, %c0_8] : memref<16x8x512xbf16, #tpu.memory_space<vmem>>, vector<16x8x512xbf16>
    tpu.vector_store %arg10[%c0_6, %c0_7, %c0_8], %9 {strides = array<i32>} : memref<16x8x512xbf16, #tpu.memory_space<vmem>>, vector<16x8x512xbf16>,
    %c0_9 = arith.constant 0 : index
    %c0_10 = arith.constant 0 : index
    %11 = vector.load %arg4[%c0_9, %c0_10] : memref<128x512xbf16, #tpu.memory_space<vmem>>, vector<128x512xbf16>
    %cst_11 = arith.constant dense<0.000000e+00> : vector<128x512xf32>
    %12 = tpu.matmul %2, %11, %cst_11 {dimension_numbers = #tpu.dot_dimension_numbers<[1], [0], [0], [1], [0, 0, 1, 1], [], []>} : vector<128x128xbf16>, vector<128x512xbf16>, vector<128x512xf32> -> vector<128x512xf32>
    %c0_12 = arith.constant 0 : index
    %c0_13 = arith.constant 0 : index
    %13 = vector.load %arg7[%c0_12, %c0_13] : memref<1x512xf32, #tpu.memory_space<vmem>>, vector<1x512xf32>
    %14 = vector.broadcast %13 : vector<1x512xf32> to vector<128x512xf32>
    %15 = arith.addf %12, %14 : vector<128x512xf32>
    %16 = arith.truncf %15 : vector<128x512xf32> to vector<128x512xbf16>
    %17 = vector.shape_cast %16 : vector<128x512xbf16> to vector<16x8x512xbf16>
    %c0_14 = arith.constant 0 : index
    %c0_15 = arith.constant 0 : index
    %c0_16 = arith.constant 0 : index
    %18 = vector.load %arg11[%c0_14, %c0_15, %c0_16] : memref<16x8x512xbf16, #tpu.memory_space<vmem>>, vector<16x8x512xbf16>
    tpu.vector_store %arg11[%c0_14, %c0_15, %c0_16], %17 {strides = array<i32>} : memref<16x8x512xbf16, #tpu.memory_space<vmem>>, vector<16x8x512xbf16>,
    %c0_17 = arith.constant 0 : index
    %c0_18 = arith.constant 0 : index
    %c0_19 = arith.constant 0 : index
    %19 = vector.load %arg5[%c0_17, %c0_18, %c0_19] : memref<2x128x512xf32, #tpu.memory_space<vmem>>, vector<2x128x512xf32>
    %c0_20 = arith.constant 0 : index
    %c0_21 = arith.constant 0 : index
    %20 = vector.load %arg1[%c0_20, %c0_21] : memref<8x1xi32, #tpu.memory_space<vmem>>, vector<8x1xi32>
    %cst_22 = arith.constant 0.000000e+00 : f32
    %21 = vector.broadcast %cst_22 : f32 to vector<2x8x128xf32>
    %cst_23 = arith.constant 0.000000e+00 : f32
    %22 = vector.broadcast %cst_23 : f32 to vector<2x8x128xf32>
    %c0_i32 = arith.constant 0 : i32
    %c16_i32 = arith.constant 16 : i32
    %23 = arith.addi %c0_i32, %c16_i32 : i32
    %c1_i32 = arith.constant 1 : i32
    %24:2 = scf.for %arg12 = %c0_i32 to %23 step %c1_i32 iter_args(%arg13 = %21, %arg14 = %22) -> (vector<2x8x128xf32>, vector<2x8x128xf32>)  : i32 {
      %c15_i32 = arith.constant 15 : i32
      %25 = arith.subi %c15_i32, %arg12 : i32
      %26 = arith.index_cast %arg12 : i32 to index
      %c0_25 = arith.constant 0 : index
      %c0_26 = arith.constant 0 : index
      %27 = vector.load %arg10[%26, %c0_25, %c0_26] : memref<16x8x512xbf16, #tpu.memory_space<vmem>>, vector<1x8x512xbf16>
      %28 = vector.shape_cast %27 : vector<1x8x512xbf16> to vector<8x512xbf16>
      %29 = arith.extf %28 : vector<8x512xbf16> to vector<8x512xf32>
      %30 = vector.shape_cast %29 : vector<8x512xf32> to vector<1x8x512xf32>
      %31 = arith.index_cast %25 : i32 to index
      %c0_27 = arith.constant 0 : index
      %c0_28 = arith.constant 0 : index
      %32 = vector.load %arg11[%31, %c0_27, %c0_28] : memref<16x8x512xbf16, #tpu.memory_space<vmem>>, vector<1x8x512xbf16>
      %33 = vector.shape_cast %32 : vector<1x8x512xbf16> to vector<8x512xbf16>
      %34 = arith.extf %33 : vector<8x512xbf16> to vector<8x512xf32>
      %35 = vector.shape_cast %34 : vector<8x512xf32> to vector<1x8x512xf32>
      %36 = tpu.concatenate %30, %35 in 0 : vector<1x8x512xf32>, vector<1x8x512xf32> -> vector<2x8x512xf32>
      "tpu.trace_start"() <{level = 10 : i32, message = "dbh,dhg->dbg"}> : () -> ()
      %cst_29 = arith.constant dense<0.000000e+00> : vector<2x8x512xf32>
      %37 = tpu.matmul %arg13, %19, %cst_29 {dimension_numbers = #tpu.dot_dimension_numbers<[2], [1], [1], [2], [0, 0, 0, 1, 1, 2], [0], [0]>} : vector<2x8x128xf32>, vector<2x128x512xf32>, vector<2x8x512xf32> -> vector<2x8x512xf32>
      "tpu.trace_stop"() : () -> ()
      %38 = arith.addf %36, %37 : vector<2x8x512xf32>
      %39 = vector.extract_strided_slice %38 {offsets = [0, 0, 0], sizes = [2, 8, 128], strides = [1, 1, 1]} : vector<2x8x512xf32> to vector<2x8x128xf32>
      %40 = arith.negf %39 : vector<2x8x128xf32>
      %41 = math.exp %40 : vector<2x8x128xf32>
      %cst_30 = arith.constant 1.000000e+00 : f32
      %42 = vector.broadcast %cst_30 : f32 to vector<2x8x128xf32>
      %43 = arith.addf %42, %41 : vector<2x8x128xf32>
      %44 = arith.divf %42, %43 : vector<2x8x128xf32>
      %45 = vector.extract_strided_slice %38 {offsets = [0, 0, 128], sizes = [2, 8, 128], strides = [1, 1, 1]} : vector<2x8x512xf32> to vector<2x8x128xf32>
      %46 = arith.negf %45 : vector<2x8x128xf32>
      %47 = math.exp %46 : vector<2x8x128xf32>
      %cst_31 = arith.constant 1.000000e+00 : f32
      %48 = vector.broadcast %cst_31 : f32 to vector<2x8x128xf32>
      %49 = arith.addf %48, %47 : vector<2x8x128xf32>
      %50 = arith.divf %48, %49 : vector<2x8x128xf32>
      %51 = vector.extract_strided_slice %38 {offsets = [0, 0, 256], sizes = [2, 8, 128], strides = [1, 1, 1]} : vector<2x8x512xf32> to vector<2x8x128xf32>
      %52 = math.tanh %51 : vector<2x8x128xf32>
      %53 = vector.extract_strided_slice %38 {offsets = [0, 0, 384], sizes = [2, 8, 128], strides = [1, 1, 1]} : vector<2x8x512xf32> to vector<2x8x128xf32>
      %54 = arith.negf %53 : vector<2x8x128xf32>
      %55 = math.exp %54 : vector<2x8x128xf32>
      %cst_32 = arith.constant 1.000000e+00 : f32
      %56 = vector.broadcast %cst_32 : f32 to vector<2x8x128xf32>
      %57 = arith.addf %56, %55 : vector<2x8x128xf32>
      %58 = arith.divf %56, %57 : vector<2x8x128xf32>
      %59 = arith.mulf %50, %arg14 : vector<2x8x128xf32>
      %60 = arith.mulf %44, %52 : vector<2x8x128xf32>
      %61 = arith.addf %59, %60 : vector<2x8x128xf32>
      %62 = math.tanh %61 : vector<2x8x128xf32>
      %63 = arith.mulf %58, %62 : vector<2x8x128xf32>
      %64 = vector.broadcast %arg12 : i32 to vector<8x1xi32>
      %65 = arith.cmpi sgt, %20, %64 : vector<8x1xi32>
      %66 = arith.extui %65 : vector<8x1xi1> to vector<8x1xi32>
      %67 = arith.sitofp %66 : vector<8x1xi32> to vector<8x1xf32>
      %68 = vector.broadcast %25 : i32 to vector<8x1xi32>
      %69 = arith.cmpi sgt, %20, %68 : vector<8x1xi32>
      %70 = arith.extui %69 : vector<8x1xi1> to vector<8x1xi32>
      %71 = arith.sitofp %70 : vector<8x1xi32> to vector<8x1xf32>
      %72 = vector.shape_cast %67 : vector<8x1xf32> to vector<1x8x1xf32>
      %73 = vector.shape_cast %71 : vector<8x1xf32> to vector<1x8x1xf32>
      %74 = tpu.concatenate %72, %73 in 0 : vector<1x8x1xf32>, vector<1x8x1xf32> -> vector<2x8x1xf32>
      %75 = vector.broadcast %74 : vector<2x8x1xf32> to vector<2x8x128xf32>
      %76 = arith.mulf %75, %63 : vector<2x8x128xf32>
      %cst_33 = arith.constant 1.000000e+00 : f32
      %77 = vector.broadcast %cst_33 : f32 to vector<2x8x1xf32>
      %78 = arith.subf %77, %74 : vector<2x8x1xf32>
      %79 = vector.broadcast %78 : vector<2x8x1xf32> to vector<2x8x128xf32>
      %80 = arith.mulf %79, %arg13 : vector<2x8x128xf32>
      %81 = arith.addf %76, %80 : vector<2x8x128xf32>
      %82 = vector.broadcast %74 : vector<2x8x1xf32> to vector<2x8x128xf32>
      %83 = arith.mulf %82, %61 : vector<2x8x128xf32>
      %cst_34 = arith.constant 1.000000e+00 : f32
      %84 = vector.broadcast %cst_34 : f32 to vector<2x8x1xf32>
      %85 = arith.subf %84, %74 : vector<2x8x1xf32>
      %86 = vector.broadcast %85 : vector<2x8x1xf32> to vector<2x8x128xf32>
      %87 = arith.mulf %86, %arg14 : vector<2x8x128xf32>
      %88 = arith.addf %83, %87 : vector<2x8x128xf32>
      %89 = vector.extract_strided_slice %81 {offsets = [0, 0, 0], sizes = [1, 8, 128], strides = [1, 1, 1]} : vector<2x8x128xf32> to vector<1x8x128xf32>
      %90 = vector.shape_cast %89 : vector<1x8x128xf32> to vector<8x128xf32>
      %91 = vector.broadcast %67 : vector<8x1xf32> to vector<8x128xf32>
      %92 = arith.mulf %90, %91 : vector<8x128xf32>
      %93 = arith.index_cast %arg12 : i32 to index
      %c0_35 = arith.constant 0 : index
      %c0_36 = arith.constant 0 : index
      %94 = vector.load %arg8[%93, %c0_35, %c0_36] : memref<16x8x128xf32, #tpu.memory_space<vmem>>, vector<1x8x128xf32>
      %95 = vector.shape_cast %94 : vector<1x8x128xf32> to vector<8x128xf32>
      %96 = vector.shape_cast %92 : vector<8x128xf32> to vector<1x8x128xf32>
      tpu.vector_store %arg8[%93, %c0_35, %c0_36], %96 {strides = array<i32>} : memref<16x8x128xf32, #tpu.memory_space<vmem>>, vector<1x8x128xf32>,
      %97 = vector.extract_strided_slice %81 {offsets = [1, 0, 0], sizes = [1, 8, 128], strides = [1, 1, 1]} : vector<2x8x128xf32> to vector<1x8x128xf32>
      %98 = vector.shape_cast %97 : vector<1x8x128xf32> to vector<8x128xf32>
      %99 = vector.broadcast %71 : vector<8x1xf32> to vector<8x128xf32>
      %100 = arith.mulf %98, %99 : vector<8x128xf32>
      %101 = arith.index_cast %25 : i32 to index
      %c0_37 = arith.constant 0 : index
      %c0_38 = arith.constant 0 : index
      %102 = vector.load %arg9[%101, %c0_37, %c0_38] : memref<16x8x128xf32, #tpu.memory_space<vmem>>, vector<1x8x128xf32>
      %103 = vector.shape_cast %102 : vector<1x8x128xf32> to vector<8x128xf32>
      %104 = vector.shape_cast %100 : vector<8x128xf32> to vector<1x8x128xf32>
      tpu.vector_store %arg9[%101, %c0_37, %c0_38], %104 {strides = array<i32>} : memref<16x8x128xf32, #tpu.memory_space<vmem>>, vector<1x8x128xf32>,
      scf.yield %81, %88 : vector<2x8x128xf32>, vector<2x8x128xf32>
    }
    %c16_i32_24 = arith.constant 16 : i32
    return
  }
  func.func @transform_0(%arg0: i32) -> (i32, i32) {
    %c0_i32 = arith.constant 0 : i32
    %c0_i32_0 = arith.constant 0 : i32
    return %arg0, %c0_i32 : i32, i32
  }
  func.func @transform_1(%arg0: i32) -> (i32, i32, i32) {
    %c0_i32 = arith.constant 0 : i32
    %c0_i32_0 = arith.constant 0 : i32
    %c0_i32_1 = arith.constant 0 : i32
    return %c0_i32, %arg0, %c0_i32_0 : i32, i32, i32
  }
  func.func @transform_2(%arg0: i32) -> (i32, i32) {
    %c0_i32 = arith.constant 0 : i32
    %c0_i32_0 = arith.constant 0 : i32
    %c0_i32_1 = arith.constant 0 : i32
    return %c0_i32, %c0_i32_0 : i32, i32
  }
  func.func @transform_3(%arg0: i32) -> (i32, i32) {
    %c0_i32 = arith.constant 0 : i32
    %c0_i32_0 = arith.constant 0 : i32
    %c0_i32_1 = arith.constant 0 : i32
    return %c0_i32, %c0_i32_0 : i32, i32
  }
  func.func @transform_4(%arg0: i32) -> (i32, i32, i32) {
    %c0_i32 = arith.constant 0 : i32
    %c0_i32_0 = arith.constant 0 : i32
    %c0_i32_1 = arith.constant 0 : i32
    %c0_i32_2 = arith.constant 0 : i32
    return %c0_i32, %c0_i32_0, %c0_i32_1 : i32, i32, i32
  }
  func.func @transform_5(%arg0: i32) -> (i32, i32) {
    %c0_i32 = arith.constant 0 : i32
    %c0_i32_0 = arith.constant 0 : i32
    %c0_i32_1 = arith.constant 0 : i32
    return %c0_i32, %c0_i32_0 : i32, i32
  }
  func.func @transform_6(%arg0: i32) -> (i32, i32) {
    %c0_i32 = arith.constant 0 : i32
    %c0_i32_0 = arith.constant 0 : i32
    %c0_i32_1 = arith.constant 0 : i32
    return %c0_i32, %c0_i32_0 : i32, i32
  }
  func.func @transform_7(%arg0: i32) -> (i32, i32, i32) {
    %c0_i32 = arith.constant 0 : i32
    %c0_i32_0 = arith.constant 0 : i32
    %c0_i32_1 = arith.constant 0 : i32
    return %c0_i32, %arg0, %c0_i32_0 : i32, i32, i32
  }
  func.func @transform_8(%arg0: i32) -> (i32, i32, i32) {
    %c0_i32 = arith.constant 0 : i32
    %c0_i32_0 = arith.constant 0 : i32
    %c0_i32_1 = arith.constant 0 : i32
    return %c0_i32, %arg0, %c0_i32_0 : i32, i32, i32
  }
}

module attributes {stable_mosaic.version = 11 : i64} {
  func.func @_linear_kernel(%arg0: i32, %arg1: memref<128x256xf32, #tpu.memory_space<vmem>>, %arg2: memref<256x128xbf16, #tpu.memory_space<vmem>>, %arg3: memref<1x128xf32, #tpu.memory_space<vmem>>, %arg4: memref<128x128xf32, #tpu.memory_space<vmem>>) attributes {dimension_semantics = [#tpu.dimension_semantics<parallel>], iteration_bounds = array<i64: 1>, scalar_prefetch = 0 : i64, scratch_operands = 0 : i64, tpu.core_type = #tpu.core_type<tc>, window_params = [{transform_indices = @transform_0, window_bounds = array<i64: 128, 256>}, {pipeline_mode = #tpu.pipeline_mode<synchronous>, transform_indices = @transform_1, window_bounds = array<i64: 256, 128>}, {pipeline_mode = #tpu.pipeline_mode<synchronous>, transform_indices = @transform_2, window_bounds = array<i64: 1, 128>}, {transform_indices = @transform_3, window_bounds = array<i64: 128, 128>}]} {
    %c0 = arith.constant 0 : index
    %c0_0 = arith.constant 0 : index
    %0 = vector.load %arg1[%c0, %c0_0] : memref<128x256xf32, #tpu.memory_space<vmem>>, vector<128x256xf32>
    %1 = arith.truncf %0 : vector<128x256xf32> to vector<128x256xbf16>
    %c0_1 = arith.constant 0 : index
    %c0_2 = arith.constant 0 : index
    %2 = vector.load %arg2[%c0_1, %c0_2] : memref<256x128xbf16, #tpu.memory_space<vmem>>, vector<256x128xbf16>
    %cst = arith.constant dense<0.000000e+00> : vector<128x128xf32>
    %3 = tpu.matmul %1, %2, %cst {dimension_numbers = #tpu.dot_dimension_numbers<[1], [0], [0], [1], [0, 0, 1, 1], [], []>} : vector<128x256xbf16>, vector<256x128xbf16>, vector<128x128xf32> -> vector<128x128xf32>
    %c0_3 = arith.constant 0 : index
    %c0_4 = arith.constant 0 : index
    %4 = vector.load %arg3[%c0_3, %c0_4] : memref<1x128xf32, #tpu.memory_space<vmem>>, vector<1x128xf32>
    %5 = vector.broadcast %4 : vector<1x128xf32> to vector<128x128xf32>
    %6 = arith.addf %3, %5 : vector<128x128xf32>
    %c0_5 = arith.constant 0 : index
    %c0_6 = arith.constant 0 : index
    %7 = vector.load %arg4[%c0_5, %c0_6] : memref<128x128xf32, #tpu.memory_space<vmem>>, vector<128x128xf32>
    tpu.vector_store %arg4[%c0_5, %c0_6], %6 {strides = array<i32>} : memref<128x128xf32, #tpu.memory_space<vmem>>, vector<128x128xf32>,
    return
  }
  func.func @transform_0(%arg0: i32) -> (i32, i32) {
    %c0_i32 = arith.constant 0 : i32
    %c0_i32_0 = arith.constant 0 : i32
    return %arg0, %c0_i32 : i32, i32
  }
  func.func @transform_1(%arg0: i32) -> (i32, i32) {
    %c0_i32 = arith.constant 0 : i32
    %c0_i32_0 = arith.constant 0 : i32
    %c0_i32_1 = arith.constant 0 : i32
    return %c0_i32, %c0_i32_0 : i32, i32
  }
  func.func @transform_2(%arg0: i32) -> (i32, i32) {
    %c0_i32 = arith.constant 0 : i32
    %c0_i32_0 = arith.constant 0 : i32
    %c0_i32_1 = arith.constant 0 : i32
    return %c0_i32, %c0_i32_0 : i32, i32
  }
  func.func @transform_3(%arg0: i32) -> (i32, i32) {
    %c0_i32 = arith.constant 0 : i32
    %c0_i32_0 = arith.constant 0 : i32
    return %arg0, %c0_i32 : i32, i32
  }
}

</mosaic_0001>

<llo_original>
// kernel: forward.7
$region0: #{forward.7}
  #allocation0 [shape = 'u32[]', space=smem, size = 0x4, offset = 0x4, fixed_abs, tag = 'smem constant byte address 0x4 - core index']
  #allocation1 [shape = 'u32[144,128]{1,0:T(1,128)}', space=vmem, size = 0x12000, scoped, tag = 'internal scratch']
  %s0 = inlined_call_operand.hbm [shape: f32[128,256], index: 0, kind: input, shape index: {}]
  %s1 = inlined_call_operand.hbm [shape: bf16[256,128], index: 1, kind: input, shape index: {}]
  %s2 = inlined_call_operand.hbm [shape: f32[1,128], index: 2, kind: input, shape index: {}]
  %s3 = inlined_call_operand.hbm [shape: f32[128,128], index: 3, kind: output, shape index: {}]
  %s4 = sld [smem:[#allocation0]]
  $region34: #{forward.7} parent=0
    _
  %s6 = ssub.s32 1, %s4
  %s7 = scalar_select 0, %s6, %s4
  $region1: #{forward.7} parent=0
    #allocation2 [shape = 'u8[131072]{0}', space=vmem, size = 0x20000, scoped, tag = 'input window, operand 0, single buffered']
    #allocation3 [shape = 's32[1]{0}', space=sflag, size = 0x4, scoped, tag = 'scoped memory for forward.7']
    #allocation4 [shape = 's32[1]{0}', space=sflag, size = 0x4, scoped, tag = 'scoped memory for forward.7']
    #allocation5 [shape = 'u8[65536]{0}', space=vmem, size = 0x10000, scoped, tag = 'input window, operand 1, single buffered']
    #allocation6 [shape = 's32[1]{0}', space=sflag, size = 0x4, scoped, tag = 'scoped memory for forward.7']
    #allocation7 [shape = 'u8[512]{0}', space=vmem, size = 0x400, scoped, tag = 'input window, operand 2, single buffered']
    #allocation8 [shape = 'u8[65536]{0}', space=vmem, size = 0x10000, scoped, tag = 'output window, operand 0, single buffered']
    %8 = vsyncpa [#allocation3], 0
    %9 = vsyncpa [#allocation6], 0
    %10 = vsyncpa [#allocation4], 0
    // Predicated region
    $region2: #{forward.7} parent=1 // pred_check
      _
    $region3: #{forward.7} parent=1 // pred_check_branch
      %12 = sbr.rel (0) target = $region5
    $region4: #{forward.7} parent=1 // pred_region
      %s14 = ssub.s32 4096, 4096
      %15 = vsyncadd [#allocation3], %s14
      %s16 = sshll.u32 [#allocation2], 4
      %s17 = int_to_ptr.vmem [resolvable:$true] %s16
      %22 = dma.hbm_to_vmem [thread:$0]  %s0, 4096, %s17, [#allocation3], 256, 256, 16
    $region5: #{forward.7} parent=1 // pred_fallthru
      _
    // Predicated region
    $region6: #{forward.7} parent=1 // pred_check
      _
    $region7: #{forward.7} parent=1 // pred_check_branch
      %24 = sbr.rel (0) target = $region9
    $region8: #{forward.7} parent=1 // pred_region
      %s26 = ssub.s32 2048, 2048
      %27 = vsyncadd [#allocation6], %s26
      %s28 = sshll.u32 [#allocation5], 4
      %s29 = int_to_ptr.vmem [resolvable:$true] %s28
      %34 = dma.hbm_to_vmem [thread:$0]  %s1, 2048, %s29, [#allocation6], 64, 64, 4
    $region9: #{forward.7} parent=1 // pred_fallthru
      _
    // Predicated region
    $region10: #{forward.7} parent=1 // pred_check
      _
    $region11: #{forward.7} parent=1 // pred_check_branch
      %36 = sbr.rel (0) target = $region13
    $region12: #{forward.7} parent=1 // pred_region
      %s38 = ssub.s32 16, 16
      %39 = vsyncadd [#allocation6], %s38
      %s41 = sshll.u32 [#allocation7], 4
      %s42 = int_to_ptr.vmem [resolvable:$true] %s41
      %44 = dma.hbm_to_vmem [thread:$0]  %s2, 16, %s42, [#allocation6]
    $region13: #{forward.7} parent=1 // pred_fallthru
      _
    // Predicated region
    $region14: #{forward.7} parent=1 // pred_check
      _
    $region15: #{forward.7} parent=1 // pred_check_branch
      %46 = sbr.rel (0) target = $region17
    $region16: #{forward.7} parent=1 // pred_region
      %47 = dma.done [#allocation3], 4096
    $region17: #{forward.7} parent=1 // pred_fallthru
      _
    // Predicated region
    $region18: #{forward.7} parent=1 // pred_check
      _
    $region19: #{forward.7} parent=1 // pred_check_branch
      %49 = sbr.rel (0) target = $region21
    $region20: #{forward.7} parent=1 // pred_region
      %50 = dma.done [#allocation6], 2048
    $region21: #{forward.7} parent=1 // pred_fallthru
      _
    // Predicated region
    $region22: #{forward.7} parent=1 // pred_check
      _
    $region23: #{forward.7} parent=1 // pred_check_branch
      %52 = sbr.rel (0) target = $region25
    $region24: #{forward.7} parent=1 // pred_region
      %53 = dma.done [#allocation6], 16
    $region25: #{forward.7} parent=1 // pred_fallthru
      _
    %v55 = vld [vmem:[#allocation2] sm:$0xff]
    %v56 = vld [vmem:[#allocation2 + $0x8] sm:$0xff]
    %v57 = vld [vmem:[#allocation2 + $0x10] sm:$0xff]
    %v58 = vld [vmem:[#allocation2 + $0x18] sm:$0xff]
    %v59 = vld [vmem:[#allocation2 + $0x20] sm:$0xff]
    %v60 = vld [vmem:[#allocation2 + $0x28] sm:$0xff]
    %v61 = vld [vmem:[#allocation2 + $0x30] sm:$0xff]
    %v62 = vld [vmem:[#allocation2 + $0x38] sm:$0xff]
    %v63 = vld [vmem:[#allocation2 + $0x40] sm:$0xff]
    %v64 = vld [vmem:[#allocation2 + $0x48] sm:$0xff]
    %v65 = vld [vmem:[#allocation2 + $0x50] sm:$0xff]
    %v66 = vld [vmem:[#allocation2 + $0x58] sm:$0xff]
    %v67 = vld [vmem:[#allocation2 + $0x60] sm:$0xff]
    %v68 = vld [vmem:[#allocation2 + $0x68] sm:$0xff]
    %v69 = vld [vmem:[#allocation2 + $0x70] sm:$0xff]
    %v70 = vld [vmem:[#allocation2 + $0x78] sm:$0xff]
    %v71 = vld [vmem:[#allocation2 + $0x80] sm:$0xff]
    %v72 = vld [vmem:[#allocation2 + $0x88] sm:$0xff]
    %v73 = vld [vmem:[#allocation2 + $0x90] sm:$0xff]
    %v74 = vld [vmem:[#allocation2 + $0x98] sm:$0xff]
    %v75 = vld [vmem:[#allocation2 + $0xa0] sm:$0xff]
    %v76 = vld [vmem:[#allocation2 + $0xa8] sm:$0xff]
    %v77 = vld [vmem:[#allocation2 + $0xb0] sm:$0xff]
    %v78 = vld [vmem:[#allocation2 + $0xb8] sm:$0xff]
    %v79 = vld [vmem:[#allocation2 + $0xc0] sm:$0xff]
    %v80 = vld [vmem:[#allocation2 + $0xc8] sm:$0xff]
    %v81 = vld [vmem:[#allocation2 + $0xd0] sm:$0xff]
    %v82 = vld [vmem:[#allocation2 + $0xd8] sm:$0xff]
    %v83 = vld [vmem:[#allocation2 + $0xe0] sm:$0xff]
    %v84 = vld [vmem:[#allocation2 + $0xe8] sm:$0xff]
    %v85 = vld [vmem:[#allocation2 + $0xf0] sm:$0xff]
    %v86 = vld [vmem:[#allocation2 + $0xf8] sm:$0xff]
    %v87 = vpack.c.bf16 %v57, %v55
    %v88 = vpack.c.bf16 %v58, %v56
    %v89 = vpack.c.bf16 %v61, %v59
    %v90 = vpack.c.bf16 %v62, %v60
    %v91 = vpack.c.bf16 %v65, %v63
    %v92 = vpack.c.bf16 %v66, %v64
    %v93 = vpack.c.bf16 %v69, %v67
    %v94 = vpack.c.bf16 %v70, %v68
    %v95 = vpack.c.bf16 %v73, %v71
    %v96 = vpack.c.bf16 %v74, %v72
    %v97 = vpack.c.bf16 %v77, %v75
    %v98 = vpack.c.bf16 %v78, %v76
    %v99 = vpack.c.bf16 %v81, %v79
    %v100 = vpack.c.bf16 %v82, %v80
    %v101 = vpack.c.bf16 %v85, %v83
    %v102 = vpack.c.bf16 %v86, %v84
    %v103 = vld [vmem:[#allocation5] sm:$0xf]
    %v104 = vld [vmem:[#allocation5 + $0x4] sm:$0xf]
    %v105 = vld [vmem:[#allocation5 + $0x8] sm:$0xf]
    %v106 = vld [vmem:[#allocation5 + $0xc] sm:$0xf]
    %v107 = vld [vmem:[#allocation5 + $0x10] sm:$0xf]
    %v108 = vld [vmem:[#allocation5 + $0x14] sm:$0xf]
    %v109 = vld [vmem:[#allocation5 + $0x18] sm:$0xf]
    %v110 = vld [vmem:[#allocation5 + $0x1c] sm:$0xf]
    %v111 = vld [vmem:[#allocation5 + $0x20] sm:$0xf]
    %v112 = vld [vmem:[#allocation5 + $0x24] sm:$0xf]
    %v113 = vld [vmem:[#allocation5 + $0x28] sm:$0xf]
    %v114 = vld [vmem:[#allocation5 + $0x2c] sm:$0xf]
    %v115 = vld [vmem:[#allocation5 + $0x30] sm:$0xf]
    %v116 = vld [vmem:[#allocation5 + $0x34] sm:$0xf]
    %v117 = vld [vmem:[#allocation5 + $0x38] sm:$0xf]
    %v118 = vld [vmem:[#allocation5 + $0x3c] sm:$0xf]
    %v119 = vld [vmem:[#allocation5 + $0x40] sm:$0xf]
    %v120 = vld [vmem:[#allocation5 + $0x44] sm:$0xf]
    %v121 = vld [vmem:[#allocation5 + $0x48] sm:$0xf]
    %v122 = vld [vmem:[#allocation5 + $0x4c] sm:$0xf]
    %v123 = vld [vmem:[#allocation5 + $0x50] sm:$0xf]
    %v124 = vld [vmem:[#allocation5 + $0x54] sm:$0xf]
    %v125 = vld [vmem:[#allocation5 + $0x58] sm:$0xf]
    %v126 = vld [vmem:[#allocation5 + $0x5c] sm:$0xf]
    %v127 = vld [vmem:[#allocation5 + $0x60] sm:$0xf]
    %v128 = vld [vmem:[#allocation5 + $0x64] sm:$0xf]
    %v129 = vld [vmem:[#allocation5 + $0x68] sm:$0xf]
    %v130 = vld [vmem:[#allocation5 + $0x6c] sm:$0xf]
    %v131 = vld [vmem:[#allocation5 + $0x70] sm:$0xf]
    %v132 = vld [vmem:[#allocation5 + $0x74] sm:$0xf]
    %v133 = vld [vmem:[#allocation5 + $0x78] sm:$0xf]
    %v134 = vld [vmem:[#allocation5 + $0x7c] sm:$0xf]
    %v135 = vld [vmem:[#allocation7] sm:$0x1]
    %v137 = vlaneseq
    %v138 = vshrl.u32 %v137, 7
    %v139 = vsub.s32 0, %v138
    %v140 = vrot.slane %v135, %v139
    %v174 = vunpack.c.l.b16 %v103
    %v175 = vunpack.c.l.b16 %v104
    %v176 = vunpack.c.l.b16 %v105
    %v177 = vunpack.c.l.b16 %v106
    %v178 = vunpack.c.l.b16 %v107
    %v179 = vunpack.c.l.b16 %v108
    %v180 = vunpack.c.l.b16 %v109
    %v181 = vunpack.c.l.b16 %v110
    %v182 = vunpack.c.l.b16 %v111
    %v183 = vunpack.c.l.b16 %v112
    %v184 = vunpack.c.l.b16 %v113
    %v185 = vunpack.c.l.b16 %v114
    %v186 = vunpack.c.l.b16 %v115
    %v187 = vunpack.c.l.b16 %v116
    %v188 = vunpack.c.l.b16 %v117
    %v189 = vunpack.c.l.b16 %v118
    %v190 = vunpack.c.l.b16 %v119
    %v191 = vunpack.c.l.b16 %v120
    %v192 = vunpack.c.l.b16 %v121
    %v193 = vunpack.c.l.b16 %v122
    %v194 = vunpack.c.l.b16 %v123
    %v195 = vunpack.c.l.b16 %v124
    %v196 = vunpack.c.l.b16 %v125
    %v197 = vunpack.c.l.b16 %v126
    %v198 = vunpack.c.l.b16 %v127
    %v199 = vunpack.c.l.b16 %v128
    %v200 = vunpack.c.l.b16 %v129
    %v201 = vunpack.c.l.b16 %v130
    %v202 = vunpack.c.l.b16 %v131
    %v203 = vunpack.c.l.b16 %v132
    %v204 = vunpack.c.l.b16 %v133
    %v205 = vunpack.c.l.b16 %v134
    %v206 = vpack.c.b16 %v175, %v174
    %v207 = vpack.c.b16 %v177, %v176
    %v208 = vpack.c.b16 %v179, %v178
    %v209 = vpack.c.b16 %v181, %v180
    %v210 = vpack.c.b16 %v183, %v182
    %v211 = vpack.c.b16 %v185, %v184
    %v212 = vpack.c.b16 %v187, %v186
    %v213 = vpack.c.b16 %v189, %v188
    %v214 = vpack.c.b16 %v191, %v190
    %v215 = vpack.c.b16 %v193, %v192
    %v216 = vpack.c.b16 %v195, %v194
    %v217 = vpack.c.b16 %v197, %v196
    %v218 = vpack.c.b16 %v199, %v198
    %v219 = vpack.c.b16 %v201, %v200
    %v220 = vpack.c.b16 %v203, %v202
    %v221 = vpack.c.b16 %v205, %v204
    %238 = vmatprep.subr.bf16.mxu0 0
    %239 = vmatpush1.bf16.msra.mxu0 %v206
    %240 = vmatprep.subr.bf16.mxu0 0
    %241 = vmatpush1.bf16.msra.mxu0 %v207
    %242 = vmatprep.subr.bf16.mxu0 0
    %243 = vmatpush1.bf16.msra.mxu0 %v208
    %244 = vmatprep.subr.bf16.mxu0 0
    %245 = vmatpush1.bf16.msra.mxu0 %v209
    %246 = vmatprep.subr.bf16.mxu0 0
    %247 = vmatpush1.bf16.msra.mxu0 %v210
    %248 = vmatprep.subr.bf16.mxu0 0
    %249 = vmatpush1.bf16.msra.mxu0 %v211
    %250 = vmatprep.subr.bf16.mxu0 0
    %251 = vmatpush1.bf16.msra.mxu0 %v212
    %252 = vmatprep.subr.bf16.mxu0 0
    %253 = vmatpush1.bf16.msra.mxu0 %v213
    %254 = vmatprep.subr.bf16.mxu0 0
    %255 = vmatpush1.bf16.msra.mxu0 %v214
    %256 = vmatprep.subr.bf16.mxu0 0
    %257 = vmatpush1.bf16.msra.mxu0 %v215
    %258 = vmatprep.subr.bf16.mxu0 0
    %259 = vmatpush1.bf16.msra.mxu0 %v216
    %260 = vmatprep.subr.bf16.mxu0 0
    %261 = vmatpush1.bf16.msra.mxu0 %v217
    %262 = vmatprep.subr.bf16.mxu0 0
    %263 = vmatpush1.bf16.msra.mxu0 %v218
    %264 = vmatprep.subr.bf16.mxu0 0
    %265 = vmatpush1.bf16.msra.mxu0 %v219
    %266 = vmatprep.subr.bf16.mxu0 0
    %267 = vmatpush1.bf16.msra.mxu0 %v220
    %268 = vmatprep.subr.bf16.mxu0 0
    %269 = vmatpush1.bf16.msra.mxu0 %v221
    %270 = vmatprep.mubr.bf16.mxu0 %v88
    %271 = vmatmul.mubr.bf16.gmra.mrb[0].mxu0 %v87
    %v272 = vpop.f32.mrb[0].mxu0
    %v273 = vadd.f32 %v140, %v272
    %v274 = vpop.f32.mrb[0].mxu0
    %v275 = vpop.f32.mrb[0].mxu0
    %v276 = vadd.f32 %v140, %v275
    %v277 = vpop.f32.mrb[0].mxu0
    %278 = vmatprep.mubr.bf16.mxu0 %v90
    %279 = vmatmul.mubr.bf16.gmra.mrb[0].mxu0 %v89
    %v280 = vpop.f32.mrb[0].mxu0
    %v281 = vadd.f32 %v140, %v280
    %v282 = vpop.f32.mrb[0].mxu0
    %v283 = vpop.f32.mrb[0].mxu0
    %v284 = vadd.f32 %v140, %v283
    %v285 = vpop.f32.mrb[0].mxu0
    %286 = vmatprep.mubr.bf16.mxu0 %v92
    %287 = vmatmul.mubr.bf16.gmra.mrb[0].mxu0 %v91
    %v288 = vpop.f32.mrb[0].mxu0
    %v289 = vadd.f32 %v140, %v288
    %v290 = vpop.f32.mrb[0].mxu0
    %v291 = vpop.f32.mrb[0].mxu0
    %v292 = vadd.f32 %v140, %v291
    %v293 = vpop.f32.mrb[0].mxu0
    %294 = vmatprep.mubr.bf16.mxu0 %v94
    %295 = vmatmul.mubr.bf16.gmra.mrb[0].mxu0 %v93
    %v296 = vpop.f32.mrb[0].mxu0
    %v297 = vadd.f32 %v140, %v296
    %v298 = vpop.f32.mrb[0].mxu0
    %v299 = vpop.f32.mrb[0].mxu0
    %v300 = vadd.f32 %v140, %v299
    %v301 = vpop.f32.mrb[0].mxu0
    %302 = vmatprep.mubr.bf16.mxu0 %v96
    %303 = vmatmul.mubr.bf16.gmra.mrb[0].mxu0 %v95
    %v304 = vpop.f32.mrb[0].mxu0
    %v305 = vadd.f32 %v140, %v304
    %v306 = vpop.f32.mrb[0].mxu0
    %v307 = vpop.f32.mrb[0].mxu0
    %v308 = vadd.f32 %v140, %v307
    %v309 = vpop.f32.mrb[0].mxu0
    %310 = vmatprep.mubr.bf16.mxu0 %v98
    %311 = vmatmul.mubr.bf16.gmra.mrb[0].mxu0 %v97
    %v312 = vpop.f32.mrb[0].mxu0
    %v313 = vadd.f32 %v140, %v312
    %v314 = vpop.f32.mrb[0].mxu0
    %v315 = vpop.f32.mrb[0].mxu0
    %v316 = vadd.f32 %v140, %v315
    %v317 = vpop.f32.mrb[0].mxu0
    %318 = vmatprep.mubr.bf16.mxu0 %v100
    %319 = vmatmul.mubr.bf16.gmra.mrb[0].mxu0 %v99
    %v320 = vpop.f32.mrb[0].mxu0
    %v321 = vadd.f32 %v140, %v320
    %v322 = vpop.f32.mrb[0].mxu0
    %v323 = vpop.f32.mrb[0].mxu0
    %v324 = vadd.f32 %v140, %v323
    %v325 = vpop.f32.mrb[0].mxu0
    %326 = vmatprep.mubr.bf16.mxu0 %v102
    %327 = vmatmul.mubr.bf16.gmra.mrb[0].mxu0 %v101
    %v328 = vpop.f32.mrb[0].mxu0
    %v329 = vadd.f32 %v140, %v328
    %v330 = vpop.f32.mrb[0].mxu0
    %v331 = vpop.f32.mrb[0].mxu0
    %v332 = vadd.f32 %v140, %v331
    %v333 = vpop.f32.mrb[0].mxu0
    %334 = vdwg.mxu0
    %335 = vst [vmem:[#allocation8] sm:$0xff] %v273
    %336 = vst [vmem:[#allocation8 + $0x8] sm:$0xff] %v276
    %337 = vst [vmem:[#allocation8 + $0x10] sm:$0xff] %v281
    %338 = vst [vmem:[#allocation8 + $0x18] sm:$0xff] %v284
    %339 = vst [vmem:[#allocation8 + $0x20] sm:$0xff] %v289
    %340 = vst [vmem:[#allocation8 + $0x28] sm:$0xff] %v292
    %341 = vst [vmem:[#allocation8 + $0x30] sm:$0xff] %v297
    %342 = vst [vmem:[#allocation8 + $0x38] sm:$0xff] %v300
    %343 = vst [vmem:[#allocation8 + $0x40] sm:$0xff] %v305
    %344 = vst [vmem:[#allocation8 + $0x48] sm:$0xff] %v308
    %345 = vst [vmem:[#allocation8 + $0x50] sm:$0xff] %v313
    %346 = vst [vmem:[#allocation8 + $0x58] sm:$0xff] %v316
    %347 = vst [vmem:[#allocation8 + $0x60] sm:$0xff] %v321
    %348 = vst [vmem:[#allocation8 + $0x68] sm:$0xff] %v324
    %349 = vst [vmem:[#allocation8 + $0x70] sm:$0xff] %v329
    %350 = vst [vmem:[#allocation8 + $0x78] sm:$0xff] %v332
    // Predicated region
    $region26: #{forward.7} parent=1 // pred_check
      _
    $region27: #{forward.7} parent=1 // pred_check_branch
      %352 = sbr.rel (0) target = $region29
    $region28: #{forward.7} parent=1 // pred_region
      %s354 = ssub.s32 2048, 2048
      %355 = vsyncadd [#allocation4], %s354
      %s356 = sshll.u32 [#allocation8], 4
      %s357 = int_to_ptr.vmem [resolvable:$true] %s356
      %362 = dma.vmem_to_hbm [thread:$0]  %s357, 2048, %s3, [#allocation4], 128, 128, 8
    $region29: #{forward.7} parent=1 // pred_fallthru
      _
    // Predicated region
    $region30: #{forward.7} parent=1 // pred_check
      _
    $region31: #{forward.7} parent=1 // pred_check_branch
      %364 = sbr.rel (0) target = $region33
    $region32: #{forward.7} parent=1 // pred_region
      %365 = dma.done [#allocation4], 2048
    $region33: #{forward.7} parent=1 // pred_fallthru
      _
    %366 = vsyncpa [#allocation3], 1
    %367 = vsyncpa [#allocation6], 1
    %368 = vsyncpa [#allocation4], 1

// kernel: forward.6
$region0: #{forward.6}
  #allocation0 [shape = 'u32[]', space=smem, size = 0x4, offset = 0x4, fixed_abs, tag = 'smem constant byte address 0x4 - core index']
  #allocation1 [shape = 'u32[144,128]{1,0:T(1,128)}', space=vmem, size = 0x12000, scoped, tag = 'internal scratch']
  #allocation2 [shape = 'bf16[16,8,512]{2,1,0:T(8,128)(2,1)}', space=vmem, size = 0x20000, scoped, tag = 'scratch operand']
  #allocation3 [shape = 'bf16[16,8,512]{2,1,0:T(8,128)(2,1)}', space=vmem, size = 0x20000, scoped, tag = 'scratch operand']
  %s0 = inlined_call_operand.hbm [shape: s32[8,1], index: 0, kind: input, shape index: {}]
  %s1 = inlined_call_operand.hbm [shape: f32[16,8,128], index: 1, kind: input, shape index: {}]
  %s2 = inlined_call_operand.hbm [shape: bf16[128,512], index: 2, kind: input, shape index: {}]
  %s3 = inlined_call_operand.hbm [shape: bf16[128,512], index: 3, kind: input, shape index: {}]
  %s4 = inlined_call_operand.hbm [shape: f32[2,128,512], index: 4, kind: input, shape index: {}]
  %s5 = inlined_call_operand.hbm [shape: f32[1,512], index: 5, kind: input, shape index: {}]
  %s6 = inlined_call_operand.hbm [shape: f32[1,512], index: 6, kind: input, shape index: {}]
  %s7 = inlined_call_operand.hbm [shape: f32[16,8,128], index: 7, kind: output, shape index: {0}]
  %s8 = inlined_call_operand.hbm [shape: f32[16,8,128], index: 8, kind: output, shape index: {1}]
  %9 = xla_tuple %s7, %s8
  %s10 = sld [smem:[#allocation0]]
  $region81: #{forward.6} parent=0
    _
  %s12 = ssub.s32 1, %s10
  %s13 = scalar_select 0, %s12, %s10
  $region1: #{forward.6} parent=0
    #allocation4 [shape = 'u8[4096]{0}', space=vmem, size = 0x1000, scoped, tag = 'input window, operand 0, single buffered']
    #allocation5 [shape = 's32[1]{0}', space=sflag, size = 0x4, scoped, tag = 'scoped memory for forward.6']
    #allocation6 [shape = 's32[1]{0}', space=sflag, size = 0x4, scoped, tag = 'scoped memory for forward.6']
    #allocation7 [shape = 'u8[65536]{0}', space=vmem, size = 0x10000, scoped, tag = 'input window, operand 1, single buffered']
    #allocation8 [shape = 's32[1]{0}', space=sflag, size = 0x4, scoped, tag = 'scoped memory for forward.6']
    #allocation9 [shape = 'u8[131072]{0}', space=vmem, size = 0x20000, scoped, tag = 'input window, operand 2, single buffered']
    #allocation10 [shape = 'u8[131072]{0}', space=vmem, size = 0x20000, scoped, tag = 'input window, operand 3, single buffered']
    #allocation11 [shape = 's32[1]{0}', space=sflag, size = 0x4, scoped, tag = 'scoped memory for forward.6']
    #allocation12 [shape = 'u8[524288]{0}', space=vmem, size = 0x80000, scoped, tag = 'input window, operand 4, single buffered']
    #allocation13 [shape = 'u8[2048]{0}', space=vmem, size = 0x800, scoped, tag = 'input window, operand 5, single buffered']
    #allocation14 [shape = 's32[1]{0}', space=sflag, size = 0x4, scoped, tag = 'scoped memory for forward.6']
    #allocation15 [shape = 'u8[2048]{0}', space=vmem, size = 0x800, scoped, tag = 'input window, operand 6, single buffered']
    #allocation16 [shape = 'u8[65536]{0}', space=vmem, size = 0x10000, scoped, tag = 'output window, operand 0, single buffered']
    #allocation17 [shape = 'u8[65536]{0}', space=vmem, size = 0x10000, scoped, tag = 'output window, operand 1, single buffered']
    #allocation18 [shape = 's32[1]{0}', space=sflag, size = 0x4, scoped, tag = 'scoped memory for forward.6']
    %14 = vsyncpa [#allocation5], 0
    %15 = vsyncpa [#allocation8], 0
    %16 = vsyncpa [#allocation11], 0
    %17 = vsyncpa [#allocation14], 0
    %18 = vsyncpa [#allocation6], 0
    %19 = vsyncpa [#allocation18], 0
    // Predicated region
    $region2: #{forward.6} parent=1 // pred_check
      _
    $region3: #{forward.6} parent=1 // pred_check_branch
      %21 = sbr.rel (0) target = $region5
    $region4: #{forward.6} parent=1 // pred_region
      %s23 = ssub.s32 128, 128
      %24 = vsyncadd [#allocation5], %s23
      %s26 = sshll.u32 [#allocation4], 4
      %s27 = int_to_ptr.vmem [resolvable:$true] %s26
      %29 = dma.hbm_to_vmem [thread:$0]  %s0, 128, %s27, [#allocation5]
    $region5: #{forward.6} parent=1 // pred_fallthru
      _
    // Predicated region
    $region6: #{forward.6} parent=1 // pred_check
      _
    $region7: #{forward.6} parent=1 // pred_check_branch
      %31 = sbr.rel (0) target = $region9
    $region8: #{forward.6} parent=1 // pred_region
      %s33 = ssub.s32 2048, 2048
      %34 = vsyncadd [#allocation8], %s33
      %s35 = sshll.u32 [#allocation7], 4
      %s36 = int_to_ptr.vmem [resolvable:$true] %s35
      %41 = dma.hbm_to_vmem [thread:$0]  %s1, 2048, %s36, [#allocation8], 128, 128, 8
    $region9: #{forward.6} parent=1 // pred_fallthru
      _
    // Predicated region
    $region10: #{forward.6} parent=1 // pred_check
      _
    $region11: #{forward.6} parent=1 // pred_check_branch
      %43 = sbr.rel (0) target = $region13
    $region12: #{forward.6} parent=1 // pred_region
      %s45 = ssub.s32 4096, 4096
      %46 = vsyncadd [#allocation8], %s45
      %s47 = sshll.u32 [#allocation9], 4
      %s48 = int_to_ptr.vmem [resolvable:$true] %s47
      %53 = dma.hbm_to_vmem [thread:$0]  %s2, 4096, %s48, [#allocation8], 256, 256, 16
    $region13: #{forward.6} parent=1 // pred_fallthru
      _
    // Predicated region
    $region14: #{forward.6} parent=1 // pred_check
      _
    $region15: #{forward.6} parent=1 // pred_check_branch
      %55 = sbr.rel (0) target = $region17
    $region16: #{forward.6} parent=1 // pred_region
      %s57 = ssub.s32 4096, 4096
      %58 = vsyncadd [#allocation11], %s57
      %s59 = sshll.u32 [#allocation10], 4
      %s60 = int_to_ptr.vmem [resolvable:$true] %s59
      %65 = dma.hbm_to_vmem [thread:$0]  %s3, 4096, %s60, [#allocation11], 256, 256, 16
    $region17: #{forward.6} parent=1 // pred_fallthru
      _
    // Predicated region
    $region18: #{forward.6} parent=1 // pred_check
      _
    $region19: #{forward.6} parent=1 // pred_check_branch
      %67 = sbr.rel (0) target = $region21
    $region20: #{forward.6} parent=1 // pred_region
      %s69 = ssub.s32 16384, 16384
      %70 = vsyncadd [#allocation11], %s69
      %s71 = sshll.u32 [#allocation12], 4
      %s72 = int_to_ptr.vmem [resolvable:$true] %s71
      %77 = dma.hbm_to_vmem [thread:$0]  %s4, 16384, %s72, [#allocation11], 512, 512, 32
    $region21: #{forward.6} parent=1 // pred_fallthru
      _
    // Predicated region
    $region22: #{forward.6} parent=1 // pred_check
      _
    $region23: #{forward.6} parent=1 // pred_check_branch
      %79 = sbr.rel (0) target = $region25
    $region24: #{forward.6} parent=1 // pred_region
      %s81 = ssub.s32 64, 64
      %82 = vsyncadd [#allocation14], %s81
      %s84 = sshll.u32 [#allocation13], 4
      %s85 = int_to_ptr.vmem [resolvable:$true] %s84
      %87 = dma.hbm_to_vmem [thread:$0]  %s5, 64, %s85, [#allocation14]
    $region25: #{forward.6} parent=1 // pred_fallthru
      _
    // Predicated region
    $region26: #{forward.6} parent=1 // pred_check
      _
    $region27: #{forward.6} parent=1 // pred_check_branch
      %89 = sbr.rel (0) target = $region29
    $region28: #{forward.6} parent=1 // pred_region
      %s91 = ssub.s32 64, 64
      %92 = vsyncadd [#allocation14], %s91
      %s94 = sshll.u32 [#allocation15], 4
      %s95 = int_to_ptr.vmem [resolvable:$true] %s94
      %97 = dma.hbm_to_vmem [thread:$0]  %s6, 64, %s95, [#allocation14]
    $region29: #{forward.6} parent=1 // pred_fallthru
      _
    // Predicated region
    $region30: #{forward.6} parent=1 // pred_check
      _
    $region31: #{forward.6} parent=1 // pred_check_branch
      %99 = sbr.rel (0) target = $region33
    $region32: #{forward.6} parent=1 // pred_region
      %100 = dma.done [#allocation5], 128
    $region33: #{forward.6} parent=1 // pred_fallthru
      _
    // Predicated region
    $region34: #{forward.6} parent=1 // pred_check
      _
    $region35: #{forward.6} parent=1 // pred_check_branch
      %102 = sbr.rel (0) target = $region37
    $region36: #{forward.6} parent=1 // pred_region
      %103 = dma.done [#allocation8], 2048
    $region37: #{forward.6} parent=1 // pred_fallthru
      _
    // Predicated region
    $region38: #{forward.6} parent=1 // pred_check
      _
    $region39: #{forward.6} parent=1 // pred_check_branch
      %105 = sbr.rel (0) target = $region41
    $region40: #{forward.6} parent=1 // pred_region
      %106 = dma.done [#allocation8], 4096
    $region41: #{forward.6} parent=1 // pred_fallthru
      _
    // Predicated region
    $region42: #{forward.6} parent=1 // pred_check
      _
    $region43: #{forward.6} parent=1 // pred_check_branch
      %108 = sbr.rel (0) target = $region45
    $region44: #{forward.6} parent=1 // pred_region
      %109 = dma.done [#allocation11], 4096
    $region45: #{forward.6} parent=1 // pred_fallthru
      _
    // Predicated region
    $region46: #{forward.6} parent=1 // pred_check
      _
    $region47: #{forward.6} parent=1 // pred_check_branch
      %111 = sbr.rel (0) target = $region49
    $region48: #{forward.6} parent=1 // pred_region
      %112 = dma.done [#allocation11], 16384
    $region49: #{forward.6} parent=1 // pred_fallthru
      _
    // Predicated region
    $region50: #{forward.6} parent=1 // pred_check
      _
    $region51: #{forward.6} parent=1 // pred_check_branch
      %114 = sbr.rel (0) target = $region53
    $region52: #{forward.6} parent=1 // pred_region
      %115 = dma.done [#allocation14], 64
    $region53: #{forward.6} parent=1 // pred_fallthru
      _
    // Predicated region
    $region54: #{forward.6} parent=1 // pred_check
      _
    $region55: #{forward.6} parent=1 // pred_check_branch
      %117 = sbr.rel (0) target = $region57
    $region56: #{forward.6} parent=1 // pred_region
      %118 = dma.done [#allocation14], 64
    $region57: #{forward.6} parent=1 // pred_fallthru
      _
    %v120 = vld [vmem:[#allocation7] sm:$0xff]
    %v121 = vld [vmem:[#allocation7 + $0x8] sm:$0xff]
    %v122 = vld [vmem:[#allocation7 + $0x10] sm:$0xff]
    %v123 = vld [vmem:[#allocation7 + $0x18] sm:$0xff]
    %v124 = vld [vmem:[#allocation7 + $0x20] sm:$0xff]
    %v125 = vld [vmem:[#allocation7 + $0x28] sm:$0xff]
    %v126 = vld [vmem:[#allocation7 + $0x30] sm:$0xff]
    %v127 = vld [vmem:[#allocation7 + $0x38] sm:$0xff]
    %v128 = vld [vmem:[#allocation7 + $0x40] sm:$0xff]
    %v129 = vld [vmem:[#allocation7 + $0x48] sm:$0xff]
    %v130 = vld [vmem:[#allocation7 + $0x50] sm:$0xff]
    %v131 = vld [vmem:[#allocation7 + $0x58] sm:$0xff]
    %v132 = vld [vmem:[#allocation7 + $0x60] sm:$0xff]
    %v133 = vld [vmem:[#allocation7 + $0x68] sm:$0xff]
    %v134 = vld [vmem:[#allocation7 + $0x70] sm:$0xff]
    %v135 = vld [vmem:[#allocation7 + $0x78] sm:$0xff]
    %v136 = vpack.c.bf16 %v121, %v120
    %v137 = vpack.c.bf16 %v123, %v122
    %v138 = vpack.c.bf16 %v125, %v124
    %v139 = vpack.c.bf16 %v127, %v126
    %v140 = vpack.c.bf16 %v129, %v128
    %v141 = vpack.c.bf16 %v131, %v130
    %v142 = vpack.c.bf16 %v133, %v132
    %v143 = vpack.c.bf16 %v135, %v134
    %v144 = vld [vmem:[#allocation9] sm:$0xff]
    %v145 = vld [vmem:[#allocation9 + $0x8] sm:$0xff]
    %v146 = vld [vmem:[#allocation9 + $0x10] sm:$0xff]
    %v147 = vld [vmem:[#allocation9 + $0x18] sm:$0xff]
    %v148 = vld [vmem:[#allocation9 + $0x20] sm:$0xff]
    %v149 = vld [vmem:[#allocation9 + $0x28] sm:$0xff]
    %v150 = vld [vmem:[#allocation9 + $0x30] sm:$0xff]
    %v151 = vld [vmem:[#allocation9 + $0x38] sm:$0xff]
    %v152 = vld [vmem:[#allocation9 + $0x40] sm:$0xff]
    %v153 = vld [vmem:[#allocation9 + $0x48] sm:$0xff]
    %v154 = vld [vmem:[#allocation9 + $0x50] sm:$0xff]
    %v155 = vld [vmem:[#allocation9 + $0x58] sm:$0xff]
    %v156 = vld [vmem:[#allocation9 + $0x60] sm:$0xff]
    %v157 = vld [vmem:[#allocation9 + $0x68] sm:$0xff]
    %v158 = vld [vmem:[#allocation9 + $0x70] sm:$0xff]
    %v159 = vld [vmem:[#allocation9 + $0x78] sm:$0xff]
    %v160 = vld [vmem:[#allocation9 + $0x80] sm:$0xff]
    %v161 = vld [vmem:[#allocation9 + $0x88] sm:$0xff]
    %v162 = vld [vmem:[#allocation9 + $0x90] sm:$0xff]
    %v163 = vld [vmem:[#allocation9 + $0x98] sm:$0xff]
    %v164 = vld [vmem:[#allocation9 + $0xa0] sm:$0xff]
    %v165 = vld [vmem:[#allocation9 + $0xa8] sm:$0xff]
    %v166 = vld [vmem:[#allocation9 + $0xb0] sm:$0xff]
    %v167 = vld [vmem:[#allocation9 + $0xb8] sm:$0xff]
    %v168 = vld [vmem:[#allocation9 + $0xc0] sm:$0xff]
    %v169 = vld [vmem:[#allocation9 + $0xc8] sm:$0xff]
    %v170 = vld [vmem:[#allocation9 + $0xd0] sm:$0xff]
    %v171 = vld [vmem:[#allocation9 + $0xd8] sm:$0xff]
    %v172 = vld [vmem:[#allocation9 + $0xe0] sm:$0xff]
    %v173 = vld [vmem:[#allocation9 + $0xe8] sm:$0xff]
    %v174 = vld [vmem:[#allocation9 + $0xf0] sm:$0xff]
    %v175 = vld [vmem:[#allocation9 + $0xf8] sm:$0xff]
    %v176 = vld [vmem:[#allocation13] sm:$0xf]
    %v178 = vlaneseq
    %v179 = vshrl.u32 %v178, 7
    %v180 = vsub.s32 0, %v179
    %v181 = vrot.slane %v176, %v180
    %v182 = vlaneseq
    %v183 = vshrl.u32 %v182, 7
    %v184 = vsub.s32 1, %v183
    %v185 = vrot.slane %v176, %v184
    %v186 = vlaneseq
    %v187 = vshrl.u32 %v186, 7
    %v188 = vsub.s32 2, %v187
    %v189 = vrot.slane %v176, %v188
    %v190 = vlaneseq
    %v191 = vshrl.u32 %v190, 7
    %v192 = vsub.s32 3, %v191
    %v193 = vrot.slane %v176, %v192
    %v230 = vunpack.c.l.b16 %v144
    %v231 = vunpack.c.h.b16 %v144
    %v232 = vunpack.c.l.b16 %v145
    %v233 = vunpack.c.h.b16 %v145
    %v234 = vunpack.c.l.b16 %v146
    %v235 = vunpack.c.h.b16 %v146
    %v236 = vunpack.c.l.b16 %v147
    %v237 = vunpack.c.h.b16 %v147
    %v238 = vunpack.c.l.b16 %v148
    %v239 = vunpack.c.h.b16 %v148
    %v240 = vunpack.c.l.b16 %v149
    %v241 = vunpack.c.h.b16 %v149
    %v242 = vunpack.c.l.b16 %v150
    %v243 = vunpack.c.h.b16 %v150
    %v244 = vunpack.c.l.b16 %v151
    %v245 = vunpack.c.h.b16 %v151
    %v246 = vunpack.c.l.b16 %v152
    %v247 = vunpack.c.h.b16 %v152
    %v248 = vunpack.c.l.b16 %v153
    %v249 = vunpack.c.h.b16 %v153
    %v250 = vunpack.c.l.b16 %v154
    %v251 = vunpack.c.h.b16 %v154
    %v252 = vunpack.c.l.b16 %v155
    %v253 = vunpack.c.h.b16 %v155
    %v254 = vunpack.c.l.b16 %v156
    %v255 = vunpack.c.h.b16 %v156
    %v256 = vunpack.c.l.b16 %v157
    %v257 = vunpack.c.h.b16 %v157
    %v258 = vunpack.c.l.b16 %v158
    %v259 = vunpack.c.h.b16 %v158
    %v260 = vunpack.c.l.b16 %v159
    %v261 = vunpack.c.h.b16 %v159
    %v262 = vunpack.c.l.b16 %v160
    %v263 = vunpack.c.h.b16 %v160
    %v264 = vunpack.c.l.b16 %v161
    %v265 = vunpack.c.h.b16 %v161
    %v266 = vunpack.c.l.b16 %v162
    %v267 = vunpack.c.h.b16 %v162
    %v268 = vunpack.c.l.b16 %v163
    %v269 = vunpack.c.h.b16 %v163
    %v270 = vunpack.c.l.b16 %v164
    %v271 = vunpack.c.h.b16 %v164
    %v272 = vunpack.c.l.b16 %v165
    %v273 = vunpack.c.h.b16 %v165
    %v274 = vunpack.c.l.b16 %v166
    %v275 = vunpack.c.h.b16 %v166
    %v276 = vunpack.c.l.b16 %v167
    %v277 = vunpack.c.h.b16 %v167
    %v278 = vunpack.c.l.b16 %v168
    %v279 = vunpack.c.h.b16 %v168
    %v280 = vunpack.c.l.b16 %v169
    %v281 = vunpack.c.h.b16 %v169
    %v282 = vunpack.c.l.b16 %v170
    %v283 = vunpack.c.h.b16 %v170
    %v284 = vunpack.c.l.b16 %v171
    %v285 = vunpack.c.h.b16 %v171
    %v286 = vunpack.c.l.b16 %v172
    %v287 = vunpack.c.h.b16 %v172
    %v288 = vunpack.c.l.b16 %v173
    %v289 = vunpack.c.h.b16 %v173
    %v290 = vunpack.c.l.b16 %v174
    %v291 = vunpack.c.h.b16 %v174
    %v292 = vunpack.c.l.b16 %v175
    %v293 = vunpack.c.h.b16 %v175
    %v294 = vpack.c.b16 %v234, %v230
    %v295 = vpack.c.b16 %v235, %v231
    %v296 = vpack.c.b16 %v236, %v232
    %v297 = vpack.c.b16 %v237, %v233
    %v298 = vpack.c.b16 %v242, %v238
    %v299 = vpack.c.b16 %v243, %v239
    %v300 = vpack.c.b16 %v244, %v240
    %v301 = vpack.c.b16 %v245, %v241
    %v302 = vpack.c.b16 %v250, %v246
    %v303 = vpack.c.b16 %v251, %v247
    %v304 = vpack.c.b16 %v252, %v248
    %v305 = vpack.c.b16 %v253, %v249
    %v306 = vpack.c.b16 %v258, %v254
    %v307 = vpack.c.b16 %v259, %v255
    %v308 = vpack.c.b16 %v260, %v256
    %v309 = vpack.c.b16 %v261, %v257
    %v310 = vpack.c.b16 %v266, %v262
    %v311 = vpack.c.b16 %v267, %v263
    %v312 = vpack.c.b16 %v268, %v264
    %v313 = vpack.c.b16 %v269, %v265
    %v314 = vpack.c.b16 %v274, %v270
    %v315 = vpack.c.b16 %v275, %v271
    %v316 = vpack.c.b16 %v276, %v272
    %v317 = vpack.c.b16 %v277, %v273
    %v318 = vpack.c.b16 %v282, %v278
    %v319 = vpack.c.b16 %v283, %v279
    %v320 = vpack.c.b16 %v284, %v280
    %v321 = vpack.c.b16 %v285, %v281
    %v322 = vpack.c.b16 %v290, %v286
    %v323 = vpack.c.b16 %v291, %v287
    %v324 = vpack.c.b16 %v292, %v288
    %v325 = vpack.c.b16 %v293, %v289
    %358 = vmatprep.subr.bf16.mxu0 %v295
    %359 = vmatpush1.bf16.msra.mxu0 %v294
    %360 = vmatprep.subr.bf16.mxu0 %v299
    %361 = vmatpush1.bf16.msra.mxu0 %v298
    %362 = vmatprep.subr.bf16.mxu0 %v303
    %363 = vmatpush1.bf16.msra.mxu0 %v302
    %364 = vmatprep.subr.bf16.mxu0 %v307
    %365 = vmatpush1.bf16.msra.mxu0 %v306
    %366 = vmatprep.subr.bf16.mxu0 %v311
    %367 = vmatpush1.bf16.msra.mxu0 %v310
    %368 = vmatprep.subr.bf16.mxu0 %v315
    %369 = vmatpush1.bf16.msra.mxu0 %v314
    %370 = vmatprep.subr.bf16.mxu0 %v319
    %371 = vmatpush1.bf16.msra.mxu0 %v318
    %372 = vmatprep.subr.bf16.mxu0 %v323
    %373 = vmatpush1.bf16.msra.mxu0 %v322
    %374 = vmatprep.subr.bf16.mxu0 0
    %375 = vmatpush1.bf16.msra.mxu0 0
    %376 = vmatprep.subr.bf16.mxu0 0
    %377 = vmatpush1.bf16.msra.mxu0 0
    %378 = vmatprep.subr.bf16.mxu0 0
    %379 = vmatpush1.bf16.msra.mxu0 0
    %380 = vmatprep.subr.bf16.mxu0 0
    %381 = vmatpush1.bf16.msra.mxu0 0
    %382 = vmatprep.subr.bf16.mxu0 0
    %383 = vmatpush1.bf16.msra.mxu0 0
    %384 = vmatprep.subr.bf16.mxu0 0
    %385 = vmatpush1.bf16.msra.mxu0 0
    %386 = vmatprep.subr.bf16.mxu0 0
    %387 = vmatpush1.bf16.msra.mxu0 0
    %388 = vmatprep.subr.bf16.mxu0 0
    %389 = vmatpush1.bf16.msra.mxu0 0
    %390 = vmatprep.mubr.bf16.mxu0 0
    %391 = vmatmul.mubr.bf16.gmra.mrb[0].mxu0 %v136
    %v392 = vpop.f32.mrb[0].mxu0
    %v393 = vadd.f32 %v181, %v392
    %v394 = vpop.f32.mrb[0].mxu0
    %v395 = vadd.f32 %v185, %v394
    %v396 = vpop.f32.mrb[0].mxu0
    %v397 = vadd.f32 %v181, %v396
    %v398 = vpop.f32.mrb[0].mxu0
    %v399 = vadd.f32 %v185, %v398
    %400 = vmatprep.mubr.bf16.mxu0 0
    %401 = vmatmul.mubr.bf16.gmra.mrb[0].mxu0 %v137
    %v402 = vpop.f32.mrb[0].mxu0
    %v403 = vadd.f32 %v181, %v402
    %v404 = vpop.f32.mrb[0].mxu0
    %v405 = vadd.f32 %v185, %v404
    %v406 = vpop.f32.mrb[0].mxu0
    %v407 = vadd.f32 %v181, %v406
    %v408 = vpop.f32.mrb[0].mxu0
    %v409 = vadd.f32 %v185, %v408
    %410 = vmatprep.mubr.bf16.mxu0 0
    %411 = vmatmul.mubr.bf16.gmra.mrb[0].mxu0 %v138
    %v412 = vpop.f32.mrb[0].mxu0
    %v413 = vadd.f32 %v181, %v412
    %v414 = vpop.f32.mrb[0].mxu0
    %v415 = vadd.f32 %v185, %v414
    %v416 = vpop.f32.mrb[0].mxu0
    %v417 = vadd.f32 %v181, %v416
    %v418 = vpop.f32.mrb[0].mxu0
    %v419 = vadd.f32 %v185, %v418
    %420 = vmatprep.mubr.bf16.mxu0 0
    %421 = vmatmul.mubr.bf16.gmra.mrb[0].mxu0 %v139
    %v422 = vpop.f32.mrb[0].mxu0
    %v423 = vadd.f32 %v181, %v422
    %v424 = vpop.f32.mrb[0].mxu0
    %v425 = vadd.f32 %v185, %v424
    %v426 = vpop.f32.mrb[0].mxu0
    %v427 = vadd.f32 %v181, %v426
    %v428 = vpop.f32.mrb[0].mxu0
    %v429 = vadd.f32 %v185, %v428
    %430 = vmatprep.mubr.bf16.mxu0 0
    %431 = vmatmul.mubr.bf16.gmra.mrb[0].mxu0 %v140
    %v432 = vpop.f32.mrb[0].mxu0
    %v433 = vadd.f32 %v181, %v432
    %v434 = vpop.f32.mrb[0].mxu0
    %v435 = vadd.f32 %v185, %v434
    %v436 = vpop.f32.mrb[0].mxu0
    %v437 = vadd.f32 %v181, %v436
    %v438 = vpop.f32.mrb[0].mxu0
    %v439 = vadd.f32 %v185, %v438
    %440 = vmatprep.mubr.bf16.mxu0 0
    %441 = vmatmul.mubr.bf16.gmra.mrb[0].mxu0 %v141
    %v442 = vpop.f32.mrb[0].mxu0
    %v443 = vadd.f32 %v181, %v442
    %v444 = vpop.f32.mrb[0].mxu0
    %v445 = vadd.f32 %v185, %v444
    %v446 = vpop.f32.mrb[0].mxu0
    %v447 = vadd.f32 %v181, %v446
    %v448 = vpop.f32.mrb[0].mxu0
    %v449 = vadd.f32 %v185, %v448
    %450 = vmatprep.mubr.bf16.mxu0 0
    %451 = vmatmul.mubr.bf16.gmra.mrb[0].mxu0 %v142
    %v452 = vpop.f32.mrb[0].mxu0
    %v453 = vadd.f32 %v181, %v452
    %v454 = vpop.f32.mrb[0].mxu0
    %v455 = vadd.f32 %v185, %v454
    %v456 = vpop.f32.mrb[0].mxu0
    %v457 = vadd.f32 %v181, %v456
    %v458 = vpop.f32.mrb[0].mxu0
    %v459 = vadd.f32 %v185, %v458
    %460 = vmatprep.mubr.bf16.mxu0 0
    %461 = vmatmul.mubr.bf16.gmra.mrb[0].mxu0 %v143
    %v462 = vpop.f32.mrb[0].mxu0
    %v463 = vadd.f32 %v181, %v462
    %v464 = vpop.f32.mrb[0].mxu0
    %v465 = vadd.f32 %v185, %v464
    %v466 = vpop.f32.mrb[0].mxu0
    %v467 = vadd.f32 %v181, %v466
    %v468 = vpop.f32.mrb[0].mxu0
    %v469 = vadd.f32 %v185, %v468
    %470 = vdwg.mxu0
    %471 = vmatprep.subr.bf16.mxu0 %v297
    %472 = vmatpush1.bf16.msra.mxu0 %v296
    %473 = vmatprep.subr.bf16.mxu0 %v301
    %474 = vmatpush1.bf16.msra.mxu0 %v300
    %475 = vmatprep.subr.bf16.mxu0 %v305
    %476 = vmatpush1.bf16.msra.mxu0 %v304
    %477 = vmatprep.subr.bf16.mxu0 %v309
    %478 = vmatpush1.bf16.msra.mxu0 %v308
    %479 = vmatprep.subr.bf16.mxu0 %v313
    %480 = vmatpush1.bf16.msra.mxu0 %v312
    %481 = vmatprep.subr.bf16.mxu0 %v317
    %482 = vmatpush1.bf16.msra.mxu0 %v316
    %483 = vmatprep.subr.bf16.mxu0 %v321
    %484 = vmatpush1.bf16.msra.mxu0 %v320
    %485 = vmatprep.subr.bf16.mxu0 %v325
    %486 = vmatpush1.bf16.msra.mxu0 %v324
    %487 = vmatprep.subr.bf16.mxu0 0
    %488 = vmatpush1.bf16.msra.mxu0 0
    %489 = vmatprep.subr.bf16.mxu0 0
    %490 = vmatpush1.bf16.msra.mxu0 0
    %491 = vmatprep.subr.bf16.mxu0 0
    %492 = vmatpush1.bf16.msra.mxu0 0
    %493 = vmatprep.subr.bf16.mxu0 0
    %494 = vmatpush1.bf16.msra.mxu0 0
    %495 = vmatprep.subr.bf16.mxu0 0
    %496 = vmatpush1.bf16.msra.mxu0 0
    %497 = vmatprep.subr.bf16.mxu0 0
    %498 = vmatpush1.bf16.msra.mxu0 0
    %499 = vmatprep.subr.bf16.mxu0 0
    %500 = vmatpush1.bf16.msra.mxu0 0
    %501 = vmatprep.subr.bf16.mxu0 0
    %502 = vmatpush1.bf16.msra.mxu0 0
    %503 = vmatprep.mubr.bf16.mxu0 0
    %504 = vmatmul.mubr.bf16.gmra.mrb[0].mxu0 %v136
    %v505 = vpop.f32.mrb[0].mxu0
    %v506 = vadd.f32 %v189, %v505
    %v507 = vpop.f32.mrb[0].mxu0
    %v508 = vadd.f32 %v193, %v507
    %v509 = vpop.f32.mrb[0].mxu0
    %v510 = vadd.f32 %v189, %v509
    %v511 = vpop.f32.mrb[0].mxu0
    %v512 = vadd.f32 %v193, %v511
    %513 = vmatprep.mubr.bf16.mxu0 0
    %514 = vmatmul.mubr.bf16.gmra.mrb[0].mxu0 %v137
    %v515 = vpop.f32.mrb[0].mxu0
    %v516 = vadd.f32 %v189, %v515
    %v517 = vpop.f32.mrb[0].mxu0
    %v518 = vadd.f32 %v193, %v517
    %v519 = vpop.f32.mrb[0].mxu0
    %v520 = vadd.f32 %v189, %v519
    %v521 = vpop.f32.mrb[0].mxu0
    %v522 = vadd.f32 %v193, %v521
    %523 = vmatprep.mubr.bf16.mxu0 0
    %524 = vmatmul.mubr.bf16.gmra.mrb[0].mxu0 %v138
    %v525 = vpop.f32.mrb[0].mxu0
    %v526 = vadd.f32 %v189, %v525
    %v527 = vpop.f32.mrb[0].mxu0
    %v528 = vadd.f32 %v193, %v527
    %v529 = vpop.f32.mrb[0].mxu0
    %v530 = vadd.f32 %v189, %v529
    %v531 = vpop.f32.mrb[0].mxu0
    %v532 = vadd.f32 %v193, %v531
    %533 = vmatprep.mubr.bf16.mxu0 0
    %534 = vmatmul.mubr.bf16.gmra.mrb[0].mxu0 %v139
    %v535 = vpop.f32.mrb[0].mxu0
    %v536 = vadd.f32 %v189, %v535
    %v537 = vpop.f32.mrb[0].mxu0
    %v538 = vadd.f32 %v193, %v537
    %v539 = vpop.f32.mrb[0].mxu0
    %v540 = vadd.f32 %v189, %v539
    %v541 = vpop.f32.mrb[0].mxu0
    %v542 = vadd.f32 %v193, %v541
    %543 = vmatprep.mubr.bf16.mxu0 0
    %544 = vmatmul.mubr.bf16.gmra.mrb[0].mxu0 %v140
    %v545 = vpop.f32.mrb[0].mxu0
    %v546 = vadd.f32 %v189, %v545
    %v547 = vpop.f32.mrb[0].mxu0
    %v548 = vadd.f32 %v193, %v547
    %v549 = vpop.f32.mrb[0].mxu0
    %v550 = vadd.f32 %v189, %v549
    %v551 = vpop.f32.mrb[0].mxu0
    %v552 = vadd.f32 %v193, %v551
    %553 = vmatprep.mubr.bf16.mxu0 0
    %554 = vmatmul.mubr.bf16.gmra.mrb[0].mxu0 %v141
    %v555 = vpop.f32.mrb[0].mxu0
    %v556 = vadd.f32 %v189, %v555
    %v557 = vpop.f32.mrb[0].mxu0
    %v558 = vadd.f32 %v193, %v557
    %v559 = vpop.f32.mrb[0].mxu0
    %v560 = vadd.f32 %v189, %v559
    %v561 = vpop.f32.mrb[0].mxu0
    %v562 = vadd.f32 %v193, %v561
    %563 = vmatprep.mubr.bf16.mxu0 0
    %564 = vmatmul.mubr.bf16.gmra.mrb[0].mxu0 %v142
    %v565 = vpop.f32.mrb[0].mxu0
    %v566 = vadd.f32 %v189, %v565
    %v567 = vpop.f32.mrb[0].mxu0
    %v568 = vadd.f32 %v193, %v567
    %v569 = vpop.f32.mrb[0].mxu0
    %v570 = vadd.f32 %v189, %v569
    %v571 = vpop.f32.mrb[0].mxu0
    %v572 = vadd.f32 %v193, %v571
    %573 = vmatprep.mubr.bf16.mxu0 0
    %574 = vmatmul.mubr.bf16.gmra.mrb[0].mxu0 %v143
    %v575 = vpop.f32.mrb[0].mxu0
    %v576 = vadd.f32 %v189, %v575
    %v577 = vpop.f32.mrb[0].mxu0
    %v578 = vadd.f32 %v193, %v577
    %v579 = vpop.f32.mrb[0].mxu0
    %v580 = vadd.f32 %v189, %v579
    %v581 = vpop.f32.mrb[0].mxu0
    %v582 = vadd.f32 %v193, %v581
    %583 = vdwg.mxu0
    %v584 = vpack.c.bf16 %v397, %v393
    %v585 = vpack.c.bf16 %v399, %v395
    %v586 = vpack.c.bf16 %v510, %v506
    %v587 = vpack.c.bf16 %v512, %v508
    %v588 = vpack.c.bf16 %v407, %v403
    %v589 = vpack.c.bf16 %v409, %v405
    %v590 = vpack.c.bf16 %v520, %v516
    %v591 = vpack.c.bf16 %v522, %v518
    %v592 = vpack.c.bf16 %v417, %v413
    %v593 = vpack.c.bf16 %v419, %v415
    %v594 = vpack.c.bf16 %v530, %v526
    %v595 = vpack.c.bf16 %v532, %v528
    %v596 = vpack.c.bf16 %v427, %v423
    %v597 = vpack.c.bf16 %v429, %v425
    %v598 = vpack.c.bf16 %v540, %v536
    %v599 = vpack.c.bf16 %v542, %v538
    %v600 = vpack.c.bf16 %v437, %v433
    %v601 = vpack.c.bf16 %v439, %v435
    %v602 = vpack.c.bf16 %v550, %v546
    %v603 = vpack.c.bf16 %v552, %v548
    %v604 = vpack.c.bf16 %v447, %v443
    %v605 = vpack.c.bf16 %v449, %v445
    %v606 = vpack.c.bf16 %v560, %v556
    %v607 = vpack.c.bf16 %v562, %v558
    %v608 = vpack.c.bf16 %v457, %v453
    %v609 = vpack.c.bf16 %v459, %v455
    %v610 = vpack.c.bf16 %v570, %v566
    %v611 = vpack.c.bf16 %v572, %v568
    %v612 = vpack.c.bf16 %v467, %v463
    %v613 = vpack.c.bf16 %v469, %v465
    %v614 = vpack.c.bf16 %v580, %v576
    %v615 = vpack.c.bf16 %v582, %v578
    %v648 = vunpack.c.l.b16 %v584
    %v649 = vunpack.c.l.b16 %v585
    %v650 = vunpack.c.l.b16 %v586
    %v651 = vunpack.c.l.b16 %v587
    %v652 = vunpack.c.h.b16 %v584
    %v653 = vunpack.c.h.b16 %v585
    %v654 = vunpack.c.h.b16 %v586
    %v655 = vunpack.c.h.b16 %v587
    %v656 = vunpack.c.l.b16 %v588
    %v657 = vunpack.c.l.b16 %v589
    %v658 = vunpack.c.l.b16 %v590
    %v659 = vunpack.c.l.b16 %v591
    %v660 = vunpack.c.h.b16 %v588
    %v661 = vunpack.c.h.b16 %v589
    %v662 = vunpack.c.h.b16 %v590
    %v663 = vunpack.c.h.b16 %v591
    %v664 = vunpack.c.l.b16 %v592
    %v665 = vunpack.c.l.b16 %v593
    %v666 = vunpack.c.l.b16 %v594
    %v667 = vunpack.c.l.b16 %v595
    %v668 = vunpack.c.h.b16 %v592
    %v669 = vunpack.c.h.b16 %v593
    %v670 = vunpack.c.h.b16 %v594
    %v671 = vunpack.c.h.b16 %v595
    %v672 = vunpack.c.l.b16 %v596
    %v673 = vunpack.c.l.b16 %v597
    %v674 = vunpack.c.l.b16 %v598
    %v675 = vunpack.c.l.b16 %v599
    %v676 = vunpack.c.h.b16 %v596
    %v677 = vunpack.c.h.b16 %v597
    %v678 = vunpack.c.h.b16 %v598
    %v679 = vunpack.c.h.b16 %v599
    %v680 = vunpack.c.l.b16 %v600
    %v681 = vunpack.c.l.b16 %v601
    %v682 = vunpack.c.l.b16 %v602
    %v683 = vunpack.c.l.b16 %v603
    %v684 = vunpack.c.h.b16 %v600
    %v685 = vunpack.c.h.b16 %v601
    %v686 = vunpack.c.h.b16 %v602
    %v687 = vunpack.c.h.b16 %v603
    %v688 = vunpack.c.l.b16 %v604
    %v689 = vunpack.c.l.b16 %v605
    %v690 = vunpack.c.l.b16 %v606
    %v691 = vunpack.c.l.b16 %v607
    %v692 = vunpack.c.h.b16 %v604
    %v693 = vunpack.c.h.b16 %v605
    %v694 = vunpack.c.h.b16 %v606
    %v695 = vunpack.c.h.b16 %v607
    %v696 = vunpack.c.l.b16 %v608
    %v697 = vunpack.c.l.b16 %v609
    %v698 = vunpack.c.l.b16 %v610
    %v699 = vunpack.c.l.b16 %v611
    %v700 = vunpack.c.h.b16 %v608
    %v701 = vunpack.c.h.b16 %v609
    %v702 = vunpack.c.h.b16 %v610
    %v703 = vunpack.c.h.b16 %v611
    %v704 = vunpack.c.l.b16 %v612
    %v705 = vunpack.c.l.b16 %v613
    %v706 = vunpack.c.l.b16 %v614
    %v707 = vunpack.c.l.b16 %v615
    %v708 = vunpack.c.h.b16 %v612
    %v709 = vunpack.c.h.b16 %v613
    %v710 = vunpack.c.h.b16 %v614
    %v711 = vunpack.c.h.b16 %v615
    %v712 = vpack.c.b16 %v649, %v648
    %v713 = vpack.c.b16 %v651, %v650
    %v714 = vpack.c.b16 %v653, %v652
    %v715 = vpack.c.b16 %v655, %v654
    %v716 = vpack.c.b16 %v657, %v656
    %v717 = vpack.c.b16 %v659, %v658
    %v718 = vpack.c.b16 %v661, %v660
    %v719 = vpack.c.b16 %v663, %v662
    %v720 = vpack.c.b16 %v665, %v664
    %v721 = vpack.c.b16 %v667, %v666
    %v722 = vpack.c.b16 %v669, %v668
    %v723 = vpack.c.b16 %v671, %v670
    %v724 = vpack.c.b16 %v673, %v672
    %v725 = vpack.c.b16 %v675, %v674
    %v726 = vpack.c.b16 %v677, %v676
    %v727 = vpack.c.b16 %v679, %v678
    %v728 = vpack.c.b16 %v681, %v680
    %v729 = vpack.c.b16 %v683, %v682
    %v730 = vpack.c.b16 %v685, %v684
    %v731 = vpack.c.b16 %v687, %v686
    %v732 = vpack.c.b16 %v689, %v688
    %v733 = vpack.c.b16 %v691, %v690
    %v734 = vpack.c.b16 %v693, %v692
    %v735 = vpack.c.b16 %v695, %v694
    %v736 = vpack.c.b16 %v697, %v696
    %v737 = vpack.c.b16 %v699, %v698
    %v738 = vpack.c.b16 %v701, %v700
    %v739 = vpack.c.b16 %v703, %v702
    %v740 = vpack.c.b16 %v705, %v704
    %v741 = vpack.c.b16 %v707, %v706
    %v742 = vpack.c.b16 %v709, %v708
    %v743 = vpack.c.b16 %v711, %v710
    %776 = vst [vmem:[#allocation2] sm:$0xff] %v712
    %777 = vst [vmem:[#allocation2 + $0x8] sm:$0xff] %v713
    %778 = vst [vmem:[#allocation2 + $0x10] sm:$0xff] %v714
    %779 = vst [vmem:[#allocation2 + $0x18] sm:$0xff] %v715
    %780 = vst [vmem:[#allocation2 + $0x20] sm:$0xff] %v716
    %781 = vst [vmem:[#allocation2 + $0x28] sm:$0xff] %v717
    %782 = vst [vmem:[#allocation2 + $0x30] sm:$0xff] %v718
    %783 = vst [vmem:[#allocation2 + $0x38] sm:$0xff] %v719
    %784 = vst [vmem:[#allocation2 + $0x40] sm:$0xff] %v720
    %785 = vst [vmem:[#allocation2 + $0x48] sm:$0xff] %v721
    %786 = vst [vmem:[#allocation2 + $0x50] sm:$0xff] %v722
    %787 = vst [vmem:[#allocation2 + $0x58] sm:$0xff] %v723
    %788 = vst [vmem:[#allocation2 + $0x60] sm:$0xff] %v724
    %789 = vst [vmem:[#allocation2 + $0x68] sm:$0xff] %v725
    %790 = vst [vmem:[#allocation2 + $0x70] sm:$0xff] %v726
    %791 = vst [vmem:[#allocation2 + $0x78] sm:$0xff] %v727
    %792 = vst [vmem:[#allocation2 + $0x80] sm:$0xff] %v728
    %793 = vst [vmem:[#allocation2 + $0x88] sm:$0xff] %v729
    %794 = vst [vmem:[#allocation2 + $0x90] sm:$0xff] %v730
    %795 = vst [vmem:[#allocation2 + $0x98] sm:$0xff] %v731
    %796 = vst [vmem:[#allocation2 + $0xa0] sm:$0xff] %v732
    %797 = vst [vmem:[#allocation2 + $0xa8] sm:$0xff] %v733
    %798 = vst [vmem:[#allocation2 + $0xb0] sm:$0xff] %v734
    %799 = vst [vmem:[#allocation2 + $0xb8] sm:$0xff] %v735
    %800 = vst [vmem:[#allocation2 + $0xc0] sm:$0xff] %v736
    %801 = vst [vmem:[#allocation2 + $0xc8] sm:$0xff] %v737
    %802 = vst [vmem:[#allocation2 + $0xd0] sm:$0xff] %v738
    %803 = vst [vmem:[#allocation2 + $0xd8] sm:$0xff] %v739
    %804 = vst [vmem:[#allocation2 + $0xe0] sm:$0xff] %v740
    %805 = vst [vmem:[#allocation2 + $0xe8] sm:$0xff] %v741
    %806 = vst [vmem:[#allocation2 + $0xf0] sm:$0xff] %v742
    %807 = vst [vmem:[#allocation2 + $0xf8] sm:$0xff] %v743
    %v808 = vld [vmem:[#allocation10] sm:$0xff]
    %v809 = vld [vmem:[#allocation10 + $0x8] sm:$0xff]
    %v810 = vld [vmem:[#allocation10 + $0x10] sm:$0xff]
    %v811 = vld [vmem:[#allocation10 + $0x18] sm:$0xff]
    %v812 = vld [vmem:[#allocation10 + $0x20] sm:$0xff]
    %v813 = vld [vmem:[#allocation10 + $0x28] sm:$0xff]
    %v814 = vld [vmem:[#allocation10 + $0x30] sm:$0xff]
    %v815 = vld [vmem:[#allocation10 + $0x38] sm:$0xff]
    %v816 = vld [vmem:[#allocation10 + $0x40] sm:$0xff]
    %v817 = vld [vmem:[#allocation10 + $0x48] sm:$0xff]
    %v818 = vld [vmem:[#allocation10 + $0x50] sm:$0xff]
    %v819 = vld [vmem:[#allocation10 + $0x58] sm:$0xff]
    %v820 = vld [vmem:[#allocation10 + $0x60] sm:$0xff]
    %v821 = vld [vmem:[#allocation10 + $0x68] sm:$0xff]
    %v822 = vld [vmem:[#allocation10 + $0x70] sm:$0xff]
    %v823 = vld [vmem:[#allocation10 + $0x78] sm:$0xff]
    %v824 = vld [vmem:[#allocation10 + $0x80] sm:$0xff]
    %v825 = vld [vmem:[#allocation10 + $0x88] sm:$0xff]
    %v826 = vld [vmem:[#allocation10 + $0x90] sm:$0xff]
    %v827 = vld [vmem:[#allocation10 + $0x98] sm:$0xff]
    %v828 = vld [vmem:[#allocation10 + $0xa0] sm:$0xff]
    %v829 = vld [vmem:[#allocation10 + $0xa8] sm:$0xff]
    %v830 = vld [vmem:[#allocation10 + $0xb0] sm:$0xff]
    %v831 = vld [vmem:[#allocation10 + $0xb8] sm:$0xff]
    %v832 = vld [vmem:[#allocation10 + $0xc0] sm:$0xff]
    %v833 = vld [vmem:[#allocation10 + $0xc8] sm:$0xff]
    %v834 = vld [vmem:[#allocation10 + $0xd0] sm:$0xff]
    %v835 = vld [vmem:[#allocation10 + $0xd8] sm:$0xff]
    %v836 = vld [vmem:[#allocation10 + $0xe0] sm:$0xff]
    %v837 = vld [vmem:[#allocation10 + $0xe8] sm:$0xff]
    %v838 = vld [vmem:[#allocation10 + $0xf0] sm:$0xff]
    %v839 = vld [vmem:[#allocation10 + $0xf8] sm:$0xff]
    %v840 = vld [vmem:[#allocation15] sm:$0xf]
    %v842 = vlaneseq
    %v843 = vshrl.u32 %v842, 7
    %v844 = vsub.s32 0, %v843
    %v845 = vrot.slane %v840, %v844
    %v846 = vlaneseq
    %v847 = vshrl.u32 %v846, 7
    %v848 = vsub.s32 1, %v847
    %v849 = vrot.slane %v840, %v848
    %v850 = vlaneseq
    %v851 = vshrl.u32 %v850, 7
    %v852 = vsub.s32 2, %v851
    %v853 = vrot.slane %v840, %v852
    %v854 = vlaneseq
    %v855 = vshrl.u32 %v854, 7
    %v856 = vsub.s32 3, %v855
    %v857 = vrot.slane %v840, %v856
    %v894 = vunpack.c.l.b16 %v808
    %v895 = vunpack.c.h.b16 %v808
    %v896 = vunpack.c.l.b16 %v809
    %v897 = vunpack.c.h.b16 %v809
    %v898 = vunpack.c.l.b16 %v810
    %v899 = vunpack.c.h.b16 %v810
    %v900 = vunpack.c.l.b16 %v811
    %v901 = vunpack.c.h.b16 %v811
    %v902 = vunpack.c.l.b16 %v812
    %v903 = vunpack.c.h.b16 %v812
    %v904 = vunpack.c.l.b16 %v813
    %v905 = vunpack.c.h.b16 %v813
    %v906 = vunpack.c.l.b16 %v814
    %v907 = vunpack.c.h.b16 %v814
    %v908 = vunpack.c.l.b16 %v815
    %v909 = vunpack.c.h.b16 %v815
    %v910 = vunpack.c.l.b16 %v816
    %v911 = vunpack.c.h.b16 %v816
    %v912 = vunpack.c.l.b16 %v817
    %v913 = vunpack.c.h.b16 %v817
    %v914 = vunpack.c.l.b16 %v818
    %v915 = vunpack.c.h.b16 %v818
    %v916 = vunpack.c.l.b16 %v819
    %v917 = vunpack.c.h.b16 %v819
    %v918 = vunpack.c.l.b16 %v820
    %v919 = vunpack.c.h.b16 %v820
    %v920 = vunpack.c.l.b16 %v821
    %v921 = vunpack.c.h.b16 %v821
    %v922 = vunpack.c.l.b16 %v822
    %v923 = vunpack.c.h.b16 %v822
    %v924 = vunpack.c.l.b16 %v823
    %v925 = vunpack.c.h.b16 %v823
    %v926 = vunpack.c.l.b16 %v824
    %v927 = vunpack.c.h.b16 %v824
    %v928 = vunpack.c.l.b16 %v825
    %v929 = vunpack.c.h.b16 %v825
    %v930 = vunpack.c.l.b16 %v826
    %v931 = vunpack.c.h.b16 %v826
    %v932 = vunpack.c.l.b16 %v827
    %v933 = vunpack.c.h.b16 %v827
    %v934 = vunpack.c.l.b16 %v828
    %v935 = vunpack.c.h.b16 %v828
    %v936 = vunpack.c.l.b16 %v829
    %v937 = vunpack.c.h.b16 %v829
    %v938 = vunpack.c.l.b16 %v830
    %v939 = vunpack.c.h.b16 %v830
    %v940 = vunpack.c.l.b16 %v831
    %v941 = vunpack.c.h.b16 %v831
    %v942 = vunpack.c.l.b16 %v832
    %v943 = vunpack.c.h.b16 %v832
    %v944 = vunpack.c.l.b16 %v833
    %v945 = vunpack.c.h.b16 %v833
    %v946 = vunpack.c.l.b16 %v834
    %v947 = vunpack.c.h.b16 %v834
    %v948 = vunpack.c.l.b16 %v835
    %v949 = vunpack.c.h.b16 %v835
    %v950 = vunpack.c.l.b16 %v836
    %v951 = vunpack.c.h.b16 %v836
    %v952 = vunpack.c.l.b16 %v837
    %v953 = vunpack.c.h.b16 %v837
    %v954 = vunpack.c.l.b16 %v838
    %v955 = vunpack.c.h.b16 %v838
    %v956 = vunpack.c.l.b16 %v839
    %v957 = vunpack.c.h.b16 %v839
    %v958 = vpack.c.b16 %v898, %v894
    %v959 = vpack.c.b16 %v899, %v895
    %v960 = vpack.c.b16 %v900, %v896
    %v961 = vpack.c.b16 %v901, %v897
    %v962 = vpack.c.b16 %v906, %v902
    %v963 = vpack.c.b16 %v907, %v903
    %v964 = vpack.c.b16 %v908, %v904
    %v965 = vpack.c.b16 %v909, %v905
    %v966 = vpack.c.b16 %v914, %v910
    %v967 = vpack.c.b16 %v915, %v911
    %v968 = vpack.c.b16 %v916, %v912
    %v969 = vpack.c.b16 %v917, %v913
    %v970 = vpack.c.b16 %v922, %v918
    %v971 = vpack.c.b16 %v923, %v919
    %v972 = vpack.c.b16 %v924, %v920
    %v973 = vpack.c.b16 %v925, %v921
    %v974 = vpack.c.b16 %v930, %v926
    %v975 = vpack.c.b16 %v931, %v927
    %v976 = vpack.c.b16 %v932, %v928
    %v977 = vpack.c.b16 %v933, %v929
    %v978 = vpack.c.b16 %v938, %v934
    %v979 = vpack.c.b16 %v939, %v935
    %v980 = vpack.c.b16 %v940, %v936
    %v981 = vpack.c.b16 %v941, %v937
    %v982 = vpack.c.b16 %v946, %v942
    %v983 = vpack.c.b16 %v947, %v943
    %v984 = vpack.c.b16 %v948, %v944
    %v985 = vpack.c.b16 %v949, %v945
    %v986 = vpack.c.b16 %v954, %v950
    %v987 = vpack.c.b16 %v955, %v951
    %v988 = vpack.c.b16 %v956, %v952
    %v989 = vpack.c.b16 %v957, %v953
    %1022 = vmatprep.subr.bf16.mxu0 %v959
    %1023 = vmatpush1.bf16.msra.mxu0 %v958
    %1024 = vmatprep.subr.bf16.mxu0 %v963
    %1025 = vmatpush1.bf16.msra.mxu0 %v962
    %1026 = vmatprep.subr.bf16.mxu0 %v967
    %1027 = vmatpush1.bf16.msra.mxu0 %v966
    %1028 = vmatprep.subr.bf16.mxu0 %v971
    %1029 = vmatpush1.bf16.msra.mxu0 %v970
    %1030 = vmatprep.subr.bf16.mxu0 %v975
    %1031 = vmatpush1.bf16.msra.mxu0 %v974
    %1032 = vmatprep.subr.bf16.mxu0 %v979
    %1033 = vmatpush1.bf16.msra.mxu0 %v978
    %1034 = vmatprep.subr.bf16.mxu0 %v983
    %1035 = vmatpush1.bf16.msra.mxu0 %v982
    %1036 = vmatprep.subr.bf16.mxu0 %v987
    %1037 = vmatpush1.bf16.msra.mxu0 %v986
    %1038 = vmatprep.subr.bf16.mxu0 0
    %1039 = vmatpush1.bf16.msra.mxu0 0
    %1040 = vmatprep.subr.bf16.mxu0 0
    %1041 = vmatpush1.bf16.msra.mxu0 0
    %1042 = vmatprep.subr.bf16.mxu0 0
    %1043 = vmatpush1.bf16.msra.mxu0 0
    %1044 = vmatprep.subr.bf16.mxu0 0
    %1045 = vmatpush1.bf16.msra.mxu0 0
    %1046 = vmatprep.subr.bf16.mxu0 0
    %1047 = vmatpush1.bf16.msra.mxu0 0
    %1048 = vmatprep.subr.bf16.mxu0 0
    %1049 = vmatpush1.bf16.msra.mxu0 0
    %1050 = vmatprep.subr.bf16.mxu0 0
    %1051 = vmatpush1.bf16.msra.mxu0 0
    %1052 = vmatprep.subr.bf16.mxu0 0
    %1053 = vmatpush1.bf16.msra.mxu0 0
    %1054 = vmatprep.mubr.bf16.mxu0 0
    %1055 = vmatmul.mubr.bf16.gmra.mrb[0].mxu0 %v136
    %v1056 = vpop.f32.mrb[0].mxu0
    %v1057 = vadd.f32 %v845, %v1056
    %v1058 = vpop.f32.mrb[0].mxu0
    %v1059 = vadd.f32 %v849, %v1058
    %v1060 = vpop.f32.mrb[0].mxu0
    %v1061 = vadd.f32 %v845, %v1060
    %v1062 = vpop.f32.mrb[0].mxu0
    %v1063 = vadd.f32 %v849, %v1062
    %1064 = vmatprep.mubr.bf16.mxu0 0
    %1065 = vmatmul.mubr.bf16.gmra.mrb[0].mxu0 %v137
    %v1066 = vpop.f32.mrb[0].mxu0
    %v1067 = vadd.f32 %v845, %v1066
    %v1068 = vpop.f32.mrb[0].mxu0
    %v1069 = vadd.f32 %v849, %v1068
    %v1070 = vpop.f32.mrb[0].mxu0
    %v1071 = vadd.f32 %v845, %v1070
    %v1072 = vpop.f32.mrb[0].mxu0
    %v1073 = vadd.f32 %v849, %v1072
    %1074 = vmatprep.mubr.bf16.mxu0 0
    %1075 = vmatmul.mubr.bf16.gmra.mrb[0].mxu0 %v138
    %v1076 = vpop.f32.mrb[0].mxu0
    %v1077 = vadd.f32 %v845, %v1076
    %v1078 = vpop.f32.mrb[0].mxu0
    %v1079 = vadd.f32 %v849, %v1078
    %v1080 = vpop.f32.mrb[0].mxu0
    %v1081 = vadd.f32 %v845, %v1080
    %v1082 = vpop.f32.mrb[0].mxu0
    %v1083 = vadd.f32 %v849, %v1082
    %1084 = vmatprep.mubr.bf16.mxu0 0
    %1085 = vmatmul.mubr.bf16.gmra.mrb[0].mxu0 %v139
    %v1086 = vpop.f32.mrb[0].mxu0
    %v1087 = vadd.f32 %v845, %v1086
    %v1088 = vpop.f32.mrb[0].mxu0
    %v1089 = vadd.f32 %v849, %v1088
    %v1090 = vpop.f32.mrb[0].mxu0
    %v1091 = vadd.f32 %v845, %v1090
    %v1092 = vpop.f32.mrb[0].mxu0
    %v1093 = vadd.f32 %v849, %v1092
    %1094 = vmatprep.mubr.bf16.mxu0 0
    %1095 = vmatmul.mubr.bf16.gmra.mrb[0].mxu0 %v140
    %v1096 = vpop.f32.mrb[0].mxu0
    %v1097 = vadd.f32 %v845, %v1096
    %v1098 = vpop.f32.mrb[0].mxu0
    %v1099 = vadd.f32 %v849, %v1098
    %v1100 = vpop.f32.mrb[0].mxu0
    %v1101 = vadd.f32 %v845, %v1100
    %v1102 = vpop.f32.mrb[0].mxu0
    %v1103 = vadd.f32 %v849, %v1102
    %1104 = vmatprep.mubr.bf16.mxu0 0
    %1105 = vmatmul.mubr.bf16.gmra.mrb[0].mxu0 %v141
    %v1106 = vpop.f32.mrb[0].mxu0
    %v1107 = vadd.f32 %v845, %v1106
    %v1108 = vpop.f32.mrb[0].mxu0
    %v1109 = vadd.f32 %v849, %v1108
    %v1110 = vpop.f32.mrb[0].mxu0
    %v1111 = vadd.f32 %v845, %v1110
    %v1112 = vpop.f32.mrb[0].mxu0
    %v1113 = vadd.f32 %v849, %v1112
    %1114 = vmatprep.mubr.bf16.mxu0 0
    %1115 = vmatmul.mubr.bf16.gmra.mrb[0].mxu0 %v142
    %v1116 = vpop.f32.mrb[0].mxu0
    %v1117 = vadd.f32 %v845, %v1116
    %v1118 = vpop.f32.mrb[0].mxu0
    %v1119 = vadd.f32 %v849, %v1118
    %v1120 = vpop.f32.mrb[0].mxu0
    %v1121 = vadd.f32 %v845, %v1120
    %v1122 = vpop.f32.mrb[0].mxu0
    %v1123 = vadd.f32 %v849, %v1122
    %1124 = vmatprep.mubr.bf16.mxu0 0
    %1125 = vmatmul.mubr.bf16.gmra.mrb[0].mxu0 %v143
    %v1126 = vpop.f32.mrb[0].mxu0
    %v1127 = vadd.f32 %v845, %v1126
    %v1128 = vpop.f32.mrb[0].mxu0
    %v1129 = vadd.f32 %v849, %v1128
    %v1130 = vpop.f32.mrb[0].mxu0
    %v1131 = vadd.f32 %v845, %v1130
    %v1132 = vpop.f32.mrb[0].mxu0
    %v1133 = vadd.f32 %v849, %v1132
    %1134 = vdwg.mxu0
    %1135 = vmatprep.subr.bf16.mxu0 %v961
    %1136 = vmatpush1.bf16.msra.mxu0 %v960
    %1137 = vmatprep.subr.bf16.mxu0 %v965
    %1138 = vmatpush1.bf16.msra.mxu0 %v964
    %1139 = vmatprep.subr.bf16.mxu0 %v969
    %1140 = vmatpush1.bf16.msra.mxu0 %v968
    %1141 = vmatprep.subr.bf16.mxu0 %v973
    %1142 = vmatpush1.bf16.msra.mxu0 %v972
    %1143 = vmatprep.subr.bf16.mxu0 %v977
    %1144 = vmatpush1.bf16.msra.mxu0 %v976
    %1145 = vmatprep.subr.bf16.mxu0 %v981
    %1146 = vmatpush1.bf16.msra.mxu0 %v980
    %1147 = vmatprep.subr.bf16.mxu0 %v985
    %1148 = vmatpush1.bf16.msra.mxu0 %v984
    %1149 = vmatprep.subr.bf16.mxu0 %v989
    %1150 = vmatpush1.bf16.msra.mxu0 %v988
    %1151 = vmatprep.subr.bf16.mxu0 0
    %1152 = vmatpush1.bf16.msra.mxu0 0
    %1153 = vmatprep.subr.bf16.mxu0 0
    %1154 = vmatpush1.bf16.msra.mxu0 0
    %1155 = vmatprep.subr.bf16.mxu0 0
    %1156 = vmatpush1.bf16.msra.mxu0 0
    %1157 = vmatprep.subr.bf16.mxu0 0
    %1158 = vmatpush1.bf16.msra.mxu0 0
    %1159 = vmatprep.subr.bf16.mxu0 0
    %1160 = vmatpush1.bf16.msra.mxu0 0
    %1161 = vmatprep.subr.bf16.mxu0 0
    %1162 = vmatpush1.bf16.msra.mxu0 0
    %1163 = vmatprep.subr.bf16.mxu0 0
    %1164 = vmatpush1.bf16.msra.mxu0 0
    %1165 = vmatprep.subr.bf16.mxu0 0
    %1166 = vmatpush1.bf16.msra.mxu0 0
    %1167 = vmatprep.mubr.bf16.mxu0 0
    %1168 = vmatmul.mubr.bf16.gmra.mrb[0].mxu0 %v136
    %v1169 = vpop.f32.mrb[0].mxu0
    %v1170 = vadd.f32 %v853, %v1169
    %v1171 = vpop.f32.mrb[0].mxu0
    %v1172 = vadd.f32 %v857, %v1171
    %v1173 = vpop.f32.mrb[0].mxu0
    %v1174 = vadd.f32 %v853, %v1173
    %v1175 = vpop.f32.mrb[0].mxu0
    %v1176 = vadd.f32 %v857, %v1175
    %1177 = vmatprep.mubr.bf16.mxu0 0
    %1178 = vmatmul.mubr.bf16.gmra.mrb[0].mxu0 %v137
    %v1179 = vpop.f32.mrb[0].mxu0
    %v1180 = vadd.f32 %v853, %v1179
    %v1181 = vpop.f32.mrb[0].mxu0
    %v1182 = vadd.f32 %v857, %v1181
    %v1183 = vpop.f32.mrb[0].mxu0
    %v1184 = vadd.f32 %v853, %v1183
    %v1185 = vpop.f32.mrb[0].mxu0
    %v1186 = vadd.f32 %v857, %v1185
    %1187 = vmatprep.mubr.bf16.mxu0 0
    %1188 = vmatmul.mubr.bf16.gmra.mrb[0].mxu0 %v138
    %v1189 = vpop.f32.mrb[0].mxu0
    %v1190 = vadd.f32 %v853, %v1189
    %v1191 = vpop.f32.mrb[0].mxu0
    %v1192 = vadd.f32 %v857, %v1191
    %v1193 = vpop.f32.mrb[0].mxu0
    %v1194 = vadd.f32 %v853, %v1193
    %v1195 = vpop.f32.mrb[0].mxu0
    %v1196 = vadd.f32 %v857, %v1195
    %1197 = vmatprep.mubr.bf16.mxu0 0
    %1198 = vmatmul.mubr.bf16.gmra.mrb[0].mxu0 %v139
    %v1199 = vpop.f32.mrb[0].mxu0
    %v1200 = vadd.f32 %v853, %v1199
    %v1201 = vpop.f32.mrb[0].mxu0
    %v1202 = vadd.f32 %v857, %v1201
    %v1203 = vpop.f32.mrb[0].mxu0
    %v1204 = vadd.f32 %v853, %v1203
    %v1205 = vpop.f32.mrb[0].mxu0
    %v1206 = vadd.f32 %v857, %v1205
    %1207 = vmatprep.mubr.bf16.mxu0 0
    %1208 = vmatmul.mubr.bf16.gmra.mrb[0].mxu0 %v140
    %v1209 = vpop.f32.mrb[0].mxu0
    %v1210 = vadd.f32 %v853, %v1209
    %v1211 = vpop.f32.mrb[0].mxu0
    %v1212 = vadd.f32 %v857, %v1211
    %v1213 = vpop.f32.mrb[0].mxu0
    %v1214 = vadd.f32 %v853, %v1213
    %v1215 = vpop.f32.mrb[0].mxu0
    %v1216 = vadd.f32 %v857, %v1215
    %1217 = vmatprep.mubr.bf16.mxu0 0
    %1218 = vmatmul.mubr.bf16.gmra.mrb[0].mxu0 %v141
    %v1219 = vpop.f32.mrb[0].mxu0
    %v1220 = vadd.f32 %v853, %v1219
    %v1221 = vpop.f32.mrb[0].mxu0
    %v1222 = vadd.f32 %v857, %v1221
    %v1223 = vpop.f32.mrb[0].mxu0
    %v1224 = vadd.f32 %v853, %v1223
    %v1225 = vpop.f32.mrb[0].mxu0
    %v1226 = vadd.f32 %v857, %v1225
    %1227 = vmatprep.mubr.bf16.mxu0 0
    %1228 = vmatmul.mubr.bf16.gmra.mrb[0].mxu0 %v142
    %v1229 = vpop.f32.mrb[0].mxu0
    %v1230 = vadd.f32 %v853, %v1229
    %v1231 = vpop.f32.mrb[0].mxu0
    %v1232 = vadd.f32 %v857, %v1231
    %v1233 = vpop.f32.mrb[0].mxu0
    %v1234 = vadd.f32 %v853, %v1233
    %v1235 = vpop.f32.mrb[0].mxu0
    %v1236 = vadd.f32 %v857, %v1235
    %1237 = vmatprep.mubr.bf16.mxu0 0
    %1238 = vmatmul.mubr.bf16.gmra.mrb[0].mxu0 %v143
    %v1239 = vpop.f32.mrb[0].mxu0
    %v1240 = vadd.f32 %v853, %v1239
    %v1241 = vpop.f32.mrb[0].mxu0
    %v1242 = vadd.f32 %v857, %v1241
    %v1243 = vpop.f32.mrb[0].mxu0
    %v1244 = vadd.f32 %v853, %v1243
    %v1245 = vpop.f32.mrb[0].mxu0
    %v1246 = vadd.f32 %v857, %v1245
    %1247 = vdwg.mxu0
    %v1248 = vpack.c.bf16 %v1061, %v1057
    %v1249 = vpack.c.bf16 %v1063, %v1059
    %v1250 = vpack.c.bf16 %v1174, %v1170
    %v1251 = vpack.c.bf16 %v1176, %v1172
    %v1252 = vpack.c.bf16 %v1071, %v1067
    %v1253 = vpack.c.bf16 %v1073, %v1069
    %v1254 = vpack.c.bf16 %v1184, %v1180
    %v1255 = vpack.c.bf16 %v1186, %v1182
    %v1256 = vpack.c.bf16 %v1081, %v1077
    %v1257 = vpack.c.bf16 %v1083, %v1079
    %v1258 = vpack.c.bf16 %v1194, %v1190
    %v1259 = vpack.c.bf16 %v1196, %v1192
    %v1260 = vpack.c.bf16 %v1091, %v1087
    %v1261 = vpack.c.bf16 %v1093, %v1089
    %v1262 = vpack.c.bf16 %v1204, %v1200
    %v1263 = vpack.c.bf16 %v1206, %v1202
    %v1264 = vpack.c.bf16 %v1101, %v1097
    %v1265 = vpack.c.bf16 %v1103, %v1099
    %v1266 = vpack.c.bf16 %v1214, %v1210
    %v1267 = vpack.c.bf16 %v1216, %v1212
    %v1268 = vpack.c.bf16 %v1111, %v1107
    %v1269 = vpack.c.bf16 %v1113, %v1109
    %v1270 = vpack.c.bf16 %v1224, %v1220
    %v1271 = vpack.c.bf16 %v1226, %v1222
    %v1272 = vpack.c.bf16 %v1121, %v1117
    %v1273 = vpack.c.bf16 %v1123, %v1119
    %v1274 = vpack.c.bf16 %v1234, %v1230
    %v1275 = vpack.c.bf16 %v1236, %v1232
    %v1276 = vpack.c.bf16 %v1131, %v1127
    %v1277 = vpack.c.bf16 %v1133, %v1129
    %v1278 = vpack.c.bf16 %v1244, %v1240
    %v1279 = vpack.c.bf16 %v1246, %v1242
    %v1312 = vunpack.c.l.b16 %v1248
    %v1313 = vunpack.c.l.b16 %v1249
    %v1314 = vunpack.c.l.b16 %v1250
    %v1315 = vunpack.c.l.b16 %v1251
    %v1316 = vunpack.c.h.b16 %v1248
    %v1317 = vunpack.c.h.b16 %v1249
    %v1318 = vunpack.c.h.b16 %v1250
    %v1319 = vunpack.c.h.b16 %v1251
    %v1320 = vunpack.c.l.b16 %v1252
    %v1321 = vunpack.c.l.b16 %v1253
    %v1322 = vunpack.c.l.b16 %v1254
    %v1323 = vunpack.c.l.b16 %v1255
    %v1324 = vunpack.c.h.b16 %v1252
    %v1325 = vunpack.c.h.b16 %v1253
    %v1326 = vunpack.c.h.b16 %v1254
    %v1327 = vunpack.c.h.b16 %v1255
    %v1328 = vunpack.c.l.b16 %v1256
    %v1329 = vunpack.c.l.b16 %v1257
    %v1330 = vunpack.c.l.b16 %v1258
    %v1331 = vunpack.c.l.b16 %v1259
    %v1332 = vunpack.c.h.b16 %v1256
    %v1333 = vunpack.c.h.b16 %v1257
    %v1334 = vunpack.c.h.b16 %v1258
    %v1335 = vunpack.c.h.b16 %v1259
    %v1336 = vunpack.c.l.b16 %v1260
    %v1337 = vunpack.c.l.b16 %v1261
    %v1338 = vunpack.c.l.b16 %v1262
    %v1339 = vunpack.c.l.b16 %v1263
    %v1340 = vunpack.c.h.b16 %v1260
    %v1341 = vunpack.c.h.b16 %v1261
    %v1342 = vunpack.c.h.b16 %v1262
    %v1343 = vunpack.c.h.b16 %v1263
    %v1344 = vunpack.c.l.b16 %v1264
    %v1345 = vunpack.c.l.b16 %v1265
    %v1346 = vunpack.c.l.b16 %v1266
    %v1347 = vunpack.c.l.b16 %v1267
    %v1348 = vunpack.c.h.b16 %v1264
    %v1349 = vunpack.c.h.b16 %v1265
    %v1350 = vunpack.c.h.b16 %v1266
    %v1351 = vunpack.c.h.b16 %v1267
    %v1352 = vunpack.c.l.b16 %v1268
    %v1353 = vunpack.c.l.b16 %v1269
    %v1354 = vunpack.c.l.b16 %v1270
    %v1355 = vunpack.c.l.b16 %v1271
    %v1356 = vunpack.c.h.b16 %v1268
    %v1357 = vunpack.c.h.b16 %v1269
    %v1358 = vunpack.c.h.b16 %v1270
    %v1359 = vunpack.c.h.b16 %v1271
    %v1360 = vunpack.c.l.b16 %v1272
    %v1361 = vunpack.c.l.b16 %v1273
    %v1362 = vunpack.c.l.b16 %v1274
    %v1363 = vunpack.c.l.b16 %v1275
    %v1364 = vunpack.c.h.b16 %v1272
    %v1365 = vunpack.c.h.b16 %v1273
    %v1366 = vunpack.c.h.b16 %v1274
    %v1367 = vunpack.c.h.b16 %v1275
    %v1368 = vunpack.c.l.b16 %v1276
    %v1369 = vunpack.c.l.b16 %v1277
    %v1370 = vunpack.c.l.b16 %v1278
    %v1371 = vunpack.c.l.b16 %v1279
    %v1372 = vunpack.c.h.b16 %v1276
    %v1373 = vunpack.c.h.b16 %v1277
    %v1374 = vunpack.c.h.b16 %v1278
    %v1375 = vunpack.c.h.b16 %v1279
    %v1376 = vpack.c.b16 %v1313, %v1312
    %v1377 = vpack.c.b16 %v1315, %v1314
    %v1378 = vpack.c.b16 %v1317, %v1316
    %v1379 = vpack.c.b16 %v1319, %v1318
    %v1380 = vpack.c.b16 %v1321, %v1320
    %v1381 = vpack.c.b16 %v1323, %v1322
    %v1382 = vpack.c.b16 %v1325, %v1324
    %v1383 = vpack.c.b16 %v1327, %v1326
    %v1384 = vpack.c.b16 %v1329, %v1328
    %v1385 = vpack.c.b16 %v1331, %v1330
    %v1386 = vpack.c.b16 %v1333, %v1332
    %v1387 = vpack.c.b16 %v1335, %v1334
    %v1388 = vpack.c.b16 %v1337, %v1336
    %v1389 = vpack.c.b16 %v1339, %v1338
    %v1390 = vpack.c.b16 %v1341, %v1340
    %v1391 = vpack.c.b16 %v1343, %v1342
    %v1392 = vpack.c.b16 %v1345, %v1344
    %v1393 = vpack.c.b16 %v1347, %v1346
    %v1394 = vpack.c.b16 %v1349, %v1348
    %v1395 = vpack.c.b16 %v1351, %v1350
    %v1396 = vpack.c.b16 %v1353, %v1352
    %v1397 = vpack.c.b16 %v1355, %v1354
    %v1398 = vpack.c.b16 %v1357, %v1356
    %v1399 = vpack.c.b16 %v1359, %v1358
    %v1400 = vpack.c.b16 %v1361, %v1360
    %v1401 = vpack.c.b16 %v1363, %v1362
    %v1402 = vpack.c.b16 %v1365, %v1364
    %v1403 = vpack.c.b16 %v1367, %v1366
    %v1404 = vpack.c.b16 %v1369, %v1368
    %v1405 = vpack.c.b16 %v1371, %v1370
    %v1406 = vpack.c.b16 %v1373, %v1372
    %v1407 = vpack.c.b16 %v1375, %v1374
    %1440 = vst [vmem:[#allocation3] sm:$0xff] %v1376
    %1441 = vst [vmem:[#allocation3 + $0x8] sm:$0xff] %v1377
    %1442 = vst [vmem:[#allocation3 + $0x10] sm:$0xff] %v1378
    %1443 = vst [vmem:[#allocation3 + $0x18] sm:$0xff] %v1379
    %1444 = vst [vmem:[#allocation3 + $0x20] sm:$0xff] %v1380
    %1445 = vst [vmem:[#allocation3 + $0x28] sm:$0xff] %v1381
    %1446 = vst [vmem:[#allocation3 + $0x30] sm:$0xff] %v1382
    %1447 = vst [vmem:[#allocation3 + $0x38] sm:$0xff] %v1383
    %1448 = vst [vmem:[#allocation3 + $0x40] sm:$0xff] %v1384
    %1449 = vst [vmem:[#allocation3 + $0x48] sm:$0xff] %v1385
    %1450 = vst [vmem:[#allocation3 + $0x50] sm:$0xff] %v1386
    %1451 = vst [vmem:[#allocation3 + $0x58] sm:$0xff] %v1387
    %1452 = vst [vmem:[#allocation3 + $0x60] sm:$0xff] %v1388
    %1453 = vst [vmem:[#allocation3 + $0x68] sm:$0xff] %v1389
    %1454 = vst [vmem:[#allocation3 + $0x70] sm:$0xff] %v1390
    %1455 = vst [vmem:[#allocation3 + $0x78] sm:$0xff] %v1391
    %1456 = vst [vmem:[#allocation3 + $0x80] sm:$0xff] %v1392
    %1457 = vst [vmem:[#allocation3 + $0x88] sm:$0xff] %v1393
    %1458 = vst [vmem:[#allocation3 + $0x90] sm:$0xff] %v1394
    %1459 = vst [vmem:[#allocation3 + $0x98] sm:$0xff] %v1395
    %1460 = vst [vmem:[#allocation3 + $0xa0] sm:$0xff] %v1396
    %1461 = vst [vmem:[#allocation3 + $0xa8] sm:$0xff] %v1397
    %1462 = vst [vmem:[#allocation3 + $0xb0] sm:$0xff] %v1398
    %1463 = vst [vmem:[#allocation3 + $0xb8] sm:$0xff] %v1399
    %1464 = vst [vmem:[#allocation3 + $0xc0] sm:$0xff] %v1400
    %1465 = vst [vmem:[#allocation3 + $0xc8] sm:$0xff] %v1401
    %1466 = vst [vmem:[#allocation3 + $0xd0] sm:$0xff] %v1402
    %1467 = vst [vmem:[#allocation3 + $0xd8] sm:$0xff] %v1403
    %1468 = vst [vmem:[#allocation3 + $0xe0] sm:$0xff] %v1404
    %1469 = vst [vmem:[#allocation3 + $0xe8] sm:$0xff] %v1405
    %1470 = vst [vmem:[#allocation3 + $0xf0] sm:$0xff] %v1406
    %1471 = vst [vmem:[#allocation3 + $0xf8] sm:$0xff] %v1407
    %v1472 = vld [vmem:[#allocation12] sm:$0xff]
    %v1473 = vld [vmem:[#allocation12 + $0x8] sm:$0xff]
    %v1474 = vld [vmem:[#allocation12 + $0x10] sm:$0xff]
    %v1475 = vld [vmem:[#allocation12 + $0x18] sm:$0xff]
    %v1476 = vld [vmem:[#allocation12 + $0x20] sm:$0xff]
    %v1477 = vld [vmem:[#allocation12 + $0x28] sm:$0xff]
    %v1478 = vld [vmem:[#allocation12 + $0x30] sm:$0xff]
    %v1479 = vld [vmem:[#allocation12 + $0x38] sm:$0xff]
    %v1480 = vld [vmem:[#allocation12 + $0x40] sm:$0xff]
    %v1481 = vld [vmem:[#allocation12 + $0x48] sm:$0xff]
    %v1482 = vld [vmem:[#allocation12 + $0x50] sm:$0xff]
    %v1483 = vld [vmem:[#allocation12 + $0x58] sm:$0xff]
    %v1484 = vld [vmem:[#allocation12 + $0x60] sm:$0xff]
    %v1485 = vld [vmem:[#allocation12 + $0x68] sm:$0xff]
    %v1486 = vld [vmem:[#allocation12 + $0x70] sm:$0xff]
    %v1487 = vld [vmem:[#allocation12 + $0x78] sm:$0xff]
    %v1488 = vld [vmem:[#allocation12 + $0x80] sm:$0xff]
    %v1489 = vld [vmem:[#allocation12 + $0x88] sm:$0xff]
    %v1490 = vld [vmem:[#allocation12 + $0x90] sm:$0xff]
    %v1491 = vld [vmem:[#allocation12 + $0x98] sm:$0xff]
    %v1492 = vld [vmem:[#allocation12 + $0xa0] sm:$0xff]
    %v1493 = vld [vmem:[#allocation12 + $0xa8] sm:$0xff]
    %v1494 = vld [vmem:[#allocation12 + $0xb0] sm:$0xff]
    %v1495 = vld [vmem:[#allocation12 + $0xb8] sm:$0xff]
    %v1496 = vld [vmem:[#allocation12 + $0xc0] sm:$0xff]
    %v1497 = vld [vmem:[#allocation12 + $0xc8] sm:$0xff]
    %v1498 = vld [vmem:[#allocation12 + $0xd0] sm:$0xff]
    %v1499 = vld [vmem:[#allocation12 + $0xd8] sm:$0xff]
    %v1500 = vld [vmem:[#allocation12 + $0xe0] sm:$0xff]
    %v1501 = vld [vmem:[#allocation12 + $0xe8] sm:$0xff]
    %v1502 = vld [vmem:[#allocation12 + $0xf0] sm:$0xff]
    %v1503 = vld [vmem:[#allocation12 + $0xf8] sm:$0xff]
    %v1504 = vld [vmem:[#allocation12 + $0x100] sm:$0xff]
    %v1505 = vld [vmem:[#allocation12 + $0x108] sm:$0xff]
    %v1506 = vld [vmem:[#allocation12 + $0x110] sm:$0xff]
    %v1507 = vld [vmem:[#allocation12 + $0x118] sm:$0xff]
    %v1508 = vld [vmem:[#allocation12 + $0x120] sm:$0xff]
    %v1509 = vld [vmem:[#allocation12 + $0x128] sm:$0xff]
    %v1510 = vld [vmem:[#allocation12 + $0x130] sm:$0xff]
    %v1511 = vld [vmem:[#allocation12 + $0x138] sm:$0xff]
    %v1512 = vld [vmem:[#allocation12 + $0x140] sm:$0xff]
    %v1513 = vld [vmem:[#allocation12 + $0x148] sm:$0xff]
    %v1514 = vld [vmem:[#allocation12 + $0x150] sm:$0xff]
    %v1515 = vld [vmem:[#allocation12 + $0x158] sm:$0xff]
    %v1516 = vld [vmem:[#allocation12 + $0x160] sm:$0xff]
    %v1517 = vld [vmem:[#allocation12 + $0x168] sm:$0xff]
    %v1518 = vld [vmem:[#allocation12 + $0x170] sm:$0xff]
    %v1519 = vld [vmem:[#allocation12 + $0x178] sm:$0xff]
    %v1520 = vld [vmem:[#allocation12 + $0x180] sm:$0xff]
    %v1521 = vld [vmem:[#allocation12 + $0x188] sm:$0xff]
    %v1522 = vld [vmem:[#allocation12 + $0x190] sm:$0xff]
    %v1523 = vld [vmem:[#allocation12 + $0x198] sm:$0xff]
    %v1524 = vld [vmem:[#allocation12 + $0x1a0] sm:$0xff]
    %v1525 = vld [vmem:[#allocation12 + $0x1a8] sm:$0xff]
    %v1526 = vld [vmem:[#allocation12 + $0x1b0] sm:$0xff]
    %v1527 = vld [vmem:[#allocation12 + $0x1b8] sm:$0xff]
    %v1528 = vld [vmem:[#allocation12 + $0x1c0] sm:$0xff]
    %v1529 = vld [vmem:[#allocation12 + $0x1c8] sm:$0xff]
    %v1530 = vld [vmem:[#allocation12 + $0x1d0] sm:$0xff]
    %v1531 = vld [vmem:[#allocation12 + $0x1d8] sm:$0xff]
    %v1532 = vld [vmem:[#allocation12 + $0x1e0] sm:$0xff]
    %v1533 = vld [vmem:[#allocation12 + $0x1e8] sm:$0xff]
    %v1534 = vld [vmem:[#allocation12 + $0x1f0] sm:$0xff]
    %v1535 = vld [vmem:[#allocation12 + $0x1f8] sm:$0xff]
    %v1536 = vld [vmem:[#allocation12 + $0x200] sm:$0xff]
    %v1537 = vld [vmem:[#allocation12 + $0x208] sm:$0xff]
    %v1538 = vld [vmem:[#allocation12 + $0x210] sm:$0xff]
    %v1539 = vld [vmem:[#allocation12 + $0x218] sm:$0xff]
    %v1540 = vld [vmem:[#allocation12 + $0x220] sm:$0xff]
    %v1541 = vld [vmem:[#allocation12 + $0x228] sm:$0xff]
    %v1542 = vld [vmem:[#allocation12 + $0x230] sm:$0xff]
    %v1543 = vld [vmem:[#allocation12 + $0x238] sm:$0xff]
    %v1544 = vld [vmem:[#allocation12 + $0x240] sm:$0xff]
    %v1545 = vld [vmem:[#allocation12 + $0x248] sm:$0xff]
    %v1546 = vld [vmem:[#allocation12 + $0x250] sm:$0xff]
    %v1547 = vld [vmem:[#allocation12 + $0x258] sm:$0xff]
    %v1548 = vld [vmem:[#allocation12 + $0x260] sm:$0xff]
    %v1549 = vld [vmem:[#allocation12 + $0x268] sm:$0xff]
    %v1550 = vld [vmem:[#allocation12 + $0x270] sm:$0xff]
    %v1551 = vld [vmem:[#allocation12 + $0x278] sm:$0xff]
    %v1552 = vld [vmem:[#allocation12 + $0x280] sm:$0xff]
    %v1553 = vld [vmem:[#allocation12 + $0x288] sm:$0xff]
    %v1554 = vld [vmem:[#allocation12 + $0x290] sm:$0xff]
    %v1555 = vld [vmem:[#allocation12 + $0x298] sm:$0xff]
    %v1556 = vld [vmem:[#allocation12 + $0x2a0] sm:$0xff]
    %v1557 = vld [vmem:[#allocation12 + $0x2a8] sm:$0xff]
    %v1558 = vld [vmem:[#allocation12 + $0x2b0] sm:$0xff]
    %v1559 = vld [vmem:[#allocation12 + $0x2b8] sm:$0xff]
    %v1560 = vld [vmem:[#allocation12 + $0x2c0] sm:$0xff]
    %v1561 = vld [vmem:[#allocation12 + $0x2c8] sm:$0xff]
    %v1562 = vld [vmem:[#allocation12 + $0x2d0] sm:$0xff]
    %v1563 = vld [vmem:[#allocation12 + $0x2d8] sm:$0xff]
    %v1564 = vld [vmem:[#allocation12 + $0x2e0] sm:$0xff]
    %v1565 = vld [vmem:[#allocation12 + $0x2e8] sm:$0xff]
    %v1566 = vld [vmem:[#allocation12 + $0x2f0] sm:$0xff]
    %v1567 = vld [vmem:[#allocation12 + $0x2f8] sm:$0xff]
    %v1568 = vld [vmem:[#allocation12 + $0x300] sm:$0xff]
    %v1569 = vld [vmem:[#allocation12 + $0x308] sm:$0xff]
    %v1570 = vld [vmem:[#allocation12 + $0x310] sm:$0xff]
    %v1571 = vld [vmem:[#allocation12 + $0x318] sm:$0xff]
    %v1572 = vld [vmem:[#allocation12 + $0x320] sm:$0xff]
    %v1573 = vld [vmem:[#allocation12 + $0x328] sm:$0xff]
    %v1574 = vld [vmem:[#allocation12 + $0x330] sm:$0xff]
    %v1575 = vld [vmem:[#allocation12 + $0x338] sm:$0xff]
    %v1576 = vld [vmem:[#allocation12 + $0x340] sm:$0xff]
    %v1577 = vld [vmem:[#allocation12 + $0x348] sm:$0xff]
    %v1578 = vld [vmem:[#allocation12 + $0x350] sm:$0xff]
    %v1579 = vld [vmem:[#allocation12 + $0x358] sm:$0xff]
    %v1580 = vld [vmem:[#allocation12 + $0x360] sm:$0xff]
    %v1581 = vld [vmem:[#allocation12 + $0x368] sm:$0xff]
    %v1582 = vld [vmem:[#allocation12 + $0x370] sm:$0xff]
    %v1583 = vld [vmem:[#allocation12 + $0x378] sm:$0xff]
    %v1584 = vld [vmem:[#allocation12 + $0x380] sm:$0xff]
    %v1585 = vld [vmem:[#allocation12 + $0x388] sm:$0xff]
    %v1586 = vld [vmem:[#allocation12 + $0x390] sm:$0xff]
    %v1587 = vld [vmem:[#allocation12 + $0x398] sm:$0xff]
    %v1588 = vld [vmem:[#allocation12 + $0x3a0] sm:$0xff]
    %v1589 = vld [vmem:[#allocation12 + $0x3a8] sm:$0xff]
    %v1590 = vld [vmem:[#allocation12 + $0x3b0] sm:$0xff]
    %v1591 = vld [vmem:[#allocation12 + $0x3b8] sm:$0xff]
    %v1592 = vld [vmem:[#allocation12 + $0x3c0] sm:$0xff]
    %v1593 = vld [vmem:[#allocation12 + $0x3c8] sm:$0xff]
    %v1594 = vld [vmem:[#allocation12 + $0x3d0] sm:$0xff]
    %v1595 = vld [vmem:[#allocation12 + $0x3d8] sm:$0xff]
    %v1596 = vld [vmem:[#allocation12 + $0x3e0] sm:$0xff]
    %v1597 = vld [vmem:[#allocation12 + $0x3e8] sm:$0xff]
    %v1598 = vld [vmem:[#allocation12 + $0x3f0] sm:$0xff]
    %v1599 = vld [vmem:[#allocation12 + $0x3f8] sm:$0xff]
    %v1600 = vld [vmem:[#allocation4] sm:$0xff]
    loop: start=0, step=1, limit=16
    $region58: #{forward.6} parent=1 // loop_pre_header
      _
    $region59: #{forward.6} parent=1 // loop_header
      %s1602 = sphi 0, %s1606
      %p1603 = scmp.ge.s32.totalorder %s1602, 16
      %v1607 = vphi 0.0, %v2004
      %v1608 = vphi 0.0, %v2005
      %v1609 = vphi 0.0, %v2010
      %v1610 = vphi 0.0, %v2011
    $region60: #{forward.6} parent=1 // loop_header_branch
      %1605 = sbr.rel (%p1603) target = $region64
    $region61: #{forward.6} parent=1 // loop_body
      %s1611 = ssub.s32 15, %s1602
      %s1612 = smul.u32 %s1602, 4
      %s1613 = smul.addr %s1612, 4
      %s1614 = scalar_lea.vmem [#allocation2], %s1613
      %v1615 = vld [vmem:[%s1614] sm:$0xff]
      %v1616 = vld [vmem:[%s1614 + $0x8] sm:$0xff]
      %v1617 = vunpack.c.l.bf16 %v1615
      %v1618 = vunpack.c.h.bf16 %v1615
      %v1619 = vunpack.c.l.bf16 %v1616
      %v1620 = vunpack.c.h.bf16 %v1616
      %s1621 = smul.u32 %s1611, 4
      %s1622 = smul.addr %s1621, 4
      %s1623 = scalar_lea.vmem [#allocation3], %s1622
      %v1624 = vld [vmem:[%s1623] sm:$0xff]
      %v1625 = vld [vmem:[%s1623 + $0x8] sm:$0xff]
      %v1626 = vunpack.c.l.bf16 %v1624
      %v1627 = vunpack.c.h.bf16 %v1624
      %v1628 = vunpack.c.l.bf16 %v1625
      %v1629 = vunpack.c.h.bf16 %v1625
      %1630 = vmatprep.subr.mxu0 %v1473
      %1631 = vmatpush1.msra.mxu0 %v1472
      %1632 = vmatprep.subr.mxu0 %v1477
      %1633 = vmatpush1.msra.mxu0 %v1476
      %1634 = vmatprep.subr.mxu0 %v1481
      %1635 = vmatpush1.msra.mxu0 %v1480
      %1636 = vmatprep.subr.mxu0 %v1485
      %1637 = vmatpush1.msra.mxu0 %v1484
      %1638 = vmatprep.subr.mxu0 %v1489
      %1639 = vmatpush1.msra.mxu0 %v1488
      %1640 = vmatprep.subr.mxu0 %v1493
      %1641 = vmatpush1.msra.mxu0 %v1492
      %1642 = vmatprep.subr.mxu0 %v1497
      %1643 = vmatpush1.msra.mxu0 %v1496
      %1644 = vmatprep.subr.mxu0 %v1501
      %1645 = vmatpush1.msra.mxu0 %v1500
      %1646 = vmatprep.subr.mxu0 %v1505
      %1647 = vmatpush1.msra.mxu0 %v1504
      %1648 = vmatprep.subr.mxu0 %v1509
      %1649 = vmatpush1.msra.mxu0 %v1508
      %1650 = vmatprep.subr.mxu0 %v1513
      %1651 = vmatpush1.msra.mxu0 %v1512
      %1652 = vmatprep.subr.mxu0 %v1517
      %1653 = vmatpush1.msra.mxu0 %v1516
      %1654 = vmatprep.subr.mxu0 %v1521
      %1655 = vmatpush1.msra.mxu0 %v1520
      %1656 = vmatprep.subr.mxu0 %v1525
      %1657 = vmatpush1.msra.mxu0 %v1524
      %1658 = vmatprep.subr.mxu0 %v1529
      %1659 = vmatpush1.msra.mxu0 %v1528
      %1660 = vmatprep.subr.mxu0 %v1533
      %1661 = vmatpush1.msra.mxu0 %v1532
      %1662 = vmatprep.subr.mxu0 0.0
      %1663 = vmatpush1.msra.mxu0 0.0
      %1664 = vmatprep.subr.mxu0 0.0
      %1665 = vmatpush1.msra.mxu0 0.0
      %1666 = vmatprep.subr.mxu0 0.0
      %1667 = vmatpush1.msra.mxu0 0.0
      %1668 = vmatprep.subr.mxu0 0.0
      %1669 = vmatpush1.msra.mxu0 0.0
      %1670 = vmatprep.subr.mxu0 0.0
      %1671 = vmatpush1.msra.mxu0 0.0
      %1672 = vmatprep.subr.mxu0 0.0
      %1673 = vmatpush1.msra.mxu0 0.0
      %1674 = vmatprep.subr.mxu0 0.0
      %1675 = vmatpush1.msra.mxu0 0.0
      %1676 = vmatprep.subr.mxu0 0.0
      %1677 = vmatpush1.msra.mxu0 0.0
      %1678 = vmatprep.subr.mxu0 0.0
      %1679 = vmatpush1.msra.mxu0 0.0
      %1680 = vmatprep.subr.mxu0 0.0
      %1681 = vmatpush1.msra.mxu0 0.0
      %1682 = vmatprep.subr.mxu0 0.0
      %1683 = vmatpush1.msra.mxu0 0.0
      %1684 = vmatprep.subr.mxu0 0.0
      %1685 = vmatpush1.msra.mxu0 0.0
      %1686 = vmatprep.subr.mxu0 0.0
      %1687 = vmatpush1.msra.mxu0 0.0
      %1688 = vmatprep.subr.mxu0 0.0
      %1689 = vmatpush1.msra.mxu0 0.0
      %1690 = vmatprep.subr.mxu0 0.0
      %1691 = vmatpush1.msra.mxu0 0.0
      %1692 = vmatprep.subr.mxu0 0.0
      %1693 = vmatpush1.msra.mxu0 0.0
      %1694 = vmatprep.mubr.f32.mxu0 0.0
      %1695 = vmatmul.mubr.f32.gmra.mrb[0].mxu0 %v1607
      %v1696 = vpop.f32.mrb[0].mxu0
      %v1697 = vadd.f32 0.0, %v1696
      %v1698 = vpop.f32.mrb[0].mxu0
      %v1699 = vadd.f32 0.0, %v1698
      %1700 = vdwg.mxu0
      %1701 = vmatprep.subr.mxu0 %v1475
      %1702 = vmatpush1.msra.mxu0 %v1474
      %1703 = vmatprep.subr.mxu0 %v1479
      %1704 = vmatpush1.msra.mxu0 %v1478
      %1705 = vmatprep.subr.mxu0 %v1483
      %1706 = vmatpush1.msra.mxu0 %v1482
      %1707 = vmatprep.subr.mxu0 %v1487
      %1708 = vmatpush1.msra.mxu0 %v1486
      %1709 = vmatprep.subr.mxu0 %v1491
      %1710 = vmatpush1.msra.mxu0 %v1490
      %1711 = vmatprep.subr.mxu0 %v1495
      %1712 = vmatpush1.msra.mxu0 %v1494
      %1713 = vmatprep.subr.mxu0 %v1499
      %1714 = vmatpush1.msra.mxu0 %v1498
      %1715 = vmatprep.subr.mxu0 %v1503
      %1716 = vmatpush1.msra.mxu0 %v1502
      %1717 = vmatprep.subr.mxu0 %v1507
      %1718 = vmatpush1.msra.mxu0 %v1506
      %1719 = vmatprep.subr.mxu0 %v1511
      %1720 = vmatpush1.msra.mxu0 %v1510
      %1721 = vmatprep.subr.mxu0 %v1515
      %1722 = vmatpush1.msra.mxu0 %v1514
      %1723 = vmatprep.subr.mxu0 %v1519
      %1724 = vmatpush1.msra.mxu0 %v1518
      %1725 = vmatprep.subr.mxu0 %v1523
      %1726 = vmatpush1.msra.mxu0 %v1522
      %1727 = vmatprep.subr.mxu0 %v1527
      %1728 = vmatpush1.msra.mxu0 %v1526
      %1729 = vmatprep.subr.mxu0 %v1531
      %1730 = vmatpush1.msra.mxu0 %v1530
      %1731 = vmatprep.subr.mxu0 %v1535
      %1732 = vmatpush1.msra.mxu0 %v1534
      %1733 = vmatprep.subr.mxu0 0.0
      %1734 = vmatpush1.msra.mxu0 0.0
      %1735 = vmatprep.subr.mxu0 0.0
      %1736 = vmatpush1.msra.mxu0 0.0
      %1737 = vmatprep.subr.mxu0 0.0
      %1738 = vmatpush1.msra.mxu0 0.0
      %1739 = vmatprep.subr.mxu0 0.0
      %1740 = vmatpush1.msra.mxu0 0.0
      %1741 = vmatprep.subr.mxu0 0.0
      %1742 = vmatpush1.msra.mxu0 0.0
      %1743 = vmatprep.subr.mxu0 0.0
      %1744 = vmatpush1.msra.mxu0 0.0
      %1745 = vmatprep.subr.mxu0 0.0
      %1746 = vmatpush1.msra.mxu0 0.0
      %1747 = vmatprep.subr.mxu0 0.0
      %1748 = vmatpush1.msra.mxu0 0.0
      %1749 = vmatprep.subr.mxu0 0.0
      %1750 = vmatpush1.msra.mxu0 0.0
      %1751 = vmatprep.subr.mxu0 0.0
      %1752 = vmatpush1.msra.mxu0 0.0
      %1753 = vmatprep.subr.mxu0 0.0
      %1754 = vmatpush1.msra.mxu0 0.0
      %1755 = vmatprep.subr.mxu0 0.0
      %1756 = vmatpush1.msra.mxu0 0.0
      %1757 = vmatprep.subr.mxu0 0.0
      %1758 = vmatpush1.msra.mxu0 0.0
      %1759 = vmatprep.subr.mxu0 0.0
      %1760 = vmatpush1.msra.mxu0 0.0
      %1761 = vmatprep.subr.mxu0 0.0
      %1762 = vmatpush1.msra.mxu0 0.0
      %1763 = vmatprep.subr.mxu0 0.0
      %1764 = vmatpush1.msra.mxu0 0.0
      %1765 = vmatprep.mubr.f32.mxu0 0.0
      %1766 = vmatmul.mubr.f32.gmra.mrb[0].mxu0 %v1607
      %v1767 = vpop.f32.mrb[0].mxu0
      %v1768 = vadd.f32 0.0, %v1767
      %v1769 = vpop.f32.mrb[0].mxu0
      %v1770 = vadd.f32 0.0, %v1769
      %1771 = vdwg.mxu0
      %1772 = vmatprep.subr.mxu0 %v1537
      %1773 = vmatpush1.msra.mxu0 %v1536
      %1774 = vmatprep.subr.mxu0 %v1541
      %1775 = vmatpush1.msra.mxu0 %v1540
      %1776 = vmatprep.subr.mxu0 %v1545
      %1777 = vmatpush1.msra.mxu0 %v1544
      %1778 = vmatprep.subr.mxu0 %v1549
      %1779 = vmatpush1.msra.mxu0 %v1548
      %1780 = vmatprep.subr.mxu0 %v1553
      %1781 = vmatpush1.msra.mxu0 %v1552
      %1782 = vmatprep.subr.mxu0 %v1557
      %1783 = vmatpush1.msra.mxu0 %v1556
      %1784 = vmatprep.subr.mxu0 %v1561
      %1785 = vmatpush1.msra.mxu0 %v1560
      %1786 = vmatprep.subr.mxu0 %v1565
      %1787 = vmatpush1.msra.mxu0 %v1564
      %1788 = vmatprep.subr.mxu0 %v1569
      %1789 = vmatpush1.msra.mxu0 %v1568
      %1790 = vmatprep.subr.mxu0 %v1573
      %1791 = vmatpush1.msra.mxu0 %v1572
      %1792 = vmatprep.subr.mxu0 %v1577
      %1793 = vmatpush1.msra.mxu0 %v1576
      %1794 = vmatprep.subr.mxu0 %v1581
      %1795 = vmatpush1.msra.mxu0 %v1580
      %1796 = vmatprep.subr.mxu0 %v1585
      %1797 = vmatpush1.msra.mxu0 %v1584
      %1798 = vmatprep.subr.mxu0 %v1589
      %1799 = vmatpush1.msra.mxu0 %v1588
      %1800 = vmatprep.subr.mxu0 %v1593
      %1801 = vmatpush1.msra.mxu0 %v1592
      %1802 = vmatprep.subr.mxu0 %v1597
      %1803 = vmatpush1.msra.mxu0 %v1596
      %1804 = vmatprep.subr.mxu0 0.0
      %1805 = vmatpush1.msra.mxu0 0.0
      %1806 = vmatprep.subr.mxu0 0.0
      %1807 = vmatpush1.msra.mxu0 0.0
      %1808 = vmatprep.subr.mxu0 0.0
      %1809 = vmatpush1.msra.mxu0 0.0
      %1810 = vmatprep.subr.mxu0 0.0
      %1811 = vmatpush1.msra.mxu0 0.0
      %1812 = vmatprep.subr.mxu0 0.0
      %1813 = vmatpush1.msra.mxu0 0.0
      %1814 = vmatprep.subr.mxu0 0.0
      %1815 = vmatpush1.msra.mxu0 0.0
      %1816 = vmatprep.subr.mxu0 0.0
      %1817 = vmatpush1.msra.mxu0 0.0
      %1818 = vmatprep.subr.mxu0 0.0
      %1819 = vmatpush1.msra.mxu0 0.0
      %1820 = vmatprep.subr.mxu0 0.0
      %1821 = vmatpush1.msra.mxu0 0.0
      %1822 = vmatprep.subr.mxu0 0.0
      %1823 = vmatpush1.msra.mxu0 0.0
      %1824 = vmatprep.subr.mxu0 0.0
      %1825 = vmatpush1.msra.mxu0 0.0
      %1826 = vmatprep.subr.mxu0 0.0
      %1827 = vmatpush1.msra.mxu0 0.0
      %1828 = vmatprep.subr.mxu0 0.0
      %1829 = vmatpush1.msra.mxu0 0.0
      %1830 = vmatprep.subr.mxu0 0.0
      %1831 = vmatpush1.msra.mxu0 0.0
      %1832 = vmatprep.subr.mxu0 0.0
      %1833 = vmatpush1.msra.mxu0 0.0
      %1834 = vmatprep.subr.mxu0 0.0
      %1835 = vmatpush1.msra.mxu0 0.0
      %1836 = vmatprep.mubr.f32.mxu0 0.0
      %1837 = vmatmul.mubr.f32.gmra.mrb[0].mxu0 %v1608
      %v1838 = vpop.f32.mrb[0].mxu0
      %v1839 = vadd.f32 0.0, %v1838
      %v1840 = vpop.f32.mrb[0].mxu0
      %v1841 = vadd.f32 0.0, %v1840
      %1842 = vdwg.mxu0
      %1843 = vmatprep.subr.mxu0 %v1539
      %1844 = vmatpush1.msra.mxu0 %v1538
      %1845 = vmatprep.subr.mxu0 %v1543
      %1846 = vmatpush1.msra.mxu0 %v1542
      %1847 = vmatprep.subr.mxu0 %v1547
      %1848 = vmatpush1.msra.mxu0 %v1546
      %1849 = vmatprep.subr.mxu0 %v1551
      %1850 = vmatpush1.msra.mxu0 %v1550
      %1851 = vmatprep.subr.mxu0 %v1555
      %1852 = vmatpush1.msra.mxu0 %v1554
      %1853 = vmatprep.subr.mxu0 %v1559
      %1854 = vmatpush1.msra.mxu0 %v1558
      %1855 = vmatprep.subr.mxu0 %v1563
      %1856 = vmatpush1.msra.mxu0 %v1562
      %1857 = vmatprep.subr.mxu0 %v1567
      %1858 = vmatpush1.msra.mxu0 %v1566
      %1859 = vmatprep.subr.mxu0 %v1571
      %1860 = vmatpush1.msra.mxu0 %v1570
      %1861 = vmatprep.subr.mxu0 %v1575
      %1862 = vmatpush1.msra.mxu0 %v1574
      %1863 = vmatprep.subr.mxu0 %v1579
      %1864 = vmatpush1.msra.mxu0 %v1578
      %1865 = vmatprep.subr.mxu0 %v1583
      %1866 = vmatpush1.msra.mxu0 %v1582
      %1867 = vmatprep.subr.mxu0 %v1587
      %1868 = vmatpush1.msra.mxu0 %v1586
      %1869 = vmatprep.subr.mxu0 %v1591
      %1870 = vmatpush1.msra.mxu0 %v1590
      %1871 = vmatprep.subr.mxu0 %v1595
      %1872 = vmatpush1.msra.mxu0 %v1594
      %1873 = vmatprep.subr.mxu0 %v1599
      %1874 = vmatpush1.msra.mxu0 %v1598
      %1875 = vmatprep.subr.mxu0 0.0
      %1876 = vmatpush1.msra.mxu0 0.0
      %1877 = vmatprep.subr.mxu0 0.0
      %1878 = vmatpush1.msra.mxu0 0.0
      %1879 = vmatprep.subr.mxu0 0.0
      %1880 = vmatpush1.msra.mxu0 0.0
      %1881 = vmatprep.subr.mxu0 0.0
      %1882 = vmatpush1.msra.mxu0 0.0
      %1883 = vmatprep.subr.mxu0 0.0
      %1884 = vmatpush1.msra.mxu0 0.0
      %1885 = vmatprep.subr.mxu0 0.0
      %1886 = vmatpush1.msra.mxu0 0.0
      %1887 = vmatprep.subr.mxu0 0.0
      %1888 = vmatpush1.msra.mxu0 0.0
      %1889 = vmatprep.subr.mxu0 0.0
      %1890 = vmatpush1.msra.mxu0 0.0
      %1891 = vmatprep.subr.mxu0 0.0
      %1892 = vmatpush1.msra.mxu0 0.0
      %1893 = vmatprep.subr.mxu0 0.0
      %1894 = vmatpush1.msra.mxu0 0.0
      %1895 = vmatprep.subr.mxu0 0.0
      %1896 = vmatpush1.msra.mxu0 0.0
      %1897 = vmatprep.subr.mxu0 0.0
      %1898 = vmatpush1.msra.mxu0 0.0
      %1899 = vmatprep.subr.mxu0 0.0
      %1900 = vmatpush1.msra.mxu0 0.0
      %1901 = vmatprep.subr.mxu0 0.0
      %1902 = vmatpush1.msra.mxu0 0.0
      %1903 = vmatprep.subr.mxu0 0.0
      %1904 = vmatpush1.msra.mxu0 0.0
      %1905 = vmatprep.subr.mxu0 0.0
      %1906 = vmatpush1.msra.mxu0 0.0
      %1907 = vmatprep.mubr.f32.mxu0 0.0
      %1908 = vmatmul.mubr.f32.gmra.mrb[0].mxu0 %v1608
      %v1909 = vpop.f32.mrb[0].mxu0
      %v1910 = vadd.f32 0.0, %v1909
      %v1911 = vpop.f32.mrb[0].mxu0
      %v1912 = vadd.f32 0.0, %v1911
      %1913 = vdwg.mxu0
      %v1914 = vadd.f32 %v1617, %v1697
      %v1915 = vadd.f32 %v1618, %v1699
      %v1916 = vadd.f32 %v1619, %v1768
      %v1917 = vadd.f32 %v1620, %v1770
      %v1918 = vadd.f32 %v1626, %v1839
      %v1919 = vadd.f32 %v1627, %v1841
      %v1920 = vadd.f32 %v1628, %v1910
      %v1921 = vadd.f32 %v1629, %v1912
      %v1922 = vxor.u32 %v1914, 2147483648
      %v1923 = vxor.u32 %v1918, 2147483648
      %v1924 = vmul.f32 %v1922, 1.442695
      %v1925 = vpow.pop %v1924
      %v1926 = vmul.f32 %v1923, 1.442695
      %v1927 = vpow.pop %v1926
      %v1928 = vadd.f32 %v1925, 1.0
      %v1929 = vadd.f32 %v1927, 1.0
      %v1930 = vrcp.pop %v1928
      %v1931 = vmul.f32 1.0, %v1930
      %v1932 = vrcp.pop %v1929
      %v1933 = vmul.f32 1.0, %v1932
      %v1934 = vxor.u32 %v1915, 2147483648
      %v1935 = vxor.u32 %v1919, 2147483648
      %v1936 = vmul.f32 %v1934, 1.442695
      %v1937 = vpow.pop %v1936
      %v1938 = vmul.f32 %v1935, 1.442695
      %v1939 = vpow.pop %v1938
      %v1940 = vadd.f32 %v1937, 1.0
      %v1941 = vadd.f32 %v1939, 1.0
      %v1942 = vrcp.pop %v1940
      %v1943 = vmul.f32 1.0, %v1942
      %v1944 = vrcp.pop %v1941
      %v1945 = vmul.f32 1.0, %v1944
      %v1946 = vtanh.pop %v1916
      %v1947 = vtanh.pop %v1920
      %v1948 = vxor.u32 %v1917, 2147483648
      %v1949 = vxor.u32 %v1921, 2147483648
      %v1950 = vmul.f32 %v1948, 1.442695
      %v1951 = vpow.pop %v1950
      %v1952 = vmul.f32 %v1949, 1.442695
      %v1953 = vpow.pop %v1952
      %v1954 = vadd.f32 %v1951, 1.0
      %v1955 = vadd.f32 %v1953, 1.0
      %v1956 = vrcp.pop %v1954
      %v1957 = vmul.f32 1.0, %v1956
      %v1958 = vrcp.pop %v1955
      %v1959 = vmul.f32 1.0, %v1958
      %v1960 = vmul.f32 %v1943, %v1609
      %v1961 = vmul.f32 %v1945, %v1610
      %v1962 = vmul.f32 %v1931, %v1946
      %v1963 = vmul.f32 %v1933, %v1947
      %v1964 = vadd.f32 %v1960, %v1962
      %v1965 = vadd.f32 %v1961, %v1963
      %v1966 = vtanh.pop %v1964
      %v1967 = vtanh.pop %v1965
      %v1968 = vmul.f32 %v1957, %v1966
      %v1969 = vmul.f32 %v1959, %v1967
      %v1970 = vstv %s1602
      %vm1971 = vcmp.gt.s32.totalorder %v1600, %v1970
      %v1972 = vsel %vm1971, 1, 0
      %v1973 = vcvt.s32.f32 %v1972
      %v1974 = vstv %s1611
      %vm1975 = vcmp.gt.s32.totalorder %v1600, %v1974
      %v1976 = vsel %vm1975, 1, 0
      %v1977 = vcvt.s32.f32 %v1976
      %1979 = vset.pattern.permute.xlu0 0
      %1980 = vperm.xlu0 %1979, %v1973
      %v1981 = vpop.permute.xlu0 %1980
      %1984 = vset.pattern.permute.xlu0 0
      %1985 = vperm.xlu0 %1984, %v1977
      %v1986 = vpop.permute.xlu0 %1985
      %v1988 = vmul.f32 %v1981, %v1968
      %v1989 = vmul.f32 %v1986, %v1969
      %v1990 = vsub.f32 1.0, %v1973
      %v1991 = vsub.f32 1.0, %v1977
      %1993 = vset.pattern.permute.xlu0 0
      %1994 = vperm.xlu0 %1993, %v1990
      %v1995 = vpop.permute.xlu0 %1994
      %1998 = vset.pattern.permute.xlu0 0
      %1999 = vperm.xlu0 %1998, %v1991
      %v2000 = vpop.permute.xlu0 %1999
      %v2002 = vmul.f32 %v1995, %v1607
      %v2003 = vmul.f32 %v2000, %v1608
      %v2004 = vadd.f32 %v1988, %v2002
      %v2005 = vadd.f32 %v1989, %v2003
      %v2006 = vmul.f32 %v1981, %v1964
      %v2007 = vmul.f32 %v1986, %v1965
      %v2008 = vmul.f32 %v1995, %v1609
      %v2009 = vmul.f32 %v2000, %v1610
      %v2010 = vadd.f32 %v2006, %v2008
      %v2011 = vadd.f32 %v2007, %v2009
      %v2012 = vmul.f32 %v2004, %v1981
      %s2013 = smul.u32 %s1602, 8
      %s2014 = scalar_lea.vmem [#allocation16], %s2013
      %2015 = vst [vmem:[%s2014] sm:$0xff] %v2012
      %v2016 = vmul.f32 %v2005, %v1986
      %s2017 = smul.u32 %s1611, 8
      %s2018 = scalar_lea.vmem [#allocation17], %s2017
      %2019 = vst [vmem:[%s2018] sm:$0xff] %v2016
    $region62: #{forward.6} parent=1 // loop_footer
      %s1606 = sadd.s32 1, %s1602
    $region63: #{forward.6} parent=1 // loop_footer_branch
      %1601 = sbr.rel target = $region59
    $region64: #{forward.6} parent=1 // loop_exit
      _
    // Predicated region
    $region65: #{forward.6} parent=1 // pred_check
      _
    $region66: #{forward.6} parent=1 // pred_check_branch
      %2021 = sbr.rel (0) target = $region68
    $region67: #{forward.6} parent=1 // pred_region
      %s2023 = ssub.s32 2048, 2048
      %2024 = vsyncadd [#allocation6], %s2023
      %s2025 = sshll.u32 [#allocation16], 4
      %s2026 = int_to_ptr.vmem [resolvable:$true] %s2025
      %2031 = dma.vmem_to_hbm [thread:$0]  %s2026, 2048, %s7, [#allocation6], 128, 128, 8
    $region68: #{forward.6} parent=1 // pred_fallthru
      _
    // Predicated region
    $region69: #{forward.6} parent=1 // pred_check
      _
    $region70: #{forward.6} parent=1 // pred_check_branch
      %2033 = sbr.rel (0) target = $region72
    $region71: #{forward.6} parent=1 // pred_region
      %s2035 = ssub.s32 2048, 2048
      %2036 = vsyncadd [#allocation18], %s2035
      %s2037 = sshll.u32 [#allocation17], 4
      %s2038 = int_to_ptr.vmem [resolvable:$true] %s2037
      %2043 = dma.vmem_to_hbm [thread:$0]  %s2038, 2048, %s8, [#allocation18], 128, 128, 8
    $region72: #{forward.6} parent=1 // pred_fallthru
      _
    // Predicated region
    $region73: #{forward.6} parent=1 // pred_check
      _
    $region74: #{forward.6} parent=1 // pred_check_branch
      %2045 = sbr.rel (0) target = $region76
    $region75: #{forward.6} parent=1 // pred_region
      %2046 = dma.done [#allocation6], 2048
    $region76: #{forward.6} parent=1 // pred_fallthru
      _
    // Predicated region
    $region77: #{forward.6} parent=1 // pred_check
      _
    $region78: #{forward.6} parent=1 // pred_check_branch
      %2048 = sbr.rel (0) target = $region80
    $region79: #{forward.6} parent=1 // pred_region
      %2049 = dma.done [#allocation18], 2048
    $region80: #{forward.6} parent=1 // pred_fallthru
      _
    %2050 = vsyncpa [#allocation5], 1
    %2051 = vsyncpa [#allocation8], 1
    %2052 = vsyncpa [#allocation11], 1
    %2053 = vsyncpa [#allocation14], 1
    %2054 = vsyncpa [#allocation6], 1
    %2055 = vsyncpa [#allocation18], 1

// kernel: forward.4
$region0: #{forward.4}
  #allocation0 [shape = 'u32[]', space=smem, size = 0x4, offset = 0x4, fixed_abs, tag = 'smem constant byte address 0x4 - core index']
  #allocation1 [shape = 'u32[144,128]{1,0:T(1,128)}', space=vmem, size = 0x12000, scoped, tag = 'internal scratch']
  %s0 = inlined_call_operand.hbm [shape: f32[16,4,128], index: 0, kind: input, shape index: {}]
  %s1 = inlined_call_operand.hbm [shape: bf16[128,1536], index: 1, kind: input, shape index: {}]
  %s2 = inlined_call_operand.hbm [shape: f32[1,1536], index: 2, kind: input, shape index: {}]
  %s3 = inlined_call_operand.hbm [shape: bf16[512,128], index: 3, kind: input, shape index: {}]
  %s4 = inlined_call_operand.hbm [shape: f32[1,128], index: 4, kind: input, shape index: {}]
  %s5 = inlined_call_operand.hbm [shape: f32[1,128], index: 5, kind: input, shape index: {}]
  %s6 = inlined_call_operand.hbm [shape: f32[1,128], index: 6, kind: input, shape index: {}]
  %s7 = inlined_call_operand.hbm [shape: bf16[128,128], index: 7, kind: input, shape index: {}]
  %s8 = inlined_call_operand.hbm [shape: f32[1,128], index: 8, kind: input, shape index: {}]
  %s9 = inlined_call_operand.hbm [shape: bf16[128,128], index: 9, kind: input, shape index: {}]
  %s10 = inlined_call_operand.hbm [shape: f32[1,128], index: 10, kind: input, shape index: {}]
  %s11 = inlined_call_operand.hbm [shape: f32[1,128], index: 11, kind: input, shape index: {}]
  %s12 = inlined_call_operand.hbm [shape: f32[1,128], index: 12, kind: input, shape index: {}]
  %s13 = inlined_call_operand.hbm [shape: f32[16,4,128], index: 13, kind: output, shape index: {}]
  %s14 = sld [smem:[#allocation0]]
  $region137: #{forward.4} parent=0
    _
  %s16 = ssub.s32 1, %s14
  %s17 = scalar_select 0, %s16, %s14
  $region1: #{forward.4} parent=0
    #allocation2 [shape = 'u8[32768]{0}', space=vmem, size = 0x8000, scoped, tag = 'input window, operand 0']
    #allocation3 [shape = 's32[2]{0}', space=sflag, size = 0x8, scoped, tag = 'scoped memory for forward.4']
    #allocation4 [shape = 's32[2]{0}', space=sflag, size = 0x8, scoped, tag = 'scoped memory for forward.4']
    #allocation5 [shape = 'u8[393216]{0}', space=vmem, size = 0x60000, scoped, tag = 'input window, operand 1, single buffered']
    #allocation6 [shape = 's32[1]{0}', space=sflag, size = 0x4, scoped, tag = 'scoped memory for forward.4']
    #allocation7 [shape = 'u8[6144]{0}', space=vmem, size = 0x1800, scoped, tag = 'input window, operand 2, single buffered']
    #allocation8 [shape = 'u8[131072]{0}', space=vmem, size = 0x20000, scoped, tag = 'input window, operand 3, single buffered']
    #allocation9 [shape = 's32[1]{0}', space=sflag, size = 0x4, scoped, tag = 'scoped memory for forward.4']
    #allocation10 [shape = 'u8[512]{0}', space=vmem, size = 0x400, scoped, tag = 'input window, operand 4, single buffered']
    #allocation11 [shape = 'u8[512]{0}', space=vmem, size = 0x400, scoped, tag = 'input window, operand 5, single buffered']
    #allocation12 [shape = 's32[1]{0}', space=sflag, size = 0x4, scoped, tag = 'scoped memory for forward.4']
    #allocation13 [shape = 'u8[512]{0}', space=vmem, size = 0x400, scoped, tag = 'input window, operand 6, single buffered']
    #allocation14 [shape = 'u8[32768]{0}', space=vmem, size = 0x8000, scoped, tag = 'input window, operand 7, single buffered']
    #allocation15 [shape = 's32[1]{0}', space=sflag, size = 0x4, scoped, tag = 'scoped memory for forward.4']
    #allocation16 [shape = 'u8[512]{0}', space=vmem, size = 0x400, scoped, tag = 'input window, operand 8, single buffered']
    #allocation17 [shape = 'u8[32768]{0}', space=vmem, size = 0x8000, scoped, tag = 'input window, operand 9, single buffered']
    #allocation18 [shape = 's32[1]{0}', space=sflag, size = 0x4, scoped, tag = 'scoped memory for forward.4']
    #allocation19 [shape = 'u8[512]{0}', space=vmem, size = 0x400, scoped, tag = 'input window, operand 10, single buffered']
    #allocation20 [shape = 'u8[512]{0}', space=vmem, size = 0x400, scoped, tag = 'input window, operand 11, single buffered']
    #allocation21 [shape = 's32[1]{0}', space=sflag, size = 0x4, scoped, tag = 'scoped memory for forward.4']
    #allocation22 [shape = 'u8[512]{0}', space=vmem, size = 0x400, scoped, tag = 'input window, operand 12, single buffered']
    #allocation23 [shape = 'u8[32768]{0}', space=vmem, size = 0x8000, scoped, tag = 'output window, operand 0']
    %18 = vsyncpa [#allocation3], 0
    %s19 = scalar_lea.sflag [#allocation3], 1
    %20 = vsyncpa %s19, 0
    %21 = vsyncpa [#allocation6], 0
    %22 = vsyncpa [#allocation9], 0
    %23 = vsyncpa [#allocation12], 0
    %24 = vsyncpa [#allocation15], 0
    %25 = vsyncpa [#allocation18], 0
    %26 = vsyncpa [#allocation21], 0
    %27 = vsyncpa [#allocation4], 0
    %s28 = scalar_lea.sflag [#allocation4], 1
    %29 = vsyncpa %s28, 0
    loop: start=0, step=1, limit=4
    $region2: #{forward.4} parent=1 // loop_pre_header
      _
    $region3: #{forward.4} parent=1 // loop_header
      %s31 = sphi 0, %s35
      %p32 = scmp.ge.s32.totalorder %s31, 4
      %s41 = sphi 0, %s43
      %s44 = sphi 0, %s41
      %s45 = sphi 0, %s44
      %s61 = sphi 0, %s45
      %s65 = sphi 0, %s65
      %s67 = sphi 0, %s65
      %s68 = sphi 0, %s67
      %s82 = sphi 0, %s68
      %s86 = sphi 0, %s86
      %s88 = sphi 0, %s86
      %s89 = sphi 0, %s88
      %s103 = sphi 0, %s89
      %s107 = sphi 0, %s107
      %s109 = sphi 0, %s107
      %s110 = sphi 0, %s109
      %s124 = sphi 0, %s110
      %s128 = sphi 0, %s128
      %s130 = sphi 0, %s128
      %s131 = sphi 0, %s130
      %s145 = sphi 0, %s131
      %s149 = sphi 0, %s149
      %s151 = sphi 0, %s149
      %s152 = sphi 0, %s151
      %s166 = sphi 0, %s152
      %s170 = sphi 0, %s170
      %s172 = sphi 0, %s170
      %s173 = sphi 0, %s172
      %s187 = sphi 0, %s173
      %s191 = sphi 0, %s191
      %s193 = sphi 0, %s191
      %s194 = sphi 0, %s193
      %s208 = sphi 0, %s194
      %s212 = sphi 0, %s212
      %s214 = sphi 0, %s212
      %s215 = sphi 0, %s214
      %s229 = sphi 0, %s215
      %s233 = sphi 0, %s233
      %s235 = sphi 0, %s233
      %s236 = sphi 0, %s235
      %s250 = sphi 0, %s236
      %s254 = sphi 0, %s254
      %s256 = sphi 0, %s254
      %s257 = sphi 0, %s256
      %s271 = sphi 0, %s257
      %s275 = sphi 0, %s275
      %s277 = sphi 0, %s275
      %s278 = sphi 0, %s277
      %s292 = sphi 0, %s278
      %s296 = sphi 0, %s296
      %s298 = sphi 0, %s296
      %s299 = sphi 0, %s298
      %s313 = sphi 0, %s299
      %s319 = sphi 0, %s321
      %s322 = sphi 0, %s319
      %s323 = sphi 0, %s322
      %s339 = sphi 0, %s323
    $region4: #{forward.4} parent=1 // loop_header_branch
      %34 = sbr.rel (%p32) target = $region8
    $region5: #{forward.4} parent=1 // loop_body
      %s36 = ssub.s32 %s31, 1
      %s37 = ssub.s32 %s31, 2
      %s38 = sadd.s32 %s31, 1
      %s39 = ssub.s32 %s31, %s38
      %p40 = scmp.eq.s32.totalorder %s39, 0
      %s42 = sadd.s32 %s41, 1
      %s43 = scalar_select %p40, %s41, %s42
      %p46 = pneg %p40
      %p47 = scmp.eq.s32.totalorder %s31, 1
      %p48 = por %p46, %p47
      %p49 = scmp.ne.s32.totalorder %s41, %s44
      %p50 = scmp.eq.s32.totalorder %s31, 0
      %p51 = por %p49, %p50
      %p52 = scmp.ne.s32.totalorder %s41, %s44
      %p53 = scmp.eq.s32.totalorder %s36, 1
      %p54 = por %p52, %p53
      %p55 = scmp.ne.s32.totalorder %s44, %s45
      %p56 = scmp.eq.s32.totalorder %s36, 0
      %p57 = por %p55, %p56
      %p58 = scmp.ne.s32.totalorder %s44, %s45
      %p59 = scmp.eq.s32.totalorder %s37, 1
      %p60 = por %p58, %p59
      %p62 = scmp.ne.s32.totalorder %s45, %s61
      %p63 = scmp.eq.s32.totalorder %s37, 0
      %p64 = por %p62, %p63
      %s66 = sadd.s32 %s65, 1
      %p69 = scmp.eq.s32.totalorder %s31, 1
      %p70 = scmp.ne.s32.totalorder %s65, %s67
      %p71 = scmp.eq.s32.totalorder %s31, 0
      %p72 = por %p70, %p71
      %p73 = scmp.ne.s32.totalorder %s65, %s67
      %p74 = scmp.eq.s32.totalorder %s36, 1
      %p75 = por %p73, %p74
      %p76 = scmp.ne.s32.totalorder %s67, %s68
      %p77 = scmp.eq.s32.totalorder %s36, 0
      %p78 = por %p76, %p77
      %p79 = scmp.ne.s32.totalorder %s67, %s68
      %p80 = scmp.eq.s32.totalorder %s37, 1
      %p81 = por %p79, %p80
      %p83 = scmp.ne.s32.totalorder %s68, %s82
      %p84 = scmp.eq.s32.totalorder %s37, 0
      %p85 = por %p83, %p84
      %s87 = sadd.s32 %s86, 1
      %p90 = scmp.eq.s32.totalorder %s31, 1
      %p91 = scmp.ne.s32.totalorder %s86, %s88
      %p92 = scmp.eq.s32.totalorder %s31, 0
      %p93 = por %p91, %p92
      %p94 = scmp.ne.s32.totalorder %s86, %s88
      %p95 = scmp.eq.s32.totalorder %s36, 1
      %p96 = por %p94, %p95
      %p97 = scmp.ne.s32.totalorder %s88, %s89
      %p98 = scmp.eq.s32.totalorder %s36, 0
      %p99 = por %p97, %p98
      %p100 = scmp.ne.s32.totalorder %s88, %s89
      %p101 = scmp.eq.s32.totalorder %s37, 1
      %p102 = por %p100, %p101
      %p104 = scmp.ne.s32.totalorder %s89, %s103
      %p105 = scmp.eq.s32.totalorder %s37, 0
      %p106 = por %p104, %p105
      %s108 = sadd.s32 %s107, 1
      %p111 = scmp.eq.s32.totalorder %s31, 1
      %p112 = scmp.ne.s32.totalorder %s107, %s109
      %p113 = scmp.eq.s32.totalorder %s31, 0
      %p114 = por %p112, %p113
      %p115 = scmp.ne.s32.totalorder %s107, %s109
      %p116 = scmp.eq.s32.totalorder %s36, 1
      %p117 = por %p115, %p116
      %p118 = scmp.ne.s32.totalorder %s109, %s110
      %p119 = scmp.eq.s32.totalorder %s36, 0
      %p120 = por %p118, %p119
      %p121 = scmp.ne.s32.totalorder %s109, %s110
      %p122 = scmp.eq.s32.totalorder %s37, 1
      %p123 = por %p121, %p122
      %p125 = scmp.ne.s32.totalorder %s110, %s124
      %p126 = scmp.eq.s32.totalorder %s37, 0
      %p127 = por %p125, %p126
      %s129 = sadd.s32 %s128, 1
      %p132 = scmp.eq.s32.totalorder %s31, 1
      %p133 = scmp.ne.s32.totalorder %s128, %s130
      %p134 = scmp.eq.s32.totalorder %s31, 0
      %p135 = por %p133, %p134
      %p136 = scmp.ne.s32.totalorder %s128, %s130
      %p137 = scmp.eq.s32.totalorder %s36, 1
      %p138 = por %p136, %p137
      %p139 = scmp.ne.s32.totalorder %s130, %s131
      %p140 = scmp.eq.s32.totalorder %s36, 0
      %p141 = por %p139, %p140
      %p142 = scmp.ne.s32.totalorder %s130, %s131
      %p143 = scmp.eq.s32.totalorder %s37, 1
      %p144 = por %p142, %p143
      %p146 = scmp.ne.s32.totalorder %s131, %s145
      %p147 = scmp.eq.s32.totalorder %s37, 0
      %p148 = por %p146, %p147
      %s150 = sadd.s32 %s149, 1
      %p153 = scmp.eq.s32.totalorder %s31, 1
      %p154 = scmp.ne.s32.totalorder %s149, %s151
      %p155 = scmp.eq.s32.totalorder %s31, 0
      %p156 = por %p154, %p155
      %p157 = scmp.ne.s32.totalorder %s149, %s151
      %p158 = scmp.eq.s32.totalorder %s36, 1
      %p159 = por %p157, %p158
      %p160 = scmp.ne.s32.totalorder %s151, %s152
      %p161 = scmp.eq.s32.totalorder %s36, 0
      %p162 = por %p160, %p161
      %p163 = scmp.ne.s32.totalorder %s151, %s152
      %p164 = scmp.eq.s32.totalorder %s37, 1
      %p165 = por %p163, %p164
      %p167 = scmp.ne.s32.totalorder %s152, %s166
      %p168 = scmp.eq.s32.totalorder %s37, 0
      %p169 = por %p167, %p168
      %s171 = sadd.s32 %s170, 1
      %p174 = scmp.eq.s32.totalorder %s31, 1
      %p175 = scmp.ne.s32.totalorder %s170, %s172
      %p176 = scmp.eq.s32.totalorder %s31, 0
      %p177 = por %p175, %p176
      %p178 = scmp.ne.s32.totalorder %s170, %s172
      %p179 = scmp.eq.s32.totalorder %s36, 1
      %p180 = por %p178, %p179
      %p181 = scmp.ne.s32.totalorder %s172, %s173
      %p182 = scmp.eq.s32.totalorder %s36, 0
      %p183 = por %p181, %p182
      %p184 = scmp.ne.s32.totalorder %s172, %s173
      %p185 = scmp.eq.s32.totalorder %s37, 1
      %p186 = por %p184, %p185
      %p188 = scmp.ne.s32.totalorder %s173, %s187
      %p189 = scmp.eq.s32.totalorder %s37, 0
      %p190 = por %p188, %p189
      %s192 = sadd.s32 %s191, 1
      %p195 = scmp.eq.s32.totalorder %s31, 1
      %p196 = scmp.ne.s32.totalorder %s191, %s193
      %p197 = scmp.eq.s32.totalorder %s31, 0
      %p198 = por %p196, %p197
      %p199 = scmp.ne.s32.totalorder %s191, %s193
      %p200 = scmp.eq.s32.totalorder %s36, 1
      %p201 = por %p199, %p200
      %p202 = scmp.ne.s32.totalorder %s193, %s194
      %p203 = scmp.eq.s32.totalorder %s36, 0
      %p204 = por %p202, %p203
      %p205 = scmp.ne.s32.totalorder %s193, %s194
      %p206 = scmp.eq.s32.totalorder %s37, 1
      %p207 = por %p205, %p206
      %p209 = scmp.ne.s32.totalorder %s194, %s208
      %p210 = scmp.eq.s32.totalorder %s37, 0
      %p211 = por %p209, %p210
      %s213 = sadd.s32 %s212, 1
      %p216 = scmp.eq.s32.totalorder %s31, 1
      %p217 = scmp.ne.s32.totalorder %s212, %s214
      %p218 = scmp.eq.s32.totalorder %s31, 0
      %p219 = por %p217, %p218
      %p220 = scmp.ne.s32.totalorder %s212, %s214
      %p221 = scmp.eq.s32.totalorder %s36, 1
      %p222 = por %p220, %p221
      %p223 = scmp.ne.s32.totalorder %s214, %s215
      %p224 = scmp.eq.s32.totalorder %s36, 0
      %p225 = por %p223, %p224
      %p226 = scmp.ne.s32.totalorder %s214, %s215
      %p227 = scmp.eq.s32.totalorder %s37, 1
      %p228 = por %p226, %p227
      %p230 = scmp.ne.s32.totalorder %s215, %s229
      %p231 = scmp.eq.s32.totalorder %s37, 0
      %p232 = por %p230, %p231
      %s234 = sadd.s32 %s233, 1
      %p237 = scmp.eq.s32.totalorder %s31, 1
      %p238 = scmp.ne.s32.totalorder %s233, %s235
      %p239 = scmp.eq.s32.totalorder %s31, 0
      %p240 = por %p238, %p239
      %p241 = scmp.ne.s32.totalorder %s233, %s235
      %p242 = scmp.eq.s32.totalorder %s36, 1
      %p243 = por %p241, %p242
      %p244 = scmp.ne.s32.totalorder %s235, %s236
      %p245 = scmp.eq.s32.totalorder %s36, 0
      %p246 = por %p244, %p245
      %p247 = scmp.ne.s32.totalorder %s235, %s236
      %p248 = scmp.eq.s32.totalorder %s37, 1
      %p249 = por %p247, %p248
      %p251 = scmp.ne.s32.totalorder %s236, %s250
      %p252 = scmp.eq.s32.totalorder %s37, 0
      %p253 = por %p251, %p252
      %s255 = sadd.s32 %s254, 1
      %p258 = scmp.eq.s32.totalorder %s31, 1
      %p259 = scmp.ne.s32.totalorder %s254, %s256
      %p260 = scmp.eq.s32.totalorder %s31, 0
      %p261 = por %p259, %p260
      %p262 = scmp.ne.s32.totalorder %s254, %s256
      %p263 = scmp.eq.s32.totalorder %s36, 1
      %p264 = por %p262, %p263
      %p265 = scmp.ne.s32.totalorder %s256, %s257
      %p266 = scmp.eq.s32.totalorder %s36, 0
      %p267 = por %p265, %p266
      %p268 = scmp.ne.s32.totalorder %s256, %s257
      %p269 = scmp.eq.s32.totalorder %s37, 1
      %p270 = por %p268, %p269
      %p272 = scmp.ne.s32.totalorder %s257, %s271
      %p273 = scmp.eq.s32.totalorder %s37, 0
      %p274 = por %p272, %p273
      %s276 = sadd.s32 %s275, 1
      %p279 = scmp.eq.s32.totalorder %s31, 1
      %p280 = scmp.ne.s32.totalorder %s275, %s277
      %p281 = scmp.eq.s32.totalorder %s31, 0
      %p282 = por %p280, %p281
      %p283 = scmp.ne.s32.totalorder %s275, %s277
      %p284 = scmp.eq.s32.totalorder %s36, 1
      %p285 = por %p283, %p284
      %p286 = scmp.ne.s32.totalorder %s277, %s278
      %p287 = scmp.eq.s32.totalorder %s36, 0
      %p288 = por %p286, %p287
      %p289 = scmp.ne.s32.totalorder %s277, %s278
      %p290 = scmp.eq.s32.totalorder %s37, 1
      %p291 = por %p289, %p290
      %p293 = scmp.ne.s32.totalorder %s278, %s292
      %p294 = scmp.eq.s32.totalorder %s37, 0
      %p295 = por %p293, %p294
      %s297 = sadd.s32 %s296, 1
      %p300 = scmp.eq.s32.totalorder %s31, 1
      %p301 = scmp.ne.s32.totalorder %s296, %s298
      %p302 = scmp.eq.s32.totalorder %s31, 0
      %p303 = por %p301, %p302
      %p304 = scmp.ne.s32.totalorder %s296, %s298
      %p305 = scmp.eq.s32.totalorder %s36, 1
      %p306 = por %p304, %p305
      %p307 = scmp.ne.s32.totalorder %s298, %s299
      %p308 = scmp.eq.s32.totalorder %s36, 0
      %p309 = por %p307, %p308
      %p310 = scmp.ne.s32.totalorder %s298, %s299
      %p311 = scmp.eq.s32.totalorder %s37, 1
      %p312 = por %p310, %p311
      %p314 = scmp.ne.s32.totalorder %s299, %s313
      %p315 = scmp.eq.s32.totalorder %s37, 0
      %p316 = por %p314, %p315
      %s317 = ssub.s32 %s31, %s38
      %p318 = scmp.eq.s32.totalorder %s317, 0
      %s320 = sadd.s32 %s319, 1
      %s321 = scalar_select %p318, %s319, %s320
      %p324 = pneg %p318
      %p325 = scmp.eq.s32.totalorder %s31, 1
      %p326 = por %p324, %p325
      %p327 = scmp.ne.s32.totalorder %s319, %s322
      %p328 = scmp.eq.s32.totalorder %s31, 0
      %p329 = por %p327, %p328
      %p330 = scmp.ne.s32.totalorder %s319, %s322
      %p331 = scmp.eq.s32.totalorder %s36, 1
      %p332 = por %p330, %p331
      %p333 = scmp.ne.s32.totalorder %s322, %s323
      %p334 = scmp.eq.s32.totalorder %s36, 0
      %p335 = por %p333, %p334
      %p336 = scmp.ne.s32.totalorder %s322, %s323
      %p337 = scmp.eq.s32.totalorder %s37, 1
      %p338 = por %p336, %p337
      %p340 = scmp.ne.s32.totalorder %s323, %s339
      %p341 = scmp.eq.s32.totalorder %s37, 0
      %p342 = por %p340, %p341
      %p343 = scmp.le.s32.totalorder 1, %s31
      %p344 = scmp.lt.s32.totalorder %s31, 3
      %p345 = pnand %p343, %p344
      %p346 = pneg %p345
      // Predicated region
      $region9: #{forward.4} parent=5 // pred_check
        _
      $region10: #{forward.4} parent=5 // pred_check_branch
        %348 = sbr.rel (%p345) target = $region12
      $region11: #{forward.4} parent=5 // pred_region
        %s349 = ssub.s32 %s31, 1
        // Predicated region
        $region13: #{forward.4} parent=11 // pred_check
          %p350 = pneg %p78
        $region14: #{forward.4} parent=11 // pred_check_branch
          %352 = sbr.rel (%p350) target = $region16
        $region15: #{forward.4} parent=11 // pred_region
          %s354 = ssub.s32 12288, 12288
          %355 = vsyncadd [#allocation6], %s354
          %s356 = sshll.u32 [#allocation5], 4
          %s357 = int_to_ptr.vmem [resolvable:$true] %s356
          %362 = dma.hbm_to_vmem [thread:$0]  %s1, 12288, %s357, [#allocation6], 768, 768, 48
        $region16: #{forward.4} parent=11 // pred_fallthru
          _
        // Predicated region
        $region17: #{forward.4} parent=11 // pred_check
          %p363 = pneg %p99
        $region18: #{forward.4} parent=11 // pred_check_branch
          %365 = sbr.rel (%p363) target = $region20
        $region19: #{forward.4} parent=11 // pred_region
          %s367 = ssub.s32 192, 192
          %368 = vsyncadd [#allocation6], %s367
          %s370 = sshll.u32 [#allocation7], 4
          %s371 = int_to_ptr.vmem [resolvable:$true] %s370
          %373 = dma.hbm_to_vmem [thread:$0]  %s2, 192, %s371, [#allocation6]
        $region20: #{forward.4} parent=11 // pred_fallthru
          _
        // Predicated region
        $region21: #{forward.4} parent=11 // pred_check
          %p374 = pneg %p120
        $region22: #{forward.4} parent=11 // pred_check_branch
          %376 = sbr.rel (%p374) target = $region24
        $region23: #{forward.4} parent=11 // pred_region
          %s378 = ssub.s32 4096, 4096
          %379 = vsyncadd [#allocation9], %s378
          %s380 = sshll.u32 [#allocation8], 4
          %s381 = int_to_ptr.vmem [resolvable:$true] %s380
          %386 = dma.hbm_to_vmem [thread:$0]  %s3, 4096, %s381, [#allocation9], 64, 64, 4
        $region24: #{forward.4} parent=11 // pred_fallthru
          _
        // Predicated region
        $region25: #{forward.4} parent=11 // pred_check
          %p387 = pneg %p141
        $region26: #{forward.4} parent=11 // pred_check_branch
          %389 = sbr.rel (%p387) target = $region28
        $region27: #{forward.4} parent=11 // pred_region
          %s391 = ssub.s32 16, 16
          %392 = vsyncadd [#allocation9], %s391
          %s394 = sshll.u32 [#allocation10], 4
          %s395 = int_to_ptr.vmem [resolvable:$true] %s394
          %397 = dma.hbm_to_vmem [thread:$0]  %s4, 16, %s395, [#allocation9]
        $region28: #{forward.4} parent=11 // pred_fallthru
          _
        // Predicated region
        $region29: #{forward.4} parent=11 // pred_check
          %p398 = pneg %p162
        $region30: #{forward.4} parent=11 // pred_check_branch
          %400 = sbr.rel (%p398) target = $region32
        $region31: #{forward.4} parent=11 // pred_region
          %s402 = ssub.s32 16, 16
          %403 = vsyncadd [#allocation12], %s402
          %s405 = sshll.u32 [#allocation11], 4
          %s406 = int_to_ptr.vmem [resolvable:$true] %s405
          %408 = dma.hbm_to_vmem [thread:$0]  %s5, 16, %s406, [#allocation12]
        $region32: #{forward.4} parent=11 // pred_fallthru
          _
        // Predicated region
        $region33: #{forward.4} parent=11 // pred_check
          %p409 = pneg %p183
        $region34: #{forward.4} parent=11 // pred_check_branch
          %411 = sbr.rel (%p409) target = $region36
        $region35: #{forward.4} parent=11 // pred_region
          %s413 = ssub.s32 16, 16
          %414 = vsyncadd [#allocation12], %s413
          %s416 = sshll.u32 [#allocation13], 4
          %s417 = int_to_ptr.vmem [resolvable:$true] %s416
          %419 = dma.hbm_to_vmem [thread:$0]  %s6, 16, %s417, [#allocation12]
        $region36: #{forward.4} parent=11 // pred_fallthru
          _
        // Predicated region
        $region37: #{forward.4} parent=11 // pred_check
          %p420 = pneg %p204
        $region38: #{forward.4} parent=11 // pred_check_branch
          %422 = sbr.rel (%p420) target = $region40
        $region39: #{forward.4} parent=11 // pred_region
          %s424 = ssub.s32 1024, 1024
          %425 = vsyncadd [#allocation15], %s424
          %s426 = sshll.u32 [#allocation14], 4
          %s427 = int_to_ptr.vmem [resolvable:$true] %s426
          %432 = dma.hbm_to_vmem [thread:$0]  %s7, 1024, %s427, [#allocation15], 64, 64, 4
        $region40: #{forward.4} parent=11 // pred_fallthru
          _
        // Predicated region
        $region41: #{forward.4} parent=11 // pred_check
          %p433 = pneg %p225
        $region42: #{forward.4} parent=11 // pred_check_branch
          %435 = sbr.rel (%p433) target = $region44
        $region43: #{forward.4} parent=11 // pred_region
          %s437 = ssub.s32 16, 16
          %438 = vsyncadd [#allocation15], %s437
          %s440 = sshll.u32 [#allocation16], 4
          %s441 = int_to_ptr.vmem [resolvable:$true] %s440
          %443 = dma.hbm_to_vmem [thread:$0]  %s8, 16, %s441, [#allocation15]
        $region44: #{forward.4} parent=11 // pred_fallthru
          _
        // Predicated region
        $region45: #{forward.4} parent=11 // pred_check
          %p444 = pneg %p246
        $region46: #{forward.4} parent=11 // pred_check_branch
          %446 = sbr.rel (%p444) target = $region48
        $region47: #{forward.4} parent=11 // pred_region
          %s448 = ssub.s32 1024, 1024
          %449 = vsyncadd [#allocation18], %s448
          %s450 = sshll.u32 [#allocation17], 4
          %s451 = int_to_ptr.vmem [resolvable:$true] %s450
          %456 = dma.hbm_to_vmem [thread:$0]  %s9, 1024, %s451, [#allocation18], 64, 64, 4
        $region48: #{forward.4} parent=11 // pred_fallthru
          _
        // Predicated region
        $region49: #{forward.4} parent=11 // pred_check
          %p457 = pneg %p267
        $region50: #{forward.4} parent=11 // pred_check_branch
          %459 = sbr.rel (%p457) target = $region52
        $region51: #{forward.4} parent=11 // pred_region
          %s461 = ssub.s32 16, 16
          %462 = vsyncadd [#allocation18], %s461
          %s464 = sshll.u32 [#allocation19], 4
          %s465 = int_to_ptr.vmem [resolvable:$true] %s464
          %467 = dma.hbm_to_vmem [thread:$0]  %s10, 16, %s465, [#allocation18]
        $region52: #{forward.4} parent=11 // pred_fallthru
          _
        // Predicated region
        $region53: #{forward.4} parent=11 // pred_check
          %p468 = pneg %p288
        $region54: #{forward.4} parent=11 // pred_check_branch
          %470 = sbr.rel (%p468) target = $region56
        $region55: #{forward.4} parent=11 // pred_region
          %s472 = ssub.s32 16, 16
          %473 = vsyncadd [#allocation21], %s472
          %s475 = sshll.u32 [#allocation20], 4
          %s476 = int_to_ptr.vmem [resolvable:$true] %s475
          %478 = dma.hbm_to_vmem [thread:$0]  %s11, 16, %s476, [#allocation21]
        $region56: #{forward.4} parent=11 // pred_fallthru
          _
        // Predicated region
        $region57: #{forward.4} parent=11 // pred_check
          %p479 = pneg %p309
        $region58: #{forward.4} parent=11 // pred_check_branch
          %481 = sbr.rel (%p479) target = $region60
        $region59: #{forward.4} parent=11 // pred_region
          %s483 = ssub.s32 16, 16
          %484 = vsyncadd [#allocation21], %s483
          %s486 = sshll.u32 [#allocation22], 4
          %s487 = int_to_ptr.vmem [resolvable:$true] %s486
          %489 = dma.hbm_to_vmem [thread:$0]  %s12, 16, %s487, [#allocation21]
        $region60: #{forward.4} parent=11 // pred_fallthru
          _
      $region12: #{forward.4} parent=5 // pred_fallthru
        _
      %p490 = scmp.lt.s32.totalorder %s31, 2
      // Predicated region
      $region61: #{forward.4} parent=5 // pred_check
        %p491 = pneg %p490
      $region62: #{forward.4} parent=5 // pred_check_branch
        %493 = sbr.rel (%p491) target = $region64
      $region63: #{forward.4} parent=5 // pred_region
        // Predicated region
        $region65: #{forward.4} parent=63 // pred_check
          %p494 = pneg %p51
        $region66: #{forward.4} parent=63 // pred_check_branch
          %496 = sbr.rel (%p494) target = $region68
        $region67: #{forward.4} parent=63 // pred_region
          %s497 = sand.u32 %s41, 1
          %s498 = scalar_lea.sflag [#allocation3], %s497
          %s499 = sand.u32 %s41, 1
          %s500 = smul.addr %s499, 32
          %s501 = scalar_lea.vmem [#allocation2], %s500
          %s502 = smul.u32 8, %s31
          %s504 = ssub.s32 512, 512
          %505 = vsyncadd %s498, %s504
          %s506 = smul.addr %s502, 64
          %s507 = scalar_lea.hbm %s0, %s506
          %s508 = sshll.u32 %s501, 4
          %s509 = int_to_ptr.vmem [resolvable:$true] %s508
          %514 = dma.hbm_to_vmem [thread:$0]  %s507, 512, %s509, %s498, 64, 64, 4
        $region68: #{forward.4} parent=63 // pred_fallthru
          _
      $region64: #{forward.4} parent=5 // pred_fallthru
        _
      %p515 = scmp.le.s32.totalorder 1, %s31
      %p516 = scmp.lt.s32.totalorder %s31, 3
      %p517 = pnand %p515, %p516
      %p518 = pneg %p517
      // Predicated region
      $region69: #{forward.4} parent=5 // pred_check
        _
      $region70: #{forward.4} parent=5 // pred_check_branch
        %520 = sbr.rel (%p517) target = $region72
      $region71: #{forward.4} parent=5 // pred_region
        %s521 = ssub.s32 %s31, 1
        %s522 = sand.u32 %s44, 1
        %s523 = scalar_lea.sflag [#allocation3], %s522
        %s524 = sand.u32 %s44, 1
        %s525 = smul.addr %s524, 32
        %s526 = scalar_lea.vmem [#allocation2], %s525
        // Predicated region
        $region73: #{forward.4} parent=71 // pred_check
          %p527 = pneg %p57
        $region74: #{forward.4} parent=71 // pred_check_branch
          %529 = sbr.rel (%p527) target = $region76
        $region75: #{forward.4} parent=71 // pred_region
          %530 = dma.done %s523, 512
        $region76: #{forward.4} parent=71 // pred_fallthru
          _
        // Predicated region
        $region77: #{forward.4} parent=71 // pred_check
          %p531 = pneg %p78
        $region78: #{forward.4} parent=71 // pred_check_branch
          %533 = sbr.rel (%p531) target = $region80
        $region79: #{forward.4} parent=71 // pred_region
          %534 = dma.done [#allocation6], 12288
        $region80: #{forward.4} parent=71 // pred_fallthru
          _
        // Predicated region
        $region81: #{forward.4} parent=71 // pred_check
          %p535 = pneg %p99
        $region82: #{forward.4} parent=71 // pred_check_branch
          %537 = sbr.rel (%p535) target = $region84
        $region83: #{forward.4} parent=71 // pred_region
          %538 = dma.done [#allocation6], 192
        $region84: #{forward.4} parent=71 // pred_fallthru
          _
        // Predicated region
        $region85: #{forward.4} parent=71 // pred_check
          %p539 = pneg %p120
        $region86: #{forward.4} parent=71 // pred_check_branch
          %541 = sbr.rel (%p539) target = $region88
        $region87: #{forward.4} parent=71 // pred_region
          %542 = dma.done [#allocation9], 4096
        $region88: #{forward.4} parent=71 // pred_fallthru
          _
        // Predicated region
        $region89: #{forward.4} parent=71 // pred_check
          %p543 = pneg %p141
        $region90: #{forward.4} parent=71 // pred_check_branch
          %545 = sbr.rel (%p543) target = $region92
        $region91: #{forward.4} parent=71 // pred_region
          %546 = dma.done [#allocation9], 16
        $region92: #{forward.4} parent=71 // pred_fallthru
          _
        // Predicated region
        $region93: #{forward.4} parent=71 // pred_check
          %p547 = pneg %p162
        $region94: #{forward.4} parent=71 // pred_check_branch
          %549 = sbr.rel (%p547) target = $region96
        $region95: #{forward.4} parent=71 // pred_region
          %550 = dma.done [#allocation12], 16
        $region96: #{forward.4} parent=71 // pred_fallthru
          _
        // Predicated region
        $region97: #{forward.4} parent=71 // pred_check
          %p551 = pneg %p183
        $region98: #{forward.4} parent=71 // pred_check_branch
          %553 = sbr.rel (%p551) target = $region100
        $region99: #{forward.4} parent=71 // pred_region
          %554 = dma.done [#allocation12], 16
        $region100: #{forward.4} parent=71 // pred_fallthru
          _
        // Predicated region
        $region101: #{forward.4} parent=71 // pred_check
          %p555 = pneg %p204
        $region102: #{forward.4} parent=71 // pred_check_branch
          %557 = sbr.rel (%p555) target = $region104
        $region103: #{forward.4} parent=71 // pred_region
          %558 = dma.done [#allocation15], 1024
        $region104: #{forward.4} parent=71 // pred_fallthru
          _
        // Predicated region
        $region105: #{forward.4} parent=71 // pred_check
          %p559 = pneg %p225
        $region106: #{forward.4} parent=71 // pred_check_branch
          %561 = sbr.rel (%p559) target = $region108
        $region107: #{forward.4} parent=71 // pred_region
          %562 = dma.done [#allocation15], 16
        $region108: #{forward.4} parent=71 // pred_fallthru
          _
        // Predicated region
        $region109: #{forward.4} parent=71 // pred_check
          %p563 = pneg %p246
        $region110: #{forward.4} parent=71 // pred_check_branch
          %565 = sbr.rel (%p563) target = $region112
        $region111: #{forward.4} parent=71 // pred_region
          %566 = dma.done [#allocation18], 1024
        $region112: #{forward.4} parent=71 // pred_fallthru
          _
        // Predicated region
        $region113: #{forward.4} parent=71 // pred_check
          %p567 = pneg %p267
        $region114: #{forward.4} parent=71 // pred_check_branch
          %569 = sbr.rel (%p567) target = $region116
        $region115: #{forward.4} parent=71 // pred_region
          %570 = dma.done [#allocation18], 16
        $region116: #{forward.4} parent=71 // pred_fallthru
          _
        // Predicated region
        $region117: #{forward.4} parent=71 // pred_check
          %p571 = pneg %p288
        $region118: #{forward.4} parent=71 // pred_check_branch
          %573 = sbr.rel (%p571) target = $region120
        $region119: #{forward.4} parent=71 // pred_region
          %574 = dma.done [#allocation21], 16
        $region120: #{forward.4} parent=71 // pred_fallthru
          _
        // Predicated region
        $region121: #{forward.4} parent=71 // pred_check
          %p575 = pneg %p309
        $region122: #{forward.4} parent=71 // pred_check_branch
          %577 = sbr.rel (%p575) target = $region124
        $region123: #{forward.4} parent=71 // pred_region
          %578 = dma.done [#allocation21], 16
        $region124: #{forward.4} parent=71 // pred_fallthru
          _
        %s579 = sand.u32 %s44, 1
        %s580 = scalar_lea.sflag [#allocation3], %s579
        %s581 = sand.u32 %s44, 1
        %s582 = smul.addr %s581, 32
        %s583 = scalar_lea.vmem [#allocation2], %s582
        %p584 = pneg %p57
        %p585 = pneg %p54
        %p586 = pneg %p78
        %p587 = pneg %p75
        %p588 = pneg %p99
        %p589 = pneg %p96
        %p590 = pneg %p120
        %p591 = pneg %p117
        %p592 = pneg %p141
        %p593 = pneg %p138
        %p594 = pneg %p162
        %p595 = pneg %p159
        %p596 = pneg %p183
        %p597 = pneg %p180
        %p598 = pneg %p204
        %p599 = pneg %p201
        %p600 = pneg %p225
        %p601 = pneg %p222
        %p602 = pneg %p246
        %p603 = pneg %p243
        %p604 = pneg %p267
        %p605 = pneg %p264
        %p606 = pneg %p288
        %p607 = pneg %p285
        %p608 = pneg %p309
        %p609 = pneg %p306
        %p610 = pneg %p335
        %p611 = pneg %p332
        %s612 = sand.u32 %s322, 1
        %s613 = scalar_lea.sflag [#allocation4], %s612
        %s614 = sand.u32 %s322, 1
        %s615 = smul.addr %s614, 32
        %s616 = scalar_lea.vmem [#allocation23], %s615
        %s617 = smul.u32 8, %s36
        %s618 = smul.u32 8, %s36
        %v620 = vld [vmem:[%s526] sm:$0xf]
        %v621 = vld [vmem:[%s526 + $0x4] sm:$0xf]
        %v622 = vld [vmem:[%s526 + $0x8] sm:$0xf]
        %v623 = vld [vmem:[%s526 + $0xc] sm:$0xf]
        %v624 = vld [vmem:[%s526 + $0x10] sm:$0xf]
        %v625 = vld [vmem:[%s526 + $0x14] sm:$0xf]
        %v626 = vld [vmem:[%s526 + $0x18] sm:$0xf]
        %v627 = vld [vmem:[%s526 + $0x1c] sm:$0xf]
        %v636 = vcombine.low %v620, %v621
        %v637 = vcombine.low %v622, %v623
        %v638 = vcombine.low %v624, %v625
        %v639 = vcombine.low %v626, %v627
        %v644 = vpack.c.bf16 %v637, %v636
        %v645 = vpack.c.bf16 %v639, %v638
        %v646 = vld [vmem:[#allocation5] sm:$0xff]
        %v647 = vld [vmem:[#allocation5 + $0x8] sm:$0xff]
        %v648 = vld [vmem:[#allocation5 + $0x10] sm:$0xff]
        %v649 = vld [vmem:[#allocation5 + $0x18] sm:$0xff]
        %v650 = vld [vmem:[#allocation5 + $0x20] sm:$0xff]
        %v651 = vld [vmem:[#allocation5 + $0x28] sm:$0xff]
        %v652 = vld [vmem:[#allocation5 + $0x30] sm:$0xff]
        %v653 = vld [vmem:[#allocation5 + $0x38] sm:$0xff]
        %v654 = vld [vmem:[#allocation5 + $0x40] sm:$0xff]
        %v655 = vld [vmem:[#allocation5 + $0x48] sm:$0xff]
        %v656 = vld [vmem:[#allocation5 + $0x50] sm:$0xff]
        %v657 = vld [vmem:[#allocation5 + $0x58] sm:$0xff]
        %v658 = vld [vmem:[#allocation5 + $0x60] sm:$0xff]
        %v659 = vld [vmem:[#allocation5 + $0x68] sm:$0xff]
        %v660 = vld [vmem:[#allocation5 + $0x70] sm:$0xff]
        %v661 = vld [vmem:[#allocation5 + $0x78] sm:$0xff]
        %v662 = vld [vmem:[#allocation5 + $0x80] sm:$0xff]
        %v663 = vld [vmem:[#allocation5 + $0x88] sm:$0xff]
        %v664 = vld [vmem:[#allocation5 + $0x90] sm:$0xff]
        %v665 = vld [vmem:[#allocation5 + $0x98] sm:$0xff]
        %v666 = vld [vmem:[#allocation5 + $0xa0] sm:$0xff]
        %v667 = vld [vmem:[#allocation5 + $0xa8] sm:$0xff]
        %v668 = vld [vmem:[#allocation5 + $0xb0] sm:$0xff]
        %v669 = vld [vmem:[#allocation5 + $0xb8] sm:$0xff]
        %v670 = vld [vmem:[#allocation5 + $0xc0] sm:$0xff]
        %v671 = vld [vmem:[#allocation5 + $0xc8] sm:$0xff]
        %v672 = vld [vmem:[#allocation5 + $0xd0] sm:$0xff]
        %v673 = vld [vmem:[#allocation5 + $0xd8] sm:$0xff]
        %v674 = vld [vmem:[#allocation5 + $0xe0] sm:$0xff]
        %v675 = vld [vmem:[#allocation5 + $0xe8] sm:$0xff]
        %v676 = vld [vmem:[#allocation5 + $0xf0] sm:$0xff]
        %v677 = vld [vmem:[#allocation5 + $0xf8] sm:$0xff]
        %v678 = vld [vmem:[#allocation5 + $0x100] sm:$0xff]
        %v679 = vld [vmem:[#allocation5 + $0x108] sm:$0xff]
        %v680 = vld [vmem:[#allocation5 + $0x110] sm:$0xff]
        %v681 = vld [vmem:[#allocation5 + $0x118] sm:$0xff]
        %v682 = vld [vmem:[#allocation5 + $0x120] sm:$0xff]
        %v683 = vld [vmem:[#allocation5 + $0x128] sm:$0xff]
        %v684 = vld [vmem:[#allocation5 + $0x130] sm:$0xff]
        %v685 = vld [vmem:[#allocation5 + $0x138] sm:$0xff]
        %v686 = vld [vmem:[#allocation5 + $0x140] sm:$0xff]
        %v687 = vld [vmem:[#allocation5 + $0x148] sm:$0xff]
        %v688 = vld [vmem:[#allocation5 + $0x150] sm:$0xff]
        %v689 = vld [vmem:[#allocation5 + $0x158] sm:$0xff]
        %v690 = vld [vmem:[#allocation5 + $0x160] sm:$0xff]
        %v691 = vld [vmem:[#allocation5 + $0x168] sm:$0xff]
        %v692 = vld [vmem:[#allocation5 + $0x170] sm:$0xff]
        %v693 = vld [vmem:[#allocation5 + $0x178] sm:$0xff]
        %v694 = vld [vmem:[#allocation5 + $0x180] sm:$0xff]
        %v695 = vld [vmem:[#allocation5 + $0x188] sm:$0xff]
        %v696 = vld [vmem:[#allocation5 + $0x190] sm:$0xff]
        %v697 = vld [vmem:[#allocation5 + $0x198] sm:$0xff]
        %v698 = vld [vmem:[#allocation5 + $0x1a0] sm:$0xff]
        %v699 = vld [vmem:[#allocation5 + $0x1a8] sm:$0xff]
        %v700 = vld [vmem:[#allocation5 + $0x1b0] sm:$0xff]
        %v701 = vld [vmem:[#allocation5 + $0x1b8] sm:$0xff]
        %v702 = vld [vmem:[#allocation5 + $0x1c0] sm:$0xff]
        %v703 = vld [vmem:[#allocation5 + $0x1c8] sm:$0xff]
        %v704 = vld [vmem:[#allocation5 + $0x1d0] sm:$0xff]
        %v705 = vld [vmem:[#allocation5 + $0x1d8] sm:$0xff]
        %v706 = vld [vmem:[#allocation5 + $0x1e0] sm:$0xff]
        %v707 = vld [vmem:[#allocation5 + $0x1e8] sm:$0xff]
        %v708 = vld [vmem:[#allocation5 + $0x1f0] sm:$0xff]
        %v709 = vld [vmem:[#allocation5 + $0x1f8] sm:$0xff]
        %v710 = vld [vmem:[#allocation5 + $0x200] sm:$0xff]
        %v711 = vld [vmem:[#allocation5 + $0x208] sm:$0xff]
        %v712 = vld [vmem:[#allocation5 + $0x210] sm:$0xff]
        %v713 = vld [vmem:[#allocation5 + $0x218] sm:$0xff]
        %v714 = vld [vmem:[#allocation5 + $0x220] sm:$0xff]
        %v715 = vld [vmem:[#allocation5 + $0x228] sm:$0xff]
        %v716 = vld [vmem:[#allocation5 + $0x230] sm:$0xff]
        %v717 = vld [vmem:[#allocation5 + $0x238] sm:$0xff]
        %v718 = vld [vmem:[#allocation5 + $0x240] sm:$0xff]
        %v719 = vld [vmem:[#allocation5 + $0x248] sm:$0xff]
        %v720 = vld [vmem:[#allocation5 + $0x250] sm:$0xff]
        %v721 = vld [vmem:[#allocation5 + $0x258] sm:$0xff]
        %v722 = vld [vmem:[#allocation5 + $0x260] sm:$0xff]
        %v723 = vld [vmem:[#allocation5 + $0x268] sm:$0xff]
        %v724 = vld [vmem:[#allocation5 + $0x270] sm:$0xff]
        %v725 = vld [vmem:[#allocation5 + $0x278] sm:$0xff]
        %v726 = vld [vmem:[#allocation5 + $0x280] sm:$0xff]
        %v727 = vld [vmem:[#allocation5 + $0x288] sm:$0xff]
        %v728 = vld [vmem:[#allocation5 + $0x290] sm:$0xff]
        %v729 = vld [vmem:[#allocation5 + $0x298] sm:$0xff]
        %v730 = vld [vmem:[#allocation5 + $0x2a0] sm:$0xff]
        %v731 = vld [vmem:[#allocation5 + $0x2a8] sm:$0xff]
        %v732 = vld [vmem:[#allocation5 + $0x2b0] sm:$0xff]
        %v733 = vld [vmem:[#allocation5 + $0x2b8] sm:$0xff]
        %v734 = vld [vmem:[#allocation5 + $0x2c0] sm:$0xff]
        %v735 = vld [vmem:[#allocation5 + $0x2c8] sm:$0xff]
        %v736 = vld [vmem:[#allocation5 + $0x2d0] sm:$0xff]
        %v737 = vld [vmem:[#allocation5 + $0x2d8] sm:$0xff]
        %v738 = vld [vmem:[#allocation5 + $0x2e0] sm:$0xff]
        %v739 = vld [vmem:[#allocation5 + $0x2e8] sm:$0xff]
        %v740 = vld [vmem:[#allocation5 + $0x2f0] sm:$0xff]
        %v741 = vld [vmem:[#allocation5 + $0x2f8] sm:$0xff]
        %v742 = vld [vmem:[#allocation7] sm:$0xff]
        %v743 = vld [vmem:[#allocation7 + $0x8] sm:$0xf]
        %v746 = vlaneseq
        %v747 = vshrl.u32 %v746, 7
        %v748 = vsub.s32 0, %v747
        %v749 = vrot.slane %v742, %v748
        %v750 = vlaneseq
        %v751 = vshrl.u32 %v750, 7
        %v752 = vsub.s32 1, %v751
        %v753 = vrot.slane %v742, %v752
        %v754 = vlaneseq
        %v755 = vshrl.u32 %v754, 7
        %v756 = vsub.s32 2, %v755
        %v757 = vrot.slane %v742, %v756
        %v758 = vlaneseq
        %v759 = vshrl.u32 %v758, 7
        %v760 = vsub.s32 3, %v759
        %v761 = vrot.slane %v742, %v760
        %v762 = vlaneseq
        %v763 = vshrl.u32 %v762, 7
        %v764 = vsub.s32 4, %v763
        %v765 = vrot.slane %v742, %v764
        %v766 = vlaneseq
        %v767 = vshrl.u32 %v766, 7
        %v768 = vsub.s32 5, %v767
        %v769 = vrot.slane %v742, %v768
        %v770 = vlaneseq
        %v771 = vshrl.u32 %v770, 7
        %v772 = vsub.s32 6, %v771
        %v773 = vrot.slane %v742, %v772
        %v774 = vlaneseq
        %v775 = vshrl.u32 %v774, 7
        %v776 = vsub.s32 7, %v775
        %v777 = vrot.slane %v742, %v776
        %v778 = vlaneseq
        %v779 = vshrl.u32 %v778, 7
        %v780 = vsub.s32 0, %v779
        %v781 = vrot.slane %v743, %v780
        %v782 = vlaneseq
        %v783 = vshrl.u32 %v782, 7
        %v784 = vsub.s32 1, %v783
        %v785 = vrot.slane %v743, %v784
        %v786 = vlaneseq
        %v787 = vshrl.u32 %v786, 7
        %v788 = vsub.s32 2, %v787
        %v789 = vrot.slane %v743, %v788
        %v790 = vlaneseq
        %v791 = vshrl.u32 %v790, 7
        %v792 = vsub.s32 3, %v791
        %v793 = vrot.slane %v743, %v792
        %v902 = vunpack.c.l.b16 %v646
        %v903 = vunpack.c.h.b16 %v646
        %v904 = vunpack.c.l.b16 %v647
        %v905 = vunpack.c.h.b16 %v647
        %v906 = vunpack.c.l.b16 %v648
        %v907 = vunpack.c.h.b16 %v648
        %v908 = vunpack.c.l.b16 %v649
        %v909 = vunpack.c.h.b16 %v649
        %v910 = vunpack.c.l.b16 %v650
        %v911 = vunpack.c.h.b16 %v650
        %v912 = vunpack.c.l.b16 %v651
        %v913 = vunpack.c.h.b16 %v651
        %v914 = vunpack.c.l.b16 %v652
        %v915 = vunpack.c.h.b16 %v652
        %v916 = vunpack.c.l.b16 %v653
        %v917 = vunpack.c.h.b16 %v653
        %v918 = vunpack.c.l.b16 %v654
        %v919 = vunpack.c.h.b16 %v654
        %v920 = vunpack.c.l.b16 %v655
        %v921 = vunpack.c.h.b16 %v655
        %v922 = vunpack.c.l.b16 %v656
        %v923 = vunpack.c.h.b16 %v656
        %v924 = vunpack.c.l.b16 %v657
        %v925 = vunpack.c.h.b16 %v657
        %v926 = vunpack.c.l.b16 %v658
        %v927 = vunpack.c.h.b16 %v658
        %v928 = vunpack.c.l.b16 %v659
        %v929 = vunpack.c.h.b16 %v659
        %v930 = vunpack.c.l.b16 %v660
        %v931 = vunpack.c.h.b16 %v660
        %v932 = vunpack.c.l.b16 %v661
        %v933 = vunpack.c.h.b16 %v661
        %v934 = vunpack.c.l.b16 %v662
        %v935 = vunpack.c.h.b16 %v662
        %v936 = vunpack.c.l.b16 %v663
        %v937 = vunpack.c.h.b16 %v663
        %v938 = vunpack.c.l.b16 %v664
        %v939 = vunpack.c.h.b16 %v664
        %v940 = vunpack.c.l.b16 %v665
        %v941 = vunpack.c.h.b16 %v665
        %v942 = vunpack.c.l.b16 %v666
        %v943 = vunpack.c.h.b16 %v666
        %v944 = vunpack.c.l.b16 %v667
        %v945 = vunpack.c.h.b16 %v667
        %v946 = vunpack.c.l.b16 %v668
        %v947 = vunpack.c.h.b16 %v668
        %v948 = vunpack.c.l.b16 %v669
        %v949 = vunpack.c.h.b16 %v669
        %v950 = vunpack.c.l.b16 %v670
        %v951 = vunpack.c.h.b16 %v670
        %v952 = vunpack.c.l.b16 %v671
        %v953 = vunpack.c.h.b16 %v671
        %v954 = vunpack.c.l.b16 %v672
        %v955 = vunpack.c.h.b16 %v672
        %v956 = vunpack.c.l.b16 %v673
        %v957 = vunpack.c.h.b16 %v673
        %v958 = vunpack.c.l.b16 %v674
        %v959 = vunpack.c.h.b16 %v674
        %v960 = vunpack.c.l.b16 %v675
        %v961 = vunpack.c.h.b16 %v675
        %v962 = vunpack.c.l.b16 %v676
        %v963 = vunpack.c.h.b16 %v676
        %v964 = vunpack.c.l.b16 %v677
        %v965 = vunpack.c.h.b16 %v677
        %v966 = vunpack.c.l.b16 %v678
        %v967 = vunpack.c.h.b16 %v678
        %v968 = vunpack.c.l.b16 %v679
        %v969 = vunpack.c.h.b16 %v679
        %v970 = vunpack.c.l.b16 %v680
        %v971 = vunpack.c.h.b16 %v680
        %v972 = vunpack.c.l.b16 %v681
        %v973 = vunpack.c.h.b16 %v681
        %v974 = vunpack.c.l.b16 %v682
        %v975 = vunpack.c.h.b16 %v682
        %v976 = vunpack.c.l.b16 %v683
        %v977 = vunpack.c.h.b16 %v683
        %v978 = vunpack.c.l.b16 %v684
        %v979 = vunpack.c.h.b16 %v684
        %v980 = vunpack.c.l.b16 %v685
        %v981 = vunpack.c.h.b16 %v685
        %v982 = vunpack.c.l.b16 %v686
        %v983 = vunpack.c.h.b16 %v686
        %v984 = vunpack.c.l.b16 %v687
        %v985 = vunpack.c.h.b16 %v687
        %v986 = vunpack.c.l.b16 %v688
        %v987 = vunpack.c.h.b16 %v688
        %v988 = vunpack.c.l.b16 %v689
        %v989 = vunpack.c.h.b16 %v689
        %v990 = vunpack.c.l.b16 %v690
        %v991 = vunpack.c.h.b16 %v690
        %v992 = vunpack.c.l.b16 %v691
        %v993 = vunpack.c.h.b16 %v691
        %v994 = vunpack.c.l.b16 %v692
        %v995 = vunpack.c.h.b16 %v692
        %v996 = vunpack.c.l.b16 %v693
        %v997 = vunpack.c.h.b16 %v693
        %v998 = vunpack.c.l.b16 %v694
        %v999 = vunpack.c.h.b16 %v694
        %v1000 = vunpack.c.l.b16 %v695
        %v1001 = vunpack.c.h.b16 %v695
        %v1002 = vunpack.c.l.b16 %v696
        %v1003 = vunpack.c.h.b16 %v696
        %v1004 = vunpack.c.l.b16 %v697
        %v1005 = vunpack.c.h.b16 %v697
        %v1006 = vunpack.c.l.b16 %v698
        %v1007 = vunpack.c.h.b16 %v698
        %v1008 = vunpack.c.l.b16 %v699
        %v1009 = vunpack.c.h.b16 %v699
        %v1010 = vunpack.c.l.b16 %v700
        %v1011 = vunpack.c.h.b16 %v700
        %v1012 = vunpack.c.l.b16 %v701
        %v1013 = vunpack.c.h.b16 %v701
        %v1014 = vunpack.c.l.b16 %v702
        %v1015 = vunpack.c.h.b16 %v702
        %v1016 = vunpack.c.l.b16 %v703
        %v1017 = vunpack.c.h.b16 %v703
        %v1018 = vunpack.c.l.b16 %v704
        %v1019 = vunpack.c.h.b16 %v704
        %v1020 = vunpack.c.l.b16 %v705
        %v1021 = vunpack.c.h.b16 %v705
        %v1022 = vunpack.c.l.b16 %v706
        %v1023 = vunpack.c.h.b16 %v706
        %v1024 = vunpack.c.l.b16 %v707
        %v1025 = vunpack.c.h.b16 %v707
        %v1026 = vunpack.c.l.b16 %v708
        %v1027 = vunpack.c.h.b16 %v708
        %v1028 = vunpack.c.l.b16 %v709
        %v1029 = vunpack.c.h.b16 %v709
        %v1030 = vunpack.c.l.b16 %v710
        %v1031 = vunpack.c.h.b16 %v710
        %v1032 = vunpack.c.l.b16 %v711
        %v1033 = vunpack.c.h.b16 %v711
        %v1034 = vunpack.c.l.b16 %v712
        %v1035 = vunpack.c.h.b16 %v712
        %v1036 = vunpack.c.l.b16 %v713
        %v1037 = vunpack.c.h.b16 %v713
        %v1038 = vunpack.c.l.b16 %v714
        %v1039 = vunpack.c.h.b16 %v714
        %v1040 = vunpack.c.l.b16 %v715
        %v1041 = vunpack.c.h.b16 %v715
        %v1042 = vunpack.c.l.b16 %v716
        %v1043 = vunpack.c.h.b16 %v716
        %v1044 = vunpack.c.l.b16 %v717
        %v1045 = vunpack.c.h.b16 %v717
        %v1046 = vunpack.c.l.b16 %v718
        %v1047 = vunpack.c.h.b16 %v718
        %v1048 = vunpack.c.l.b16 %v719
        %v1049 = vunpack.c.h.b16 %v719
        %v1050 = vunpack.c.l.b16 %v720
        %v1051 = vunpack.c.h.b16 %v720
        %v1052 = vunpack.c.l.b16 %v721
        %v1053 = vunpack.c.h.b16 %v721
        %v1054 = vunpack.c.l.b16 %v722
        %v1055 = vunpack.c.h.b16 %v722
        %v1056 = vunpack.c.l.b16 %v723
        %v1057 = vunpack.c.h.b16 %v723
        %v1058 = vunpack.c.l.b16 %v724
        %v1059 = vunpack.c.h.b16 %v724
        %v1060 = vunpack.c.l.b16 %v725
        %v1061 = vunpack.c.h.b16 %v725
        %v1062 = vunpack.c.l.b16 %v726
        %v1063 = vunpack.c.h.b16 %v726
        %v1064 = vunpack.c.l.b16 %v727
        %v1065 = vunpack.c.h.b16 %v727
        %v1066 = vunpack.c.l.b16 %v728
        %v1067 = vunpack.c.h.b16 %v728
        %v1068 = vunpack.c.l.b16 %v729
        %v1069 = vunpack.c.h.b16 %v729
        %v1070 = vunpack.c.l.b16 %v730
        %v1071 = vunpack.c.h.b16 %v730
        %v1072 = vunpack.c.l.b16 %v731
        %v1073 = vunpack.c.h.b16 %v731
        %v1074 = vunpack.c.l.b16 %v732
        %v1075 = vunpack.c.h.b16 %v732
        %v1076 = vunpack.c.l.b16 %v733
        %v1077 = vunpack.c.h.b16 %v733
        %v1078 = vunpack.c.l.b16 %v734
        %v1079 = vunpack.c.h.b16 %v734
        %v1080 = vunpack.c.l.b16 %v735
        %v1081 = vunpack.c.h.b16 %v735
        %v1082 = vunpack.c.l.b16 %v736
        %v1083 = vunpack.c.h.b16 %v736
        %v1084 = vunpack.c.l.b16 %v737
        %v1085 = vunpack.c.h.b16 %v737
        %v1086 = vunpack.c.l.b16 %v738
        %v1087 = vunpack.c.h.b16 %v738
        %v1088 = vunpack.c.l.b16 %v739
        %v1089 = vunpack.c.h.b16 %v739
        %v1090 = vunpack.c.l.b16 %v740
        %v1091 = vunpack.c.h.b16 %v740
        %v1092 = vunpack.c.l.b16 %v741
        %v1093 = vunpack.c.h.b16 %v741
        %v1094 = vpack.c.b16 %v914, %v902
        %v1095 = vpack.c.b16 %v915, %v903
        %v1096 = vpack.c.b16 %v916, %v904
        %v1097 = vpack.c.b16 %v917, %v905
        %v1098 = vpack.c.b16 %v918, %v906
        %v1099 = vpack.c.b16 %v919, %v907
        %v1100 = vpack.c.b16 %v920, %v908
        %v1101 = vpack.c.b16 %v921, %v909
        %v1102 = vpack.c.b16 %v922, %v910
        %v1103 = vpack.c.b16 %v923, %v911
        %v1104 = vpack.c.b16 %v924, %v912
        %v1105 = vpack.c.b16 %v925, %v913
        %v1106 = vpack.c.b16 %v938, %v926
        %v1107 = vpack.c.b16 %v939, %v927
        %v1108 = vpack.c.b16 %v940, %v928
        %v1109 = vpack.c.b16 %v941, %v929
        %v1110 = vpack.c.b16 %v942, %v930
        %v1111 = vpack.c.b16 %v943, %v931
        %v1112 = vpack.c.b16 %v944, %v932
        %v1113 = vpack.c.b16 %v945, %v933
        %v1114 = vpack.c.b16 %v946, %v934
        %v1115 = vpack.c.b16 %v947, %v935
        %v1116 = vpack.c.b16 %v948, %v936
        %v1117 = vpack.c.b16 %v949, %v937
        %v1118 = vpack.c.b16 %v962, %v950
        %v1119 = vpack.c.b16 %v963, %v951
        %v1120 = vpack.c.b16 %v964, %v952
        %v1121 = vpack.c.b16 %v965, %v953
        %v1122 = vpack.c.b16 %v966, %v954
        %v1123 = vpack.c.b16 %v967, %v955
        %v1124 = vpack.c.b16 %v968, %v956
        %v1125 = vpack.c.b16 %v969, %v957
        %v1126 = vpack.c.b16 %v970, %v958
        %v1127 = vpack.c.b16 %v971, %v959
        %v1128 = vpack.c.b16 %v972, %v960
        %v1129 = vpack.c.b16 %v973, %v961
        %v1130 = vpack.c.b16 %v986, %v974
        %v1131 = vpack.c.b16 %v987, %v975
        %v1132 = vpack.c.b16 %v988, %v976
        %v1133 = vpack.c.b16 %v989, %v977
        %v1134 = vpack.c.b16 %v990, %v978
        %v1135 = vpack.c.b16 %v991, %v979
        %v1136 = vpack.c.b16 %v992, %v980
        %v1137 = vpack.c.b16 %v993, %v981
        %v1138 = vpack.c.b16 %v994, %v982
        %v1139 = vpack.c.b16 %v995, %v983
        %v1140 = vpack.c.b16 %v996, %v984
        %v1141 = vpack.c.b16 %v997, %v985
        %v1142 = vpack.c.b16 %v1010, %v998
        %v1143 = vpack.c.b16 %v1011, %v999
        %v1144 = vpack.c.b16 %v1012, %v1000
        %v1145 = vpack.c.b16 %v1013, %v1001
        %v1146 = vpack.c.b16 %v1014, %v1002
        %v1147 = vpack.c.b16 %v1015, %v1003
        %v1148 = vpack.c.b16 %v1016, %v1004
        %v1149 = vpack.c.b16 %v1017, %v1005
        %v1150 = vpack.c.b16 %v1018, %v1006
        %v1151 = vpack.c.b16 %v1019, %v1007
        %v1152 = vpack.c.b16 %v1020, %v1008
        %v1153 = vpack.c.b16 %v1021, %v1009
        %v1154 = vpack.c.b16 %v1034, %v1022
        %v1155 = vpack.c.b16 %v1035, %v1023
        %v1156 = vpack.c.b16 %v1036, %v1024
        %v1157 = vpack.c.b16 %v1037, %v1025
        %v1158 = vpack.c.b16 %v1038, %v1026
        %v1159 = vpack.c.b16 %v1039, %v1027
        %v1160 = vpack.c.b16 %v1040, %v1028
        %v1161 = vpack.c.b16 %v1041, %v1029
        %v1162 = vpack.c.b16 %v1042, %v1030
        %v1163 = vpack.c.b16 %v1043, %v1031
        %v1164 = vpack.c.b16 %v1044, %v1032
        %v1165 = vpack.c.b16 %v1045, %v1033
        %v1166 = vpack.c.b16 %v1058, %v1046
        %v1167 = vpack.c.b16 %v1059, %v1047
        %v1168 = vpack.c.b16 %v1060, %v1048
        %v1169 = vpack.c.b16 %v1061, %v1049
        %v1170 = vpack.c.b16 %v1062, %v1050
        %v1171 = vpack.c.b16 %v1063, %v1051
        %v1172 = vpack.c.b16 %v1064, %v1052
        %v1173 = vpack.c.b16 %v1065, %v1053
        %v1174 = vpack.c.b16 %v1066, %v1054
        %v1175 = vpack.c.b16 %v1067, %v1055
        %v1176 = vpack.c.b16 %v1068, %v1056
        %v1177 = vpack.c.b16 %v1069, %v1057
        %v1178 = vpack.c.b16 %v1082, %v1070
        %v1179 = vpack.c.b16 %v1083, %v1071
        %v1180 = vpack.c.b16 %v1084, %v1072
        %v1181 = vpack.c.b16 %v1085, %v1073
        %v1182 = vpack.c.b16 %v1086, %v1074
        %v1183 = vpack.c.b16 %v1087, %v1075
        %v1184 = vpack.c.b16 %v1088, %v1076
        %v1185 = vpack.c.b16 %v1089, %v1077
        %v1186 = vpack.c.b16 %v1090, %v1078
        %v1187 = vpack.c.b16 %v1091, %v1079
        %v1188 = vpack.c.b16 %v1092, %v1080
        %v1189 = vpack.c.b16 %v1093, %v1081
        %1286 = vmatprep.subr.bf16.mxu0 %v1095
        %1287 = vmatpush1.bf16.msra.mxu0 %v1094
        %1288 = vmatprep.subr.bf16.mxu0 %v1107
        %1289 = vmatpush1.bf16.msra.mxu0 %v1106
        %1290 = vmatprep.subr.bf16.mxu0 %v1119
        %1291 = vmatpush1.bf16.msra.mxu0 %v1118
        %1292 = vmatprep.subr.bf16.mxu0 %v1131
        %1293 = vmatpush1.bf16.msra.mxu0 %v1130
        %1294 = vmatprep.subr.bf16.mxu0 %v1143
        %1295 = vmatpush1.bf16.msra.mxu0 %v1142
        %1296 = vmatprep.subr.bf16.mxu0 %v1155
        %1297 = vmatpush1.bf16.msra.mxu0 %v1154
        %1298 = vmatprep.subr.bf16.mxu0 %v1167
        %1299 = vmatpush1.bf16.msra.mxu0 %v1166
        %1300 = vmatprep.subr.bf16.mxu0 %v1179
        %1301 = vmatpush1.bf16.msra.mxu0 %v1178
        %1302 = vmatprep.subr.bf16.mxu0 0
        %1303 = vmatpush1.bf16.msra.mxu0 0
        %1304 = vmatprep.subr.bf16.mxu0 0
        %1305 = vmatpush1.bf16.msra.mxu0 0
        %1306 = vmatprep.subr.bf16.mxu0 0
        %1307 = vmatpush1.bf16.msra.mxu0 0
        %1308 = vmatprep.subr.bf16.mxu0 0
        %1309 = vmatpush1.bf16.msra.mxu0 0
        %1310 = vmatprep.subr.bf16.mxu0 0
        %1311 = vmatpush1.bf16.msra.mxu0 0
        %1312 = vmatprep.subr.bf16.mxu0 0
        %1313 = vmatpush1.bf16.msra.mxu0 0
        %1314 = vmatprep.subr.bf16.mxu0 0
        %1315 = vmatpush1.bf16.msra.mxu0 0
        %1316 = vmatprep.subr.bf16.mxu0 0
        %1317 = vmatpush1.bf16.msra.mxu0 0
        %1318 = vmatprep.mubr.bf16.mxu0 0
        %1319 = vmatmul.mubr.bf16.gmra.mrb[0].mxu0 %v644
        %v1320 = vpop.f32.mrb[0].mxu0
        %v1321 = vadd.f32 %v749, %v1320
        %v1322 = vpop.f32.mrb[0].mxu0
        %v1323 = vadd.f32 %v753, %v1322
        %v1324 = vpop.f32.mrb[0].mxu0
        %v1325 = vadd.f32 %v749, %v1324
        %v1326 = vpop.f32.mrb[0].mxu0
        %v1327 = vadd.f32 %v753, %v1326
        %1328 = vmatprep.mubr.bf16.mxu0 0
        %1329 = vmatmul.mubr.bf16.gmra.mrb[0].mxu0 %v645
        %v1330 = vpop.f32.mrb[0].mxu0
        %v1331 = vadd.f32 %v749, %v1330
        %v1332 = vpop.f32.mrb[0].mxu0
        %v1333 = vadd.f32 %v753, %v1332
        %v1334 = vpop.f32.mrb[0].mxu0
        %v1335 = vadd.f32 %v749, %v1334
        %v1336 = vpop.f32.mrb[0].mxu0
        %v1337 = vadd.f32 %v753, %v1336
        %1338 = vdwg.mxu0
        %1339 = vmatprep.subr.bf16.mxu0 %v1097
        %1340 = vmatpush1.bf16.msra.mxu0 %v1096
        %1341 = vmatprep.subr.bf16.mxu0 %v1109
        %1342 = vmatpush1.bf16.msra.mxu0 %v1108
        %1343 = vmatprep.subr.bf16.mxu0 %v1121
        %1344 = vmatpush1.bf16.msra.mxu0 %v1120
        %1345 = vmatprep.subr.bf16.mxu0 %v1133
        %1346 = vmatpush1.bf16.msra.mxu0 %v1132
        %1347 = vmatprep.subr.bf16.mxu0 %v1145
        %1348 = vmatpush1.bf16.msra.mxu0 %v1144
        %1349 = vmatprep.subr.bf16.mxu0 %v1157
        %1350 = vmatpush1.bf16.msra.mxu0 %v1156
        %1351 = vmatprep.subr.bf16.mxu0 %v1169
        %1352 = vmatpush1.bf16.msra.mxu0 %v1168
        %1353 = vmatprep.subr.bf16.mxu0 %v1181
        %1354 = vmatpush1.bf16.msra.mxu0 %v1180
        %1355 = vmatprep.subr.bf16.mxu0 0
        %1356 = vmatpush1.bf16.msra.mxu0 0
        %1357 = vmatprep.subr.bf16.mxu0 0
        %1358 = vmatpush1.bf16.msra.mxu0 0
        %1359 = vmatprep.subr.bf16.mxu0 0
        %1360 = vmatpush1.bf16.msra.mxu0 0
        %1361 = vmatprep.subr.bf16.mxu0 0
        %1362 = vmatpush1.bf16.msra.mxu0 0
        %1363 = vmatprep.subr.bf16.mxu0 0
        %1364 = vmatpush1.bf16.msra.mxu0 0
        %1365 = vmatprep.subr.bf16.mxu0 0
        %1366 = vmatpush1.bf16.msra.mxu0 0
        %1367 = vmatprep.subr.bf16.mxu0 0
        %1368 = vmatpush1.bf16.msra.mxu0 0
        %1369 = vmatprep.subr.bf16.mxu0 0
        %1370 = vmatpush1.bf16.msra.mxu0 0
        %1371 = vmatprep.mubr.bf16.mxu0 0
        %1372 = vmatmul.mubr.bf16.gmra.mrb[0].mxu0 %v644
        %v1373 = vpop.f32.mrb[0].mxu0
        %v1374 = vadd.f32 %v757, %v1373
        %v1375 = vpop.f32.mrb[0].mxu0
        %v1376 = vadd.f32 %v761, %v1375
        %v1377 = vpop.f32.mrb[0].mxu0
        %v1378 = vadd.f32 %v757, %v1377
        %v1379 = vpop.f32.mrb[0].mxu0
        %v1380 = vadd.f32 %v761, %v1379
        %1381 = vmatprep.mubr.bf16.mxu0 0
        %1382 = vmatmul.mubr.bf16.gmra.mrb[0].mxu0 %v645
        %v1383 = vpop.f32.mrb[0].mxu0
        %v1384 = vadd.f32 %v757, %v1383
        %v1385 = vpop.f32.mrb[0].mxu0
        %v1386 = vadd.f32 %v761, %v1385
        %v1387 = vpop.f32.mrb[0].mxu0
        %v1388 = vadd.f32 %v757, %v1387
        %v1389 = vpop.f32.mrb[0].mxu0
        %v1390 = vadd.f32 %v761, %v1389
        %1391 = vdwg.mxu0
        %1392 = vmatprep.subr.bf16.mxu0 %v1099
        %1393 = vmatpush1.bf16.msra.mxu0 %v1098
        %1394 = vmatprep.subr.bf16.mxu0 %v1111
        %1395 = vmatpush1.bf16.msra.mxu0 %v1110
        %1396 = vmatprep.subr.bf16.mxu0 %v1123
        %1397 = vmatpush1.bf16.msra.mxu0 %v1122
        %1398 = vmatprep.subr.bf16.mxu0 %v1135
        %1399 = vmatpush1.bf16.msra.mxu0 %v1134
        %1400 = vmatprep.subr.bf16.mxu0 %v1147
        %1401 = vmatpush1.bf16.msra.mxu0 %v1146
        %1402 = vmatprep.subr.bf16.mxu0 %v1159
        %1403 = vmatpush1.bf16.msra.mxu0 %v1158
        %1404 = vmatprep.subr.bf16.mxu0 %v1171
        %1405 = vmatpush1.bf16.msra.mxu0 %v1170
        %1406 = vmatprep.subr.bf16.mxu0 %v1183
        %1407 = vmatpush1.bf16.msra.mxu0 %v1182
        %1408 = vmatprep.subr.bf16.mxu0 0
        %1409 = vmatpush1.bf16.msra.mxu0 0
        %1410 = vmatprep.subr.bf16.mxu0 0
        %1411 = vmatpush1.bf16.msra.mxu0 0
        %1412 = vmatprep.subr.bf16.mxu0 0
        %1413 = vmatpush1.bf16.msra.mxu0 0
        %1414 = vmatprep.subr.bf16.mxu0 0
        %1415 = vmatpush1.bf16.msra.mxu0 0
        %1416 = vmatprep.subr.bf16.mxu0 0
        %1417 = vmatpush1.bf16.msra.mxu0 0
        %1418 = vmatprep.subr.bf16.mxu0 0
        %1419 = vmatpush1.bf16.msra.mxu0 0
        %1420 = vmatprep.subr.bf16.mxu0 0
        %1421 = vmatpush1.bf16.msra.mxu0 0
        %1422 = vmatprep.subr.bf16.mxu0 0
        %1423 = vmatpush1.bf16.msra.mxu0 0
        %1424 = vmatprep.mubr.bf16.mxu0 0
        %1425 = vmatmul.mubr.bf16.gmra.mrb[0].mxu0 %v644
        %v1426 = vpop.f32.mrb[0].mxu0
        %v1427 = vadd.f32 %v765, %v1426
        %v1428 = vpop.f32.mrb[0].mxu0
        %v1429 = vadd.f32 %v769, %v1428
        %v1430 = vpop.f32.mrb[0].mxu0
        %v1431 = vadd.f32 %v765, %v1430
        %v1432 = vpop.f32.mrb[0].mxu0
        %v1433 = vadd.f32 %v769, %v1432
        %1434 = vmatprep.mubr.bf16.mxu0 0
        %1435 = vmatmul.mubr.bf16.gmra.mrb[0].mxu0 %v645
        %v1436 = vpop.f32.mrb[0].mxu0
        %v1437 = vadd.f32 %v765, %v1436
        %v1438 = vpop.f32.mrb[0].mxu0
        %v1439 = vadd.f32 %v769, %v1438
        %v1440 = vpop.f32.mrb[0].mxu0
        %v1441 = vadd.f32 %v765, %v1440
        %v1442 = vpop.f32.mrb[0].mxu0
        %v1443 = vadd.f32 %v769, %v1442
        %1444 = vdwg.mxu0
        %1445 = vmatprep.subr.bf16.mxu0 %v1101
        %1446 = vmatpush1.bf16.msra.mxu0 %v1100
        %1447 = vmatprep.subr.bf16.mxu0 %v1113
        %1448 = vmatpush1.bf16.msra.mxu0 %v1112
        %1449 = vmatprep.subr.bf16.mxu0 %v1125
        %1450 = vmatpush1.bf16.msra.mxu0 %v1124
        %1451 = vmatprep.subr.bf16.mxu0 %v1137
        %1452 = vmatpush1.bf16.msra.mxu0 %v1136
        %1453 = vmatprep.subr.bf16.mxu0 %v1149
        %1454 = vmatpush1.bf16.msra.mxu0 %v1148
        %1455 = vmatprep.subr.bf16.mxu0 %v1161
        %1456 = vmatpush1.bf16.msra.mxu0 %v1160
        %1457 = vmatprep.subr.bf16.mxu0 %v1173
        %1458 = vmatpush1.bf16.msra.mxu0 %v1172
        %1459 = vmatprep.subr.bf16.mxu0 %v1185
        %1460 = vmatpush1.bf16.msra.mxu0 %v1184
        %1461 = vmatprep.subr.bf16.mxu0 0
        %1462 = vmatpush1.bf16.msra.mxu0 0
        %1463 = vmatprep.subr.bf16.mxu0 0
        %1464 = vmatpush1.bf16.msra.mxu0 0
        %1465 = vmatprep.subr.bf16.mxu0 0
        %1466 = vmatpush1.bf16.msra.mxu0 0
        %1467 = vmatprep.subr.bf16.mxu0 0
        %1468 = vmatpush1.bf16.msra.mxu0 0
        %1469 = vmatprep.subr.bf16.mxu0 0
        %1470 = vmatpush1.bf16.msra.mxu0 0
        %1471 = vmatprep.subr.bf16.mxu0 0
        %1472 = vmatpush1.bf16.msra.mxu0 0
        %1473 = vmatprep.subr.bf16.mxu0 0
        %1474 = vmatpush1.bf16.msra.mxu0 0
        %1475 = vmatprep.subr.bf16.mxu0 0
        %1476 = vmatpush1.bf16.msra.mxu0 0
        %1477 = vmatprep.mubr.bf16.mxu0 0
        %1478 = vmatmul.mubr.bf16.gmra.mrb[0].mxu0 %v644
        %v1479 = vpop.f32.mrb[0].mxu0
        %v1480 = vadd.f32 %v773, %v1479
        %v1481 = vpop.f32.mrb[0].mxu0
        %v1482 = vadd.f32 %v777, %v1481
        %v1483 = vpop.f32.mrb[0].mxu0
        %v1484 = vadd.f32 %v773, %v1483
        %v1485 = vpop.f32.mrb[0].mxu0
        %v1486 = vadd.f32 %v777, %v1485
        %1487 = vmatprep.mubr.bf16.mxu0 0
        %1488 = vmatmul.mubr.bf16.gmra.mrb[0].mxu0 %v645
        %v1489 = vpop.f32.mrb[0].mxu0
        %v1490 = vadd.f32 %v773, %v1489
        %v1491 = vpop.f32.mrb[0].mxu0
        %v1492 = vadd.f32 %v777, %v1491
        %v1493 = vpop.f32.mrb[0].mxu0
        %v1494 = vadd.f32 %v773, %v1493
        %v1495 = vpop.f32.mrb[0].mxu0
        %v1496 = vadd.f32 %v777, %v1495
        %1497 = vdwg.mxu0
        %1498 = vmatprep.subr.bf16.mxu0 %v1103
        %1499 = vmatpush1.bf16.msra.mxu0 %v1102
        %1500 = vmatprep.subr.bf16.mxu0 %v1115
        %1501 = vmatpush1.bf16.msra.mxu0 %v1114
        %1502 = vmatprep.subr.bf16.mxu0 %v1127
        %1503 = vmatpush1.bf16.msra.mxu0 %v1126
        %1504 = vmatprep.subr.bf16.mxu0 %v1139
        %1505 = vmatpush1.bf16.msra.mxu0 %v1138
        %1506 = vmatprep.subr.bf16.mxu0 %v1151
        %1507 = vmatpush1.bf16.msra.mxu0 %v1150
        %1508 = vmatprep.subr.bf16.mxu0 %v1163
        %1509 = vmatpush1.bf16.msra.mxu0 %v1162
        %1510 = vmatprep.subr.bf16.mxu0 %v1175
        %1511 = vmatpush1.bf16.msra.mxu0 %v1174
        %1512 = vmatprep.subr.bf16.mxu0 %v1187
        %1513 = vmatpush1.bf16.msra.mxu0 %v1186
        %1514 = vmatprep.subr.bf16.mxu0 0
        %1515 = vmatpush1.bf16.msra.mxu0 0
        %1516 = vmatprep.subr.bf16.mxu0 0
        %1517 = vmatpush1.bf16.msra.mxu0 0
        %1518 = vmatprep.subr.bf16.mxu0 0
        %1519 = vmatpush1.bf16.msra.mxu0 0
        %1520 = vmatprep.subr.bf16.mxu0 0
        %1521 = vmatpush1.bf16.msra.mxu0 0
        %1522 = vmatprep.subr.bf16.mxu0 0
        %1523 = vmatpush1.bf16.msra.mxu0 0
        %1524 = vmatprep.subr.bf16.mxu0 0
        %1525 = vmatpush1.bf16.msra.mxu0 0
        %1526 = vmatprep.subr.bf16.mxu0 0
        %1527 = vmatpush1.bf16.msra.mxu0 0
        %1528 = vmatprep.subr.bf16.mxu0 0
        %1529 = vmatpush1.bf16.msra.mxu0 0
        %1530 = vmatprep.mubr.bf16.mxu0 0
        %1531 = vmatmul.mubr.bf16.gmra.mrb[0].mxu0 %v644
        %v1532 = vpop.f32.mrb[0].mxu0
        %v1533 = vadd.f32 %v781, %v1532
        %v1534 = vpop.f32.mrb[0].mxu0
        %v1535 = vadd.f32 %v785, %v1534
        %v1536 = vpop.f32.mrb[0].mxu0
        %v1537 = vadd.f32 %v781, %v1536
        %v1538 = vpop.f32.mrb[0].mxu0
        %v1539 = vadd.f32 %v785, %v1538
        %1540 = vmatprep.mubr.bf16.mxu0 0
        %1541 = vmatmul.mubr.bf16.gmra.mrb[0].mxu0 %v645
        %v1542 = vpop.f32.mrb[0].mxu0
        %v1543 = vadd.f32 %v781, %v1542
        %v1544 = vpop.f32.mrb[0].mxu0
        %v1545 = vadd.f32 %v785, %v1544
        %v1546 = vpop.f32.mrb[0].mxu0
        %v1547 = vadd.f32 %v781, %v1546
        %v1548 = vpop.f32.mrb[0].mxu0
        %v1549 = vadd.f32 %v785, %v1548
        %1550 = vdwg.mxu0
        %1551 = vmatprep.subr.bf16.mxu0 %v1105
        %1552 = vmatpush1.bf16.msra.mxu0 %v1104
        %1553 = vmatprep.subr.bf16.mxu0 %v1117
        %1554 = vmatpush1.bf16.msra.mxu0 %v1116
        %1555 = vmatprep.subr.bf16.mxu0 %v1129
        %1556 = vmatpush1.bf16.msra.mxu0 %v1128
        %1557 = vmatprep.subr.bf16.mxu0 %v1141
        %1558 = vmatpush1.bf16.msra.mxu0 %v1140
        %1559 = vmatprep.subr.bf16.mxu0 %v1153
        %1560 = vmatpush1.bf16.msra.mxu0 %v1152
        %1561 = vmatprep.subr.bf16.mxu0 %v1165
        %1562 = vmatpush1.bf16.msra.mxu0 %v1164
        %1563 = vmatprep.subr.bf16.mxu0 %v1177
        %1564 = vmatpush1.bf16.msra.mxu0 %v1176
        %1565 = vmatprep.subr.bf16.mxu0 %v1189
        %1566 = vmatpush1.bf16.msra.mxu0 %v1188
        %1567 = vmatprep.subr.bf16.mxu0 0
        %1568 = vmatpush1.bf16.msra.mxu0 0
        %1569 = vmatprep.subr.bf16.mxu0 0
        %1570 = vmatpush1.bf16.msra.mxu0 0
        %1571 = vmatprep.subr.bf16.mxu0 0
        %1572 = vmatpush1.bf16.msra.mxu0 0
        %1573 = vmatprep.subr.bf16.mxu0 0
        %1574 = vmatpush1.bf16.msra.mxu0 0
        %1575 = vmatprep.subr.bf16.mxu0 0
        %1576 = vmatpush1.bf16.msra.mxu0 0
        %1577 = vmatprep.subr.bf16.mxu0 0
        %1578 = vmatpush1.bf16.msra.mxu0 0
        %1579 = vmatprep.subr.bf16.mxu0 0
        %1580 = vmatpush1.bf16.msra.mxu0 0
        %1581 = vmatprep.subr.bf16.mxu0 0
        %1582 = vmatpush1.bf16.msra.mxu0 0
        %1583 = vmatprep.mubr.bf16.mxu0 0
        %1584 = vmatmul.mubr.bf16.gmra.mrb[0].mxu0 %v644
        %v1585 = vpop.f32.mrb[0].mxu0
        %v1586 = vadd.f32 %v789, %v1585
        %v1587 = vpop.f32.mrb[0].mxu0
        %v1588 = vadd.f32 %v793, %v1587
        %v1589 = vpop.f32.mrb[0].mxu0
        %v1590 = vadd.f32 %v789, %v1589
        %v1591 = vpop.f32.mrb[0].mxu0
        %v1592 = vadd.f32 %v793, %v1591
        %1593 = vmatprep.mubr.bf16.mxu0 0
        %1594 = vmatmul.mubr.bf16.gmra.mrb[0].mxu0 %v645
        %v1595 = vpop.f32.mrb[0].mxu0
        %v1596 = vadd.f32 %v789, %v1595
        %v1597 = vpop.f32.mrb[0].mxu0
        %v1598 = vadd.f32 %v793, %v1597
        %v1599 = vpop.f32.mrb[0].mxu0
        %v1600 = vadd.f32 %v789, %v1599
        %v1601 = vpop.f32.mrb[0].mxu0
        %v1602 = vadd.f32 %v793, %v1601
        %1603 = vdwg.mxu0
        %v1608 = vcombine.high %v1321, %v1321
        %v1609 = vcombine.high %v1325, %v1325
        %v1610 = vcombine.high %v1331, %v1331
        %v1611 = vcombine.high %v1335, %v1335
        %v1620 = vcombine.high %v1323, %v1323
        %v1621 = vcombine.high %v1327, %v1327
        %v1622 = vcombine.high %v1333, %v1333
        %v1623 = vcombine.high %v1337, %v1337
        %v1632 = vcombine.high %v1374, %v1374
        %v1633 = vcombine.high %v1378, %v1378
        %v1634 = vcombine.high %v1384, %v1384
        %v1635 = vcombine.high %v1388, %v1388
        %v1644 = vcombine.high %v1376, %v1376
        %v1645 = vcombine.high %v1380, %v1380
        %v1646 = vcombine.high %v1386, %v1386
        %v1647 = vcombine.high %v1390, %v1390
        %v1656 = vcombine.high %v1427, %v1427
        %v1657 = vcombine.high %v1431, %v1431
        %v1658 = vcombine.high %v1437, %v1437
        %v1659 = vcombine.high %v1441, %v1441
        %v1668 = vcombine.high %v1429, %v1429
        %v1669 = vcombine.high %v1433, %v1433
        %v1670 = vcombine.high %v1439, %v1439
        %v1671 = vcombine.high %v1443, %v1443
        %v1680 = vcombine.high %v1480, %v1480
        %v1681 = vcombine.high %v1484, %v1484
        %v1682 = vcombine.high %v1490, %v1490
        %v1683 = vcombine.high %v1494, %v1494
        %v1692 = vcombine.high %v1482, %v1482
        %v1693 = vcombine.high %v1486, %v1486
        %v1694 = vcombine.high %v1492, %v1492
        %v1695 = vcombine.high %v1496, %v1496
        %v1704 = vcombine.high %v1533, %v1533
        %v1705 = vcombine.high %v1537, %v1537
        %v1706 = vcombine.high %v1543, %v1543
        %v1707 = vcombine.high %v1547, %v1547
        %v1712 = vcombine.high %v1535, %v1535
        %v1713 = vcombine.high %v1539, %v1539
        %v1714 = vcombine.high %v1545, %v1545
        %v1715 = vcombine.high %v1549, %v1549
        %v1720 = vcombine.high %v1586, %v1586
        %v1721 = vcombine.high %v1590, %v1590
        %v1722 = vcombine.high %v1596, %v1596
        %v1723 = vcombine.high %v1600, %v1600
        %v1728 = vcombine.high %v1588, %v1588
        %v1729 = vcombine.high %v1592, %v1592
        %v1730 = vcombine.high %v1598, %v1598
        %v1731 = vcombine.high %v1602, %v1602
        %1732 = vmatprep.subr.mxu0 0.0
        %1733 = vmatpush1.xpose.msra.mxu0 %v1427
        %1734 = vmatprep.subr.mxu0 0.0
        %1735 = vmatpush1.xpose.msra.mxu0 0.0
        %1736 = vmatprep.subr.mxu0 0.0
        %1737 = vmatpush1.xpose.msra.mxu0 0.0
        %1738 = vmatprep.subr.mxu0 0.0
        %1739 = vmatpush1.xpose.msra.mxu0 0.0
        %1740 = vmatprep.subr.mxu0 0.0
        %1741 = vmatpush1.xpose.msra.mxu0 0.0
        %1742 = vmatprep.subr.mxu0 0.0
        %1743 = vmatpush1.xpose.msra.mxu0 0.0
        %1744 = vmatprep.subr.mxu0 0.0
        %1745 = vmatpush1.xpose.msra.mxu0 0.0
        %1746 = vmatprep.subr.mxu0 0.0
        %1747 = vmatpush1.xpose.msra.mxu0 0.0
        %1748 = vmatprep.subr.mxu0 0.0
        %1749 = vmatpush1.xpose.msra.mxu0 0.0
        %1750 = vmatprep.subr.mxu0 0.0
        %1751 = vmatpush1.xpose.msra.mxu0 0.0
        %1752 = vmatprep.subr.mxu0 0.0
        %1753 = vmatpush1.xpose.msra.mxu0 0.0
        %1754 = vmatprep.subr.mxu0 0.0
        %1755 = vmatpush1.xpose.msra.mxu0 0.0
        %1756 = vmatprep.subr.mxu0 0.0
        %1757 = vmatpush1.xpose.msra.mxu0 0.0
        %1758 = vmatprep.subr.mxu0 0.0
        %1759 = vmatpush1.xpose.msra.mxu0 0.0
        %1760 = vmatprep.subr.mxu0 0.0
        %1761 = vmatpush1.xpose.msra.mxu0 0.0
        %1762 = vmatprep.subr.mxu0 0.0
        %1763 = vmatpush1.xpose.msra.mxu0 0.0
        %1764 = vmatprep.subr.mxu0 0.0
        %1765 = vmatpush1.xpose.msra.mxu0 0.0
        %1766 = vmatprep.subr.mxu0 0.0
        %1767 = vmatpush1.xpose.msra.mxu0 0.0
        %1768 = vmatprep.subr.mxu0 0.0
        %1769 = vmatpush1.xpose.msra.mxu0 0.0
        %1770 = vmatprep.subr.mxu0 0.0
        %1771 = vmatpush1.xpose.msra.mxu0 0.0
        %1772 = vmatprep.subr.mxu0 0.0
        %1773 = vmatpush1.xpose.msra.mxu0 0.0
        %1774 = vmatprep.subr.mxu0 0.0
        %1775 = vmatpush1.xpose.msra.mxu0 0.0
        %1776 = vmatprep.subr.mxu0 0.0
        %1777 = vmatpush1.xpose.msra.mxu0 0.0
        %1778 = vmatprep.subr.mxu0 0.0
        %1779 = vmatpush1.xpose.msra.mxu0 0.0
        %1780 = vmatprep.subr.mxu0 0.0
        %1781 = vmatpush1.xpose.msra.mxu0 0.0
        %1782 = vmatprep.subr.mxu0 0.0
        %1783 = vmatpush1.xpose.msra.mxu0 0.0
        %1784 = vmatprep.subr.mxu0 0.0
        %1785 = vmatpush1.xpose.msra.mxu0 0.0
        %1786 = vmatprep.subr.mxu0 0.0
        %1787 = vmatpush1.xpose.msra.mxu0 0.0
        %1788 = vmatprep.subr.mxu0 0.0
        %1789 = vmatpush1.xpose.msra.mxu0 0.0
        %1790 = vmatprep.subr.mxu0 0.0
        %1791 = vmatpush1.xpose.msra.mxu0 0.0
        %1792 = vmatprep.subr.mxu0 0.0
        %1793 = vmatpush1.xpose.msra.mxu0 0.0
        %1794 = vmatprep.subr.mxu0 0.0
        %1795 = vmatpush1.xpose.msra.mxu0 0.0
        %1796 = vmatprep.mubr.f32.mxu0 0.0
        %1797 = vmatmul.mubr.f32.gmra.mrb[0].mxu0 %v1321
        %v1798 = vpop.f32.mrb[0].mxu0
        %v1799 = vadd.f32 0.0, %v1798
        %v1800 = vpop.f32.mrb[0].mxu0
        %1801 = vdwg.mxu0
        %1802 = vmatprep.subr.mxu0 0.0
        %1803 = vmatpush1.xpose.msra.mxu0 %v1656
        %1804 = vmatprep.subr.mxu0 0.0
        %1805 = vmatpush1.xpose.msra.mxu0 0.0
        %1806 = vmatprep.subr.mxu0 0.0
        %1807 = vmatpush1.xpose.msra.mxu0 0.0
        %1808 = vmatprep.subr.mxu0 0.0
        %1809 = vmatpush1.xpose.msra.mxu0 0.0
        %1810 = vmatprep.subr.mxu0 0.0
        %1811 = vmatpush1.xpose.msra.mxu0 0.0
        %1812 = vmatprep.subr.mxu0 0.0
        %1813 = vmatpush1.xpose.msra.mxu0 0.0
        %1814 = vmatprep.subr.mxu0 0.0
        %1815 = vmatpush1.xpose.msra.mxu0 0.0
        %1816 = vmatprep.subr.mxu0 0.0
        %1817 = vmatpush1.xpose.msra.mxu0 0.0
        %1818 = vmatprep.subr.mxu0 0.0
        %1819 = vmatpush1.xpose.msra.mxu0 0.0
        %1820 = vmatprep.subr.mxu0 0.0
        %1821 = vmatpush1.xpose.msra.mxu0 0.0
        %1822 = vmatprep.subr.mxu0 0.0
        %1823 = vmatpush1.xpose.msra.mxu0 0.0
        %1824 = vmatprep.subr.mxu0 0.0
        %1825 = vmatpush1.xpose.msra.mxu0 0.0
        %1826 = vmatprep.subr.mxu0 0.0
        %1827 = vmatpush1.xpose.msra.mxu0 0.0
        %1828 = vmatprep.subr.mxu0 0.0
        %1829 = vmatpush1.xpose.msra.mxu0 0.0
        %1830 = vmatprep.subr.mxu0 0.0
        %1831 = vmatpush1.xpose.msra.mxu0 0.0
        %1832 = vmatprep.subr.mxu0 0.0
        %1833 = vmatpush1.xpose.msra.mxu0 0.0
        %1834 = vmatprep.subr.mxu0 0.0
        %1835 = vmatpush1.xpose.msra.mxu0 0.0
        %1836 = vmatprep.subr.mxu0 0.0
        %1837 = vmatpush1.xpose.msra.mxu0 0.0
        %1838 = vmatprep.subr.mxu0 0.0
        %1839 = vmatpush1.xpose.msra.mxu0 0.0
        %1840 = vmatprep.subr.mxu0 0.0
        %1841 = vmatpush1.xpose.msra.mxu0 0.0
        %1842 = vmatprep.subr.mxu0 0.0
        %1843 = vmatpush1.xpose.msra.mxu0 0.0
        %1844 = vmatprep.subr.mxu0 0.0
        %1845 = vmatpush1.xpose.msra.mxu0 0.0
        %1846 = vmatprep.subr.mxu0 0.0
        %1847 = vmatpush1.xpose.msra.mxu0 0.0
        %1848 = vmatprep.subr.mxu0 0.0
        %1849 = vmatpush1.xpose.msra.mxu0 0.0
        %1850 = vmatprep.subr.mxu0 0.0
        %1851 = vmatpush1.xpose.msra.mxu0 0.0
        %1852 = vmatprep.subr.mxu0 0.0
        %1853 = vmatpush1.xpose.msra.mxu0 0.0
        %1854 = vmatprep.subr.mxu0 0.0
        %1855 = vmatpush1.xpose.msra.mxu0 0.0
        %1856 = vmatprep.subr.mxu0 0.0
        %1857 = vmatpush1.xpose.msra.mxu0 0.0
        %1858 = vmatprep.subr.mxu0 0.0
        %1859 = vmatpush1.xpose.msra.mxu0 0.0
        %1860 = vmatprep.subr.mxu0 0.0
        %1861 = vmatpush1.xpose.msra.mxu0 0.0
        %1862 = vmatprep.subr.mxu0 0.0
        %1863 = vmatpush1.xpose.msra.mxu0 0.0
        %1864 = vmatprep.subr.mxu0 0.0
        %1865 = vmatpush1.xpose.msra.mxu0 0.0
        %1866 = vmatprep.mubr.f32.mxu0 0.0
        %1867 = vmatmul.mubr.f32.gmra.mrb[0].mxu0 %v1608
        %v1868 = vpop.f32.mrb[0].mxu0
        %v1869 = vadd.f32 0.0, %v1868
        %v1870 = vpop.f32.mrb[0].mxu0
        %1871 = vdwg.mxu0
        %1872 = vmatprep.subr.mxu0 0.0
        %1873 = vmatpush1.xpose.msra.mxu0 %v1431
        %1874 = vmatprep.subr.mxu0 0.0
        %1875 = vmatpush1.xpose.msra.mxu0 0.0
        %1876 = vmatprep.subr.mxu0 0.0
        %1877 = vmatpush1.xpose.msra.mxu0 0.0
        %1878 = vmatprep.subr.mxu0 0.0
        %1879 = vmatpush1.xpose.msra.mxu0 0.0
        %1880 = vmatprep.subr.mxu0 0.0
        %1881 = vmatpush1.xpose.msra.mxu0 0.0
        %1882 = vmatprep.subr.mxu0 0.0
        %1883 = vmatpush1.xpose.msra.mxu0 0.0
        %1884 = vmatprep.subr.mxu0 0.0
        %1885 = vmatpush1.xpose.msra.mxu0 0.0
        %1886 = vmatprep.subr.mxu0 0.0
        %1887 = vmatpush1.xpose.msra.mxu0 0.0
        %1888 = vmatprep.subr.mxu0 0.0
        %1889 = vmatpush1.xpose.msra.mxu0 0.0
        %1890 = vmatprep.subr.mxu0 0.0
        %1891 = vmatpush1.xpose.msra.mxu0 0.0
        %1892 = vmatprep.subr.mxu0 0.0
        %1893 = vmatpush1.xpose.msra.mxu0 0.0
        %1894 = vmatprep.subr.mxu0 0.0
        %1895 = vmatpush1.xpose.msra.mxu0 0.0
        %1896 = vmatprep.subr.mxu0 0.0
        %1897 = vmatpush1.xpose.msra.mxu0 0.0
        %1898 = vmatprep.subr.mxu0 0.0
        %1899 = vmatpush1.xpose.msra.mxu0 0.0
        %1900 = vmatprep.subr.mxu0 0.0
        %1901 = vmatpush1.xpose.msra.mxu0 0.0
        %1902 = vmatprep.subr.mxu0 0.0
        %1903 = vmatpush1.xpose.msra.mxu0 0.0
        %1904 = vmatprep.subr.mxu0 0.0
        %1905 = vmatpush1.xpose.msra.mxu0 0.0
        %1906 = vmatprep.subr.mxu0 0.0
        %1907 = vmatpush1.xpose.msra.mxu0 0.0
        %1908 = vmatprep.subr.mxu0 0.0
        %1909 = vmatpush1.xpose.msra.mxu0 0.0
        %1910 = vmatprep.subr.mxu0 0.0
        %1911 = vmatpush1.xpose.msra.mxu0 0.0
        %1912 = vmatprep.subr.mxu0 0.0
        %1913 = vmatpush1.xpose.msra.mxu0 0.0
        %1914 = vmatprep.subr.mxu0 0.0
        %1915 = vmatpush1.xpose.msra.mxu0 0.0
        %1916 = vmatprep.subr.mxu0 0.0
        %1917 = vmatpush1.xpose.msra.mxu0 0.0
        %1918 = vmatprep.subr.mxu0 0.0
        %1919 = vmatpush1.xpose.msra.mxu0 0.0
        %1920 = vmatprep.subr.mxu0 0.0
        %1921 = vmatpush1.xpose.msra.mxu0 0.0
        %1922 = vmatprep.subr.mxu0 0.0
        %1923 = vmatpush1.xpose.msra.mxu0 0.0
        %1924 = vmatprep.subr.mxu0 0.0
        %1925 = vmatpush1.xpose.msra.mxu0 0.0
        %1926 = vmatprep.subr.mxu0 0.0
        %1927 = vmatpush1.xpose.msra.mxu0 0.0
        %1928 = vmatprep.subr.mxu0 0.0
        %1929 = vmatpush1.xpose.msra.mxu0 0.0
        %1930 = vmatprep.subr.mxu0 0.0
        %1931 = vmatpush1.xpose.msra.mxu0 0.0
        %1932 = vmatprep.subr.mxu0 0.0
        %1933 = vmatpush1.xpose.msra.mxu0 0.0
        %1934 = vmatprep.subr.mxu0 0.0
        %1935 = vmatpush1.xpose.msra.mxu0 0.0
        %1936 = vmatprep.mubr.f32.mxu0 0.0
        %1937 = vmatmul.mubr.f32.gmra.mrb[0].mxu0 %v1325
        %v1938 = vpop.f32.mrb[0].mxu0
        %v1939 = vadd.f32 0.0, %v1938
        %v1940 = vpop.f32.mrb[0].mxu0
        %1941 = vdwg.mxu0
        %1942 = vmatprep.subr.mxu0 0.0
        %1943 = vmatpush1.xpose.msra.mxu0 %v1657
        %1944 = vmatprep.subr.mxu0 0.0
        %1945 = vmatpush1.xpose.msra.mxu0 0.0
        %1946 = vmatprep.subr.mxu0 0.0
        %1947 = vmatpush1.xpose.msra.mxu0 0.0
        %1948 = vmatprep.subr.mxu0 0.0
        %1949 = vmatpush1.xpose.msra.mxu0 0.0
        %1950 = vmatprep.subr.mxu0 0.0
        %1951 = vmatpush1.xpose.msra.mxu0 0.0
        %1952 = vmatprep.subr.mxu0 0.0
        %1953 = vmatpush1.xpose.msra.mxu0 0.0
        %1954 = vmatprep.subr.mxu0 0.0
        %1955 = vmatpush1.xpose.msra.mxu0 0.0
        %1956 = vmatprep.subr.mxu0 0.0
        %1957 = vmatpush1.xpose.msra.mxu0 0.0
        %1958 = vmatprep.subr.mxu0 0.0
        %1959 = vmatpush1.xpose.msra.mxu0 0.0
        %1960 = vmatprep.subr.mxu0 0.0
        %1961 = vmatpush1.xpose.msra.mxu0 0.0
        %1962 = vmatprep.subr.mxu0 0.0
        %1963 = vmatpush1.xpose.msra.mxu0 0.0
        %1964 = vmatprep.subr.mxu0 0.0
        %1965 = vmatpush1.xpose.msra.mxu0 0.0
        %1966 = vmatprep.subr.mxu0 0.0
        %1967 = vmatpush1.xpose.msra.mxu0 0.0
        %1968 = vmatprep.subr.mxu0 0.0
        %1969 = vmatpush1.xpose.msra.mxu0 0.0
        %1970 = vmatprep.subr.mxu0 0.0
        %1971 = vmatpush1.xpose.msra.mxu0 0.0
        %1972 = vmatprep.subr.mxu0 0.0
        %1973 = vmatpush1.xpose.msra.mxu0 0.0
        %1974 = vmatprep.subr.mxu0 0.0
        %1975 = vmatpush1.xpose.msra.mxu0 0.0
        %1976 = vmatprep.subr.mxu0 0.0
        %1977 = vmatpush1.xpose.msra.mxu0 0.0
        %1978 = vmatprep.subr.mxu0 0.0
        %1979 = vmatpush1.xpose.msra.mxu0 0.0
        %1980 = vmatprep.subr.mxu0 0.0
        %1981 = vmatpush1.xpose.msra.mxu0 0.0
        %1982 = vmatprep.subr.mxu0 0.0
        %1983 = vmatpush1.xpose.msra.mxu0 0.0
        %1984 = vmatprep.subr.mxu0 0.0
        %1985 = vmatpush1.xpose.msra.mxu0 0.0
        %1986 = vmatprep.subr.mxu0 0.0
        %1987 = vmatpush1.xpose.msra.mxu0 0.0
        %1988 = vmatprep.subr.mxu0 0.0
        %1989 = vmatpush1.xpose.msra.mxu0 0.0
        %1990 = vmatprep.subr.mxu0 0.0
        %1991 = vmatpush1.xpose.msra.mxu0 0.0
        %1992 = vmatprep.subr.mxu0 0.0
        %1993 = vmatpush1.xpose.msra.mxu0 0.0
        %1994 = vmatprep.subr.mxu0 0.0
        %1995 = vmatpush1.xpose.msra.mxu0 0.0
        %1996 = vmatprep.subr.mxu0 0.0
        %1997 = vmatpush1.xpose.msra.mxu0 0.0
        %1998 = vmatprep.subr.mxu0 0.0
        %1999 = vmatpush1.xpose.msra.mxu0 0.0
        %2000 = vmatprep.subr.mxu0 0.0
        %2001 = vmatpush1.xpose.msra.mxu0 0.0
        %2002 = vmatprep.subr.mxu0 0.0
        %2003 = vmatpush1.xpose.msra.mxu0 0.0
        %2004 = vmatprep.subr.mxu0 0.0
        %2005 = vmatpush1.xpose.msra.mxu0 0.0
        %2006 = vmatprep.mubr.f32.mxu0 0.0
        %2007 = vmatmul.mubr.f32.gmra.mrb[0].mxu0 %v1609
        %v2008 = vpop.f32.mrb[0].mxu0
        %v2009 = vadd.f32 0.0, %v2008
        %v2010 = vpop.f32.mrb[0].mxu0
        %2011 = vdwg.mxu0
        %2012 = vmatprep.subr.mxu0 0.0
        %2013 = vmatpush1.xpose.msra.mxu0 %v1437
        %2014 = vmatprep.subr.mxu0 0.0
        %2015 = vmatpush1.xpose.msra.mxu0 0.0
        %2016 = vmatprep.subr.mxu0 0.0
        %2017 = vmatpush1.xpose.msra.mxu0 0.0
        %2018 = vmatprep.subr.mxu0 0.0
        %2019 = vmatpush1.xpose.msra.mxu0 0.0
        %2020 = vmatprep.subr.mxu0 0.0
        %2021 = vmatpush1.xpose.msra.mxu0 0.0
        %2022 = vmatprep.subr.mxu0 0.0
        %2023 = vmatpush1.xpose.msra.mxu0 0.0
        %2024 = vmatprep.subr.mxu0 0.0
        %2025 = vmatpush1.xpose.msra.mxu0 0.0
        %2026 = vmatprep.subr.mxu0 0.0
        %2027 = vmatpush1.xpose.msra.mxu0 0.0
        %2028 = vmatprep.subr.mxu0 0.0
        %2029 = vmatpush1.xpose.msra.mxu0 0.0
        %2030 = vmatprep.subr.mxu0 0.0
        %2031 = vmatpush1.xpose.msra.mxu0 0.0
        %2032 = vmatprep.subr.mxu0 0.0
        %2033 = vmatpush1.xpose.msra.mxu0 0.0
        %2034 = vmatprep.subr.mxu0 0.0
        %2035 = vmatpush1.xpose.msra.mxu0 0.0
        %2036 = vmatprep.subr.mxu0 0.0
        %2037 = vmatpush1.xpose.msra.mxu0 0.0
        %2038 = vmatprep.subr.mxu0 0.0
        %2039 = vmatpush1.xpose.msra.mxu0 0.0
        %2040 = vmatprep.subr.mxu0 0.0
        %2041 = vmatpush1.xpose.msra.mxu0 0.0
        %2042 = vmatprep.subr.mxu0 0.0
        %2043 = vmatpush1.xpose.msra.mxu0 0.0
        %2044 = vmatprep.subr.mxu0 0.0
        %2045 = vmatpush1.xpose.msra.mxu0 0.0
        %2046 = vmatprep.subr.mxu0 0.0
        %2047 = vmatpush1.xpose.msra.mxu0 0.0
        %2048 = vmatprep.subr.mxu0 0.0
        %2049 = vmatpush1.xpose.msra.mxu0 0.0
        %2050 = vmatprep.subr.mxu0 0.0
        %2051 = vmatpush1.xpose.msra.mxu0 0.0
        %2052 = vmatprep.subr.mxu0 0.0
        %2053 = vmatpush1.xpose.msra.mxu0 0.0
        %2054 = vmatprep.subr.mxu0 0.0
        %2055 = vmatpush1.xpose.msra.mxu0 0.0
        %2056 = vmatprep.subr.mxu0 0.0
        %2057 = vmatpush1.xpose.msra.mxu0 0.0
        %2058 = vmatprep.subr.mxu0 0.0
        %2059 = vmatpush1.xpose.msra.mxu0 0.0
        %2060 = vmatprep.subr.mxu0 0.0
        %2061 = vmatpush1.xpose.msra.mxu0 0.0
        %2062 = vmatprep.subr.mxu0 0.0
        %2063 = vmatpush1.xpose.msra.mxu0 0.0
        %2064 = vmatprep.subr.mxu0 0.0
        %2065 = vmatpush1.xpose.msra.mxu0 0.0
        %2066 = vmatprep.subr.mxu0 0.0
        %2067 = vmatpush1.xpose.msra.mxu0 0.0
        %2068 = vmatprep.subr.mxu0 0.0
        %2069 = vmatpush1.xpose.msra.mxu0 0.0
        %2070 = vmatprep.subr.mxu0 0.0
        %2071 = vmatpush1.xpose.msra.mxu0 0.0
        %2072 = vmatprep.subr.mxu0 0.0
        %2073 = vmatpush1.xpose.msra.mxu0 0.0
        %2074 = vmatprep.subr.mxu0 0.0
        %2075 = vmatpush1.xpose.msra.mxu0 0.0
        %2076 = vmatprep.mubr.f32.mxu0 0.0
        %2077 = vmatmul.mubr.f32.gmra.mrb[0].mxu0 %v1331
        %v2078 = vpop.f32.mrb[0].mxu0
        %v2079 = vadd.f32 0.0, %v2078
        %v2080 = vpop.f32.mrb[0].mxu0
        %2081 = vdwg.mxu0
        %2082 = vmatprep.subr.mxu0 0.0
        %2083 = vmatpush1.xpose.msra.mxu0 %v1658
        %2084 = vmatprep.subr.mxu0 0.0
        %2085 = vmatpush1.xpose.msra.mxu0 0.0
        %2086 = vmatprep.subr.mxu0 0.0
        %2087 = vmatpush1.xpose.msra.mxu0 0.0
        %2088 = vmatprep.subr.mxu0 0.0
        %2089 = vmatpush1.xpose.msra.mxu0 0.0
        %2090 = vmatprep.subr.mxu0 0.0
        %2091 = vmatpush1.xpose.msra.mxu0 0.0
        %2092 = vmatprep.subr.mxu0 0.0
        %2093 = vmatpush1.xpose.msra.mxu0 0.0
        %2094 = vmatprep.subr.mxu0 0.0
        %2095 = vmatpush1.xpose.msra.mxu0 0.0
        %2096 = vmatprep.subr.mxu0 0.0
        %2097 = vmatpush1.xpose.msra.mxu0 0.0
        %2098 = vmatprep.subr.mxu0 0.0
        %2099 = vmatpush1.xpose.msra.mxu0 0.0
        %2100 = vmatprep.subr.mxu0 0.0
        %2101 = vmatpush1.xpose.msra.mxu0 0.0
        %2102 = vmatprep.subr.mxu0 0.0
        %2103 = vmatpush1.xpose.msra.mxu0 0.0
        %2104 = vmatprep.subr.mxu0 0.0
        %2105 = vmatpush1.xpose.msra.mxu0 0.0
        %2106 = vmatprep.subr.mxu0 0.0
        %2107 = vmatpush1.xpose.msra.mxu0 0.0
        %2108 = vmatprep.subr.mxu0 0.0
        %2109 = vmatpush1.xpose.msra.mxu0 0.0
        %2110 = vmatprep.subr.mxu0 0.0
        %2111 = vmatpush1.xpose.msra.mxu0 0.0
        %2112 = vmatprep.subr.mxu0 0.0
        %2113 = vmatpush1.xpose.msra.mxu0 0.0
        %2114 = vmatprep.subr.mxu0 0.0
        %2115 = vmatpush1.xpose.msra.mxu0 0.0
        %2116 = vmatprep.subr.mxu0 0.0
        %2117 = vmatpush1.xpose.msra.mxu0 0.0
        %2118 = vmatprep.subr.mxu0 0.0
        %2119 = vmatpush1.xpose.msra.mxu0 0.0
        %2120 = vmatprep.subr.mxu0 0.0
        %2121 = vmatpush1.xpose.msra.mxu0 0.0
        %2122 = vmatprep.subr.mxu0 0.0
        %2123 = vmatpush1.xpose.msra.mxu0 0.0
        %2124 = vmatprep.subr.mxu0 0.0
        %2125 = vmatpush1.xpose.msra.mxu0 0.0
        %2126 = vmatprep.subr.mxu0 0.0
        %2127 = vmatpush1.xpose.msra.mxu0 0.0
        %2128 = vmatprep.subr.mxu0 0.0
        %2129 = vmatpush1.xpose.msra.mxu0 0.0
        %2130 = vmatprep.subr.mxu0 0.0
        %2131 = vmatpush1.xpose.msra.mxu0 0.0
        %2132 = vmatprep.subr.mxu0 0.0
        %2133 = vmatpush1.xpose.msra.mxu0 0.0
        %2134 = vmatprep.subr.mxu0 0.0
        %2135 = vmatpush1.xpose.msra.mxu0 0.0
        %2136 = vmatprep.subr.mxu0 0.0
        %2137 = vmatpush1.xpose.msra.mxu0 0.0
        %2138 = vmatprep.subr.mxu0 0.0
        %2139 = vmatpush1.xpose.msra.mxu0 0.0
        %2140 = vmatprep.subr.mxu0 0.0
        %2141 = vmatpush1.xpose.msra.mxu0 0.0
        %2142 = vmatprep.subr.mxu0 0.0
        %2143 = vmatpush1.xpose.msra.mxu0 0.0
        %2144 = vmatprep.subr.mxu0 0.0
        %2145 = vmatpush1.xpose.msra.mxu0 0.0
        %2146 = vmatprep.mubr.f32.mxu0 0.0
        %2147 = vmatmul.mubr.f32.gmra.mrb[0].mxu0 %v1610
        %v2148 = vpop.f32.mrb[0].mxu0
        %v2149 = vadd.f32 0.0, %v2148
        %v2150 = vpop.f32.mrb[0].mxu0
        %2151 = vdwg.mxu0
        %2152 = vmatprep.subr.mxu0 0.0
        %2153 = vmatpush1.xpose.msra.mxu0 %v1441
        %2154 = vmatprep.subr.mxu0 0.0
        %2155 = vmatpush1.xpose.msra.mxu0 0.0
        %2156 = vmatprep.subr.mxu0 0.0
        %2157 = vmatpush1.xpose.msra.mxu0 0.0
        %2158 = vmatprep.subr.mxu0 0.0
        %2159 = vmatpush1.xpose.msra.mxu0 0.0
        %2160 = vmatprep.subr.mxu0 0.0
        %2161 = vmatpush1.xpose.msra.mxu0 0.0
        %2162 = vmatprep.subr.mxu0 0.0
        %2163 = vmatpush1.xpose.msra.mxu0 0.0
        %2164 = vmatprep.subr.mxu0 0.0
        %2165 = vmatpush1.xpose.msra.mxu0 0.0
        %2166 = vmatprep.subr.mxu0 0.0
        %2167 = vmatpush1.xpose.msra.mxu0 0.0
        %2168 = vmatprep.subr.mxu0 0.0
        %2169 = vmatpush1.xpose.msra.mxu0 0.0
        %2170 = vmatprep.subr.mxu0 0.0
        %2171 = vmatpush1.xpose.msra.mxu0 0.0
        %2172 = vmatprep.subr.mxu0 0.0
        %2173 = vmatpush1.xpose.msra.mxu0 0.0
        %2174 = vmatprep.subr.mxu0 0.0
        %2175 = vmatpush1.xpose.msra.mxu0 0.0
        %2176 = vmatprep.subr.mxu0 0.0
        %2177 = vmatpush1.xpose.msra.mxu0 0.0
        %2178 = vmatprep.subr.mxu0 0.0
        %2179 = vmatpush1.xpose.msra.mxu0 0.0
        %2180 = vmatprep.subr.mxu0 0.0
        %2181 = vmatpush1.xpose.msra.mxu0 0.0
        %2182 = vmatprep.subr.mxu0 0.0
        %2183 = vmatpush1.xpose.msra.mxu0 0.0
        %2184 = vmatprep.subr.mxu0 0.0
        %2185 = vmatpush1.xpose.msra.mxu0 0.0
        %2186 = vmatprep.subr.mxu0 0.0
        %2187 = vmatpush1.xpose.msra.mxu0 0.0
        %2188 = vmatprep.subr.mxu0 0.0
        %2189 = vmatpush1.xpose.msra.mxu0 0.0
        %2190 = vmatprep.subr.mxu0 0.0
        %2191 = vmatpush1.xpose.msra.mxu0 0.0
        %2192 = vmatprep.subr.mxu0 0.0
        %2193 = vmatpush1.xpose.msra.mxu0 0.0
        %2194 = vmatprep.subr.mxu0 0.0
        %2195 = vmatpush1.xpose.msra.mxu0 0.0
        %2196 = vmatprep.subr.mxu0 0.0
        %2197 = vmatpush1.xpose.msra.mxu0 0.0
        %2198 = vmatprep.subr.mxu0 0.0
        %2199 = vmatpush1.xpose.msra.mxu0 0.0
        %2200 = vmatprep.subr.mxu0 0.0
        %2201 = vmatpush1.xpose.msra.mxu0 0.0
        %2202 = vmatprep.subr.mxu0 0.0
        %2203 = vmatpush1.xpose.msra.mxu0 0.0
        %2204 = vmatprep.subr.mxu0 0.0
        %2205 = vmatpush1.xpose.msra.mxu0 0.0
        %2206 = vmatprep.subr.mxu0 0.0
        %2207 = vmatpush1.xpose.msra.mxu0 0.0
        %2208 = vmatprep.subr.mxu0 0.0
        %2209 = vmatpush1.xpose.msra.mxu0 0.0
        %2210 = vmatprep.subr.mxu0 0.0
        %2211 = vmatpush1.xpose.msra.mxu0 0.0
        %2212 = vmatprep.subr.mxu0 0.0
        %2213 = vmatpush1.xpose.msra.mxu0 0.0
        %2214 = vmatprep.subr.mxu0 0.0
        %2215 = vmatpush1.xpose.msra.mxu0 0.0
        %2216 = vmatprep.mubr.f32.mxu0 0.0
        %2217 = vmatmul.mubr.f32.gmra.mrb[0].mxu0 %v1335
        %v2218 = vpop.f32.mrb[0].mxu0
        %v2219 = vadd.f32 0.0, %v2218
        %v2220 = vpop.f32.mrb[0].mxu0
        %2221 = vdwg.mxu0
        %2222 = vmatprep.subr.mxu0 0.0
        %2223 = vmatpush1.xpose.msra.mxu0 %v1659
        %2224 = vmatprep.subr.mxu0 0.0
        %2225 = vmatpush1.xpose.msra.mxu0 0.0
        %2226 = vmatprep.subr.mxu0 0.0
        %2227 = vmatpush1.xpose.msra.mxu0 0.0
        %2228 = vmatprep.subr.mxu0 0.0
        %2229 = vmatpush1.xpose.msra.mxu0 0.0
        %2230 = vmatprep.subr.mxu0 0.0
        %2231 = vmatpush1.xpose.msra.mxu0 0.0
        %2232 = vmatprep.subr.mxu0 0.0
        %2233 = vmatpush1.xpose.msra.mxu0 0.0
        %2234 = vmatprep.subr.mxu0 0.0
        %2235 = vmatpush1.xpose.msra.mxu0 0.0
        %2236 = vmatprep.subr.mxu0 0.0
        %2237 = vmatpush1.xpose.msra.mxu0 0.0
        %2238 = vmatprep.subr.mxu0 0.0
        %2239 = vmatpush1.xpose.msra.mxu0 0.0
        %2240 = vmatprep.subr.mxu0 0.0
        %2241 = vmatpush1.xpose.msra.mxu0 0.0
        %2242 = vmatprep.subr.mxu0 0.0
        %2243 = vmatpush1.xpose.msra.mxu0 0.0
        %2244 = vmatprep.subr.mxu0 0.0
        %2245 = vmatpush1.xpose.msra.mxu0 0.0
        %2246 = vmatprep.subr.mxu0 0.0
        %2247 = vmatpush1.xpose.msra.mxu0 0.0
        %2248 = vmatprep.subr.mxu0 0.0
        %2249 = vmatpush1.xpose.msra.mxu0 0.0
        %2250 = vmatprep.subr.mxu0 0.0
        %2251 = vmatpush1.xpose.msra.mxu0 0.0
        %2252 = vmatprep.subr.mxu0 0.0
        %2253 = vmatpush1.xpose.msra.mxu0 0.0
        %2254 = vmatprep.subr.mxu0 0.0
        %2255 = vmatpush1.xpose.msra.mxu0 0.0
        %2256 = vmatprep.subr.mxu0 0.0
        %2257 = vmatpush1.xpose.msra.mxu0 0.0
        %2258 = vmatprep.subr.mxu0 0.0
        %2259 = vmatpush1.xpose.msra.mxu0 0.0
        %2260 = vmatprep.subr.mxu0 0.0
        %2261 = vmatpush1.xpose.msra.mxu0 0.0
        %2262 = vmatprep.subr.mxu0 0.0
        %2263 = vmatpush1.xpose.msra.mxu0 0.0
        %2264 = vmatprep.subr.mxu0 0.0
        %2265 = vmatpush1.xpose.msra.mxu0 0.0
        %2266 = vmatprep.subr.mxu0 0.0
        %2267 = vmatpush1.xpose.msra.mxu0 0.0
        %2268 = vmatprep.subr.mxu0 0.0
        %2269 = vmatpush1.xpose.msra.mxu0 0.0
        %2270 = vmatprep.subr.mxu0 0.0
        %2271 = vmatpush1.xpose.msra.mxu0 0.0
        %2272 = vmatprep.subr.mxu0 0.0
        %2273 = vmatpush1.xpose.msra.mxu0 0.0
        %2274 = vmatprep.subr.mxu0 0.0
        %2275 = vmatpush1.xpose.msra.mxu0 0.0
        %2276 = vmatprep.subr.mxu0 0.0
        %2277 = vmatpush1.xpose.msra.mxu0 0.0
        %2278 = vmatprep.subr.mxu0 0.0
        %2279 = vmatpush1.xpose.msra.mxu0 0.0
        %2280 = vmatprep.subr.mxu0 0.0
        %2281 = vmatpush1.xpose.msra.mxu0 0.0
        %2282 = vmatprep.subr.mxu0 0.0
        %2283 = vmatpush1.xpose.msra.mxu0 0.0
        %2284 = vmatprep.subr.mxu0 0.0
        %2285 = vmatpush1.xpose.msra.mxu0 0.0
        %2286 = vmatprep.mubr.f32.mxu0 0.0
        %2287 = vmatmul.mubr.f32.gmra.mrb[0].mxu0 %v1611
        %v2288 = vpop.f32.mrb[0].mxu0
        %v2289 = vadd.f32 0.0, %v2288
        %v2290 = vpop.f32.mrb[0].mxu0
        %2291 = vdwg.mxu0
        %2292 = vmatprep.subr.mxu0 0.0
        %2293 = vmatpush1.xpose.msra.mxu0 %v1429
        %2294 = vmatprep.subr.mxu0 0.0
        %2295 = vmatpush1.xpose.msra.mxu0 0.0
        %2296 = vmatprep.subr.mxu0 0.0
        %2297 = vmatpush1.xpose.msra.mxu0 0.0
        %2298 = vmatprep.subr.mxu0 0.0
        %2299 = vmatpush1.xpose.msra.mxu0 0.0
        %2300 = vmatprep.subr.mxu0 0.0
        %2301 = vmatpush1.xpose.msra.mxu0 0.0
        %2302 = vmatprep.subr.mxu0 0.0
        %2303 = vmatpush1.xpose.msra.mxu0 0.0
        %2304 = vmatprep.subr.mxu0 0.0
        %2305 = vmatpush1.xpose.msra.mxu0 0.0
        %2306 = vmatprep.subr.mxu0 0.0
        %2307 = vmatpush1.xpose.msra.mxu0 0.0
        %2308 = vmatprep.subr.mxu0 0.0
        %2309 = vmatpush1.xpose.msra.mxu0 0.0
        %2310 = vmatprep.subr.mxu0 0.0
        %2311 = vmatpush1.xpose.msra.mxu0 0.0
        %2312 = vmatprep.subr.mxu0 0.0
        %2313 = vmatpush1.xpose.msra.mxu0 0.0
        %2314 = vmatprep.subr.mxu0 0.0
        %2315 = vmatpush1.xpose.msra.mxu0 0.0
        %2316 = vmatprep.subr.mxu0 0.0
        %2317 = vmatpush1.xpose.msra.mxu0 0.0
        %2318 = vmatprep.subr.mxu0 0.0
        %2319 = vmatpush1.xpose.msra.mxu0 0.0
        %2320 = vmatprep.subr.mxu0 0.0
        %2321 = vmatpush1.xpose.msra.mxu0 0.0
        %2322 = vmatprep.subr.mxu0 0.0
        %2323 = vmatpush1.xpose.msra.mxu0 0.0
        %2324 = vmatprep.subr.mxu0 0.0
        %2325 = vmatpush1.xpose.msra.mxu0 0.0
        %2326 = vmatprep.subr.mxu0 0.0
        %2327 = vmatpush1.xpose.msra.mxu0 0.0
        %2328 = vmatprep.subr.mxu0 0.0
        %2329 = vmatpush1.xpose.msra.mxu0 0.0
        %2330 = vmatprep.subr.mxu0 0.0
        %2331 = vmatpush1.xpose.msra.mxu0 0.0
        %2332 = vmatprep.subr.mxu0 0.0
        %2333 = vmatpush1.xpose.msra.mxu0 0.0
        %2334 = vmatprep.subr.mxu0 0.0
        %2335 = vmatpush1.xpose.msra.mxu0 0.0
        %2336 = vmatprep.subr.mxu0 0.0
        %2337 = vmatpush1.xpose.msra.mxu0 0.0
        %2338 = vmatprep.subr.mxu0 0.0
        %2339 = vmatpush1.xpose.msra.mxu0 0.0
        %2340 = vmatprep.subr.mxu0 0.0
        %2341 = vmatpush1.xpose.msra.mxu0 0.0
        %2342 = vmatprep.subr.mxu0 0.0
        %2343 = vmatpush1.xpose.msra.mxu0 0.0
        %2344 = vmatprep.subr.mxu0 0.0
        %2345 = vmatpush1.xpose.msra.mxu0 0.0
        %2346 = vmatprep.subr.mxu0 0.0
        %2347 = vmatpush1.xpose.msra.mxu0 0.0
        %2348 = vmatprep.subr.mxu0 0.0
        %2349 = vmatpush1.xpose.msra.mxu0 0.0
        %2350 = vmatprep.subr.mxu0 0.0
        %2351 = vmatpush1.xpose.msra.mxu0 0.0
        %2352 = vmatprep.subr.mxu0 0.0
        %2353 = vmatpush1.xpose.msra.mxu0 0.0
        %2354 = vmatprep.subr.mxu0 0.0
        %2355 = vmatpush1.xpose.msra.mxu0 0.0
        %2356 = vmatprep.mubr.f32.mxu0 0.0
        %2357 = vmatmul.mubr.f32.gmra.mrb[0].mxu0 %v1323
        %v2358 = vpop.f32.mrb[0].mxu0
        %v2359 = vadd.f32 0.0, %v2358
        %v2360 = vpop.f32.mrb[0].mxu0
        %2361 = vdwg.mxu0
        %2362 = vmatprep.subr.mxu0 0.0
        %2363 = vmatpush1.xpose.msra.mxu0 %v1668
        %2364 = vmatprep.subr.mxu0 0.0
        %2365 = vmatpush1.xpose.msra.mxu0 0.0
        %2366 = vmatprep.subr.mxu0 0.0
        %2367 = vmatpush1.xpose.msra.mxu0 0.0
        %2368 = vmatprep.subr.mxu0 0.0
        %2369 = vmatpush1.xpose.msra.mxu0 0.0
        %2370 = vmatprep.subr.mxu0 0.0
        %2371 = vmatpush1.xpose.msra.mxu0 0.0
        %2372 = vmatprep.subr.mxu0 0.0
        %2373 = vmatpush1.xpose.msra.mxu0 0.0
        %2374 = vmatprep.subr.mxu0 0.0
        %2375 = vmatpush1.xpose.msra.mxu0 0.0
        %2376 = vmatprep.subr.mxu0 0.0
        %2377 = vmatpush1.xpose.msra.mxu0 0.0
        %2378 = vmatprep.subr.mxu0 0.0
        %2379 = vmatpush1.xpose.msra.mxu0 0.0
        %2380 = vmatprep.subr.mxu0 0.0
        %2381 = vmatpush1.xpose.msra.mxu0 0.0
        %2382 = vmatprep.subr.mxu0 0.0
        %2383 = vmatpush1.xpose.msra.mxu0 0.0
        %2384 = vmatprep.subr.mxu0 0.0
        %2385 = vmatpush1.xpose.msra.mxu0 0.0
        %2386 = vmatprep.subr.mxu0 0.0
        %2387 = vmatpush1.xpose.msra.mxu0 0.0
        %2388 = vmatprep.subr.mxu0 0.0
        %2389 = vmatpush1.xpose.msra.mxu0 0.0
        %2390 = vmatprep.subr.mxu0 0.0
        %2391 = vmatpush1.xpose.msra.mxu0 0.0
        %2392 = vmatprep.subr.mxu0 0.0
        %2393 = vmatpush1.xpose.msra.mxu0 0.0
        %2394 = vmatprep.subr.mxu0 0.0
        %2395 = vmatpush1.xpose.msra.mxu0 0.0
        %2396 = vmatprep.subr.mxu0 0.0
        %2397 = vmatpush1.xpose.msra.mxu0 0.0
        %2398 = vmatprep.subr.mxu0 0.0
        %2399 = vmatpush1.xpose.msra.mxu0 0.0
        %2400 = vmatprep.subr.mxu0 0.0
        %2401 = vmatpush1.xpose.msra.mxu0 0.0
        %2402 = vmatprep.subr.mxu0 0.0
        %2403 = vmatpush1.xpose.msra.mxu0 0.0
        %2404 = vmatprep.subr.mxu0 0.0
        %2405 = vmatpush1.xpose.msra.mxu0 0.0
        %2406 = vmatprep.subr.mxu0 0.0
        %2407 = vmatpush1.xpose.msra.mxu0 0.0
        %2408 = vmatprep.subr.mxu0 0.0
        %2409 = vmatpush1.xpose.msra.mxu0 0.0
        %2410 = vmatprep.subr.mxu0 0.0
        %2411 = vmatpush1.xpose.msra.mxu0 0.0
        %2412 = vmatprep.subr.mxu0 0.0
        %2413 = vmatpush1.xpose.msra.mxu0 0.0
        %2414 = vmatprep.subr.mxu0 0.0
        %2415 = vmatpush1.xpose.msra.mxu0 0.0
        %2416 = vmatprep.subr.mxu0 0.0
        %2417 = vmatpush1.xpose.msra.mxu0 0.0
        %2418 = vmatprep.subr.mxu0 0.0
        %2419 = vmatpush1.xpose.msra.mxu0 0.0
        %2420 = vmatprep.subr.mxu0 0.0
        %2421 = vmatpush1.xpose.msra.mxu0 0.0
        %2422 = vmatprep.subr.mxu0 0.0
        %2423 = vmatpush1.xpose.msra.mxu0 0.0
        %2424 = vmatprep.subr.mxu0 0.0
        %2425 = vmatpush1.xpose.msra.mxu0 0.0
        %2426 = vmatprep.mubr.f32.mxu0 0.0
        %2427 = vmatmul.mubr.f32.gmra.mrb[0].mxu0 %v1620
        %v2428 = vpop.f32.mrb[0].mxu0
        %v2429 = vadd.f32 0.0, %v2428
        %v2430 = vpop.f32.mrb[0].mxu0
        %2431 = vdwg.mxu0
        %2432 = vmatprep.subr.mxu0 0.0
        %2433 = vmatpush1.xpose.msra.mxu0 %v1433
        %2434 = vmatprep.subr.mxu0 0.0
        %2435 = vmatpush1.xpose.msra.mxu0 0.0
        %2436 = vmatprep.subr.mxu0 0.0
        %2437 = vmatpush1.xpose.msra.mxu0 0.0
        %2438 = vmatprep.subr.mxu0 0.0
        %2439 = vmatpush1.xpose.msra.mxu0 0.0
        %2440 = vmatprep.subr.mxu0 0.0
        %2441 = vmatpush1.xpose.msra.mxu0 0.0
        %2442 = vmatprep.subr.mxu0 0.0
        %2443 = vmatpush1.xpose.msra.mxu0 0.0
        %2444 = vmatprep.subr.mxu0 0.0
        %2445 = vmatpush1.xpose.msra.mxu0 0.0
        %2446 = vmatprep.subr.mxu0 0.0
        %2447 = vmatpush1.xpose.msra.mxu0 0.0
        %2448 = vmatprep.subr.mxu0 0.0
        %2449 = vmatpush1.xpose.msra.mxu0 0.0
        %2450 = vmatprep.subr.mxu0 0.0
        %2451 = vmatpush1.xpose.msra.mxu0 0.0
        %2452 = vmatprep.subr.mxu0 0.0
        %2453 = vmatpush1.xpose.msra.mxu0 0.0
        %2454 = vmatprep.subr.mxu0 0.0
        %2455 = vmatpush1.xpose.msra.mxu0 0.0
        %2456 = vmatprep.subr.mxu0 0.0
        %2457 = vmatpush1.xpose.msra.mxu0 0.0
        %2458 = vmatprep.subr.mxu0 0.0
        %2459 = vmatpush1.xpose.msra.mxu0 0.0
        %2460 = vmatprep.subr.mxu0 0.0
        %2461 = vmatpush1.xpose.msra.mxu0 0.0
        %2462 = vmatprep.subr.mxu0 0.0
        %2463 = vmatpush1.xpose.msra.mxu0 0.0
        %2464 = vmatprep.subr.mxu0 0.0
        %2465 = vmatpush1.xpose.msra.mxu0 0.0
        %2466 = vmatprep.subr.mxu0 0.0
        %2467 = vmatpush1.xpose.msra.mxu0 0.0
        %2468 = vmatprep.subr.mxu0 0.0
        %2469 = vmatpush1.xpose.msra.mxu0 0.0
        %2470 = vmatprep.subr.mxu0 0.0
        %2471 = vmatpush1.xpose.msra.mxu0 0.0
        %2472 = vmatprep.subr.mxu0 0.0
        %2473 = vmatpush1.xpose.msra.mxu0 0.0
        %2474 = vmatprep.subr.mxu0 0.0
        %2475 = vmatpush1.xpose.msra.mxu0 0.0
        %2476 = vmatprep.subr.mxu0 0.0
        %2477 = vmatpush1.xpose.msra.mxu0 0.0
        %2478 = vmatprep.subr.mxu0 0.0
        %2479 = vmatpush1.xpose.msra.mxu0 0.0
        %2480 = vmatprep.subr.mxu0 0.0
        %2481 = vmatpush1.xpose.msra.mxu0 0.0
        %2482 = vmatprep.subr.mxu0 0.0
        %2483 = vmatpush1.xpose.msra.mxu0 0.0
        %2484 = vmatprep.subr.mxu0 0.0
        %2485 = vmatpush1.xpose.msra.mxu0 0.0
        %2486 = vmatprep.subr.mxu0 0.0
        %2487 = vmatpush1.xpose.msra.mxu0 0.0
        %2488 = vmatprep.subr.mxu0 0.0
        %2489 = vmatpush1.xpose.msra.mxu0 0.0
        %2490 = vmatprep.subr.mxu0 0.0
        %2491 = vmatpush1.xpose.msra.mxu0 0.0
        %2492 = vmatprep.subr.mxu0 0.0
        %2493 = vmatpush1.xpose.msra.mxu0 0.0
        %2494 = vmatprep.subr.mxu0 0.0
        %2495 = vmatpush1.xpose.msra.mxu0 0.0
        %2496 = vmatprep.mubr.f32.mxu0 0.0
        %2497 = vmatmul.mubr.f32.gmra.mrb[0].mxu0 %v1327
        %v2498 = vpop.f32.mrb[0].mxu0
        %v2499 = vadd.f32 0.0, %v2498
        %v2500 = vpop.f32.mrb[0].mxu0
        %2501 = vdwg.mxu0
        %2502 = vmatprep.subr.mxu0 0.0
        %2503 = vmatpush1.xpose.msra.mxu0 %v1669
        %2504 = vmatprep.subr.mxu0 0.0
        %2505 = vmatpush1.xpose.msra.mxu0 0.0
        %2506 = vmatprep.subr.mxu0 0.0
        %2507 = vmatpush1.xpose.msra.mxu0 0.0
        %2508 = vmatprep.subr.mxu0 0.0
        %2509 = vmatpush1.xpose.msra.mxu0 0.0
        %2510 = vmatprep.subr.mxu0 0.0
        %2511 = vmatpush1.xpose.msra.mxu0 0.0
        %2512 = vmatprep.subr.mxu0 0.0
        %2513 = vmatpush1.xpose.msra.mxu0 0.0
        %2514 = vmatprep.subr.mxu0 0.0
        %2515 = vmatpush1.xpose.msra.mxu0 0.0
        %2516 = vmatprep.subr.mxu0 0.0
        %2517 = vmatpush1.xpose.msra.mxu0 0.0
        %2518 = vmatprep.subr.mxu0 0.0
        %2519 = vmatpush1.xpose.msra.mxu0 0.0
        %2520 = vmatprep.subr.mxu0 0.0
        %2521 = vmatpush1.xpose.msra.mxu0 0.0
        %2522 = vmatprep.subr.mxu0 0.0
        %2523 = vmatpush1.xpose.msra.mxu0 0.0
        %2524 = vmatprep.subr.mxu0 0.0
        %2525 = vmatpush1.xpose.msra.mxu0 0.0
        %2526 = vmatprep.subr.mxu0 0.0
        %2527 = vmatpush1.xpose.msra.mxu0 0.0
        %2528 = vmatprep.subr.mxu0 0.0
        %2529 = vmatpush1.xpose.msra.mxu0 0.0
        %2530 = vmatprep.subr.mxu0 0.0
        %2531 = vmatpush1.xpose.msra.mxu0 0.0
        %2532 = vmatprep.subr.mxu0 0.0
        %2533 = vmatpush1.xpose.msra.mxu0 0.0
        %2534 = vmatprep.subr.mxu0 0.0
        %2535 = vmatpush1.xpose.msra.mxu0 0.0
        %2536 = vmatprep.subr.mxu0 0.0
        %2537 = vmatpush1.xpose.msra.mxu0 0.0
        %2538 = vmatprep.subr.mxu0 0.0
        %2539 = vmatpush1.xpose.msra.mxu0 0.0
        %2540 = vmatprep.subr.mxu0 0.0
        %2541 = vmatpush1.xpose.msra.mxu0 0.0
        %2542 = vmatprep.subr.mxu0 0.0
        %2543 = vmatpush1.xpose.msra.mxu0 0.0
        %2544 = vmatprep.subr.mxu0 0.0
        %2545 = vmatpush1.xpose.msra.mxu0 0.0
        %2546 = vmatprep.subr.mxu0 0.0
        %2547 = vmatpush1.xpose.msra.mxu0 0.0
        %2548 = vmatprep.subr.mxu0 0.0
        %2549 = vmatpush1.xpose.msra.mxu0 0.0
        %2550 = vmatprep.subr.mxu0 0.0
        %2551 = vmatpush1.xpose.msra.mxu0 0.0
        %2552 = vmatprep.subr.mxu0 0.0
        %2553 = vmatpush1.xpose.msra.mxu0 0.0
        %2554 = vmatprep.subr.mxu0 0.0
        %2555 = vmatpush1.xpose.msra.mxu0 0.0
        %2556 = vmatprep.subr.mxu0 0.0
        %2557 = vmatpush1.xpose.msra.mxu0 0.0
        %2558 = vmatprep.subr.mxu0 0.0
        %2559 = vmatpush1.xpose.msra.mxu0 0.0
        %2560 = vmatprep.subr.mxu0 0.0
        %2561 = vmatpush1.xpose.msra.mxu0 0.0
        %2562 = vmatprep.subr.mxu0 0.0
        %2563 = vmatpush1.xpose.msra.mxu0 0.0
        %2564 = vmatprep.subr.mxu0 0.0
        %2565 = vmatpush1.xpose.msra.mxu0 0.0
        %2566 = vmatprep.mubr.f32.mxu0 0.0
        %2567 = vmatmul.mubr.f32.gmra.mrb[0].mxu0 %v1621
        %v2568 = vpop.f32.mrb[0].mxu0
        %v2569 = vadd.f32 0.0, %v2568
        %v2570 = vpop.f32.mrb[0].mxu0
        %2571 = vdwg.mxu0
        %2572 = vmatprep.subr.mxu0 0.0
        %2573 = vmatpush1.xpose.msra.mxu0 %v1439
        %2574 = vmatprep.subr.mxu0 0.0
        %2575 = vmatpush1.xpose.msra.mxu0 0.0
        %2576 = vmatprep.subr.mxu0 0.0
        %2577 = vmatpush1.xpose.msra.mxu0 0.0
        %2578 = vmatprep.subr.mxu0 0.0
        %2579 = vmatpush1.xpose.msra.mxu0 0.0
        %2580 = vmatprep.subr.mxu0 0.0
        %2581 = vmatpush1.xpose.msra.mxu0 0.0
        %2582 = vmatprep.subr.mxu0 0.0
        %2583 = vmatpush1.xpose.msra.mxu0 0.0
        %2584 = vmatprep.subr.mxu0 0.0
        %2585 = vmatpush1.xpose.msra.mxu0 0.0
        %2586 = vmatprep.subr.mxu0 0.0
        %2587 = vmatpush1.xpose.msra.mxu0 0.0
        %2588 = vmatprep.subr.mxu0 0.0
        %2589 = vmatpush1.xpose.msra.mxu0 0.0
        %2590 = vmatprep.subr.mxu0 0.0
        %2591 = vmatpush1.xpose.msra.mxu0 0.0
        %2592 = vmatprep.subr.mxu0 0.0
        %2593 = vmatpush1.xpose.msra.mxu0 0.0
        %2594 = vmatprep.subr.mxu0 0.0
        %2595 = vmatpush1.xpose.msra.mxu0 0.0
        %2596 = vmatprep.subr.mxu0 0.0
        %2597 = vmatpush1.xpose.msra.mxu0 0.0
        %2598 = vmatprep.subr.mxu0 0.0
        %2599 = vmatpush1.xpose.msra.mxu0 0.0
        %2600 = vmatprep.subr.mxu0 0.0
        %2601 = vmatpush1.xpose.msra.mxu0 0.0
        %2602 = vmatprep.subr.mxu0 0.0
        %2603 = vmatpush1.xpose.msra.mxu0 0.0
        %2604 = vmatprep.subr.mxu0 0.0
        %2605 = vmatpush1.xpose.msra.mxu0 0.0
        %2606 = vmatprep.subr.mxu0 0.0
        %2607 = vmatpush1.xpose.msra.mxu0 0.0
        %2608 = vmatprep.subr.mxu0 0.0
        %2609 = vmatpush1.xpose.msra.mxu0 0.0
        %2610 = vmatprep.subr.mxu0 0.0
        %2611 = vmatpush1.xpose.msra.mxu0 0.0
        %2612 = vmatprep.subr.mxu0 0.0
        %2613 = vmatpush1.xpose.msra.mxu0 0.0
        %2614 = vmatprep.subr.mxu0 0.0
        %2615 = vmatpush1.xpose.msra.mxu0 0.0
        %2616 = vmatprep.subr.mxu0 0.0
        %2617 = vmatpush1.xpose.msra.mxu0 0.0
        %2618 = vmatprep.subr.mxu0 0.0
        %2619 = vmatpush1.xpose.msra.mxu0 0.0
        %2620 = vmatprep.subr.mxu0 0.0
        %2621 = vmatpush1.xpose.msra.mxu0 0.0
        %2622 = vmatprep.subr.mxu0 0.0
        %2623 = vmatpush1.xpose.msra.mxu0 0.0
        %2624 = vmatprep.subr.mxu0 0.0
        %2625 = vmatpush1.xpose.msra.mxu0 0.0
        %2626 = vmatprep.subr.mxu0 0.0
        %2627 = vmatpush1.xpose.msra.mxu0 0.0
        %2628 = vmatprep.subr.mxu0 0.0
        %2629 = vmatpush1.xpose.msra.mxu0 0.0
        %2630 = vmatprep.subr.mxu0 0.0
        %2631 = vmatpush1.xpose.msra.mxu0 0.0
        %2632 = vmatprep.subr.mxu0 0.0
        %2633 = vmatpush1.xpose.msra.mxu0 0.0
        %2634 = vmatprep.subr.mxu0 0.0
        %2635 = vmatpush1.xpose.msra.mxu0 0.0
        %2636 = vmatprep.mubr.f32.mxu0 0.0
        %2637 = vmatmul.mubr.f32.gmra.mrb[0].mxu0 %v1333
        %v2638 = vpop.f32.mrb[0].mxu0
        %v2639 = vadd.f32 0.0, %v2638
        %v2640 = vpop.f32.mrb[0].mxu0
        %2641 = vdwg.mxu0
        %2642 = vmatprep.subr.mxu0 0.0
        %2643 = vmatpush1.xpose.msra.mxu0 %v1670
        %2644 = vmatprep.subr.mxu0 0.0
        %2645 = vmatpush1.xpose.msra.mxu0 0.0
        %2646 = vmatprep.subr.mxu0 0.0
        %2647 = vmatpush1.xpose.msra.mxu0 0.0
        %2648 = vmatprep.subr.mxu0 0.0
        %2649 = vmatpush1.xpose.msra.mxu0 0.0
        %2650 = vmatprep.subr.mxu0 0.0
        %2651 = vmatpush1.xpose.msra.mxu0 0.0
        %2652 = vmatprep.subr.mxu0 0.0
        %2653 = vmatpush1.xpose.msra.mxu0 0.0
        %2654 = vmatprep.subr.mxu0 0.0
        %2655 = vmatpush1.xpose.msra.mxu0 0.0
        %2656 = vmatprep.subr.mxu0 0.0
        %2657 = vmatpush1.xpose.msra.mxu0 0.0
        %2658 = vmatprep.subr.mxu0 0.0
        %2659 = vmatpush1.xpose.msra.mxu0 0.0
        %2660 = vmatprep.subr.mxu0 0.0
        %2661 = vmatpush1.xpose.msra.mxu0 0.0
        %2662 = vmatprep.subr.mxu0 0.0
        %2663 = vmatpush1.xpose.msra.mxu0 0.0
        %2664 = vmatprep.subr.mxu0 0.0
        %2665 = vmatpush1.xpose.msra.mxu0 0.0
        %2666 = vmatprep.subr.mxu0 0.0
        %2667 = vmatpush1.xpose.msra.mxu0 0.0
        %2668 = vmatprep.subr.mxu0 0.0
        %2669 = vmatpush1.xpose.msra.mxu0 0.0
        %2670 = vmatprep.subr.mxu0 0.0
        %2671 = vmatpush1.xpose.msra.mxu0 0.0
        %2672 = vmatprep.subr.mxu0 0.0
        %2673 = vmatpush1.xpose.msra.mxu0 0.0
        %2674 = vmatprep.subr.mxu0 0.0
        %2675 = vmatpush1.xpose.msra.mxu0 0.0
        %2676 = vmatprep.subr.mxu0 0.0
        %2677 = vmatpush1.xpose.msra.mxu0 0.0
        %2678 = vmatprep.subr.mxu0 0.0
        %2679 = vmatpush1.xpose.msra.mxu0 0.0
        %2680 = vmatprep.subr.mxu0 0.0
        %2681 = vmatpush1.xpose.msra.mxu0 0.0
        %2682 = vmatprep.subr.mxu0 0.0
        %2683 = vmatpush1.xpose.msra.mxu0 0.0
        %2684 = vmatprep.subr.mxu0 0.0
        %2685 = vmatpush1.xpose.msra.mxu0 0.0
        %2686 = vmatprep.subr.mxu0 0.0
        %2687 = vmatpush1.xpose.msra.mxu0 0.0
        %2688 = vmatprep.subr.mxu0 0.0
        %2689 = vmatpush1.xpose.msra.mxu0 0.0
        %2690 = vmatprep.subr.mxu0 0.0
        %2691 = vmatpush1.xpose.msra.mxu0 0.0
        %2692 = vmatprep.subr.mxu0 0.0
        %2693 = vmatpush1.xpose.msra.mxu0 0.0
        %2694 = vmatprep.subr.mxu0 0.0
        %2695 = vmatpush1.xpose.msra.mxu0 0.0
        %2696 = vmatprep.subr.mxu0 0.0
        %2697 = vmatpush1.xpose.msra.mxu0 0.0
        %2698 = vmatprep.subr.mxu0 0.0
        %2699 = vmatpush1.xpose.msra.mxu0 0.0
        %2700 = vmatprep.subr.mxu0 0.0
        %2701 = vmatpush1.xpose.msra.mxu0 0.0
        %2702 = vmatprep.subr.mxu0 0.0
        %2703 = vmatpush1.xpose.msra.mxu0 0.0
        %2704 = vmatprep.subr.mxu0 0.0
        %2705 = vmatpush1.xpose.msra.mxu0 0.0
        %2706 = vmatprep.mubr.f32.mxu0 0.0
        %2707 = vmatmul.mubr.f32.gmra.mrb[0].mxu0 %v1622
        %v2708 = vpop.f32.mrb[0].mxu0
        %v2709 = vadd.f32 0.0, %v2708
        %v2710 = vpop.f32.mrb[0].mxu0
        %2711 = vdwg.mxu0
        %2712 = vmatprep.subr.mxu0 0.0
        %2713 = vmatpush1.xpose.msra.mxu0 %v1443
        %2714 = vmatprep.subr.mxu0 0.0
        %2715 = vmatpush1.xpose.msra.mxu0 0.0
        %2716 = vmatprep.subr.mxu0 0.0
        %2717 = vmatpush1.xpose.msra.mxu0 0.0
        %2718 = vmatprep.subr.mxu0 0.0
        %2719 = vmatpush1.xpose.msra.mxu0 0.0
        %2720 = vmatprep.subr.mxu0 0.0
        %2721 = vmatpush1.xpose.msra.mxu0 0.0
        %2722 = vmatprep.subr.mxu0 0.0
        %2723 = vmatpush1.xpose.msra.mxu0 0.0
        %2724 = vmatprep.subr.mxu0 0.0
        %2725 = vmatpush1.xpose.msra.mxu0 0.0
        %2726 = vmatprep.subr.mxu0 0.0
        %2727 = vmatpush1.xpose.msra.mxu0 0.0
        %2728 = vmatprep.subr.mxu0 0.0
        %2729 = vmatpush1.xpose.msra.mxu0 0.0
        %2730 = vmatprep.subr.mxu0 0.0
        %2731 = vmatpush1.xpose.msra.mxu0 0.0
        %2732 = vmatprep.subr.mxu0 0.0
        %2733 = vmatpush1.xpose.msra.mxu0 0.0
        %2734 = vmatprep.subr.mxu0 0.0
        %2735 = vmatpush1.xpose.msra.mxu0 0.0
        %2736 = vmatprep.subr.mxu0 0.0
        %2737 = vmatpush1.xpose.msra.mxu0 0.0
        %2738 = vmatprep.subr.mxu0 0.0
        %2739 = vmatpush1.xpose.msra.mxu0 0.0
        %2740 = vmatprep.subr.mxu0 0.0
        %2741 = vmatpush1.xpose.msra.mxu0 0.0
        %2742 = vmatprep.subr.mxu0 0.0
        %2743 = vmatpush1.xpose.msra.mxu0 0.0
        %2744 = vmatprep.subr.mxu0 0.0
        %2745 = vmatpush1.xpose.msra.mxu0 0.0
        %2746 = vmatprep.subr.mxu0 0.0
        %2747 = vmatpush1.xpose.msra.mxu0 0.0
        %2748 = vmatprep.subr.mxu0 0.0
        %2749 = vmatpush1.xpose.msra.mxu0 0.0
        %2750 = vmatprep.subr.mxu0 0.0
        %2751 = vmatpush1.xpose.msra.mxu0 0.0
        %2752 = vmatprep.subr.mxu0 0.0
        %2753 = vmatpush1.xpose.msra.mxu0 0.0
        %2754 = vmatprep.subr.mxu0 0.0
        %2755 = vmatpush1.xpose.msra.mxu0 0.0
        %2756 = vmatprep.subr.mxu0 0.0
        %2757 = vmatpush1.xpose.msra.mxu0 0.0
        %2758 = vmatprep.subr.mxu0 0.0
        %2759 = vmatpush1.xpose.msra.mxu0 0.0
        %2760 = vmatprep.subr.mxu0 0.0
        %2761 = vmatpush1.xpose.msra.mxu0 0.0
        %2762 = vmatprep.subr.mxu0 0.0
        %2763 = vmatpush1.xpose.msra.mxu0 0.0
        %2764 = vmatprep.subr.mxu0 0.0
        %2765 = vmatpush1.xpose.msra.mxu0 0.0
        %2766 = vmatprep.subr.mxu0 0.0
        %2767 = vmatpush1.xpose.msra.mxu0 0.0
        %2768 = vmatprep.subr.mxu0 0.0
        %2769 = vmatpush1.xpose.msra.mxu0 0.0
        %2770 = vmatprep.subr.mxu0 0.0
        %2771 = vmatpush1.xpose.msra.mxu0 0.0
        %2772 = vmatprep.subr.mxu0 0.0
        %2773 = vmatpush1.xpose.msra.mxu0 0.0
        %2774 = vmatprep.subr.mxu0 0.0
        %2775 = vmatpush1.xpose.msra.mxu0 0.0
        %2776 = vmatprep.mubr.f32.mxu0 0.0
        %2777 = vmatmul.mubr.f32.gmra.mrb[0].mxu0 %v1337
        %v2778 = vpop.f32.mrb[0].mxu0
        %v2779 = vadd.f32 0.0, %v2778
        %v2780 = vpop.f32.mrb[0].mxu0
        %2781 = vdwg.mxu0
        %2782 = vmatprep.subr.mxu0 0.0
        %2783 = vmatpush1.xpose.msra.mxu0 %v1671
        %2784 = vmatprep.subr.mxu0 0.0
        %2785 = vmatpush1.xpose.msra.mxu0 0.0
        %2786 = vmatprep.subr.mxu0 0.0
        %2787 = vmatpush1.xpose.msra.mxu0 0.0
        %2788 = vmatprep.subr.mxu0 0.0
        %2789 = vmatpush1.xpose.msra.mxu0 0.0
        %2790 = vmatprep.subr.mxu0 0.0
        %2791 = vmatpush1.xpose.msra.mxu0 0.0
        %2792 = vmatprep.subr.mxu0 0.0
        %2793 = vmatpush1.xpose.msra.mxu0 0.0
        %2794 = vmatprep.subr.mxu0 0.0
        %2795 = vmatpush1.xpose.msra.mxu0 0.0
        %2796 = vmatprep.subr.mxu0 0.0
        %2797 = vmatpush1.xpose.msra.mxu0 0.0
        %2798 = vmatprep.subr.mxu0 0.0
        %2799 = vmatpush1.xpose.msra.mxu0 0.0
        %2800 = vmatprep.subr.mxu0 0.0
        %2801 = vmatpush1.xpose.msra.mxu0 0.0
        %2802 = vmatprep.subr.mxu0 0.0
        %2803 = vmatpush1.xpose.msra.mxu0 0.0
        %2804 = vmatprep.subr.mxu0 0.0
        %2805 = vmatpush1.xpose.msra.mxu0 0.0
        %2806 = vmatprep.subr.mxu0 0.0
        %2807 = vmatpush1.xpose.msra.mxu0 0.0
        %2808 = vmatprep.subr.mxu0 0.0
        %2809 = vmatpush1.xpose.msra.mxu0 0.0
        %2810 = vmatprep.subr.mxu0 0.0
        %2811 = vmatpush1.xpose.msra.mxu0 0.0
        %2812 = vmatprep.subr.mxu0 0.0
        %2813 = vmatpush1.xpose.msra.mxu0 0.0
        %2814 = vmatprep.subr.mxu0 0.0
        %2815 = vmatpush1.xpose.msra.mxu0 0.0
        %2816 = vmatprep.subr.mxu0 0.0
        %2817 = vmatpush1.xpose.msra.mxu0 0.0
        %2818 = vmatprep.subr.mxu0 0.0
        %2819 = vmatpush1.xpose.msra.mxu0 0.0
        %2820 = vmatprep.subr.mxu0 0.0
        %2821 = vmatpush1.xpose.msra.mxu0 0.0
        %2822 = vmatprep.subr.mxu0 0.0
        %2823 = vmatpush1.xpose.msra.mxu0 0.0
        %2824 = vmatprep.subr.mxu0 0.0
        %2825 = vmatpush1.xpose.msra.mxu0 0.0
        %2826 = vmatprep.subr.mxu0 0.0
        %2827 = vmatpush1.xpose.msra.mxu0 0.0
        %2828 = vmatprep.subr.mxu0 0.0
        %2829 = vmatpush1.xpose.msra.mxu0 0.0
        %2830 = vmatprep.subr.mxu0 0.0
        %2831 = vmatpush1.xpose.msra.mxu0 0.0
        %2832 = vmatprep.subr.mxu0 0.0
        %2833 = vmatpush1.xpose.msra.mxu0 0.0
        %2834 = vmatprep.subr.mxu0 0.0
        %2835 = vmatpush1.xpose.msra.mxu0 0.0
        %2836 = vmatprep.subr.mxu0 0.0
        %2837 = vmatpush1.xpose.msra.mxu0 0.0
        %2838 = vmatprep.subr.mxu0 0.0
        %2839 = vmatpush1.xpose.msra.mxu0 0.0
        %2840 = vmatprep.subr.mxu0 0.0
        %2841 = vmatpush1.xpose.msra.mxu0 0.0
        %2842 = vmatprep.subr.mxu0 0.0
        %2843 = vmatpush1.xpose.msra.mxu0 0.0
        %2844 = vmatprep.subr.mxu0 0.0
        %2845 = vmatpush1.xpose.msra.mxu0 0.0
        %2846 = vmatprep.mubr.f32.mxu0 0.0
        %2847 = vmatmul.mubr.f32.gmra.mrb[0].mxu0 %v1623
        %v2848 = vpop.f32.mrb[0].mxu0
        %v2849 = vadd.f32 0.0, %v2848
        %v2850 = vpop.f32.mrb[0].mxu0
        %2851 = vdwg.mxu0
        %2852 = vmatprep.subr.mxu0 0.0
        %2853 = vmatpush1.xpose.msra.mxu0 %v1480
        %2854 = vmatprep.subr.mxu0 0.0
        %2855 = vmatpush1.xpose.msra.mxu0 0.0
        %2856 = vmatprep.subr.mxu0 0.0
        %2857 = vmatpush1.xpose.msra.mxu0 0.0
        %2858 = vmatprep.subr.mxu0 0.0
        %2859 = vmatpush1.xpose.msra.mxu0 0.0
        %2860 = vmatprep.subr.mxu0 0.0
        %2861 = vmatpush1.xpose.msra.mxu0 0.0
        %2862 = vmatprep.subr.mxu0 0.0
        %2863 = vmatpush1.xpose.msra.mxu0 0.0
        %2864 = vmatprep.subr.mxu0 0.0
        %2865 = vmatpush1.xpose.msra.mxu0 0.0
        %2866 = vmatprep.subr.mxu0 0.0
        %2867 = vmatpush1.xpose.msra.mxu0 0.0
        %2868 = vmatprep.subr.mxu0 0.0
        %2869 = vmatpush1.xpose.msra.mxu0 0.0
        %2870 = vmatprep.subr.mxu0 0.0
        %2871 = vmatpush1.xpose.msra.mxu0 0.0
        %2872 = vmatprep.subr.mxu0 0.0
        %2873 = vmatpush1.xpose.msra.mxu0 0.0
        %2874 = vmatprep.subr.mxu0 0.0
        %2875 = vmatpush1.xpose.msra.mxu0 0.0
        %2876 = vmatprep.subr.mxu0 0.0
        %2877 = vmatpush1.xpose.msra.mxu0 0.0
        %2878 = vmatprep.subr.mxu0 0.0
        %2879 = vmatpush1.xpose.msra.mxu0 0.0
        %2880 = vmatprep.subr.mxu0 0.0
        %2881 = vmatpush1.xpose.msra.mxu0 0.0
        %2882 = vmatprep.subr.mxu0 0.0
        %2883 = vmatpush1.xpose.msra.mxu0 0.0
        %2884 = vmatprep.subr.mxu0 0.0
        %2885 = vmatpush1.xpose.msra.mxu0 0.0
        %2886 = vmatprep.subr.mxu0 0.0
        %2887 = vmatpush1.xpose.msra.mxu0 0.0
        %2888 = vmatprep.subr.mxu0 0.0
        %2889 = vmatpush1.xpose.msra.mxu0 0.0
        %2890 = vmatprep.subr.mxu0 0.0
        %2891 = vmatpush1.xpose.msra.mxu0 0.0
        %2892 = vmatprep.subr.mxu0 0.0
        %2893 = vmatpush1.xpose.msra.mxu0 0.0
        %2894 = vmatprep.subr.mxu0 0.0
        %2895 = vmatpush1.xpose.msra.mxu0 0.0
        %2896 = vmatprep.subr.mxu0 0.0
        %2897 = vmatpush1.xpose.msra.mxu0 0.0
        %2898 = vmatprep.subr.mxu0 0.0
        %2899 = vmatpush1.xpose.msra.mxu0 0.0
        %2900 = vmatprep.subr.mxu0 0.0
        %2901 = vmatpush1.xpose.msra.mxu0 0.0
        %2902 = vmatprep.subr.mxu0 0.0
        %2903 = vmatpush1.xpose.msra.mxu0 0.0
        %2904 = vmatprep.subr.mxu0 0.0
        %2905 = vmatpush1.xpose.msra.mxu0 0.0
        %2906 = vmatprep.subr.mxu0 0.0
        %2907 = vmatpush1.xpose.msra.mxu0 0.0
        %2908 = vmatprep.subr.mxu0 0.0
        %2909 = vmatpush1.xpose.msra.mxu0 0.0
        %2910 = vmatprep.subr.mxu0 0.0
        %2911 = vmatpush1.xpose.msra.mxu0 0.0
        %2912 = vmatprep.subr.mxu0 0.0
        %2913 = vmatpush1.xpose.msra.mxu0 0.0
        %2914 = vmatprep.subr.mxu0 0.0
        %2915 = vmatpush1.xpose.msra.mxu0 0.0
        %2916 = vmatprep.mubr.f32.mxu0 0.0
        %2917 = vmatmul.mubr.f32.gmra.mrb[0].mxu0 %v1374
        %v2918 = vpop.f32.mrb[0].mxu0
        %v2919 = vadd.f32 0.0, %v2918
        %v2920 = vpop.f32.mrb[0].mxu0
        %2921 = vdwg.mxu0
        %2922 = vmatprep.subr.mxu0 0.0
        %2923 = vmatpush1.xpose.msra.mxu0 %v1680
        %2924 = vmatprep.subr.mxu0 0.0
        %2925 = vmatpush1.xpose.msra.mxu0 0.0
        %2926 = vmatprep.subr.mxu0 0.0
        %2927 = vmatpush1.xpose.msra.mxu0 0.0
        %2928 = vmatprep.subr.mxu0 0.0
        %2929 = vmatpush1.xpose.msra.mxu0 0.0
        %2930 = vmatprep.subr.mxu0 0.0
        %2931 = vmatpush1.xpose.msra.mxu0 0.0
        %2932 = vmatprep.subr.mxu0 0.0
        %2933 = vmatpush1.xpose.msra.mxu0 0.0
        %2934 = vmatprep.subr.mxu0 0.0
        %2935 = vmatpush1.xpose.msra.mxu0 0.0
        %2936 = vmatprep.subr.mxu0 0.0
        %2937 = vmatpush1.xpose.msra.mxu0 0.0
        %2938 = vmatprep.subr.mxu0 0.0
        %2939 = vmatpush1.xpose.msra.mxu0 0.0
        %2940 = vmatprep.subr.mxu0 0.0
        %2941 = vmatpush1.xpose.msra.mxu0 0.0
        %2942 = vmatprep.subr.mxu0 0.0
        %2943 = vmatpush1.xpose.msra.mxu0 0.0
        %2944 = vmatprep.subr.mxu0 0.0
        %2945 = vmatpush1.xpose.msra.mxu0 0.0
        %2946 = vmatprep.subr.mxu0 0.0
        %2947 = vmatpush1.xpose.msra.mxu0 0.0
        %2948 = vmatprep.subr.mxu0 0.0
        %2949 = vmatpush1.xpose.msra.mxu0 0.0
        %2950 = vmatprep.subr.mxu0 0.0
        %2951 = vmatpush1.xpose.msra.mxu0 0.0
        %2952 = vmatprep.subr.mxu0 0.0
        %2953 = vmatpush1.xpose.msra.mxu0 0.0
        %2954 = vmatprep.subr.mxu0 0.0
        %2955 = vmatpush1.xpose.msra.mxu0 0.0
        %2956 = vmatprep.subr.mxu0 0.0
        %2957 = vmatpush1.xpose.msra.mxu0 0.0
        %2958 = vmatprep.subr.mxu0 0.0
        %2959 = vmatpush1.xpose.msra.mxu0 0.0
        %2960 = vmatprep.subr.mxu0 0.0
        %2961 = vmatpush1.xpose.msra.mxu0 0.0
        %2962 = vmatprep.subr.mxu0 0.0
        %2963 = vmatpush1.xpose.msra.mxu0 0.0
        %2964 = vmatprep.subr.mxu0 0.0
        %2965 = vmatpush1.xpose.msra.mxu0 0.0
        %2966 = vmatprep.subr.mxu0 0.0
        %2967 = vmatpush1.xpose.msra.mxu0 0.0
        %2968 = vmatprep.subr.mxu0 0.0
        %2969 = vmatpush1.xpose.msra.mxu0 0.0
        %2970 = vmatprep.subr.mxu0 0.0
        %2971 = vmatpush1.xpose.msra.mxu0 0.0
        %2972 = vmatprep.subr.mxu0 0.0
        %2973 = vmatpush1.xpose.msra.mxu0 0.0
        %2974 = vmatprep.subr.mxu0 0.0
        %2975 = vmatpush1.xpose.msra.mxu0 0.0
        %2976 = vmatprep.subr.mxu0 0.0
        %2977 = vmatpush1.xpose.msra.mxu0 0.0
        %2978 = vmatprep.subr.mxu0 0.0
        %2979 = vmatpush1.xpose.msra.mxu0 0.0
        %2980 = vmatprep.subr.mxu0 0.0
        %2981 = vmatpush1.xpose.msra.mxu0 0.0
        %2982 = vmatprep.subr.mxu0 0.0
        %2983 = vmatpush1.xpose.msra.mxu0 0.0
        %2984 = vmatprep.subr.mxu0 0.0
        %2985 = vmatpush1.xpose.msra.mxu0 0.0
        %2986 = vmatprep.mubr.f32.mxu0 0.0
        %2987 = vmatmul.mubr.f32.gmra.mrb[0].mxu0 %v1632
        %v2988 = vpop.f32.mrb[0].mxu0
        %v2989 = vadd.f32 0.0, %v2988
        %v2990 = vpop.f32.mrb[0].mxu0
        %2991 = vdwg.mxu0
        %2992 = vmatprep.subr.mxu0 0.0
        %2993 = vmatpush1.xpose.msra.mxu0 %v1484
        %2994 = vmatprep.subr.mxu0 0.0
        %2995 = vmatpush1.xpose.msra.mxu0 0.0
        %2996 = vmatprep.subr.mxu0 0.0
        %2997 = vmatpush1.xpose.msra.mxu0 0.0
        %2998 = vmatprep.subr.mxu0 0.0
        %2999 = vmatpush1.xpose.msra.mxu0 0.0
        %3000 = vmatprep.subr.mxu0 0.0
        %3001 = vmatpush1.xpose.msra.mxu0 0.0
        %3002 = vmatprep.subr.mxu0 0.0
        %3003 = vmatpush1.xpose.msra.mxu0 0.0
        %3004 = vmatprep.subr.mxu0 0.0
        %3005 = vmatpush1.xpose.msra.mxu0 0.0
        %3006 = vmatprep.subr.mxu0 0.0
        %3007 = vmatpush1.xpose.msra.mxu0 0.0
        %3008 = vmatprep.subr.mxu0 0.0
        %3009 = vmatpush1.xpose.msra.mxu0 0.0
        %3010 = vmatprep.subr.mxu0 0.0
        %3011 = vmatpush1.xpose.msra.mxu0 0.0
        %3012 = vmatprep.subr.mxu0 0.0
        %3013 = vmatpush1.xpose.msra.mxu0 0.0
        %3014 = vmatprep.subr.mxu0 0.0
        %3015 = vmatpush1.xpose.msra.mxu0 0.0
        %3016 = vmatprep.subr.mxu0 0.0
        %3017 = vmatpush1.xpose.msra.mxu0 0.0
        %3018 = vmatprep.subr.mxu0 0.0
        %3019 = vmatpush1.xpose.msra.mxu0 0.0
        %3020 = vmatprep.subr.mxu0 0.0
        %3021 = vmatpush1.xpose.msra.mxu0 0.0
        %3022 = vmatprep.subr.mxu0 0.0
        %3023 = vmatpush1.xpose.msra.mxu0 0.0
        %3024 = vmatprep.subr.mxu0 0.0
        %3025 = vmatpush1.xpose.msra.mxu0 0.0
        %3026 = vmatprep.subr.mxu0 0.0
        %3027 = vmatpush1.xpose.msra.mxu0 0.0
        %3028 = vmatprep.subr.mxu0 0.0
        %3029 = vmatpush1.xpose.msra.mxu0 0.0
        %3030 = vmatprep.subr.mxu0 0.0
        %3031 = vmatpush1.xpose.msra.mxu0 0.0
        %3032 = vmatprep.subr.mxu0 0.0
        %3033 = vmatpush1.xpose.msra.mxu0 0.0
        %3034 = vmatprep.subr.mxu0 0.0
        %3035 = vmatpush1.xpose.msra.mxu0 0.0
        %3036 = vmatprep.subr.mxu0 0.0
        %3037 = vmatpush1.xpose.msra.mxu0 0.0
        %3038 = vmatprep.subr.mxu0 0.0
        %3039 = vmatpush1.xpose.msra.mxu0 0.0
        %3040 = vmatprep.subr.mxu0 0.0
        %3041 = vmatpush1.xpose.msra.mxu0 0.0
        %3042 = vmatprep.subr.mxu0 0.0
        %3043 = vmatpush1.xpose.msra.mxu0 0.0
        %3044 = vmatprep.subr.mxu0 0.0
        %3045 = vmatpush1.xpose.msra.mxu0 0.0
        %3046 = vmatprep.subr.mxu0 0.0
        %3047 = vmatpush1.xpose.msra.mxu0 0.0
        %3048 = vmatprep.subr.mxu0 0.0
        %3049 = vmatpush1.xpose.msra.mxu0 0.0
        %3050 = vmatprep.subr.mxu0 0.0
        %3051 = vmatpush1.xpose.msra.mxu0 0.0
        %3052 = vmatprep.subr.mxu0 0.0
        %3053 = vmatpush1.xpose.msra.mxu0 0.0
        %3054 = vmatprep.subr.mxu0 0.0
        %3055 = vmatpush1.xpose.msra.mxu0 0.0
        %3056 = vmatprep.mubr.f32.mxu0 0.0
        %3057 = vmatmul.mubr.f32.gmra.mrb[0].mxu0 %v1378
        %v3058 = vpop.f32.mrb[0].mxu0
        %v3059 = vadd.f32 0.0, %v3058
        %v3060 = vpop.f32.mrb[0].mxu0
        %3061 = vdwg.mxu0
        %3062 = vmatprep.subr.mxu0 0.0
        %3063 = vmatpush1.xpose.msra.mxu0 %v1681
        %3064 = vmatprep.subr.mxu0 0.0
        %3065 = vmatpush1.xpose.msra.mxu0 0.0
        %3066 = vmatprep.subr.mxu0 0.0
        %3067 = vmatpush1.xpose.msra.mxu0 0.0
        %3068 = vmatprep.subr.mxu0 0.0
        %3069 = vmatpush1.xpose.msra.mxu0 0.0
        %3070 = vmatprep.subr.mxu0 0.0
        %3071 = vmatpush1.xpose.msra.mxu0 0.0
        %3072 = vmatprep.subr.mxu0 0.0
        %3073 = vmatpush1.xpose.msra.mxu0 0.0
        %3074 = vmatprep.subr.mxu0 0.0
        %3075 = vmatpush1.xpose.msra.mxu0 0.0
        %3076 = vmatprep.subr.mxu0 0.0
        %3077 = vmatpush1.xpose.msra.mxu0 0.0
        %3078 = vmatprep.subr.mxu0 0.0
        %3079 = vmatpush1.xpose.msra.mxu0 0.0
        %3080 = vmatprep.subr.mxu0 0.0
        %3081 = vmatpush1.xpose.msra.mxu0 0.0
        %3082 = vmatprep.subr.mxu0 0.0
        %3083 = vmatpush1.xpose.msra.mxu0 0.0
        %3084 = vmatprep.subr.mxu0 0.0
        %3085 = vmatpush1.xpose.msra.mxu0 0.0
        %3086 = vmatprep.subr.mxu0 0.0
        %3087 = vmatpush1.xpose.msra.mxu0 0.0
        %3088 = vmatprep.subr.mxu0 0.0
        %3089 = vmatpush1.xpose.msra.mxu0 0.0
        %3090 = vmatprep.subr.mxu0 0.0
        %3091 = vmatpush1.xpose.msra.mxu0 0.0
        %3092 = vmatprep.subr.mxu0 0.0
        %3093 = vmatpush1.xpose.msra.mxu0 0.0
        %3094 = vmatprep.subr.mxu0 0.0
        %3095 = vmatpush1.xpose.msra.mxu0 0.0
        %3096 = vmatprep.subr.mxu0 0.0
        %3097 = vmatpush1.xpose.msra.mxu0 0.0
        %3098 = vmatprep.subr.mxu0 0.0
        %3099 = vmatpush1.xpose.msra.mxu0 0.0
        %3100 = vmatprep.subr.mxu0 0.0
        %3101 = vmatpush1.xpose.msra.mxu0 0.0
        %3102 = vmatprep.subr.mxu0 0.0
        %3103 = vmatpush1.xpose.msra.mxu0 0.0
        %3104 = vmatprep.subr.mxu0 0.0
        %3105 = vmatpush1.xpose.msra.mxu0 0.0
        %3106 = vmatprep.subr.mxu0 0.0
        %3107 = vmatpush1.xpose.msra.mxu0 0.0
        %3108 = vmatprep.subr.mxu0 0.0
        %3109 = vmatpush1.xpose.msra.mxu0 0.0
        %3110 = vmatprep.subr.mxu0 0.0
        %3111 = vmatpush1.xpose.msra.mxu0 0.0
        %3112 = vmatprep.subr.mxu0 0.0
        %3113 = vmatpush1.xpose.msra.mxu0 0.0
        %3114 = vmatprep.subr.mxu0 0.0
        %3115 = vmatpush1.xpose.msra.mxu0 0.0
        %3116 = vmatprep.subr.mxu0 0.0
        %3117 = vmatpush1.xpose.msra.mxu0 0.0
        %3118 = vmatprep.subr.mxu0 0.0
        %3119 = vmatpush1.xpose.msra.mxu0 0.0
        %3120 = vmatprep.subr.mxu0 0.0
        %3121 = vmatpush1.xpose.msra.mxu0 0.0
        %3122 = vmatprep.subr.mxu0 0.0
        %3123 = vmatpush1.xpose.msra.mxu0 0.0
        %3124 = vmatprep.subr.mxu0 0.0
        %3125 = vmatpush1.xpose.msra.mxu0 0.0
        %3126 = vmatprep.mubr.f32.mxu0 0.0
        %3127 = vmatmul.mubr.f32.gmra.mrb[0].mxu0 %v1633
        %v3128 = vpop.f32.mrb[0].mxu0
        %v3129 = vadd.f32 0.0, %v3128
        %v3130 = vpop.f32.mrb[0].mxu0
        %3131 = vdwg.mxu0
        %3132 = vmatprep.subr.mxu0 0.0
        %3133 = vmatpush1.xpose.msra.mxu0 %v1490
        %3134 = vmatprep.subr.mxu0 0.0
        %3135 = vmatpush1.xpose.msra.mxu0 0.0
        %3136 = vmatprep.subr.mxu0 0.0
        %3137 = vmatpush1.xpose.msra.mxu0 0.0
        %3138 = vmatprep.subr.mxu0 0.0
        %3139 = vmatpush1.xpose.msra.mxu0 0.0
        %3140 = vmatprep.subr.mxu0 0.0
        %3141 = vmatpush1.xpose.msra.mxu0 0.0
        %3142 = vmatprep.subr.mxu0 0.0
        %3143 = vmatpush1.xpose.msra.mxu0 0.0
        %3144 = vmatprep.subr.mxu0 0.0
        %3145 = vmatpush1.xpose.msra.mxu0 0.0
        %3146 = vmatprep.subr.mxu0 0.0
        %3147 = vmatpush1.xpose.msra.mxu0 0.0
        %3148 = vmatprep.subr.mxu0 0.0
        %3149 = vmatpush1.xpose.msra.mxu0 0.0
        %3150 = vmatprep.subr.mxu0 0.0
        %3151 = vmatpush1.xpose.msra.mxu0 0.0
        %3152 = vmatprep.subr.mxu0 0.0
        %3153 = vmatpush1.xpose.msra.mxu0 0.0
        %3154 = vmatprep.subr.mxu0 0.0
        %3155 = vmatpush1.xpose.msra.mxu0 0.0
        %3156 = vmatprep.subr.mxu0 0.0
        %3157 = vmatpush1.xpose.msra.mxu0 0.0
        %3158 = vmatprep.subr.mxu0 0.0
        %3159 = vmatpush1.xpose.msra.mxu0 0.0
        %3160 = vmatprep.subr.mxu0 0.0
        %3161 = vmatpush1.xpose.msra.mxu0 0.0
        %3162 = vmatprep.subr.mxu0 0.0
        %3163 = vmatpush1.xpose.msra.mxu0 0.0
        %3164 = vmatprep.subr.mxu0 0.0
        %3165 = vmatpush1.xpose.msra.mxu0 0.0
        %3166 = vmatprep.subr.mxu0 0.0
        %3167 = vmatpush1.xpose.msra.mxu0 0.0
        %3168 = vmatprep.subr.mxu0 0.0
        %3169 = vmatpush1.xpose.msra.mxu0 0.0
        %3170 = vmatprep.subr.mxu0 0.0
        %3171 = vmatpush1.xpose.msra.mxu0 0.0
        %3172 = vmatprep.subr.mxu0 0.0
        %3173 = vmatpush1.xpose.msra.mxu0 0.0
        %3174 = vmatprep.subr.mxu0 0.0
        %3175 = vmatpush1.xpose.msra.mxu0 0.0
        %3176 = vmatprep.subr.mxu0 0.0
        %3177 = vmatpush1.xpose.msra.mxu0 0.0
        %3178 = vmatprep.subr.mxu0 0.0
        %3179 = vmatpush1.xpose.msra.mxu0 0.0
        %3180 = vmatprep.subr.mxu0 0.0
        %3181 = vmatpush1.xpose.msra.mxu0 0.0
        %3182 = vmatprep.subr.mxu0 0.0
        %3183 = vmatpush1.xpose.msra.mxu0 0.0
        %3184 = vmatprep.subr.mxu0 0.0
        %3185 = vmatpush1.xpose.msra.mxu0 0.0
        %3186 = vmatprep.subr.mxu0 0.0
        %3187 = vmatpush1.xpose.msra.mxu0 0.0
        %3188 = vmatprep.subr.mxu0 0.0
        %3189 = vmatpush1.xpose.msra.mxu0 0.0
        %3190 = vmatprep.subr.mxu0 0.0
        %3191 = vmatpush1.xpose.msra.mxu0 0.0
        %3192 = vmatprep.subr.mxu0 0.0
        %3193 = vmatpush1.xpose.msra.mxu0 0.0
        %3194 = vmatprep.subr.mxu0 0.0
        %3195 = vmatpush1.xpose.msra.mxu0 0.0
        %3196 = vmatprep.mubr.f32.mxu0 0.0
        %3197 = vmatmul.mubr.f32.gmra.mrb[0].mxu0 %v1384
        %v3198 = vpop.f32.mrb[0].mxu0
        %v3199 = vadd.f32 0.0, %v3198
        %v3200 = vpop.f32.mrb[0].mxu0
        %3201 = vdwg.mxu0
        %3202 = vmatprep.subr.mxu0 0.0
        %3203 = vmatpush1.xpose.msra.mxu0 %v1682
        %3204 = vmatprep.subr.mxu0 0.0
        %3205 = vmatpush1.xpose.msra.mxu0 0.0
        %3206 = vmatprep.subr.mxu0 0.0
        %3207 = vmatpush1.xpose.msra.mxu0 0.0
        %3208 = vmatprep.subr.mxu0 0.0
        %3209 = vmatpush1.xpose.msra.mxu0 0.0
        %3210 = vmatprep.subr.mxu0 0.0
        %3211 = vmatpush1.xpose.msra.mxu0 0.0
        %3212 = vmatprep.subr.mxu0 0.0
        %3213 = vmatpush1.xpose.msra.mxu0 0.0
        %3214 = vmatprep.subr.mxu0 0.0
        %3215 = vmatpush1.xpose.msra.mxu0 0.0
        %3216 = vmatprep.subr.mxu0 0.0
        %3217 = vmatpush1.xpose.msra.mxu0 0.0
        %3218 = vmatprep.subr.mxu0 0.0
        %3219 = vmatpush1.xpose.msra.mxu0 0.0
        %3220 = vmatprep.subr.mxu0 0.0
        %3221 = vmatpush1.xpose.msra.mxu0 0.0
        %3222 = vmatprep.subr.mxu0 0.0
        %3223 = vmatpush1.xpose.msra.mxu0 0.0
        %3224 = vmatprep.subr.mxu0 0.0
        %3225 = vmatpush1.xpose.msra.mxu0 0.0
        %3226 = vmatprep.subr.mxu0 0.0
        %3227 = vmatpush1.xpose.msra.mxu0 0.0
        %3228 = vmatprep.subr.mxu0 0.0
        %3229 = vmatpush1.xpose.msra.mxu0 0.0
        %3230 = vmatprep.subr.mxu0 0.0
        %3231 = vmatpush1.xpose.msra.mxu0 0.0
        %3232 = vmatprep.subr.mxu0 0.0
        %3233 = vmatpush1.xpose.msra.mxu0 0.0
        %3234 = vmatprep.subr.mxu0 0.0
        %3235 = vmatpush1.xpose.msra.mxu0 0.0
        %3236 = vmatprep.subr.mxu0 0.0
        %3237 = vmatpush1.xpose.msra.mxu0 0.0
        %3238 = vmatprep.subr.mxu0 0.0
        %3239 = vmatpush1.xpose.msra.mxu0 0.0
        %3240 = vmatprep.subr.mxu0 0.0
        %3241 = vmatpush1.xpose.msra.mxu0 0.0
        %3242 = vmatprep.subr.mxu0 0.0
        %3243 = vmatpush1.xpose.msra.mxu0 0.0
        %3244 = vmatprep.subr.mxu0 0.0
        %3245 = vmatpush1.xpose.msra.mxu0 0.0
        %3246 = vmatprep.subr.mxu0 0.0
        %3247 = vmatpush1.xpose.msra.mxu0 0.0
        %3248 = vmatprep.subr.mxu0 0.0
        %3249 = vmatpush1.xpose.msra.mxu0 0.0
        %3250 = vmatprep.subr.mxu0 0.0
        %3251 = vmatpush1.xpose.msra.mxu0 0.0
        %3252 = vmatprep.subr.mxu0 0.0
        %3253 = vmatpush1.xpose.msra.mxu0 0.0
        %3254 = vmatprep.subr.mxu0 0.0
        %3255 = vmatpush1.xpose.msra.mxu0 0.0
        %3256 = vmatprep.subr.mxu0 0.0
        %3257 = vmatpush1.xpose.msra.mxu0 0.0
        %3258 = vmatprep.subr.mxu0 0.0
        %3259 = vmatpush1.xpose.msra.mxu0 0.0
        %3260 = vmatprep.subr.mxu0 0.0
        %3261 = vmatpush1.xpose.msra.mxu0 0.0
        %3262 = vmatprep.subr.mxu0 0.0
        %3263 = vmatpush1.xpose.msra.mxu0 0.0
        %3264 = vmatprep.subr.mxu0 0.0
        %3265 = vmatpush1.xpose.msra.mxu0 0.0
        %3266 = vmatprep.mubr.f32.mxu0 0.0
        %3267 = vmatmul.mubr.f32.gmra.mrb[0].mxu0 %v1634
        %v3268 = vpop.f32.mrb[0].mxu0
        %v3269 = vadd.f32 0.0, %v3268
        %v3270 = vpop.f32.mrb[0].mxu0
        %3271 = vdwg.mxu0
        %3272 = vmatprep.subr.mxu0 0.0
        %3273 = vmatpush1.xpose.msra.mxu0 %v1494
        %3274 = vmatprep.subr.mxu0 0.0
        %3275 = vmatpush1.xpose.msra.mxu0 0.0
        %3276 = vmatprep.subr.mxu0 0.0
        %3277 = vmatpush1.xpose.msra.mxu0 0.0
        %3278 = vmatprep.subr.mxu0 0.0
        %3279 = vmatpush1.xpose.msra.mxu0 0.0
        %3280 = vmatprep.subr.mxu0 0.0
        %3281 = vmatpush1.xpose.msra.mxu0 0.0
        %3282 = vmatprep.subr.mxu0 0.0
        %3283 = vmatpush1.xpose.msra.mxu0 0.0
        %3284 = vmatprep.subr.mxu0 0.0
        %3285 = vmatpush1.xpose.msra.mxu0 0.0
        %3286 = vmatprep.subr.mxu0 0.0
        %3287 = vmatpush1.xpose.msra.mxu0 0.0
        %3288 = vmatprep.subr.mxu0 0.0
        %3289 = vmatpush1.xpose.msra.mxu0 0.0
        %3290 = vmatprep.subr.mxu0 0.0
        %3291 = vmatpush1.xpose.msra.mxu0 0.0
        %3292 = vmatprep.subr.mxu0 0.0
        %3293 = vmatpush1.xpose.msra.mxu0 0.0
        %3294 = vmatprep.subr.mxu0 0.0
        %3295 = vmatpush1.xpose.msra.mxu0 0.0
        %3296 = vmatprep.subr.mxu0 0.0
        %3297 = vmatpush1.xpose.msra.mxu0 0.0
        %3298 = vmatprep.subr.mxu0 0.0
        %3299 = vmatpush1.xpose.msra.mxu0 0.0
        %3300 = vmatprep.subr.mxu0 0.0
        %3301 = vmatpush1.xpose.msra.mxu0 0.0
        %3302 = vmatprep.subr.mxu0 0.0
        %3303 = vmatpush1.xpose.msra.mxu0 0.0
        %3304 = vmatprep.subr.mxu0 0.0
        %3305 = vmatpush1.xpose.msra.mxu0 0.0
        %3306 = vmatprep.subr.mxu0 0.0
        %3307 = vmatpush1.xpose.msra.mxu0 0.0
        %3308 = vmatprep.subr.mxu0 0.0
        %3309 = vmatpush1.xpose.msra.mxu0 0.0
        %3310 = vmatprep.subr.mxu0 0.0
        %3311 = vmatpush1.xpose.msra.mxu0 0.0
        %3312 = vmatprep.subr.mxu0 0.0
        %3313 = vmatpush1.xpose.msra.mxu0 0.0
        %3314 = vmatprep.subr.mxu0 0.0
        %3315 = vmatpush1.xpose.msra.mxu0 0.0
        %3316 = vmatprep.subr.mxu0 0.0
        %3317 = vmatpush1.xpose.msra.mxu0 0.0
        %3318 = vmatprep.subr.mxu0 0.0
        %3319 = vmatpush1.xpose.msra.mxu0 0.0
        %3320 = vmatprep.subr.mxu0 0.0
        %3321 = vmatpush1.xpose.msra.mxu0 0.0
        %3322 = vmatprep.subr.mxu0 0.0
        %3323 = vmatpush1.xpose.msra.mxu0 0.0
        %3324 = vmatprep.subr.mxu0 0.0
        %3325 = vmatpush1.xpose.msra.mxu0 0.0
        %3326 = vmatprep.subr.mxu0 0.0
        %3327 = vmatpush1.xpose.msra.mxu0 0.0
        %3328 = vmatprep.subr.mxu0 0.0
        %3329 = vmatpush1.xpose.msra.mxu0 0.0
        %3330 = vmatprep.subr.mxu0 0.0
        %3331 = vmatpush1.xpose.msra.mxu0 0.0
        %3332 = vmatprep.subr.mxu0 0.0
        %3333 = vmatpush1.xpose.msra.mxu0 0.0
        %3334 = vmatprep.subr.mxu0 0.0
        %3335 = vmatpush1.xpose.msra.mxu0 0.0
        %3336 = vmatprep.mubr.f32.mxu0 0.0
        %3337 = vmatmul.mubr.f32.gmra.mrb[0].mxu0 %v1388
        %v3338 = vpop.f32.mrb[0].mxu0
        %v3339 = vadd.f32 0.0, %v3338
        %v3340 = vpop.f32.mrb[0].mxu0
        %3341 = vdwg.mxu0
        %3342 = vmatprep.subr.mxu0 0.0
        %3343 = vmatpush1.xpose.msra.mxu0 %v1683
        %3344 = vmatprep.subr.mxu0 0.0
        %3345 = vmatpush1.xpose.msra.mxu0 0.0
        %3346 = vmatprep.subr.mxu0 0.0
        %3347 = vmatpush1.xpose.msra.mxu0 0.0
        %3348 = vmatprep.subr.mxu0 0.0
        %3349 = vmatpush1.xpose.msra.mxu0 0.0
        %3350 = vmatprep.subr.mxu0 0.0
        %3351 = vmatpush1.xpose.msra.mxu0 0.0
        %3352 = vmatprep.subr.mxu0 0.0
        %3353 = vmatpush1.xpose.msra.mxu0 0.0
        %3354 = vmatprep.subr.mxu0 0.0
        %3355 = vmatpush1.xpose.msra.mxu0 0.0
        %3356 = vmatprep.subr.mxu0 0.0
        %3357 = vmatpush1.xpose.msra.mxu0 0.0
        %3358 = vmatprep.subr.mxu0 0.0
        %3359 = vmatpush1.xpose.msra.mxu0 0.0
        %3360 = vmatprep.subr.mxu0 0.0
        %3361 = vmatpush1.xpose.msra.mxu0 0.0
        %3362 = vmatprep.subr.mxu0 0.0
        %3363 = vmatpush1.xpose.msra.mxu0 0.0
        %3364 = vmatprep.subr.mxu0 0.0
        %3365 = vmatpush1.xpose.msra.mxu0 0.0
        %3366 = vmatprep.subr.mxu0 0.0
        %3367 = vmatpush1.xpose.msra.mxu0 0.0
        %3368 = vmatprep.subr.mxu0 0.0
        %3369 = vmatpush1.xpose.msra.mxu0 0.0
        %3370 = vmatprep.subr.mxu0 0.0
        %3371 = vmatpush1.xpose.msra.mxu0 0.0
        %3372 = vmatprep.subr.mxu0 0.0
        %3373 = vmatpush1.xpose.msra.mxu0 0.0
        %3374 = vmatprep.subr.mxu0 0.0
        %3375 = vmatpush1.xpose.msra.mxu0 0.0
        %3376 = vmatprep.subr.mxu0 0.0
        %3377 = vmatpush1.xpose.msra.mxu0 0.0
        %3378 = vmatprep.subr.mxu0 0.0
        %3379 = vmatpush1.xpose.msra.mxu0 0.0
        %3380 = vmatprep.subr.mxu0 0.0
        %3381 = vmatpush1.xpose.msra.mxu0 0.0
        %3382 = vmatprep.subr.mxu0 0.0
        %3383 = vmatpush1.xpose.msra.mxu0 0.0
        %3384 = vmatprep.subr.mxu0 0.0
        %3385 = vmatpush1.xpose.msra.mxu0 0.0
        %3386 = vmatprep.subr.mxu0 0.0
        %3387 = vmatpush1.xpose.msra.mxu0 0.0
        %3388 = vmatprep.subr.mxu0 0.0
        %3389 = vmatpush1.xpose.msra.mxu0 0.0
        %3390 = vmatprep.subr.mxu0 0.0
        %3391 = vmatpush1.xpose.msra.mxu0 0.0
        %3392 = vmatprep.subr.mxu0 0.0
        %3393 = vmatpush1.xpose.msra.mxu0 0.0
        %3394 = vmatprep.subr.mxu0 0.0
        %3395 = vmatpush1.xpose.msra.mxu0 0.0
        %3396 = vmatprep.subr.mxu0 0.0
        %3397 = vmatpush1.xpose.msra.mxu0 0.0
        %3398 = vmatprep.subr.mxu0 0.0
        %3399 = vmatpush1.xpose.msra.mxu0 0.0
        %3400 = vmatprep.subr.mxu0 0.0
        %3401 = vmatpush1.xpose.msra.mxu0 0.0
        %3402 = vmatprep.subr.mxu0 0.0
        %3403 = vmatpush1.xpose.msra.mxu0 0.0
        %3404 = vmatprep.subr.mxu0 0.0
        %3405 = vmatpush1.xpose.msra.mxu0 0.0
        %3406 = vmatprep.mubr.f32.mxu0 0.0
        %3407 = vmatmul.mubr.f32.gmra.mrb[0].mxu0 %v1635
        %v3408 = vpop.f32.mrb[0].mxu0
        %v3409 = vadd.f32 0.0, %v3408
        %v3410 = vpop.f32.mrb[0].mxu0
        %3411 = vdwg.mxu0
        %3412 = vmatprep.subr.mxu0 0.0
        %3413 = vmatpush1.xpose.msra.mxu0 %v1482
        %3414 = vmatprep.subr.mxu0 0.0
        %3415 = vmatpush1.xpose.msra.mxu0 0.0
        %3416 = vmatprep.subr.mxu0 0.0
        %3417 = vmatpush1.xpose.msra.mxu0 0.0
        %3418 = vmatprep.subr.mxu0 0.0
        %3419 = vmatpush1.xpose.msra.mxu0 0.0
        %3420 = vmatprep.subr.mxu0 0.0
        %3421 = vmatpush1.xpose.msra.mxu0 0.0
        %3422 = vmatprep.subr.mxu0 0.0
        %3423 = vmatpush1.xpose.msra.mxu0 0.0
        %3424 = vmatprep.subr.mxu0 0.0
        %3425 = vmatpush1.xpose.msra.mxu0 0.0
        %3426 = vmatprep.subr.mxu0 0.0
        %3427 = vmatpush1.xpose.msra.mxu0 0.0
        %3428 = vmatprep.subr.mxu0 0.0
        %3429 = vmatpush1.xpose.msra.mxu0 0.0
        %3430 = vmatprep.subr.mxu0 0.0
        %3431 = vmatpush1.xpose.msra.mxu0 0.0
        %3432 = vmatprep.subr.mxu0 0.0
        %3433 = vmatpush1.xpose.msra.mxu0 0.0
        %3434 = vmatprep.subr.mxu0 0.0
        %3435 = vmatpush1.xpose.msra.mxu0 0.0
        %3436 = vmatprep.subr.mxu0 0.0
        %3437 = vmatpush1.xpose.msra.mxu0 0.0
        %3438 = vmatprep.subr.mxu0 0.0
        %3439 = vmatpush1.xpose.msra.mxu0 0.0
        %3440 = vmatprep.subr.mxu0 0.0
        %3441 = vmatpush1.xpose.msra.mxu0 0.0
        %3442 = vmatprep.subr.mxu0 0.0
        %3443 = vmatpush1.xpose.msra.mxu0 0.0
        %3444 = vmatprep.subr.mxu0 0.0
        %3445 = vmatpush1.xpose.msra.mxu0 0.0
        %3446 = vmatprep.subr.mxu0 0.0
        %3447 = vmatpush1.xpose.msra.mxu0 0.0
        %3448 = vmatprep.subr.mxu0 0.0
        %3449 = vmatpush1.xpose.msra.mxu0 0.0
        %3450 = vmatprep.subr.mxu0 0.0
        %3451 = vmatpush1.xpose.msra.mxu0 0.0
        %3452 = vmatprep.subr.mxu0 0.0
        %3453 = vmatpush1.xpose.msra.mxu0 0.0
        %3454 = vmatprep.subr.mxu0 0.0
        %3455 = vmatpush1.xpose.msra.mxu0 0.0
        %3456 = vmatprep.subr.mxu0 0.0
        %3457 = vmatpush1.xpose.msra.mxu0 0.0
        %3458 = vmatprep.subr.mxu0 0.0
        %3459 = vmatpush1.xpose.msra.mxu0 0.0
        %3460 = vmatprep.subr.mxu0 0.0
        %3461 = vmatpush1.xpose.msra.mxu0 0.0
        %3462 = vmatprep.subr.mxu0 0.0
        %3463 = vmatpush1.xpose.msra.mxu0 0.0
        %3464 = vmatprep.subr.mxu0 0.0
        %3465 = vmatpush1.xpose.msra.mxu0 0.0
        %3466 = vmatprep.subr.mxu0 0.0
        %3467 = vmatpush1.xpose.msra.mxu0 0.0
        %3468 = vmatprep.subr.mxu0 0.0
        %3469 = vmatpush1.xpose.msra.mxu0 0.0
        %3470 = vmatprep.subr.mxu0 0.0
        %3471 = vmatpush1.xpose.msra.mxu0 0.0
        %3472 = vmatprep.subr.mxu0 0.0
        %3473 = vmatpush1.xpose.msra.mxu0 0.0
        %3474 = vmatprep.subr.mxu0 0.0
        %3475 = vmatpush1.xpose.msra.mxu0 0.0
        %3476 = vmatprep.mubr.f32.mxu0 0.0
        %3477 = vmatmul.mubr.f32.gmra.mrb[0].mxu0 %v1376
        %v3478 = vpop.f32.mrb[0].mxu0
        %v3479 = vadd.f32 0.0, %v3478
        %v3480 = vpop.f32.mrb[0].mxu0
        %3481 = vdwg.mxu0
        %3482 = vmatprep.subr.mxu0 0.0
        %3483 = vmatpush1.xpose.msra.mxu0 %v1692
        %3484 = vmatprep.subr.mxu0 0.0
        %3485 = vmatpush1.xpose.msra.mxu0 0.0
        %3486 = vmatprep.subr.mxu0 0.0
        %3487 = vmatpush1.xpose.msra.mxu0 0.0
        %3488 = vmatprep.subr.mxu0 0.0
        %3489 = vmatpush1.xpose.msra.mxu0 0.0
        %3490 = vmatprep.subr.mxu0 0.0
        %3491 = vmatpush1.xpose.msra.mxu0 0.0
        %3492 = vmatprep.subr.mxu0 0.0
        %3493 = vmatpush1.xpose.msra.mxu0 0.0
        %3494 = vmatprep.subr.mxu0 0.0
        %3495 = vmatpush1.xpose.msra.mxu0 0.0
        %3496 = vmatprep.subr.mxu0 0.0
        %3497 = vmatpush1.xpose.msra.mxu0 0.0
        %3498 = vmatprep.subr.mxu0 0.0
        %3499 = vmatpush1.xpose.msra.mxu0 0.0
        %3500 = vmatprep.subr.mxu0 0.0
        %3501 = vmatpush1.xpose.msra.mxu0 0.0
        %3502 = vmatprep.subr.mxu0 0.0
        %3503 = vmatpush1.xpose.msra.mxu0 0.0
        %3504 = vmatprep.subr.mxu0 0.0
        %3505 = vmatpush1.xpose.msra.mxu0 0.0
        %3506 = vmatprep.subr.mxu0 0.0
        %3507 = vmatpush1.xpose.msra.mxu0 0.0
        %3508 = vmatprep.subr.mxu0 0.0
        %3509 = vmatpush1.xpose.msra.mxu0 0.0
        %3510 = vmatprep.subr.mxu0 0.0
        %3511 = vmatpush1.xpose.msra.mxu0 0.0
        %3512 = vmatprep.subr.mxu0 0.0
        %3513 = vmatpush1.xpose.msra.mxu0 0.0
        %3514 = vmatprep.subr.mxu0 0.0
        %3515 = vmatpush1.xpose.msra.mxu0 0.0
        %3516 = vmatprep.subr.mxu0 0.0
        %3517 = vmatpush1.xpose.msra.mxu0 0.0
        %3518 = vmatprep.subr.mxu0 0.0
        %3519 = vmatpush1.xpose.msra.mxu0 0.0
        %3520 = vmatprep.subr.mxu0 0.0
        %3521 = vmatpush1.xpose.msra.mxu0 0.0
        %3522 = vmatprep.subr.mxu0 0.0
        %3523 = vmatpush1.xpose.msra.mxu0 0.0
        %3524 = vmatprep.subr.mxu0 0.0
        %3525 = vmatpush1.xpose.msra.mxu0 0.0
        %3526 = vmatprep.subr.mxu0 0.0
        %3527 = vmatpush1.xpose.msra.mxu0 0.0
        %3528 = vmatprep.subr.mxu0 0.0
        %3529 = vmatpush1.xpose.msra.mxu0 0.0
        %3530 = vmatprep.subr.mxu0 0.0
        %3531 = vmatpush1.xpose.msra.mxu0 0.0
        %3532 = vmatprep.subr.mxu0 0.0
        %3533 = vmatpush1.xpose.msra.mxu0 0.0
        %3534 = vmatprep.subr.mxu0 0.0
        %3535 = vmatpush1.xpose.msra.mxu0 0.0
        %3536 = vmatprep.subr.mxu0 0.0
        %3537 = vmatpush1.xpose.msra.mxu0 0.0
        %3538 = vmatprep.subr.mxu0 0.0
        %3539 = vmatpush1.xpose.msra.mxu0 0.0
        %3540 = vmatprep.subr.mxu0 0.0
        %3541 = vmatpush1.xpose.msra.mxu0 0.0
        %3542 = vmatprep.subr.mxu0 0.0
        %3543 = vmatpush1.xpose.msra.mxu0 0.0
        %3544 = vmatprep.subr.mxu0 0.0
        %3545 = vmatpush1.xpose.msra.mxu0 0.0
        %3546 = vmatprep.mubr.f32.mxu0 0.0
        %3547 = vmatmul.mubr.f32.gmra.mrb[0].mxu0 %v1644
        %v3548 = vpop.f32.mrb[0].mxu0
        %v3549 = vadd.f32 0.0, %v3548
        %v3550 = vpop.f32.mrb[0].mxu0
        %3551 = vdwg.mxu0
        %3552 = vmatprep.subr.mxu0 0.0
        %3553 = vmatpush1.xpose.msra.mxu0 %v1486
        %3554 = vmatprep.subr.mxu0 0.0
        %3555 = vmatpush1.xpose.msra.mxu0 0.0
        %3556 = vmatprep.subr.mxu0 0.0
        %3557 = vmatpush1.xpose.msra.mxu0 0.0
        %3558 = vmatprep.subr.mxu0 0.0
        %3559 = vmatpush1.xpose.msra.mxu0 0.0
        %3560 = vmatprep.subr.mxu0 0.0
        %3561 = vmatpush1.xpose.msra.mxu0 0.0
        %3562 = vmatprep.subr.mxu0 0.0
        %3563 = vmatpush1.xpose.msra.mxu0 0.0
        %3564 = vmatprep.subr.mxu0 0.0
        %3565 = vmatpush1.xpose.msra.mxu0 0.0
        %3566 = vmatprep.subr.mxu0 0.0
        %3567 = vmatpush1.xpose.msra.mxu0 0.0
        %3568 = vmatprep.subr.mxu0 0.0
        %3569 = vmatpush1.xpose.msra.mxu0 0.0
        %3570 = vmatprep.subr.mxu0 0.0
        %3571 = vmatpush1.xpose.msra.mxu0 0.0
        %3572 = vmatprep.subr.mxu0 0.0
        %3573 = vmatpush1.xpose.msra.mxu0 0.0
        %3574 = vmatprep.subr.mxu0 0.0
        %3575 = vmatpush1.xpose.msra.mxu0 0.0
        %3576 = vmatprep.subr.mxu0 0.0
        %3577 = vmatpush1.xpose.msra.mxu0 0.0
        %3578 = vmatprep.subr.mxu0 0.0
        %3579 = vmatpush1.xpose.msra.mxu0 0.0
        %3580 = vmatprep.subr.mxu0 0.0
        %3581 = vmatpush1.xpose.msra.mxu0 0.0
        %3582 = vmatprep.subr.mxu0 0.0
        %3583 = vmatpush1.xpose.msra.mxu0 0.0
        %3584 = vmatprep.subr.mxu0 0.0
        %3585 = vmatpush1.xpose.msra.mxu0 0.0
        %3586 = vmatprep.subr.mxu0 0.0
        %3587 = vmatpush1.xpose.msra.mxu0 0.0
        %3588 = vmatprep.subr.mxu0 0.0
        %3589 = vmatpush1.xpose.msra.mxu0 0.0
        %3590 = vmatprep.subr.mxu0 0.0
        %3591 = vmatpush1.xpose.msra.mxu0 0.0
        %3592 = vmatprep.subr.mxu0 0.0
        %3593 = vmatpush1.xpose.msra.mxu0 0.0
        %3594 = vmatprep.subr.mxu0 0.0
        %3595 = vmatpush1.xpose.msra.mxu0 0.0
        %3596 = vmatprep.subr.mxu0 0.0
        %3597 = vmatpush1.xpose.msra.mxu0 0.0
        %3598 = vmatprep.subr.mxu0 0.0
        %3599 = vmatpush1.xpose.msra.mxu0 0.0
        %3600 = vmatprep.subr.mxu0 0.0
        %3601 = vmatpush1.xpose.msra.mxu0 0.0
        %3602 = vmatprep.subr.mxu0 0.0
        %3603 = vmatpush1.xpose.msra.mxu0 0.0
        %3604 = vmatprep.subr.mxu0 0.0
        %3605 = vmatpush1.xpose.msra.mxu0 0.0
        %3606 = vmatprep.subr.mxu0 0.0
        %3607 = vmatpush1.xpose.msra.mxu0 0.0
        %3608 = vmatprep.subr.mxu0 0.0
        %3609 = vmatpush1.xpose.msra.mxu0 0.0
        %3610 = vmatprep.subr.mxu0 0.0
        %3611 = vmatpush1.xpose.msra.mxu0 0.0
        %3612 = vmatprep.subr.mxu0 0.0
        %3613 = vmatpush1.xpose.msra.mxu0 0.0
        %3614 = vmatprep.subr.mxu0 0.0
        %3615 = vmatpush1.xpose.msra.mxu0 0.0
        %3616 = vmatprep.mubr.f32.mxu0 0.0
        %3617 = vmatmul.mubr.f32.gmra.mrb[0].mxu0 %v1380
        %v3618 = vpop.f32.mrb[0].mxu0
        %v3619 = vadd.f32 0.0, %v3618
        %v3620 = vpop.f32.mrb[0].mxu0
        %3621 = vdwg.mxu0
        %3622 = vmatprep.subr.mxu0 0.0
        %3623 = vmatpush1.xpose.msra.mxu0 %v1693
        %3624 = vmatprep.subr.mxu0 0.0
        %3625 = vmatpush1.xpose.msra.mxu0 0.0
        %3626 = vmatprep.subr.mxu0 0.0
        %3627 = vmatpush1.xpose.msra.mxu0 0.0
        %3628 = vmatprep.subr.mxu0 0.0
        %3629 = vmatpush1.xpose.msra.mxu0 0.0
        %3630 = vmatprep.subr.mxu0 0.0
        %3631 = vmatpush1.xpose.msra.mxu0 0.0
        %3632 = vmatprep.subr.mxu0 0.0
        %3633 = vmatpush1.xpose.msra.mxu0 0.0
        %3634 = vmatprep.subr.mxu0 0.0
        %3635 = vmatpush1.xpose.msra.mxu0 0.0
        %3636 = vmatprep.subr.mxu0 0.0
        %3637 = vmatpush1.xpose.msra.mxu0 0.0
        %3638 = vmatprep.subr.mxu0 0.0
        %3639 = vmatpush1.xpose.msra.mxu0 0.0
        %3640 = vmatprep.subr.mxu0 0.0
        %3641 = vmatpush1.xpose.msra.mxu0 0.0
        %3642 = vmatprep.subr.mxu0 0.0
        %3643 = vmatpush1.xpose.msra.mxu0 0.0
        %3644 = vmatprep.subr.mxu0 0.0
        %3645 = vmatpush1.xpose.msra.mxu0 0.0
        %3646 = vmatprep.subr.mxu0 0.0
        %3647 = vmatpush1.xpose.msra.mxu0 0.0
        %3648 = vmatprep.subr.mxu0 0.0
        %3649 = vmatpush1.xpose.msra.mxu0 0.0
        %3650 = vmatprep.subr.mxu0 0.0
        %3651 = vmatpush1.xpose.msra.mxu0 0.0
        %3652 = vmatprep.subr.mxu0 0.0
        %3653 = vmatpush1.xpose.msra.mxu0 0.0
        %3654 = vmatprep.subr.mxu0 0.0
        %3655 = vmatpush1.xpose.msra.mxu0 0.0
        %3656 = vmatprep.subr.mxu0 0.0
        %3657 = vmatpush1.xpose.msra.mxu0 0.0
        %3658 = vmatprep.subr.mxu0 0.0
        %3659 = vmatpush1.xpose.msra.mxu0 0.0
        %3660 = vmatprep.subr.mxu0 0.0
        %3661 = vmatpush1.xpose.msra.mxu0 0.0
        %3662 = vmatprep.subr.mxu0 0.0
        %3663 = vmatpush1.xpose.msra.mxu0 0.0
        %3664 = vmatprep.subr.mxu0 0.0
        %3665 = vmatpush1.xpose.msra.mxu0 0.0
        %3666 = vmatprep.subr.mxu0 0.0
        %3667 = vmatpush1.xpose.msra.mxu0 0.0
        %3668 = vmatprep.subr.mxu0 0.0
        %3669 = vmatpush1.xpose.msra.mxu0 0.0
        %3670 = vmatprep.subr.mxu0 0.0
        %3671 = vmatpush1.xpose.msra.mxu0 0.0
        %3672 = vmatprep.subr.mxu0 0.0
        %3673 = vmatpush1.xpose.msra.mxu0 0.0
        %3674 = vmatprep.subr.mxu0 0.0
        %3675 = vmatpush1.xpose.msra.mxu0 0.0
        %3676 = vmatprep.subr.mxu0 0.0
        %3677 = vmatpush1.xpose.msra.mxu0 0.0
        %3678 = vmatprep.subr.mxu0 0.0
        %3679 = vmatpush1.xpose.msra.mxu0 0.0
        %3680 = vmatprep.subr.mxu0 0.0
        %3681 = vmatpush1.xpose.msra.mxu0 0.0
        %3682 = vmatprep.subr.mxu0 0.0
        %3683 = vmatpush1.xpose.msra.mxu0 0.0
        %3684 = vmatprep.subr.mxu0 0.0
        %3685 = vmatpush1.xpose.msra.mxu0 0.0
        %3686 = vmatprep.mubr.f32.mxu0 0.0
        %3687 = vmatmul.mubr.f32.gmra.mrb[0].mxu0 %v1645
        %v3688 = vpop.f32.mrb[0].mxu0
        %v3689 = vadd.f32 0.0, %v3688
        %v3690 = vpop.f32.mrb[0].mxu0
        %3691 = vdwg.mxu0
        %3692 = vmatprep.subr.mxu0 0.0
        %3693 = vmatpush1.xpose.msra.mxu0 %v1492
        %3694 = vmatprep.subr.mxu0 0.0
        %3695 = vmatpush1.xpose.msra.mxu0 0.0
        %3696 = vmatprep.subr.mxu0 0.0
        %3697 = vmatpush1.xpose.msra.mxu0 0.0
        %3698 = vmatprep.subr.mxu0 0.0
        %3699 = vmatpush1.xpose.msra.mxu0 0.0
        %3700 = vmatprep.subr.mxu0 0.0
        %3701 = vmatpush1.xpose.msra.mxu0 0.0
        %3702 = vmatprep.subr.mxu0 0.0
        %3703 = vmatpush1.xpose.msra.mxu0 0.0
        %3704 = vmatprep.subr.mxu0 0.0
        %3705 = vmatpush1.xpose.msra.mxu0 0.0
        %3706 = vmatprep.subr.mxu0 0.0
        %3707 = vmatpush1.xpose.msra.mxu0 0.0
        %3708 = vmatprep.subr.mxu0 0.0
        %3709 = vmatpush1.xpose.msra.mxu0 0.0
        %3710 = vmatprep.subr.mxu0 0.0
        %3711 = vmatpush1.xpose.msra.mxu0 0.0
        %3712 = vmatprep.subr.mxu0 0.0
        %3713 = vmatpush1.xpose.msra.mxu0 0.0
        %3714 = vmatprep.subr.mxu0 0.0
        %3715 = vmatpush1.xpose.msra.mxu0 0.0
        %3716 = vmatprep.subr.mxu0 0.0
        %3717 = vmatpush1.xpose.msra.mxu0 0.0
        %3718 = vmatprep.subr.mxu0 0.0
        %3719 = vmatpush1.xpose.msra.mxu0 0.0
        %3720 = vmatprep.subr.mxu0 0.0
        %3721 = vmatpush1.xpose.msra.mxu0 0.0
        %3722 = vmatprep.subr.mxu0 0.0
        %3723 = vmatpush1.xpose.msra.mxu0 0.0
        %3724 = vmatprep.subr.mxu0 0.0
        %3725 = vmatpush1.xpose.msra.mxu0 0.0
        %3726 = vmatprep.subr.mxu0 0.0
        %3727 = vmatpush1.xpose.msra.mxu0 0.0
        %3728 = vmatprep.subr.mxu0 0.0
        %3729 = vmatpush1.xpose.msra.mxu0 0.0
        %3730 = vmatprep.subr.mxu0 0.0
        %3731 = vmatpush1.xpose.msra.mxu0 0.0
        %3732 = vmatprep.subr.mxu0 0.0
        %3733 = vmatpush1.xpose.msra.mxu0 0.0
        %3734 = vmatprep.subr.mxu0 0.0
        %3735 = vmatpush1.xpose.msra.mxu0 0.0
        %3736 = vmatprep.subr.mxu0 0.0
        %3737 = vmatpush1.xpose.msra.mxu0 0.0
        %3738 = vmatprep.subr.mxu0 0.0
        %3739 = vmatpush1.xpose.msra.mxu0 0.0
        %3740 = vmatprep.subr.mxu0 0.0
        %3741 = vmatpush1.xpose.msra.mxu0 0.0
        %3742 = vmatprep.subr.mxu0 0.0
        %3743 = vmatpush1.xpose.msra.mxu0 0.0
        %3744 = vmatprep.subr.mxu0 0.0
        %3745 = vmatpush1.xpose.msra.mxu0 0.0
        %3746 = vmatprep.subr.mxu0 0.0
        %3747 = vmatpush1.xpose.msra.mxu0 0.0
        %3748 = vmatprep.subr.mxu0 0.0
        %3749 = vmatpush1.xpose.msra.mxu0 0.0
        %3750 = vmatprep.subr.mxu0 0.0
        %3751 = vmatpush1.xpose.msra.mxu0 0.0
        %3752 = vmatprep.subr.mxu0 0.0
        %3753 = vmatpush1.xpose.msra.mxu0 0.0
        %3754 = vmatprep.subr.mxu0 0.0
        %3755 = vmatpush1.xpose.msra.mxu0 0.0
        %3756 = vmatprep.mubr.f32.mxu0 0.0
        %3757 = vmatmul.mubr.f32.gmra.mrb[0].mxu0 %v1386
        %v3758 = vpop.f32.mrb[0].mxu0
        %v3759 = vadd.f32 0.0, %v3758
        %v3760 = vpop.f32.mrb[0].mxu0
        %3761 = vdwg.mxu0
        %3762 = vmatprep.subr.mxu0 0.0
        %3763 = vmatpush1.xpose.msra.mxu0 %v1694
        %3764 = vmatprep.subr.mxu0 0.0
        %3765 = vmatpush1.xpose.msra.mxu0 0.0
        %3766 = vmatprep.subr.mxu0 0.0
        %3767 = vmatpush1.xpose.msra.mxu0 0.0
        %3768 = vmatprep.subr.mxu0 0.0
        %3769 = vmatpush1.xpose.msra.mxu0 0.0
        %3770 = vmatprep.subr.mxu0 0.0
        %3771 = vmatpush1.xpose.msra.mxu0 0.0
        %3772 = vmatprep.subr.mxu0 0.0
        %3773 = vmatpush1.xpose.msra.mxu0 0.0
        %3774 = vmatprep.subr.mxu0 0.0
        %3775 = vmatpush1.xpose.msra.mxu0 0.0
        %3776 = vmatprep.subr.mxu0 0.0
        %3777 = vmatpush1.xpose.msra.mxu0 0.0
        %3778 = vmatprep.subr.mxu0 0.0
        %3779 = vmatpush1.xpose.msra.mxu0 0.0
        %3780 = vmatprep.subr.mxu0 0.0
        %3781 = vmatpush1.xpose.msra.mxu0 0.0
        %3782 = vmatprep.subr.mxu0 0.0
        %3783 = vmatpush1.xpose.msra.mxu0 0.0
        %3784 = vmatprep.subr.mxu0 0.0
        %3785 = vmatpush1.xpose.msra.mxu0 0.0
        %3786 = vmatprep.subr.mxu0 0.0
        %3787 = vmatpush1.xpose.msra.mxu0 0.0
        %3788 = vmatprep.subr.mxu0 0.0
        %3789 = vmatpush1.xpose.msra.mxu0 0.0
        %3790 = vmatprep.subr.mxu0 0.0
        %3791 = vmatpush1.xpose.msra.mxu0 0.0
        %3792 = vmatprep.subr.mxu0 0.0
        %3793 = vmatpush1.xpose.msra.mxu0 0.0
        %3794 = vmatprep.subr.mxu0 0.0
        %3795 = vmatpush1.xpose.msra.mxu0 0.0
        %3796 = vmatprep.subr.mxu0 0.0
        %3797 = vmatpush1.xpose.msra.mxu0 0.0
        %3798 = vmatprep.subr.mxu0 0.0
        %3799 = vmatpush1.xpose.msra.mxu0 0.0
        %3800 = vmatprep.subr.mxu0 0.0
        %3801 = vmatpush1.xpose.msra.mxu0 0.0
        %3802 = vmatprep.subr.mxu0 0.0
        %3803 = vmatpush1.xpose.msra.mxu0 0.0
        %3804 = vmatprep.subr.mxu0 0.0
        %3805 = vmatpush1.xpose.msra.mxu0 0.0
        %3806 = vmatprep.subr.mxu0 0.0
        %3807 = vmatpush1.xpose.msra.mxu0 0.0
        %3808 = vmatprep.subr.mxu0 0.0
        %3809 = vmatpush1.xpose.msra.mxu0 0.0
        %3810 = vmatprep.subr.mxu0 0.0
        %3811 = vmatpush1.xpose.msra.mxu0 0.0
        %3812 = vmatprep.subr.mxu0 0.0
        %3813 = vmatpush1.xpose.msra.mxu0 0.0
        %3814 = vmatprep.subr.mxu0 0.0
        %3815 = vmatpush1.xpose.msra.mxu0 0.0
        %3816 = vmatprep.subr.mxu0 0.0
        %3817 = vmatpush1.xpose.msra.mxu0 0.0
        %3818 = vmatprep.subr.mxu0 0.0
        %3819 = vmatpush1.xpose.msra.mxu0 0.0
        %3820 = vmatprep.subr.mxu0 0.0
        %3821 = vmatpush1.xpose.msra.mxu0 0.0
        %3822 = vmatprep.subr.mxu0 0.0
        %3823 = vmatpush1.xpose.msra.mxu0 0.0
        %3824 = vmatprep.subr.mxu0 0.0
        %3825 = vmatpush1.xpose.msra.mxu0 0.0
        %3826 = vmatprep.mubr.f32.mxu0 0.0
        %3827 = vmatmul.mubr.f32.gmra.mrb[0].mxu0 %v1646
        %v3828 = vpop.f32.mrb[0].mxu0
        %v3829 = vadd.f32 0.0, %v3828
        %v3830 = vpop.f32.mrb[0].mxu0
        %3831 = vdwg.mxu0
        %3832 = vmatprep.subr.mxu0 0.0
        %3833 = vmatpush1.xpose.msra.mxu0 %v1496
        %3834 = vmatprep.subr.mxu0 0.0
        %3835 = vmatpush1.xpose.msra.mxu0 0.0
        %3836 = vmatprep.subr.mxu0 0.0
        %3837 = vmatpush1.xpose.msra.mxu0 0.0
        %3838 = vmatprep.subr.mxu0 0.0
        %3839 = vmatpush1.xpose.msra.mxu0 0.0
        %3840 = vmatprep.subr.mxu0 0.0
        %3841 = vmatpush1.xpose.msra.mxu0 0.0
        %3842 = vmatprep.subr.mxu0 0.0
        %3843 = vmatpush1.xpose.msra.mxu0 0.0
        %3844 = vmatprep.subr.mxu0 0.0
        %3845 = vmatpush1.xpose.msra.mxu0 0.0
        %3846 = vmatprep.subr.mxu0 0.0
        %3847 = vmatpush1.xpose.msra.mxu0 0.0
        %3848 = vmatprep.subr.mxu0 0.0
        %3849 = vmatpush1.xpose.msra.mxu0 0.0
        %3850 = vmatprep.subr.mxu0 0.0
        %3851 = vmatpush1.xpose.msra.mxu0 0.0
        %3852 = vmatprep.subr.mxu0 0.0
        %3853 = vmatpush1.xpose.msra.mxu0 0.0
        %3854 = vmatprep.subr.mxu0 0.0
        %3855 = vmatpush1.xpose.msra.mxu0 0.0
        %3856 = vmatprep.subr.mxu0 0.0
        %3857 = vmatpush1.xpose.msra.mxu0 0.0
        %3858 = vmatprep.subr.mxu0 0.0
        %3859 = vmatpush1.xpose.msra.mxu0 0.0
        %3860 = vmatprep.subr.mxu0 0.0
        %3861 = vmatpush1.xpose.msra.mxu0 0.0
        %3862 = vmatprep.subr.mxu0 0.0
        %3863 = vmatpush1.xpose.msra.mxu0 0.0
        %3864 = vmatprep.subr.mxu0 0.0
        %3865 = vmatpush1.xpose.msra.mxu0 0.0
        %3866 = vmatprep.subr.mxu0 0.0
        %3867 = vmatpush1.xpose.msra.mxu0 0.0
        %3868 = vmatprep.subr.mxu0 0.0
        %3869 = vmatpush1.xpose.msra.mxu0 0.0
        %3870 = vmatprep.subr.mxu0 0.0
        %3871 = vmatpush1.xpose.msra.mxu0 0.0
        %3872 = vmatprep.subr.mxu0 0.0
        %3873 = vmatpush1.xpose.msra.mxu0 0.0
        %3874 = vmatprep.subr.mxu0 0.0
        %3875 = vmatpush1.xpose.msra.mxu0 0.0
        %3876 = vmatprep.subr.mxu0 0.0
        %3877 = vmatpush1.xpose.msra.mxu0 0.0
        %3878 = vmatprep.subr.mxu0 0.0
        %3879 = vmatpush1.xpose.msra.mxu0 0.0
        %3880 = vmatprep.subr.mxu0 0.0
        %3881 = vmatpush1.xpose.msra.mxu0 0.0
        %3882 = vmatprep.subr.mxu0 0.0
        %3883 = vmatpush1.xpose.msra.mxu0 0.0
        %3884 = vmatprep.subr.mxu0 0.0
        %3885 = vmatpush1.xpose.msra.mxu0 0.0
        %3886 = vmatprep.subr.mxu0 0.0
        %3887 = vmatpush1.xpose.msra.mxu0 0.0
        %3888 = vmatprep.subr.mxu0 0.0
        %3889 = vmatpush1.xpose.msra.mxu0 0.0
        %3890 = vmatprep.subr.mxu0 0.0
        %3891 = vmatpush1.xpose.msra.mxu0 0.0
        %3892 = vmatprep.subr.mxu0 0.0
        %3893 = vmatpush1.xpose.msra.mxu0 0.0
        %3894 = vmatprep.subr.mxu0 0.0
        %3895 = vmatpush1.xpose.msra.mxu0 0.0
        %3896 = vmatprep.mubr.f32.mxu0 0.0
        %3897 = vmatmul.mubr.f32.gmra.mrb[0].mxu0 %v1390
        %v3898 = vpop.f32.mrb[0].mxu0
        %v3899 = vadd.f32 0.0, %v3898
        %v3900 = vpop.f32.mrb[0].mxu0
        %3901 = vdwg.mxu0
        %3902 = vmatprep.subr.mxu0 0.0
        %3903 = vmatpush1.xpose.msra.mxu0 %v1695
        %3904 = vmatprep.subr.mxu0 0.0
        %3905 = vmatpush1.xpose.msra.mxu0 0.0
        %3906 = vmatprep.subr.mxu0 0.0
        %3907 = vmatpush1.xpose.msra.mxu0 0.0
        %3908 = vmatprep.subr.mxu0 0.0
        %3909 = vmatpush1.xpose.msra.mxu0 0.0
        %3910 = vmatprep.subr.mxu0 0.0
        %3911 = vmatpush1.xpose.msra.mxu0 0.0
        %3912 = vmatprep.subr.mxu0 0.0
        %3913 = vmatpush1.xpose.msra.mxu0 0.0
        %3914 = vmatprep.subr.mxu0 0.0
        %3915 = vmatpush1.xpose.msra.mxu0 0.0
        %3916 = vmatprep.subr.mxu0 0.0
        %3917 = vmatpush1.xpose.msra.mxu0 0.0
        %3918 = vmatprep.subr.mxu0 0.0
        %3919 = vmatpush1.xpose.msra.mxu0 0.0
        %3920 = vmatprep.subr.mxu0 0.0
        %3921 = vmatpush1.xpose.msra.mxu0 0.0
        %3922 = vmatprep.subr.mxu0 0.0
        %3923 = vmatpush1.xpose.msra.mxu0 0.0
        %3924 = vmatprep.subr.mxu0 0.0
        %3925 = vmatpush1.xpose.msra.mxu0 0.0
        %3926 = vmatprep.subr.mxu0 0.0
        %3927 = vmatpush1.xpose.msra.mxu0 0.0
        %3928 = vmatprep.subr.mxu0 0.0
        %3929 = vmatpush1.xpose.msra.mxu0 0.0
        %3930 = vmatprep.subr.mxu0 0.0
        %3931 = vmatpush1.xpose.msra.mxu0 0.0
        %3932 = vmatprep.subr.mxu0 0.0
        %3933 = vmatpush1.xpose.msra.mxu0 0.0
        %3934 = vmatprep.subr.mxu0 0.0
        %3935 = vmatpush1.xpose.msra.mxu0 0.0
        %3936 = vmatprep.subr.mxu0 0.0
        %3937 = vmatpush1.xpose.msra.mxu0 0.0
        %3938 = vmatprep.subr.mxu0 0.0
        %3939 = vmatpush1.xpose.msra.mxu0 0.0
        %3940 = vmatprep.subr.mxu0 0.0
        %3941 = vmatpush1.xpose.msra.mxu0 0.0
        %3942 = vmatprep.subr.mxu0 0.0
        %3943 = vmatpush1.xpose.msra.mxu0 0.0
        %3944 = vmatprep.subr.mxu0 0.0
        %3945 = vmatpush1.xpose.msra.mxu0 0.0
        %3946 = vmatprep.subr.mxu0 0.0
        %3947 = vmatpush1.xpose.msra.mxu0 0.0
        %3948 = vmatprep.subr.mxu0 0.0
        %3949 = vmatpush1.xpose.msra.mxu0 0.0
        %3950 = vmatprep.subr.mxu0 0.0
        %3951 = vmatpush1.xpose.msra.mxu0 0.0
        %3952 = vmatprep.subr.mxu0 0.0
        %3953 = vmatpush1.xpose.msra.mxu0 0.0
        %3954 = vmatprep.subr.mxu0 0.0
        %3955 = vmatpush1.xpose.msra.mxu0 0.0
        %3956 = vmatprep.subr.mxu0 0.0
        %3957 = vmatpush1.xpose.msra.mxu0 0.0
        %3958 = vmatprep.subr.mxu0 0.0
        %3959 = vmatpush1.xpose.msra.mxu0 0.0
        %3960 = vmatprep.subr.mxu0 0.0
        %3961 = vmatpush1.xpose.msra.mxu0 0.0
        %3962 = vmatprep.subr.mxu0 0.0
        %3963 = vmatpush1.xpose.msra.mxu0 0.0
        %3964 = vmatprep.subr.mxu0 0.0
        %3965 = vmatpush1.xpose.msra.mxu0 0.0
        %3966 = vmatprep.mubr.f32.mxu0 0.0
        %3967 = vmatmul.mubr.f32.gmra.mrb[0].mxu0 %v1647
        %v3968 = vpop.f32.mrb[0].mxu0
        %v3969 = vadd.f32 0.0, %v3968
        %v3970 = vpop.f32.mrb[0].mxu0
        %3971 = vdwg.mxu0
        %v3972 = vmul.f32 %v1799, 0.35355338
        %v3973 = vmul.f32 %v1869, 0.35355338
        %v3974 = vmul.f32 %v1939, 0.35355338
        %v3975 = vmul.f32 %v2009, 0.35355338
        %v3976 = vmul.f32 %v2079, 0.35355338
        %v3977 = vmul.f32 %v2149, 0.35355338
        %v3978 = vmul.f32 %v2219, 0.35355338
        %v3979 = vmul.f32 %v2289, 0.35355338
        %v3980 = vmul.f32 %v2359, 0.35355338
        %v3981 = vmul.f32 %v2429, 0.35355338
        %v3982 = vmul.f32 %v2499, 0.35355338
        %v3983 = vmul.f32 %v2569, 0.35355338
        %v3984 = vmul.f32 %v2639, 0.35355338
        %v3985 = vmul.f32 %v2709, 0.35355338
        %v3986 = vmul.f32 %v2779, 0.35355338
        %v3987 = vmul.f32 %v2849, 0.35355338
        %v3988 = vmul.f32 %v2919, 0.35355338
        %v3989 = vmul.f32 %v2989, 0.35355338
        %v3990 = vmul.f32 %v3059, 0.35355338
        %v3991 = vmul.f32 %v3129, 0.35355338
        %v3992 = vmul.f32 %v3199, 0.35355338
        %v3993 = vmul.f32 %v3269, 0.35355338
        %v3994 = vmul.f32 %v3339, 0.35355338
        %v3995 = vmul.f32 %v3409, 0.35355338
        %v3996 = vmul.f32 %v3479, 0.35355338
        %v3997 = vmul.f32 %v3549, 0.35355338
        %v3998 = vmul.f32 %v3619, 0.35355338
        %v3999 = vmul.f32 %v3689, 0.35355338
        %v4000 = vmul.f32 %v3759, 0.35355338
        %v4001 = vmul.f32 %v3829, 0.35355338
        %v4002 = vmul.f32 %v3899, 0.35355338
        %v4003 = vmul.f32 %v3969, 0.35355338
        %vm4004 = vcmask 27648
        %v4005 = vsel %vm4004, %v3972, -inf
        %4006 = vmax.xlane.f32.xlu0 %v4005
        %v4007 = vpop.xlane.xlu0 %4006
        %v4008 = vsel %vm4004, %v3973, -inf
        %4009 = vmax.xlane.f32.xlu0 %v4008
        %v4010 = vpop.xlane.xlu0 %4009
        %v4011 = vsel %vm4004, %v3974, -inf
        %4012 = vmax.xlane.f32.xlu0 %v4011
        %v4013 = vpop.xlane.xlu0 %4012
        %v4014 = vsel %vm4004, %v3975, -inf
        %4015 = vmax.xlane.f32.xlu0 %v4014
        %v4016 = vpop.xlane.xlu0 %4015
        %v4017 = vsel %vm4004, %v3976, -inf
        %4018 = vmax.xlane.f32.xlu0 %v4017
        %v4019 = vpop.xlane.xlu0 %4018
        %v4020 = vsel %vm4004, %v3977, -inf
        %4021 = vmax.xlane.f32.xlu0 %v4020
        %v4022 = vpop.xlane.xlu0 %4021
        %v4023 = vsel %vm4004, %v3978, -inf
        %4024 = vmax.xlane.f32.xlu0 %v4023
        %v4025 = vpop.xlane.xlu0 %4024
        %v4026 = vsel %vm4004, %v3979, -inf
        %4027 = vmax.xlane.f32.xlu0 %v4026
        %v4028 = vpop.xlane.xlu0 %4027
        %v4029 = vsel %vm4004, %v3980, -inf
        %4030 = vmax.xlane.f32.xlu0 %v4029
        %v4031 = vpop.xlane.xlu0 %4030
        %v4032 = vsel %vm4004, %v3981, -inf
        %4033 = vmax.xlane.f32.xlu0 %v4032
        %v4034 = vpop.xlane.xlu0 %4033
        %v4035 = vsel %vm4004, %v3982, -inf
        %4036 = vmax.xlane.f32.xlu0 %v4035
        %v4037 = vpop.xlane.xlu0 %4036
        %v4038 = vsel %vm4004, %v3983, -inf
        %4039 = vmax.xlane.f32.xlu0 %v4038
        %v4040 = vpop.xlane.xlu0 %4039
        %v4041 = vsel %vm4004, %v3984, -inf
        %4042 = vmax.xlane.f32.xlu0 %v4041
        %v4043 = vpop.xlane.xlu0 %4042
        %v4044 = vsel %vm4004, %v3985, -inf
        %4045 = vmax.xlane.f32.xlu0 %v4044
        %v4046 = vpop.xlane.xlu0 %4045
        %v4047 = vsel %vm4004, %v3986, -inf
        %4048 = vmax.xlane.f32.xlu0 %v4047
        %v4049 = vpop.xlane.xlu0 %4048
        %v4050 = vsel %vm4004, %v3987, -inf
        %4051 = vmax.xlane.f32.xlu0 %v4050
        %v4052 = vpop.xlane.xlu0 %4051
        %v4053 = vsel %vm4004, %v3988, -inf
        %4054 = vmax.xlane.f32.xlu0 %v4053
        %v4055 = vpop.xlane.xlu0 %4054
        %v4056 = vsel %vm4004, %v3989, -inf
        %4057 = vmax.xlane.f32.xlu0 %v4056
        %v4058 = vpop.xlane.xlu0 %4057
        %v4059 = vsel %vm4004, %v3990, -inf
        %4060 = vmax.xlane.f32.xlu0 %v4059
        %v4061 = vpop.xlane.xlu0 %4060
        %v4062 = vsel %vm4004, %v3991, -inf
        %4063 = vmax.xlane.f32.xlu0 %v4062
        %v4064 = vpop.xlane.xlu0 %4063
        %v4065 = vsel %vm4004, %v3992, -inf
        %4066 = vmax.xlane.f32.xlu0 %v4065
        %v4067 = vpop.xlane.xlu0 %4066
        %v4068 = vsel %vm4004, %v3993, -inf
        %4069 = vmax.xlane.f32.xlu0 %v4068
        %v4070 = vpop.xlane.xlu0 %4069
        %v4071 = vsel %vm4004, %v3994, -inf
        %4072 = vmax.xlane.f32.xlu0 %v4071
        %v4073 = vpop.xlane.xlu0 %4072
        %v4074 = vsel %vm4004, %v3995, -inf
        %4075 = vmax.xlane.f32.xlu0 %v4074
        %v4076 = vpop.xlane.xlu0 %4075
        %v4077 = vsel %vm4004, %v3996, -inf
        %4078 = vmax.xlane.f32.xlu0 %v4077
        %v4079 = vpop.xlane.xlu0 %4078
        %v4080 = vsel %vm4004, %v3997, -inf
        %4081 = vmax.xlane.f32.xlu0 %v4080
        %v4082 = vpop.xlane.xlu0 %4081
        %v4083 = vsel %vm4004, %v3998, -inf
        %4084 = vmax.xlane.f32.xlu0 %v4083
        %v4085 = vpop.xlane.xlu0 %4084
        %v4086 = vsel %vm4004, %v3999, -inf
        %4087 = vmax.xlane.f32.xlu0 %v4086
        %v4088 = vpop.xlane.xlu0 %4087
        %v4089 = vsel %vm4004, %v4000, -inf
        %4090 = vmax.xlane.f32.xlu0 %v4089
        %v4091 = vpop.xlane.xlu0 %4090
        %v4092 = vsel %vm4004, %v4001, -inf
        %4093 = vmax.xlane.f32.xlu0 %v4092
        %v4094 = vpop.xlane.xlu0 %4093
        %v4095 = vsel %vm4004, %v4002, -inf
        %4096 = vmax.xlane.f32.xlu0 %v4095
        %v4097 = vpop.xlane.xlu0 %4096
        %v4098 = vsel %vm4004, %v4003, -inf
        %4099 = vmax.xlane.f32.xlu0 %v4098
        %v4100 = vpop.xlane.xlu0 %4099
        %v4101 = vsub.f32 %v3972, %v4007
        %v4102 = vsub.f32 %v3973, %v4010
        %v4103 = vsub.f32 %v3974, %v4013
        %v4104 = vsub.f32 %v3975, %v4016
        %v4105 = vsub.f32 %v3976, %v4019
        %v4106 = vsub.f32 %v3977, %v4022
        %v4107 = vsub.f32 %v3978, %v4025
        %v4108 = vsub.f32 %v3979, %v4028
        %v4109 = vsub.f32 %v3980, %v4031
        %v4110 = vsub.f32 %v3981, %v4034
        %v4111 = vsub.f32 %v3982, %v4037
        %v4112 = vsub.f32 %v3983, %v4040
        %v4113 = vsub.f32 %v3984, %v4043
        %v4114 = vsub.f32 %v3985, %v4046
        %v4115 = vsub.f32 %v3986, %v4049
        %v4116 = vsub.f32 %v3987, %v4052
        %v4117 = vsub.f32 %v3988, %v4055
        %v4118 = vsub.f32 %v3989, %v4058
        %v4119 = vsub.f32 %v3990, %v4061
        %v4120 = vsub.f32 %v3991, %v4064
        %v4121 = vsub.f32 %v3992, %v4067
        %v4122 = vsub.f32 %v3993, %v4070
        %v4123 = vsub.f32 %v3994, %v4073
        %v4124 = vsub.f32 %v3995, %v4076
        %v4125 = vsub.f32 %v3996, %v4079
        %v4126 = vsub.f32 %v3997, %v4082
        %v4127 = vsub.f32 %v3998, %v4085
        %v4128 = vsub.f32 %v3999, %v4088
        %v4129 = vsub.f32 %v4000, %v4091
        %v4130 = vsub.f32 %v4001, %v4094
        %v4131 = vsub.f32 %v4002, %v4097
        %v4132 = vsub.f32 %v4003, %v4100
        %v4133 = vmul.f32 %v4101, 1.442695
        %v4134 = vpow.pop %v4133
        %v4135 = vmul.f32 %v4102, 1.442695
        %v4136 = vpow.pop %v4135
        %v4137 = vmul.f32 %v4103, 1.442695
        %v4138 = vpow.pop %v4137
        %v4139 = vmul.f32 %v4104, 1.442695
        %v4140 = vpow.pop %v4139
        %v4141 = vmul.f32 %v4105, 1.442695
        %v4142 = vpow.pop %v4141
        %v4143 = vmul.f32 %v4106, 1.442695
        %v4144 = vpow.pop %v4143
        %v4145 = vmul.f32 %v4107, 1.442695
        %v4146 = vpow.pop %v4145
        %v4147 = vmul.f32 %v4108, 1.442695
        %v4148 = vpow.pop %v4147
        %v4149 = vmul.f32 %v4109, 1.442695
        %v4150 = vpow.pop %v4149
        %v4151 = vmul.f32 %v4110, 1.442695
        %v4152 = vpow.pop %v4151
        %v4153 = vmul.f32 %v4111, 1.442695
        %v4154 = vpow.pop %v4153
        %v4155 = vmul.f32 %v4112, 1.442695
        %v4156 = vpow.pop %v4155
        %v4157 = vmul.f32 %v4113, 1.442695
        %v4158 = vpow.pop %v4157
        %v4159 = vmul.f32 %v4114, 1.442695
        %v4160 = vpow.pop %v4159
        %v4161 = vmul.f32 %v4115, 1.442695
        %v4162 = vpow.pop %v4161
        %v4163 = vmul.f32 %v4116, 1.442695
        %v4164 = vpow.pop %v4163
        %v4165 = vmul.f32 %v4117, 1.442695
        %v4166 = vpow.pop %v4165
        %v4167 = vmul.f32 %v4118, 1.442695
        %v4168 = vpow.pop %v4167
        %v4169 = vmul.f32 %v4119, 1.442695
        %v4170 = vpow.pop %v4169
        %v4171 = vmul.f32 %v4120, 1.442695
        %v4172 = vpow.pop %v4171
        %v4173 = vmul.f32 %v4121, 1.442695
        %v4174 = vpow.pop %v4173
        %v4175 = vmul.f32 %v4122, 1.442695
        %v4176 = vpow.pop %v4175
        %v4177 = vmul.f32 %v4123, 1.442695
        %v4178 = vpow.pop %v4177
        %v4179 = vmul.f32 %v4124, 1.442695
        %v4180 = vpow.pop %v4179
        %v4181 = vmul.f32 %v4125, 1.442695
        %v4182 = vpow.pop %v4181
        %v4183 = vmul.f32 %v4126, 1.442695
        %v4184 = vpow.pop %v4183
        %v4185 = vmul.f32 %v4127, 1.442695
        %v4186 = vpow.pop %v4185
        %v4187 = vmul.f32 %v4128, 1.442695
        %v4188 = vpow.pop %v4187
        %v4189 = vmul.f32 %v4129, 1.442695
        %v4190 = vpow.pop %v4189
        %v4191 = vmul.f32 %v4130, 1.442695
        %v4192 = vpow.pop %v4191
        %v4193 = vmul.f32 %v4131, 1.442695
        %v4194 = vpow.pop %v4193
        %v4195 = vmul.f32 %v4132, 1.442695
        %v4196 = vpow.pop %v4195
        %v4197 = vsel %vm4004, %v4134, 0.0
        %4198 = vadd.xlane.f32.xlu0 %v4197
        %v4199 = vpop.xlane.xlu0 %4198
        %v4200 = vsel %vm4004, %v4136, 0.0
        %4201 = vadd.xlane.f32.xlu0 %v4200
        %v4202 = vpop.xlane.xlu0 %4201
        %v4203 = vsel %vm4004, %v4138, 0.0
        %4204 = vadd.xlane.f32.xlu0 %v4203
        %v4205 = vpop.xlane.xlu0 %4204
        %v4206 = vsel %vm4004, %v4140, 0.0
        %4207 = vadd.xlane.f32.xlu0 %v4206
        %v4208 = vpop.xlane.xlu0 %4207
        %v4209 = vsel %vm4004, %v4142, 0.0
        %4210 = vadd.xlane.f32.xlu0 %v4209
        %v4211 = vpop.xlane.xlu0 %4210
        %v4212 = vsel %vm4004, %v4144, 0.0
        %4213 = vadd.xlane.f32.xlu0 %v4212
        %v4214 = vpop.xlane.xlu0 %4213
        %v4215 = vsel %vm4004, %v4146, 0.0
        %4216 = vadd.xlane.f32.xlu0 %v4215
        %v4217 = vpop.xlane.xlu0 %4216
        %v4218 = vsel %vm4004, %v4148, 0.0
        %4219 = vadd.xlane.f32.xlu0 %v4218
        %v4220 = vpop.xlane.xlu0 %4219
        %v4221 = vsel %vm4004, %v4150, 0.0
        %4222 = vadd.xlane.f32.xlu0 %v4221
        %v4223 = vpop.xlane.xlu0 %4222
        %v4224 = vsel %vm4004, %v4152, 0.0
        %4225 = vadd.xlane.f32.xlu0 %v4224
        %v4226 = vpop.xlane.xlu0 %4225
        %v4227 = vsel %vm4004, %v4154, 0.0
        %4228 = vadd.xlane.f32.xlu0 %v4227
        %v4229 = vpop.xlane.xlu0 %4228
        %v4230 = vsel %vm4004, %v4156, 0.0
        %4231 = vadd.xlane.f32.xlu0 %v4230
        %v4232 = vpop.xlane.xlu0 %4231
        %v4233 = vsel %vm4004, %v4158, 0.0
        %4234 = vadd.xlane.f32.xlu0 %v4233
        %v4235 = vpop.xlane.xlu0 %4234
        %v4236 = vsel %vm4004, %v4160, 0.0
        %4237 = vadd.xlane.f32.xlu0 %v4236
        %v4238 = vpop.xlane.xlu0 %4237
        %v4239 = vsel %vm4004, %v4162, 0.0
        %4240 = vadd.xlane.f32.xlu0 %v4239
        %v4241 = vpop.xlane.xlu0 %4240
        %v4242 = vsel %vm4004, %v4164, 0.0
        %4243 = vadd.xlane.f32.xlu0 %v4242
        %v4244 = vpop.xlane.xlu0 %4243
        %v4245 = vsel %vm4004, %v4166, 0.0
        %4246 = vadd.xlane.f32.xlu0 %v4245
        %v4247 = vpop.xlane.xlu0 %4246
        %v4248 = vsel %vm4004, %v4168, 0.0
        %4249 = vadd.xlane.f32.xlu0 %v4248
        %v4250 = vpop.xlane.xlu0 %4249
        %v4251 = vsel %vm4004, %v4170, 0.0
        %4252 = vadd.xlane.f32.xlu0 %v4251
        %v4253 = vpop.xlane.xlu0 %4252
        %v4254 = vsel %vm4004, %v4172, 0.0
        %4255 = vadd.xlane.f32.xlu0 %v4254
        %v4256 = vpop.xlane.xlu0 %4255
        %v4257 = vsel %vm4004, %v4174, 0.0
        %4258 = vadd.xlane.f32.xlu0 %v4257
        %v4259 = vpop.xlane.xlu0 %4258
        %v4260 = vsel %vm4004, %v4176, 0.0
        %4261 = vadd.xlane.f32.xlu0 %v4260
        %v4262 = vpop.xlane.xlu0 %4261
        %v4263 = vsel %vm4004, %v4178, 0.0
        %4264 = vadd.xlane.f32.xlu0 %v4263
        %v4265 = vpop.xlane.xlu0 %4264
        %v4266 = vsel %vm4004, %v4180, 0.0
        %4267 = vadd.xlane.f32.xlu0 %v4266
        %v4268 = vpop.xlane.xlu0 %4267
        %v4269 = vsel %vm4004, %v4182, 0.0
        %4270 = vadd.xlane.f32.xlu0 %v4269
        %v4271 = vpop.xlane.xlu0 %4270
        %v4272 = vsel %vm4004, %v4184, 0.0
        %4273 = vadd.xlane.f32.xlu0 %v4272
        %v4274 = vpop.xlane.xlu0 %4273
        %v4275 = vsel %vm4004, %v4186, 0.0
        %4276 = vadd.xlane.f32.xlu0 %v4275
        %v4277 = vpop.xlane.xlu0 %4276
        %v4278 = vsel %vm4004, %v4188, 0.0
        %4279 = vadd.xlane.f32.xlu0 %v4278
        %v4280 = vpop.xlane.xlu0 %4279
        %v4281 = vsel %vm4004, %v4190, 0.0
        %4282 = vadd.xlane.f32.xlu0 %v4281
        %v4283 = vpop.xlane.xlu0 %4282
        %v4284 = vsel %vm4004, %v4192, 0.0
        %4285 = vadd.xlane.f32.xlu0 %v4284
        %v4286 = vpop.xlane.xlu0 %4285
        %v4287 = vsel %vm4004, %v4194, 0.0
        %4288 = vadd.xlane.f32.xlu0 %v4287
        %v4289 = vpop.xlane.xlu0 %4288
        %v4290 = vsel %vm4004, %v4196, 0.0
        %4291 = vadd.xlane.f32.xlu0 %v4290
        %v4292 = vpop.xlane.xlu0 %4291
        %v4293 = vrcp.pop %v4199
        %v4294 = vrcp.pop %v4202
        %v4295 = vrcp.pop %v4205
        %v4296 = vrcp.pop %v4208
        %v4297 = vrcp.pop %v4211
        %v4298 = vrcp.pop %v4214
        %v4299 = vrcp.pop %v4217
        %v4300 = vrcp.pop %v4220
        %v4301 = vrcp.pop %v4223
        %v4302 = vrcp.pop %v4226
        %v4303 = vrcp.pop %v4229
        %v4304 = vrcp.pop %v4232
        %v4305 = vrcp.pop %v4235
        %v4306 = vrcp.pop %v4238
        %v4307 = vrcp.pop %v4241
        %v4308 = vrcp.pop %v4244
        %v4309 = vrcp.pop %v4247
        %v4310 = vrcp.pop %v4250
        %v4311 = vrcp.pop %v4253
        %v4312 = vrcp.pop %v4256
        %v4313 = vrcp.pop %v4259
        %v4314 = vrcp.pop %v4262
        %v4315 = vrcp.pop %v4265
        %v4316 = vrcp.pop %v4268
        %v4317 = vrcp.pop %v4271
        %v4318 = vrcp.pop %v4274
        %v4319 = vrcp.pop %v4277
        %v4320 = vrcp.pop %v4280
        %v4321 = vrcp.pop %v4283
        %v4322 = vrcp.pop %v4286
        %v4323 = vrcp.pop %v4289
        %v4324 = vrcp.pop %v4292
        %v4325 = vmul.f32 %v4134, %v4293
        %v4326 = vmul.f32 %v4136, %v4294
        %v4327 = vmul.f32 %v4138, %v4295
        %v4328 = vmul.f32 %v4140, %v4296
        %v4329 = vmul.f32 %v4142, %v4297
        %v4330 = vmul.f32 %v4144, %v4298
        %v4331 = vmul.f32 %v4146, %v4299
        %v4332 = vmul.f32 %v4148, %v4300
        %v4333 = vmul.f32 %v4150, %v4301
        %v4334 = vmul.f32 %v4152, %v4302
        %v4335 = vmul.f32 %v4154, %v4303
        %v4336 = vmul.f32 %v4156, %v4304
        %v4337 = vmul.f32 %v4158, %v4305
        %v4338 = vmul.f32 %v4160, %v4306
        %v4339 = vmul.f32 %v4162, %v4307
        %v4340 = vmul.f32 %v4164, %v4308
        %v4341 = vmul.f32 %v4166, %v4309
        %v4342 = vmul.f32 %v4168, %v4310
        %v4343 = vmul.f32 %v4170, %v4311
        %v4344 = vmul.f32 %v4172, %v4312
        %v4345 = vmul.f32 %v4174, %v4313
        %v4346 = vmul.f32 %v4176, %v4314
        %v4347 = vmul.f32 %v4178, %v4315
        %v4348 = vmul.f32 %v4180, %v4316
        %v4349 = vmul.f32 %v4182, %v4317
        %v4350 = vmul.f32 %v4184, %v4318
        %v4351 = vmul.f32 %v4186, %v4319
        %v4352 = vmul.f32 %v4188, %v4320
        %v4353 = vmul.f32 %v4190, %v4321
        %v4354 = vmul.f32 %v4192, %v4322
        %v4355 = vmul.f32 %v4194, %v4323
        %v4356 = vmul.f32 %v4196, %v4324
        %vm4357 = vcmask 31744
        %v4359 = vsel %vm4357, %v4325, 0
        %vm4361 = vcmask 1043456
        %v4362 = vsel %vm4361, %v1533, 0
        %4364 = vmatprep.subr.mxu0 0.0
        %4365 = vmatpush1.msra.mxu0 %v4362
        %4366 = vmatprep.subr.mxu0 0.0
        %4367 = vmatpush1.msra.mxu0 0.0
        %4368 = vmatprep.subr.mxu0 0.0
        %4369 = vmatpush1.msra.mxu0 0.0
        %4370 = vmatprep.subr.mxu0 0.0
        %4371 = vmatpush1.msra.mxu0 0.0
        %4372 = vmatprep.subr.mxu0 0.0
        %4373 = vmatpush1.msra.mxu0 0.0
        %4374 = vmatprep.subr.mxu0 0.0
        %4375 = vmatpush1.msra.mxu0 0.0
        %4376 = vmatprep.subr.mxu0 0.0
        %4377 = vmatpush1.msra.mxu0 0.0
        %4378 = vmatprep.subr.mxu0 0.0
        %4379 = vmatpush1.msra.mxu0 0.0
        %4380 = vmatprep.subr.mxu0 0.0
        %4381 = vmatpush1.msra.mxu0 0.0
        %4382 = vmatprep.subr.mxu0 0.0
        %4383 = vmatpush1.msra.mxu0 0.0
        %4384 = vmatprep.subr.mxu0 0.0
        %4385 = vmatpush1.msra.mxu0 0.0
        %4386 = vmatprep.subr.mxu0 0.0
        %4387 = vmatpush1.msra.mxu0 0.0
        %4388 = vmatprep.subr.mxu0 0.0
        %4389 = vmatpush1.msra.mxu0 0.0
        %4390 = vmatprep.subr.mxu0 0.0
        %4391 = vmatpush1.msra.mxu0 0.0
        %4392 = vmatprep.subr.mxu0 0.0
        %4393 = vmatpush1.msra.mxu0 0.0
        %4394 = vmatprep.subr.mxu0 0.0
        %4395 = vmatpush1.msra.mxu0 0.0
        %4396 = vmatprep.subr.mxu0 0.0
        %4397 = vmatpush1.msra.mxu0 0.0
        %4398 = vmatprep.subr.mxu0 0.0
        %4399 = vmatpush1.msra.mxu0 0.0
        %4400 = vmatprep.subr.mxu0 0.0
        %4401 = vmatpush1.msra.mxu0 0.0
        %4402 = vmatprep.subr.mxu0 0.0
        %4403 = vmatpush1.msra.mxu0 0.0
        %4404 = vmatprep.subr.mxu0 0.0
        %4405 = vmatpush1.msra.mxu0 0.0
        %4406 = vmatprep.subr.mxu0 0.0
        %4407 = vmatpush1.msra.mxu0 0.0
        %4408 = vmatprep.subr.mxu0 0.0
        %4409 = vmatpush1.msra.mxu0 0.0
        %4410 = vmatprep.subr.mxu0 0.0
        %4411 = vmatpush1.msra.mxu0 0.0
        %4412 = vmatprep.subr.mxu0 0.0
        %4413 = vmatpush1.msra.mxu0 0.0
        %4414 = vmatprep.subr.mxu0 0.0
        %4415 = vmatpush1.msra.mxu0 0.0
        %4416 = vmatprep.subr.mxu0 0.0
        %4417 = vmatpush1.msra.mxu0 0.0
        %4418 = vmatprep.subr.mxu0 0.0
        %4419 = vmatpush1.msra.mxu0 0.0
        %4420 = vmatprep.subr.mxu0 0.0
        %4421 = vmatpush1.msra.mxu0 0.0
        %4422 = vmatprep.subr.mxu0 0.0
        %4423 = vmatpush1.msra.mxu0 0.0
        %4424 = vmatprep.subr.mxu0 0.0
        %4425 = vmatpush1.msra.mxu0 0.0
        %4426 = vmatprep.subr.mxu0 0.0
        %4427 = vmatpush1.msra.mxu0 0.0
        %4428 = vmatprep.mubr.f32.mxu0 0.0
        %4429 = vmatmul.mubr.f32.gmra.mrb[0].mxu0 %v4359
        %v4430 = vpop.f32.mrb[0].mxu0
        %v4431 = vadd.f32 0.0, %v4430
        %v4432 = vpop.f32.mrb[0].mxu0
        %4433 = vdwg.mxu0
        %v4435 = vsel %vm4357, %v4326, 0
        %v4437 = vsel %vm4361, %v1704, 0
        %4439 = vmatprep.subr.mxu0 0.0
        %4440 = vmatpush1.msra.mxu0 %v4437
        %4441 = vmatprep.subr.mxu0 0.0
        %4442 = vmatpush1.msra.mxu0 0.0
        %4443 = vmatprep.subr.mxu0 0.0
        %4444 = vmatpush1.msra.mxu0 0.0
        %4445 = vmatprep.subr.mxu0 0.0
        %4446 = vmatpush1.msra.mxu0 0.0
        %4447 = vmatprep.subr.mxu0 0.0
        %4448 = vmatpush1.msra.mxu0 0.0
        %4449 = vmatprep.subr.mxu0 0.0
        %4450 = vmatpush1.msra.mxu0 0.0
        %4451 = vmatprep.subr.mxu0 0.0
        %4452 = vmatpush1.msra.mxu0 0.0
        %4453 = vmatprep.subr.mxu0 0.0
        %4454 = vmatpush1.msra.mxu0 0.0
        %4455 = vmatprep.subr.mxu0 0.0
        %4456 = vmatpush1.msra.mxu0 0.0
        %4457 = vmatprep.subr.mxu0 0.0
        %4458 = vmatpush1.msra.mxu0 0.0
        %4459 = vmatprep.subr.mxu0 0.0
        %4460 = vmatpush1.msra.mxu0 0.0
        %4461 = vmatprep.subr.mxu0 0.0
        %4462 = vmatpush1.msra.mxu0 0.0
        %4463 = vmatprep.subr.mxu0 0.0
        %4464 = vmatpush1.msra.mxu0 0.0
        %4465 = vmatprep.subr.mxu0 0.0
        %4466 = vmatpush1.msra.mxu0 0.0
        %4467 = vmatprep.subr.mxu0 0.0
        %4468 = vmatpush1.msra.mxu0 0.0
        %4469 = vmatprep.subr.mxu0 0.0
        %4470 = vmatpush1.msra.mxu0 0.0
        %4471 = vmatprep.subr.mxu0 0.0
        %4472 = vmatpush1.msra.mxu0 0.0
        %4473 = vmatprep.subr.mxu0 0.0
        %4474 = vmatpush1.msra.mxu0 0.0
        %4475 = vmatprep.subr.mxu0 0.0
        %4476 = vmatpush1.msra.mxu0 0.0
        %4477 = vmatprep.subr.mxu0 0.0
        %4478 = vmatpush1.msra.mxu0 0.0
        %4479 = vmatprep.subr.mxu0 0.0
        %4480 = vmatpush1.msra.mxu0 0.0
        %4481 = vmatprep.subr.mxu0 0.0
        %4482 = vmatpush1.msra.mxu0 0.0
        %4483 = vmatprep.subr.mxu0 0.0
        %4484 = vmatpush1.msra.mxu0 0.0
        %4485 = vmatprep.subr.mxu0 0.0
        %4486 = vmatpush1.msra.mxu0 0.0
        %4487 = vmatprep.subr.mxu0 0.0
        %4488 = vmatpush1.msra.mxu0 0.0
        %4489 = vmatprep.subr.mxu0 0.0
        %4490 = vmatpush1.msra.mxu0 0.0
        %4491 = vmatprep.subr.mxu0 0.0
        %4492 = vmatpush1.msra.mxu0 0.0
        %4493 = vmatprep.subr.mxu0 0.0
        %4494 = vmatpush1.msra.mxu0 0.0
        %4495 = vmatprep.subr.mxu0 0.0
        %4496 = vmatpush1.msra.mxu0 0.0
        %4497 = vmatprep.subr.mxu0 0.0
        %4498 = vmatpush1.msra.mxu0 0.0
        %4499 = vmatprep.subr.mxu0 0.0
        %4500 = vmatpush1.msra.mxu0 0.0
        %4501 = vmatprep.subr.mxu0 0.0
        %4502 = vmatpush1.msra.mxu0 0.0
        %4503 = vmatprep.mubr.f32.mxu0 0.0
        %4504 = vmatmul.mubr.f32.gmra.mrb[0].mxu0 %v4435
        %v4505 = vpop.f32.mrb[0].mxu0
        %v4506 = vadd.f32 0.0, %v4505
        %v4507 = vpop.f32.mrb[0].mxu0
        %4508 = vdwg.mxu0
        %v4510 = vsel %vm4357, %v4327, 0
        %v4512 = vsel %vm4361, %v1537, 0
        %4514 = vmatprep.subr.mxu0 0.0
        %4515 = vmatpush1.msra.mxu0 %v4512
        %4516 = vmatprep.subr.mxu0 0.0
        %4517 = vmatpush1.msra.mxu0 0.0
        %4518 = vmatprep.subr.mxu0 0.0
        %4519 = vmatpush1.msra.mxu0 0.0
        %4520 = vmatprep.subr.mxu0 0.0
        %4521 = vmatpush1.msra.mxu0 0.0
        %4522 = vmatprep.subr.mxu0 0.0
        %4523 = vmatpush1.msra.mxu0 0.0
        %4524 = vmatprep.subr.mxu0 0.0
        %4525 = vmatpush1.msra.mxu0 0.0
        %4526 = vmatprep.subr.mxu0 0.0
        %4527 = vmatpush1.msra.mxu0 0.0
        %4528 = vmatprep.subr.mxu0 0.0
        %4529 = vmatpush1.msra.mxu0 0.0
        %4530 = vmatprep.subr.mxu0 0.0
        %4531 = vmatpush1.msra.mxu0 0.0
        %4532 = vmatprep.subr.mxu0 0.0
        %4533 = vmatpush1.msra.mxu0 0.0
        %4534 = vmatprep.subr.mxu0 0.0
        %4535 = vmatpush1.msra.mxu0 0.0
        %4536 = vmatprep.subr.mxu0 0.0
        %4537 = vmatpush1.msra.mxu0 0.0
        %4538 = vmatprep.subr.mxu0 0.0
        %4539 = vmatpush1.msra.mxu0 0.0
        %4540 = vmatprep.subr.mxu0 0.0
        %4541 = vmatpush1.msra.mxu0 0.0
        %4542 = vmatprep.subr.mxu0 0.0
        %4543 = vmatpush1.msra.mxu0 0.0
        %4544 = vmatprep.subr.mxu0 0.0
        %4545 = vmatpush1.msra.mxu0 0.0
        %4546 = vmatprep.subr.mxu0 0.0
        %4547 = vmatpush1.msra.mxu0 0.0
        %4548 = vmatprep.subr.mxu0 0.0
        %4549 = vmatpush1.msra.mxu0 0.0
        %4550 = vmatprep.subr.mxu0 0.0
        %4551 = vmatpush1.msra.mxu0 0.0
        %4552 = vmatprep.subr.mxu0 0.0
        %4553 = vmatpush1.msra.mxu0 0.0
        %4554 = vmatprep.subr.mxu0 0.0
        %4555 = vmatpush1.msra.mxu0 0.0
        %4556 = vmatprep.subr.mxu0 0.0
        %4557 = vmatpush1.msra.mxu0 0.0
        %4558 = vmatprep.subr.mxu0 0.0
        %4559 = vmatpush1.msra.mxu0 0.0
        %4560 = vmatprep.subr.mxu0 0.0
        %4561 = vmatpush1.msra.mxu0 0.0
        %4562 = vmatprep.subr.mxu0 0.0
        %4563 = vmatpush1.msra.mxu0 0.0
        %4564 = vmatprep.subr.mxu0 0.0
        %4565 = vmatpush1.msra.mxu0 0.0
        %4566 = vmatprep.subr.mxu0 0.0
        %4567 = vmatpush1.msra.mxu0 0.0
        %4568 = vmatprep.subr.mxu0 0.0
        %4569 = vmatpush1.msra.mxu0 0.0
        %4570 = vmatprep.subr.mxu0 0.0
        %4571 = vmatpush1.msra.mxu0 0.0
        %4572 = vmatprep.subr.mxu0 0.0
        %4573 = vmatpush1.msra.mxu0 0.0
        %4574 = vmatprep.subr.mxu0 0.0
        %4575 = vmatpush1.msra.mxu0 0.0
        %4576 = vmatprep.subr.mxu0 0.0
        %4577 = vmatpush1.msra.mxu0 0.0
        %4578 = vmatprep.mubr.f32.mxu0 0.0
        %4579 = vmatmul.mubr.f32.gmra.mrb[0].mxu0 %v4510
        %v4580 = vpop.f32.mrb[0].mxu0
        %v4581 = vadd.f32 0.0, %v4580
        %v4582 = vpop.f32.mrb[0].mxu0
        %4583 = vdwg.mxu0
        %v4585 = vsel %vm4357, %v4328, 0
        %v4587 = vsel %vm4361, %v1705, 0
        %4589 = vmatprep.subr.mxu0 0.0
        %4590 = vmatpush1.msra.mxu0 %v4587
        %4591 = vmatprep.subr.mxu0 0.0
        %4592 = vmatpush1.msra.mxu0 0.0
        %4593 = vmatprep.subr.mxu0 0.0
        %4594 = vmatpush1.msra.mxu0 0.0
        %4595 = vmatprep.subr.mxu0 0.0
        %4596 = vmatpush1.msra.mxu0 0.0
        %4597 = vmatprep.subr.mxu0 0.0
        %4598 = vmatpush1.msra.mxu0 0.0
        %4599 = vmatprep.subr.mxu0 0.0
        %4600 = vmatpush1.msra.mxu0 0.0
        %4601 = vmatprep.subr.mxu0 0.0
        %4602 = vmatpush1.msra.mxu0 0.0
        %4603 = vmatprep.subr.mxu0 0.0
        %4604 = vmatpush1.msra.mxu0 0.0
        %4605 = vmatprep.subr.mxu0 0.0
        %4606 = vmatpush1.msra.mxu0 0.0
        %4607 = vmatprep.subr.mxu0 0.0
        %4608 = vmatpush1.msra.mxu0 0.0
        %4609 = vmatprep.subr.mxu0 0.0
        %4610 = vmatpush1.msra.mxu0 0.0
        %4611 = vmatprep.subr.mxu0 0.0
        %4612 = vmatpush1.msra.mxu0 0.0
        %4613 = vmatprep.subr.mxu0 0.0
        %4614 = vmatpush1.msra.mxu0 0.0
        %4615 = vmatprep.subr.mxu0 0.0
        %4616 = vmatpush1.msra.mxu0 0.0
        %4617 = vmatprep.subr.mxu0 0.0
        %4618 = vmatpush1.msra.mxu0 0.0
        %4619 = vmatprep.subr.mxu0 0.0
        %4620 = vmatpush1.msra.mxu0 0.0
        %4621 = vmatprep.subr.mxu0 0.0
        %4622 = vmatpush1.msra.mxu0 0.0
        %4623 = vmatprep.subr.mxu0 0.0
        %4624 = vmatpush1.msra.mxu0 0.0
        %4625 = vmatprep.subr.mxu0 0.0
        %4626 = vmatpush1.msra.mxu0 0.0
        %4627 = vmatprep.subr.mxu0 0.0
        %4628 = vmatpush1.msra.mxu0 0.0
        %4629 = vmatprep.subr.mxu0 0.0
        %4630 = vmatpush1.msra.mxu0 0.0
        %4631 = vmatprep.subr.mxu0 0.0
        %4632 = vmatpush1.msra.mxu0 0.0
        %4633 = vmatprep.subr.mxu0 0.0
        %4634 = vmatpush1.msra.mxu0 0.0
        %4635 = vmatprep.subr.mxu0 0.0
        %4636 = vmatpush1.msra.mxu0 0.0
        %4637 = vmatprep.subr.mxu0 0.0
        %4638 = vmatpush1.msra.mxu0 0.0
        %4639 = vmatprep.subr.mxu0 0.0
        %4640 = vmatpush1.msra.mxu0 0.0
        %4641 = vmatprep.subr.mxu0 0.0
        %4642 = vmatpush1.msra.mxu0 0.0
        %4643 = vmatprep.subr.mxu0 0.0
        %4644 = vmatpush1.msra.mxu0 0.0
        %4645 = vmatprep.subr.mxu0 0.0
        %4646 = vmatpush1.msra.mxu0 0.0
        %4647 = vmatprep.subr.mxu0 0.0
        %4648 = vmatpush1.msra.mxu0 0.0
        %4649 = vmatprep.subr.mxu0 0.0
        %4650 = vmatpush1.msra.mxu0 0.0
        %4651 = vmatprep.subr.mxu0 0.0
        %4652 = vmatpush1.msra.mxu0 0.0
        %4653 = vmatprep.mubr.f32.mxu0 0.0
        %4654 = vmatmul.mubr.f32.gmra.mrb[0].mxu0 %v4585
        %v4655 = vpop.f32.mrb[0].mxu0
        %v4656 = vadd.f32 0.0, %v4655
        %v4657 = vpop.f32.mrb[0].mxu0
        %4658 = vdwg.mxu0
        %v4660 = vsel %vm4357, %v4329, 0
        %v4662 = vsel %vm4361, %v1543, 0
        %4664 = vmatprep.subr.mxu0 0.0
        %4665 = vmatpush1.msra.mxu0 %v4662
        %4666 = vmatprep.subr.mxu0 0.0
        %4667 = vmatpush1.msra.mxu0 0.0
        %4668 = vmatprep.subr.mxu0 0.0
        %4669 = vmatpush1.msra.mxu0 0.0
        %4670 = vmatprep.subr.mxu0 0.0
        %4671 = vmatpush1.msra.mxu0 0.0
        %4672 = vmatprep.subr.mxu0 0.0
        %4673 = vmatpush1.msra.mxu0 0.0
        %4674 = vmatprep.subr.mxu0 0.0
        %4675 = vmatpush1.msra.mxu0 0.0
        %4676 = vmatprep.subr.mxu0 0.0
        %4677 = vmatpush1.msra.mxu0 0.0
        %4678 = vmatprep.subr.mxu0 0.0
        %4679 = vmatpush1.msra.mxu0 0.0
        %4680 = vmatprep.subr.mxu0 0.0
        %4681 = vmatpush1.msra.mxu0 0.0
        %4682 = vmatprep.subr.mxu0 0.0
        %4683 = vmatpush1.msra.mxu0 0.0
        %4684 = vmatprep.subr.mxu0 0.0
        %4685 = vmatpush1.msra.mxu0 0.0
        %4686 = vmatprep.subr.mxu0 0.0
        %4687 = vmatpush1.msra.mxu0 0.0
        %4688 = vmatprep.subr.mxu0 0.0
        %4689 = vmatpush1.msra.mxu0 0.0
        %4690 = vmatprep.subr.mxu0 0.0
        %4691 = vmatpush1.msra.mxu0 0.0
        %4692 = vmatprep.subr.mxu0 0.0
        %4693 = vmatpush1.msra.mxu0 0.0
        %4694 = vmatprep.subr.mxu0 0.0
        %4695 = vmatpush1.msra.mxu0 0.0
        %4696 = vmatprep.subr.mxu0 0.0
        %4697 = vmatpush1.msra.mxu0 0.0
        %4698 = vmatprep.subr.mxu0 0.0
        %4699 = vmatpush1.msra.mxu0 0.0
        %4700 = vmatprep.subr.mxu0 0.0
        %4701 = vmatpush1.msra.mxu0 0.0
        %4702 = vmatprep.subr.mxu0 0.0
        %4703 = vmatpush1.msra.mxu0 0.0
        %4704 = vmatprep.subr.mxu0 0.0
        %4705 = vmatpush1.msra.mxu0 0.0
        %4706 = vmatprep.subr.mxu0 0.0
        %4707 = vmatpush1.msra.mxu0 0.0
        %4708 = vmatprep.subr.mxu0 0.0
        %4709 = vmatpush1.msra.mxu0 0.0
        %4710 = vmatprep.subr.mxu0 0.0
        %4711 = vmatpush1.msra.mxu0 0.0
        %4712 = vmatprep.subr.mxu0 0.0
        %4713 = vmatpush1.msra.mxu0 0.0
        %4714 = vmatprep.subr.mxu0 0.0
        %4715 = vmatpush1.msra.mxu0 0.0
        %4716 = vmatprep.subr.mxu0 0.0
        %4717 = vmatpush1.msra.mxu0 0.0
        %4718 = vmatprep.subr.mxu0 0.0
        %4719 = vmatpush1.msra.mxu0 0.0
        %4720 = vmatprep.subr.mxu0 0.0
        %4721 = vmatpush1.msra.mxu0 0.0
        %4722 = vmatprep.subr.mxu0 0.0
        %4723 = vmatpush1.msra.mxu0 0.0
        %4724 = vmatprep.subr.mxu0 0.0
        %4725 = vmatpush1.msra.mxu0 0.0
        %4726 = vmatprep.subr.mxu0 0.0
        %4727 = vmatpush1.msra.mxu0 0.0
        %4728 = vmatprep.mubr.f32.mxu0 0.0
        %4729 = vmatmul.mubr.f32.gmra.mrb[0].mxu0 %v4660
        %v4730 = vpop.f32.mrb[0].mxu0
        %v4731 = vadd.f32 0.0, %v4730
        %v4732 = vpop.f32.mrb[0].mxu0
        %4733 = vdwg.mxu0
        %v4735 = vsel %vm4357, %v4330, 0
        %v4737 = vsel %vm4361, %v1706, 0
        %4739 = vmatprep.subr.mxu0 0.0
        %4740 = vmatpush1.msra.mxu0 %v4737
        %4741 = vmatprep.subr.mxu0 0.0
        %4742 = vmatpush1.msra.mxu0 0.0
        %4743 = vmatprep.subr.mxu0 0.0
        %4744 = vmatpush1.msra.mxu0 0.0
        %4745 = vmatprep.subr.mxu0 0.0
        %4746 = vmatpush1.msra.mxu0 0.0
        %4747 = vmatprep.subr.mxu0 0.0
        %4748 = vmatpush1.msra.mxu0 0.0
        %4749 = vmatprep.subr.mxu0 0.0
        %4750 = vmatpush1.msra.mxu0 0.0
        %4751 = vmatprep.subr.mxu0 0.0
        %4752 = vmatpush1.msra.mxu0 0.0
        %4753 = vmatprep.subr.mxu0 0.0
        %4754 = vmatpush1.msra.mxu0 0.0
        %4755 = vmatprep.subr.mxu0 0.0
        %4756 = vmatpush1.msra.mxu0 0.0
        %4757 = vmatprep.subr.mxu0 0.0
        %4758 = vmatpush1.msra.mxu0 0.0
        %4759 = vmatprep.subr.mxu0 0.0
        %4760 = vmatpush1.msra.mxu0 0.0
        %4761 = vmatprep.subr.mxu0 0.0
        %4762 = vmatpush1.msra.mxu0 0.0
        %4763 = vmatprep.subr.mxu0 0.0
        %4764 = vmatpush1.msra.mxu0 0.0
        %4765 = vmatprep.subr.mxu0 0.0
        %4766 = vmatpush1.msra.mxu0 0.0
        %4767 = vmatprep.subr.mxu0 0.0
        %4768 = vmatpush1.msra.mxu0 0.0
        %4769 = vmatprep.subr.mxu0 0.0
        %4770 = vmatpush1.msra.mxu0 0.0
        %4771 = vmatprep.subr.mxu0 0.0
        %4772 = vmatpush1.msra.mxu0 0.0
        %4773 = vmatprep.subr.mxu0 0.0
        %4774 = vmatpush1.msra.mxu0 0.0
        %4775 = vmatprep.subr.mxu0 0.0
        %4776 = vmatpush1.msra.mxu0 0.0
        %4777 = vmatprep.subr.mxu0 0.0
        %4778 = vmatpush1.msra.mxu0 0.0
        %4779 = vmatprep.subr.mxu0 0.0
        %4780 = vmatpush1.msra.mxu0 0.0
        %4781 = vmatprep.subr.mxu0 0.0
        %4782 = vmatpush1.msra.mxu0 0.0
        %4783 = vmatprep.subr.mxu0 0.0
        %4784 = vmatpush1.msra.mxu0 0.0
        %4785 = vmatprep.subr.mxu0 0.0
        %4786 = vmatpush1.msra.mxu0 0.0
        %4787 = vmatprep.subr.mxu0 0.0
        %4788 = vmatpush1.msra.mxu0 0.0
        %4789 = vmatprep.subr.mxu0 0.0
        %4790 = vmatpush1.msra.mxu0 0.0
        %4791 = vmatprep.subr.mxu0 0.0
        %4792 = vmatpush1.msra.mxu0 0.0
        %4793 = vmatprep.subr.mxu0 0.0
        %4794 = vmatpush1.msra.mxu0 0.0
        %4795 = vmatprep.subr.mxu0 0.0
        %4796 = vmatpush1.msra.mxu0 0.0
        %4797 = vmatprep.subr.mxu0 0.0
        %4798 = vmatpush1.msra.mxu0 0.0
        %4799 = vmatprep.subr.mxu0 0.0
        %4800 = vmatpush1.msra.mxu0 0.0
        %4801 = vmatprep.subr.mxu0 0.0
        %4802 = vmatpush1.msra.mxu0 0.0
        %4803 = vmatprep.mubr.f32.mxu0 0.0
        %4804 = vmatmul.mubr.f32.gmra.mrb[0].mxu0 %v4735
        %v4805 = vpop.f32.mrb[0].mxu0
        %v4806 = vadd.f32 0.0, %v4805
        %v4807 = vpop.f32.mrb[0].mxu0
        %4808 = vdwg.mxu0
        %v4810 = vsel %vm4357, %v4331, 0
        %v4812 = vsel %vm4361, %v1547, 0
        %4814 = vmatprep.subr.mxu0 0.0
        %4815 = vmatpush1.msra.mxu0 %v4812
        %4816 = vmatprep.subr.mxu0 0.0
        %4817 = vmatpush1.msra.mxu0 0.0
        %4818 = vmatprep.subr.mxu0 0.0
        %4819 = vmatpush1.msra.mxu0 0.0
        %4820 = vmatprep.subr.mxu0 0.0
        %4821 = vmatpush1.msra.mxu0 0.0
        %4822 = vmatprep.subr.mxu0 0.0
        %4823 = vmatpush1.msra.mxu0 0.0
        %4824 = vmatprep.subr.mxu0 0.0
        %4825 = vmatpush1.msra.mxu0 0.0
        %4826 = vmatprep.subr.mxu0 0.0
        %4827 = vmatpush1.msra.mxu0 0.0
        %4828 = vmatprep.subr.mxu0 0.0
        %4829 = vmatpush1.msra.mxu0 0.0
        %4830 = vmatprep.subr.mxu0 0.0
        %4831 = vmatpush1.msra.mxu0 0.0
        %4832 = vmatprep.subr.mxu0 0.0
        %4833 = vmatpush1.msra.mxu0 0.0
        %4834 = vmatprep.subr.mxu0 0.0
        %4835 = vmatpush1.msra.mxu0 0.0
        %4836 = vmatprep.subr.mxu0 0.0
        %4837 = vmatpush1.msra.mxu0 0.0
        %4838 = vmatprep.subr.mxu0 0.0
        %4839 = vmatpush1.msra.mxu0 0.0
        %4840 = vmatprep.subr.mxu0 0.0
        %4841 = vmatpush1.msra.mxu0 0.0
        %4842 = vmatprep.subr.mxu0 0.0
        %4843 = vmatpush1.msra.mxu0 0.0
        %4844 = vmatprep.subr.mxu0 0.0
        %4845 = vmatpush1.msra.mxu0 0.0
        %4846 = vmatprep.subr.mxu0 0.0
        %4847 = vmatpush1.msra.mxu0 0.0
        %4848 = vmatprep.subr.mxu0 0.0
        %4849 = vmatpush1.msra.mxu0 0.0
        %4850 = vmatprep.subr.mxu0 0.0
        %4851 = vmatpush1.msra.mxu0 0.0
        %4852 = vmatprep.subr.mxu0 0.0
        %4853 = vmatpush1.msra.mxu0 0.0
        %4854 = vmatprep.subr.mxu0 0.0
        %4855 = vmatpush1.msra.mxu0 0.0
        %4856 = vmatprep.subr.mxu0 0.0
        %4857 = vmatpush1.msra.mxu0 0.0
        %4858 = vmatprep.subr.mxu0 0.0
        %4859 = vmatpush1.msra.mxu0 0.0
        %4860 = vmatprep.subr.mxu0 0.0
        %4861 = vmatpush1.msra.mxu0 0.0
        %4862 = vmatprep.subr.mxu0 0.0
        %4863 = vmatpush1.msra.mxu0 0.0
        %4864 = vmatprep.subr.mxu0 0.0
        %4865 = vmatpush1.msra.mxu0 0.0
        %4866 = vmatprep.subr.mxu0 0.0
        %4867 = vmatpush1.msra.mxu0 0.0
        %4868 = vmatprep.subr.mxu0 0.0
        %4869 = vmatpush1.msra.mxu0 0.0
        %4870 = vmatprep.subr.mxu0 0.0
        %4871 = vmatpush1.msra.mxu0 0.0
        %4872 = vmatprep.subr.mxu0 0.0
        %4873 = vmatpush1.msra.mxu0 0.0
        %4874 = vmatprep.subr.mxu0 0.0
        %4875 = vmatpush1.msra.mxu0 0.0
        %4876 = vmatprep.subr.mxu0 0.0
        %4877 = vmatpush1.msra.mxu0 0.0
        %4878 = vmatprep.mubr.f32.mxu0 0.0
        %4879 = vmatmul.mubr.f32.gmra.mrb[0].mxu0 %v4810
        %v4880 = vpop.f32.mrb[0].mxu0
        %v4881 = vadd.f32 0.0, %v4880
        %v4882 = vpop.f32.mrb[0].mxu0
        %4883 = vdwg.mxu0
        %v4885 = vsel %vm4357, %v4332, 0
        %v4887 = vsel %vm4361, %v1707, 0
        %4889 = vmatprep.subr.mxu0 0.0
        %4890 = vmatpush1.msra.mxu0 %v4887
        %4891 = vmatprep.subr.mxu0 0.0
        %4892 = vmatpush1.msra.mxu0 0.0
        %4893 = vmatprep.subr.mxu0 0.0
        %4894 = vmatpush1.msra.mxu0 0.0
        %4895 = vmatprep.subr.mxu0 0.0
        %4896 = vmatpush1.msra.mxu0 0.0
        %4897 = vmatprep.subr.mxu0 0.0
        %4898 = vmatpush1.msra.mxu0 0.0
        %4899 = vmatprep.subr.mxu0 0.0
        %4900 = vmatpush1.msra.mxu0 0.0
        %4901 = vmatprep.subr.mxu0 0.0
        %4902 = vmatpush1.msra.mxu0 0.0
        %4903 = vmatprep.subr.mxu0 0.0
        %4904 = vmatpush1.msra.mxu0 0.0
        %4905 = vmatprep.subr.mxu0 0.0
        %4906 = vmatpush1.msra.mxu0 0.0
        %4907 = vmatprep.subr.mxu0 0.0
        %4908 = vmatpush1.msra.mxu0 0.0
        %4909 = vmatprep.subr.mxu0 0.0
        %4910 = vmatpush1.msra.mxu0 0.0
        %4911 = vmatprep.subr.mxu0 0.0
        %4912 = vmatpush1.msra.mxu0 0.0
        %4913 = vmatprep.subr.mxu0 0.0
        %4914 = vmatpush1.msra.mxu0 0.0
        %4915 = vmatprep.subr.mxu0 0.0
        %4916 = vmatpush1.msra.mxu0 0.0
        %4917 = vmatprep.subr.mxu0 0.0
        %4918 = vmatpush1.msra.mxu0 0.0
        %4919 = vmatprep.subr.mxu0 0.0
        %4920 = vmatpush1.msra.mxu0 0.0
        %4921 = vmatprep.subr.mxu0 0.0
        %4922 = vmatpush1.msra.mxu0 0.0
        %4923 = vmatprep.subr.mxu0 0.0
        %4924 = vmatpush1.msra.mxu0 0.0
        %4925 = vmatprep.subr.mxu0 0.0
        %4926 = vmatpush1.msra.mxu0 0.0
        %4927 = vmatprep.subr.mxu0 0.0
        %4928 = vmatpush1.msra.mxu0 0.0
        %4929 = vmatprep.subr.mxu0 0.0
        %4930 = vmatpush1.msra.mxu0 0.0
        %4931 = vmatprep.subr.mxu0 0.0
        %4932 = vmatpush1.msra.mxu0 0.0
        %4933 = vmatprep.subr.mxu0 0.0
        %4934 = vmatpush1.msra.mxu0 0.0
        %4935 = vmatprep.subr.mxu0 0.0
        %4936 = vmatpush1.msra.mxu0 0.0
        %4937 = vmatprep.subr.mxu0 0.0
        %4938 = vmatpush1.msra.mxu0 0.0
        %4939 = vmatprep.subr.mxu0 0.0
        %4940 = vmatpush1.msra.mxu0 0.0
        %4941 = vmatprep.subr.mxu0 0.0
        %4942 = vmatpush1.msra.mxu0 0.0
        %4943 = vmatprep.subr.mxu0 0.0
        %4944 = vmatpush1.msra.mxu0 0.0
        %4945 = vmatprep.subr.mxu0 0.0
        %4946 = vmatpush1.msra.mxu0 0.0
        %4947 = vmatprep.subr.mxu0 0.0
        %4948 = vmatpush1.msra.mxu0 0.0
        %4949 = vmatprep.subr.mxu0 0.0
        %4950 = vmatpush1.msra.mxu0 0.0
        %4951 = vmatprep.subr.mxu0 0.0
        %4952 = vmatpush1.msra.mxu0 0.0
        %4953 = vmatprep.mubr.f32.mxu0 0.0
        %4954 = vmatmul.mubr.f32.gmra.mrb[0].mxu0 %v4885
        %v4955 = vpop.f32.mrb[0].mxu0
        %v4956 = vadd.f32 0.0, %v4955
        %v4957 = vpop.f32.mrb[0].mxu0
        %4958 = vdwg.mxu0
        %v4960 = vsel %vm4357, %v4333, 0
        %v4962 = vsel %vm4361, %v1535, 0
        %4964 = vmatprep.subr.mxu0 0.0
        %4965 = vmatpush1.msra.mxu0 %v4962
        %4966 = vmatprep.subr.mxu0 0.0
        %4967 = vmatpush1.msra.mxu0 0.0
        %4968 = vmatprep.subr.mxu0 0.0
        %4969 = vmatpush1.msra.mxu0 0.0
        %4970 = vmatprep.subr.mxu0 0.0
        %4971 = vmatpush1.msra.mxu0 0.0
        %4972 = vmatprep.subr.mxu0 0.0
        %4973 = vmatpush1.msra.mxu0 0.0
        %4974 = vmatprep.subr.mxu0 0.0
        %4975 = vmatpush1.msra.mxu0 0.0
        %4976 = vmatprep.subr.mxu0 0.0
        %4977 = vmatpush1.msra.mxu0 0.0
        %4978 = vmatprep.subr.mxu0 0.0
        %4979 = vmatpush1.msra.mxu0 0.0
        %4980 = vmatprep.subr.mxu0 0.0
        %4981 = vmatpush1.msra.mxu0 0.0
        %4982 = vmatprep.subr.mxu0 0.0
        %4983 = vmatpush1.msra.mxu0 0.0
        %4984 = vmatprep.subr.mxu0 0.0
        %4985 = vmatpush1.msra.mxu0 0.0
        %4986 = vmatprep.subr.mxu0 0.0
        %4987 = vmatpush1.msra.mxu0 0.0
        %4988 = vmatprep.subr.mxu0 0.0
        %4989 = vmatpush1.msra.mxu0 0.0
        %4990 = vmatprep.subr.mxu0 0.0
        %4991 = vmatpush1.msra.mxu0 0.0
        %4992 = vmatprep.subr.mxu0 0.0
        %4993 = vmatpush1.msra.mxu0 0.0
        %4994 = vmatprep.subr.mxu0 0.0
        %4995 = vmatpush1.msra.mxu0 0.0
        %4996 = vmatprep.subr.mxu0 0.0
        %4997 = vmatpush1.msra.mxu0 0.0
        %4998 = vmatprep.subr.mxu0 0.0
        %4999 = vmatpush1.msra.mxu0 0.0
        %5000 = vmatprep.subr.mxu0 0.0
        %5001 = vmatpush1.msra.mxu0 0.0
        %5002 = vmatprep.subr.mxu0 0.0
        %5003 = vmatpush1.msra.mxu0 0.0
        %5004 = vmatprep.subr.mxu0 0.0
        %5005 = vmatpush1.msra.mxu0 0.0
        %5006 = vmatprep.subr.mxu0 0.0
        %5007 = vmatpush1.msra.mxu0 0.0
        %5008 = vmatprep.subr.mxu0 0.0
        %5009 = vmatpush1.msra.mxu0 0.0
        %5010 = vmatprep.subr.mxu0 0.0
        %5011 = vmatpush1.msra.mxu0 0.0
        %5012 = vmatprep.subr.mxu0 0.0
        %5013 = vmatpush1.msra.mxu0 0.0
        %5014 = vmatprep.subr.mxu0 0.0
        %5015 = vmatpush1.msra.mxu0 0.0
        %5016 = vmatprep.subr.mxu0 0.0
        %5017 = vmatpush1.msra.mxu0 0.0
        %5018 = vmatprep.subr.mxu0 0.0
        %5019 = vmatpush1.msra.mxu0 0.0
        %5020 = vmatprep.subr.mxu0 0.0
        %5021 = vmatpush1.msra.mxu0 0.0
        %5022 = vmatprep.subr.mxu0 0.0
        %5023 = vmatpush1.msra.mxu0 0.0
        %5024 = vmatprep.subr.mxu0 0.0
        %5025 = vmatpush1.msra.mxu0 0.0
        %5026 = vmatprep.subr.mxu0 0.0
        %5027 = vmatpush1.msra.mxu0 0.0
        %5028 = vmatprep.mubr.f32.mxu0 0.0
        %5029 = vmatmul.mubr.f32.gmra.mrb[0].mxu0 %v4960
        %v5030 = vpop.f32.mrb[0].mxu0
        %v5031 = vadd.f32 0.0, %v5030
        %v5032 = vpop.f32.mrb[0].mxu0
        %5033 = vdwg.mxu0
        %v5035 = vsel %vm4357, %v4334, 0
        %v5037 = vsel %vm4361, %v1712, 0
        %5039 = vmatprep.subr.mxu0 0.0
        %5040 = vmatpush1.msra.mxu0 %v5037
        %5041 = vmatprep.subr.mxu0 0.0
        %5042 = vmatpush1.msra.mxu0 0.0
        %5043 = vmatprep.subr.mxu0 0.0
        %5044 = vmatpush1.msra.mxu0 0.0
        %5045 = vmatprep.subr.mxu0 0.0
        %5046 = vmatpush1.msra.mxu0 0.0
        %5047 = vmatprep.subr.mxu0 0.0
        %5048 = vmatpush1.msra.mxu0 0.0
        %5049 = vmatprep.subr.mxu0 0.0
        %5050 = vmatpush1.msra.mxu0 0.0
        %5051 = vmatprep.subr.mxu0 0.0
        %5052 = vmatpush1.msra.mxu0 0.0
        %5053 = vmatprep.subr.mxu0 0.0
        %5054 = vmatpush1.msra.mxu0 0.0
        %5055 = vmatprep.subr.mxu0 0.0
        %5056 = vmatpush1.msra.mxu0 0.0
        %5057 = vmatprep.subr.mxu0 0.0
        %5058 = vmatpush1.msra.mxu0 0.0
        %5059 = vmatprep.subr.mxu0 0.0
        %5060 = vmatpush1.msra.mxu0 0.0
        %5061 = vmatprep.subr.mxu0 0.0
        %5062 = vmatpush1.msra.mxu0 0.0
        %5063 = vmatprep.subr.mxu0 0.0
        %5064 = vmatpush1.msra.mxu0 0.0
        %5065 = vmatprep.subr.mxu0 0.0
        %5066 = vmatpush1.msra.mxu0 0.0
        %5067 = vmatprep.subr.mxu0 0.0
        %5068 = vmatpush1.msra.mxu0 0.0
        %5069 = vmatprep.subr.mxu0 0.0
        %5070 = vmatpush1.msra.mxu0 0.0
        %5071 = vmatprep.subr.mxu0 0.0
        %5072 = vmatpush1.msra.mxu0 0.0
        %5073 = vmatprep.subr.mxu0 0.0
        %5074 = vmatpush1.msra.mxu0 0.0
        %5075 = vmatprep.subr.mxu0 0.0
        %5076 = vmatpush1.msra.mxu0 0.0
        %5077 = vmatprep.subr.mxu0 0.0
        %5078 = vmatpush1.msra.mxu0 0.0
        %5079 = vmatprep.subr.mxu0 0.0
        %5080 = vmatpush1.msra.mxu0 0.0
        %5081 = vmatprep.subr.mxu0 0.0
        %5082 = vmatpush1.msra.mxu0 0.0
        %5083 = vmatprep.subr.mxu0 0.0
        %5084 = vmatpush1.msra.mxu0 0.0
        %5085 = vmatprep.subr.mxu0 0.0
        %5086 = vmatpush1.msra.mxu0 0.0
        %5087 = vmatprep.subr.mxu0 0.0
        %5088 = vmatpush1.msra.mxu0 0.0
        %5089 = vmatprep.subr.mxu0 0.0
        %5090 = vmatpush1.msra.mxu0 0.0
        %5091 = vmatprep.subr.mxu0 0.0
        %5092 = vmatpush1.msra.mxu0 0.0
        %5093 = vmatprep.subr.mxu0 0.0
        %5094 = vmatpush1.msra.mxu0 0.0
        %5095 = vmatprep.subr.mxu0 0.0
        %5096 = vmatpush1.msra.mxu0 0.0
        %5097 = vmatprep.subr.mxu0 0.0
        %5098 = vmatpush1.msra.mxu0 0.0
        %5099 = vmatprep.subr.mxu0 0.0
        %5100 = vmatpush1.msra.mxu0 0.0
        %5101 = vmatprep.subr.mxu0 0.0
        %5102 = vmatpush1.msra.mxu0 0.0
        %5103 = vmatprep.mubr.f32.mxu0 0.0
        %5104 = vmatmul.mubr.f32.gmra.mrb[0].mxu0 %v5035
        %v5105 = vpop.f32.mrb[0].mxu0
        %v5106 = vadd.f32 0.0, %v5105
        %v5107 = vpop.f32.mrb[0].mxu0
        %5108 = vdwg.mxu0
        %v5110 = vsel %vm4357, %v4335, 0
        %v5112 = vsel %vm4361, %v1539, 0
        %5114 = vmatprep.subr.mxu0 0.0
        %5115 = vmatpush1.msra.mxu0 %v5112
        %5116 = vmatprep.subr.mxu0 0.0
        %5117 = vmatpush1.msra.mxu0 0.0
        %5118 = vmatprep.subr.mxu0 0.0
        %5119 = vmatpush1.msra.mxu0 0.0
        %5120 = vmatprep.subr.mxu0 0.0
        %5121 = vmatpush1.msra.mxu0 0.0
        %5122 = vmatprep.subr.mxu0 0.0
        %5123 = vmatpush1.msra.mxu0 0.0
        %5124 = vmatprep.subr.mxu0 0.0
        %5125 = vmatpush1.msra.mxu0 0.0
        %5126 = vmatprep.subr.mxu0 0.0
        %5127 = vmatpush1.msra.mxu0 0.0
        %5128 = vmatprep.subr.mxu0 0.0
        %5129 = vmatpush1.msra.mxu0 0.0
        %5130 = vmatprep.subr.mxu0 0.0
        %5131 = vmatpush1.msra.mxu0 0.0
        %5132 = vmatprep.subr.mxu0 0.0
        %5133 = vmatpush1.msra.mxu0 0.0
        %5134 = vmatprep.subr.mxu0 0.0
        %5135 = vmatpush1.msra.mxu0 0.0
        %5136 = vmatprep.subr.mxu0 0.0
        %5137 = vmatpush1.msra.mxu0 0.0
        %5138 = vmatprep.subr.mxu0 0.0
        %5139 = vmatpush1.msra.mxu0 0.0
        %5140 = vmatprep.subr.mxu0 0.0
        %5141 = vmatpush1.msra.mxu0 0.0
        %5142 = vmatprep.subr.mxu0 0.0
        %5143 = vmatpush1.msra.mxu0 0.0
        %5144 = vmatprep.subr.mxu0 0.0
        %5145 = vmatpush1.msra.mxu0 0.0
        %5146 = vmatprep.subr.mxu0 0.0
        %5147 = vmatpush1.msra.mxu0 0.0
        %5148 = vmatprep.subr.mxu0 0.0
        %5149 = vmatpush1.msra.mxu0 0.0
        %5150 = vmatprep.subr.mxu0 0.0
        %5151 = vmatpush1.msra.mxu0 0.0
        %5152 = vmatprep.subr.mxu0 0.0
        %5153 = vmatpush1.msra.mxu0 0.0
        %5154 = vmatprep.subr.mxu0 0.0
        %5155 = vmatpush1.msra.mxu0 0.0
        %5156 = vmatprep.subr.mxu0 0.0
        %5157 = vmatpush1.msra.mxu0 0.0
        %5158 = vmatprep.subr.mxu0 0.0
        %5159 = vmatpush1.msra.mxu0 0.0
        %5160 = vmatprep.subr.mxu0 0.0
        %5161 = vmatpush1.msra.mxu0 0.0
        %5162 = vmatprep.subr.mxu0 0.0
        %5163 = vmatpush1.msra.mxu0 0.0
        %5164 = vmatprep.subr.mxu0 0.0
        %5165 = vmatpush1.msra.mxu0 0.0
        %5166 = vmatprep.subr.mxu0 0.0
        %5167 = vmatpush1.msra.mxu0 0.0
        %5168 = vmatprep.subr.mxu0 0.0
        %5169 = vmatpush1.msra.mxu0 0.0
        %5170 = vmatprep.subr.mxu0 0.0
        %5171 = vmatpush1.msra.mxu0 0.0
        %5172 = vmatprep.subr.mxu0 0.0
        %5173 = vmatpush1.msra.mxu0 0.0
        %5174 = vmatprep.subr.mxu0 0.0
        %5175 = vmatpush1.msra.mxu0 0.0
        %5176 = vmatprep.subr.mxu0 0.0
        %5177 = vmatpush1.msra.mxu0 0.0
        %5178 = vmatprep.mubr.f32.mxu0 0.0
        %5179 = vmatmul.mubr.f32.gmra.mrb[0].mxu0 %v5110
        %v5180 = vpop.f32.mrb[0].mxu0
        %v5181 = vadd.f32 0.0, %v5180
        %v5182 = vpop.f32.mrb[0].mxu0
        %5183 = vdwg.mxu0
        %v5185 = vsel %vm4357, %v4336, 0
        %v5187 = vsel %vm4361, %v1713, 0
        %5189 = vmatprep.subr.mxu0 0.0
        %5190 = vmatpush1.msra.mxu0 %v5187
        %5191 = vmatprep.subr.mxu0 0.0
        %5192 = vmatpush1.msra.mxu0 0.0
        %5193 = vmatprep.subr.mxu0 0.0
        %5194 = vmatpush1.msra.mxu0 0.0
        %5195 = vmatprep.subr.mxu0 0.0
        %5196 = vmatpush1.msra.mxu0 0.0
        %5197 = vmatprep.subr.mxu0 0.0
        %5198 = vmatpush1.msra.mxu0 0.0
        %5199 = vmatprep.subr.mxu0 0.0
        %5200 = vmatpush1.msra.mxu0 0.0
        %5201 = vmatprep.subr.mxu0 0.0
        %5202 = vmatpush1.msra.mxu0 0.0
        %5203 = vmatprep.subr.mxu0 0.0
        %5204 = vmatpush1.msra.mxu0 0.0
        %5205 = vmatprep.subr.mxu0 0.0
        %5206 = vmatpush1.msra.mxu0 0.0
        %5207 = vmatprep.subr.mxu0 0.0
        %5208 = vmatpush1.msra.mxu0 0.0
        %5209 = vmatprep.subr.mxu0 0.0
        %5210 = vmatpush1.msra.mxu0 0.0
        %5211 = vmatprep.subr.mxu0 0.0
        %5212 = vmatpush1.msra.mxu0 0.0
        %5213 = vmatprep.subr.mxu0 0.0
        %5214 = vmatpush1.msra.mxu0 0.0
        %5215 = vmatprep.subr.mxu0 0.0
        %5216 = vmatpush1.msra.mxu0 0.0
        %5217 = vmatprep.subr.mxu0 0.0
        %5218 = vmatpush1.msra.mxu0 0.0
        %5219 = vmatprep.subr.mxu0 0.0
        %5220 = vmatpush1.msra.mxu0 0.0
        %5221 = vmatprep.subr.mxu0 0.0
        %5222 = vmatpush1.msra.mxu0 0.0
        %5223 = vmatprep.subr.mxu0 0.0
        %5224 = vmatpush1.msra.mxu0 0.0
        %5225 = vmatprep.subr.mxu0 0.0
        %5226 = vmatpush1.msra.mxu0 0.0
        %5227 = vmatprep.subr.mxu0 0.0
        %5228 = vmatpush1.msra.mxu0 0.0
        %5229 = vmatprep.subr.mxu0 0.0
        %5230 = vmatpush1.msra.mxu0 0.0
        %5231 = vmatprep.subr.mxu0 0.0
        %5232 = vmatpush1.msra.mxu0 0.0
        %5233 = vmatprep.subr.mxu0 0.0
        %5234 = vmatpush1.msra.mxu0 0.0
        %5235 = vmatprep.subr.mxu0 0.0
        %5236 = vmatpush1.msra.mxu0 0.0
        %5237 = vmatprep.subr.mxu0 0.0
        %5238 = vmatpush1.msra.mxu0 0.0
        %5239 = vmatprep.subr.mxu0 0.0
        %5240 = vmatpush1.msra.mxu0 0.0
        %5241 = vmatprep.subr.mxu0 0.0
        %5242 = vmatpush1.msra.mxu0 0.0
        %5243 = vmatprep.subr.mxu0 0.0
        %5244 = vmatpush1.msra.mxu0 0.0
        %5245 = vmatprep.subr.mxu0 0.0
        %5246 = vmatpush1.msra.mxu0 0.0
        %5247 = vmatprep.subr.mxu0 0.0
        %5248 = vmatpush1.msra.mxu0 0.0
        %5249 = vmatprep.subr.mxu0 0.0
        %5250 = vmatpush1.msra.mxu0 0.0
        %5251 = vmatprep.subr.mxu0 0.0
        %5252 = vmatpush1.msra.mxu0 0.0
        %5253 = vmatprep.mubr.f32.mxu0 0.0
        %5254 = vmatmul.mubr.f32.gmra.mrb[0].mxu0 %v5185
        %v5255 = vpop.f32.mrb[0].mxu0
        %v5256 = vadd.f32 0.0, %v5255
        %v5257 = vpop.f32.mrb[0].mxu0
        %5258 = vdwg.mxu0
        %v5260 = vsel %vm4357, %v4337, 0
        %v5262 = vsel %vm4361, %v1545, 0
        %5264 = vmatprep.subr.mxu0 0.0
        %5265 = vmatpush1.msra.mxu0 %v5262
        %5266 = vmatprep.subr.mxu0 0.0
        %5267 = vmatpush1.msra.mxu0 0.0
        %5268 = vmatprep.subr.mxu0 0.0
        %5269 = vmatpush1.msra.mxu0 0.0
        %5270 = vmatprep.subr.mxu0 0.0
        %5271 = vmatpush1.msra.mxu0 0.0
        %5272 = vmatprep.subr.mxu0 0.0
        %5273 = vmatpush1.msra.mxu0 0.0
        %5274 = vmatprep.subr.mxu0 0.0
        %5275 = vmatpush1.msra.mxu0 0.0
        %5276 = vmatprep.subr.mxu0 0.0
        %5277 = vmatpush1.msra.mxu0 0.0
        %5278 = vmatprep.subr.mxu0 0.0
        %5279 = vmatpush1.msra.mxu0 0.0
        %5280 = vmatprep.subr.mxu0 0.0
        %5281 = vmatpush1.msra.mxu0 0.0
        %5282 = vmatprep.subr.mxu0 0.0
        %5283 = vmatpush1.msra.mxu0 0.0
        %5284 = vmatprep.subr.mxu0 0.0
        %5285 = vmatpush1.msra.mxu0 0.0
        %5286 = vmatprep.subr.mxu0 0.0
        %5287 = vmatpush1.msra.mxu0 0.0
        %5288 = vmatprep.subr.mxu0 0.0
        %5289 = vmatpush1.msra.mxu0 0.0
        %5290 = vmatprep.subr.mxu0 0.0
        %5291 = vmatpush1.msra.mxu0 0.0
        %5292 = vmatprep.subr.mxu0 0.0
        %5293 = vmatpush1.msra.mxu0 0.0
        %5294 = vmatprep.subr.mxu0 0.0
        %5295 = vmatpush1.msra.mxu0 0.0
        %5296 = vmatprep.subr.mxu0 0.0
        %5297 = vmatpush1.msra.mxu0 0.0
        %5298 = vmatprep.subr.mxu0 0.0
        %5299 = vmatpush1.msra.mxu0 0.0
        %5300 = vmatprep.subr.mxu0 0.0
        %5301 = vmatpush1.msra.mxu0 0.0
        %5302 = vmatprep.subr.mxu0 0.0
        %5303 = vmatpush1.msra.mxu0 0.0
        %5304 = vmatprep.subr.mxu0 0.0
        %5305 = vmatpush1.msra.mxu0 0.0
        %5306 = vmatprep.subr.mxu0 0.0
        %5307 = vmatpush1.msra.mxu0 0.0
        %5308 = vmatprep.subr.mxu0 0.0
        %5309 = vmatpush1.msra.mxu0 0.0
        %5310 = vmatprep.subr.mxu0 0.0
        %5311 = vmatpush1.msra.mxu0 0.0
        %5312 = vmatprep.subr.mxu0 0.0
        %5313 = vmatpush1.msra.mxu0 0.0
        %5314 = vmatprep.subr.mxu0 0.0
        %5315 = vmatpush1.msra.mxu0 0.0
        %5316 = vmatprep.subr.mxu0 0.0
        %5317 = vmatpush1.msra.mxu0 0.0
        %5318 = vmatprep.subr.mxu0 0.0
        %5319 = vmatpush1.msra.mxu0 0.0
        %5320 = vmatprep.subr.mxu0 0.0
        %5321 = vmatpush1.msra.mxu0 0.0
        %5322 = vmatprep.subr.mxu0 0.0
        %5323 = vmatpush1.msra.mxu0 0.0
        %5324 = vmatprep.subr.mxu0 0.0
        %5325 = vmatpush1.msra.mxu0 0.0
        %5326 = vmatprep.subr.mxu0 0.0
        %5327 = vmatpush1.msra.mxu0 0.0
        %5328 = vmatprep.mubr.f32.mxu0 0.0
        %5329 = vmatmul.mubr.f32.gmra.mrb[0].mxu0 %v5260
        %v5330 = vpop.f32.mrb[0].mxu0
        %v5331 = vadd.f32 0.0, %v5330
        %v5332 = vpop.f32.mrb[0].mxu0
        %5333 = vdwg.mxu0
        %v5335 = vsel %vm4357, %v4338, 0
        %v5337 = vsel %vm4361, %v1714, 0
        %5339 = vmatprep.subr.mxu0 0.0
        %5340 = vmatpush1.msra.mxu0 %v5337
        %5341 = vmatprep.subr.mxu0 0.0
        %5342 = vmatpush1.msra.mxu0 0.0
        %5343 = vmatprep.subr.mxu0 0.0
        %5344 = vmatpush1.msra.mxu0 0.0
        %5345 = vmatprep.subr.mxu0 0.0
        %5346 = vmatpush1.msra.mxu0 0.0
        %5347 = vmatprep.subr.mxu0 0.0
        %5348 = vmatpush1.msra.mxu0 0.0
        %5349 = vmatprep.subr.mxu0 0.0
        %5350 = vmatpush1.msra.mxu0 0.0
        %5351 = vmatprep.subr.mxu0 0.0
        %5352 = vmatpush1.msra.mxu0 0.0
        %5353 = vmatprep.subr.mxu0 0.0
        %5354 = vmatpush1.msra.mxu0 0.0
        %5355 = vmatprep.subr.mxu0 0.0
        %5356 = vmatpush1.msra.mxu0 0.0
        %5357 = vmatprep.subr.mxu0 0.0
        %5358 = vmatpush1.msra.mxu0 0.0
        %5359 = vmatprep.subr.mxu0 0.0
        %5360 = vmatpush1.msra.mxu0 0.0
        %5361 = vmatprep.subr.mxu0 0.0
        %5362 = vmatpush1.msra.mxu0 0.0
        %5363 = vmatprep.subr.mxu0 0.0
        %5364 = vmatpush1.msra.mxu0 0.0
        %5365 = vmatprep.subr.mxu0 0.0
        %5366 = vmatpush1.msra.mxu0 0.0
        %5367 = vmatprep.subr.mxu0 0.0
        %5368 = vmatpush1.msra.mxu0 0.0
        %5369 = vmatprep.subr.mxu0 0.0
        %5370 = vmatpush1.msra.mxu0 0.0
        %5371 = vmatprep.subr.mxu0 0.0
        %5372 = vmatpush1.msra.mxu0 0.0
        %5373 = vmatprep.subr.mxu0 0.0
        %5374 = vmatpush1.msra.mxu0 0.0
        %5375 = vmatprep.subr.mxu0 0.0
        %5376 = vmatpush1.msra.mxu0 0.0
        %5377 = vmatprep.subr.mxu0 0.0
        %5378 = vmatpush1.msra.mxu0 0.0
        %5379 = vmatprep.subr.mxu0 0.0
        %5380 = vmatpush1.msra.mxu0 0.0
        %5381 = vmatprep.subr.mxu0 0.0
        %5382 = vmatpush1.msra.mxu0 0.0
        %5383 = vmatprep.subr.mxu0 0.0
        %5384 = vmatpush1.msra.mxu0 0.0
        %5385 = vmatprep.subr.mxu0 0.0
        %5386 = vmatpush1.msra.mxu0 0.0
        %5387 = vmatprep.subr.mxu0 0.0
        %5388 = vmatpush1.msra.mxu0 0.0
        %5389 = vmatprep.subr.mxu0 0.0
        %5390 = vmatpush1.msra.mxu0 0.0
        %5391 = vmatprep.subr.mxu0 0.0
        %5392 = vmatpush1.msra.mxu0 0.0
        %5393 = vmatprep.subr.mxu0 0.0
        %5394 = vmatpush1.msra.mxu0 0.0
        %5395 = vmatprep.subr.mxu0 0.0
        %5396 = vmatpush1.msra.mxu0 0.0
        %5397 = vmatprep.subr.mxu0 0.0
        %5398 = vmatpush1.msra.mxu0 0.0
        %5399 = vmatprep.subr.mxu0 0.0
        %5400 = vmatpush1.msra.mxu0 0.0
        %5401 = vmatprep.subr.mxu0 0.0
        %5402 = vmatpush1.msra.mxu0 0.0
        %5403 = vmatprep.mubr.f32.mxu0 0.0
        %5404 = vmatmul.mubr.f32.gmra.mrb[0].mxu0 %v5335
        %v5405 = vpop.f32.mrb[0].mxu0
        %v5406 = vadd.f32 0.0, %v5405
        %v5407 = vpop.f32.mrb[0].mxu0
        %5408 = vdwg.mxu0
        %v5410 = vsel %vm4357, %v4339, 0
        %v5412 = vsel %vm4361, %v1549, 0
        %5414 = vmatprep.subr.mxu0 0.0
        %5415 = vmatpush1.msra.mxu0 %v5412
        %5416 = vmatprep.subr.mxu0 0.0
        %5417 = vmatpush1.msra.mxu0 0.0
        %5418 = vmatprep.subr.mxu0 0.0
        %5419 = vmatpush1.msra.mxu0 0.0
        %5420 = vmatprep.subr.mxu0 0.0
        %5421 = vmatpush1.msra.mxu0 0.0
        %5422 = vmatprep.subr.mxu0 0.0
        %5423 = vmatpush1.msra.mxu0 0.0
        %5424 = vmatprep.subr.mxu0 0.0
        %5425 = vmatpush1.msra.mxu0 0.0
        %5426 = vmatprep.subr.mxu0 0.0
        %5427 = vmatpush1.msra.mxu0 0.0
        %5428 = vmatprep.subr.mxu0 0.0
        %5429 = vmatpush1.msra.mxu0 0.0
        %5430 = vmatprep.subr.mxu0 0.0
        %5431 = vmatpush1.msra.mxu0 0.0
        %5432 = vmatprep.subr.mxu0 0.0
        %5433 = vmatpush1.msra.mxu0 0.0
        %5434 = vmatprep.subr.mxu0 0.0
        %5435 = vmatpush1.msra.mxu0 0.0
        %5436 = vmatprep.subr.mxu0 0.0
        %5437 = vmatpush1.msra.mxu0 0.0
        %5438 = vmatprep.subr.mxu0 0.0
        %5439 = vmatpush1.msra.mxu0 0.0
        %5440 = vmatprep.subr.mxu0 0.0
        %5441 = vmatpush1.msra.mxu0 0.0
        %5442 = vmatprep.subr.mxu0 0.0
        %5443 = vmatpush1.msra.mxu0 0.0
        %5444 = vmatprep.subr.mxu0 0.0
        %5445 = vmatpush1.msra.mxu0 0.0
        %5446 = vmatprep.subr.mxu0 0.0
        %5447 = vmatpush1.msra.mxu0 0.0
        %5448 = vmatprep.subr.mxu0 0.0
        %5449 = vmatpush1.msra.mxu0 0.0
        %5450 = vmatprep.subr.mxu0 0.0
        %5451 = vmatpush1.msra.mxu0 0.0
        %5452 = vmatprep.subr.mxu0 0.0
        %5453 = vmatpush1.msra.mxu0 0.0
        %5454 = vmatprep.subr.mxu0 0.0
        %5455 = vmatpush1.msra.mxu0 0.0
        %5456 = vmatprep.subr.mxu0 0.0
        %5457 = vmatpush1.msra.mxu0 0.0
        %5458 = vmatprep.subr.mxu0 0.0
        %5459 = vmatpush1.msra.mxu0 0.0
        %5460 = vmatprep.subr.mxu0 0.0
        %5461 = vmatpush1.msra.mxu0 0.0
        %5462 = vmatprep.subr.mxu0 0.0
        %5463 = vmatpush1.msra.mxu0 0.0
        %5464 = vmatprep.subr.mxu0 0.0
        %5465 = vmatpush1.msra.mxu0 0.0
        %5466 = vmatprep.subr.mxu0 0.0
        %5467 = vmatpush1.msra.mxu0 0.0
        %5468 = vmatprep.subr.mxu0 0.0
        %5469 = vmatpush1.msra.mxu0 0.0
        %5470 = vmatprep.subr.mxu0 0.0
        %5471 = vmatpush1.msra.mxu0 0.0
        %5472 = vmatprep.subr.mxu0 0.0
        %5473 = vmatpush1.msra.mxu0 0.0
        %5474 = vmatprep.subr.mxu0 0.0
        %5475 = vmatpush1.msra.mxu0 0.0
        %5476 = vmatprep.subr.mxu0 0.0
        %5477 = vmatpush1.msra.mxu0 0.0
        %5478 = vmatprep.mubr.f32.mxu0 0.0
        %5479 = vmatmul.mubr.f32.gmra.mrb[0].mxu0 %v5410
        %v5480 = vpop.f32.mrb[0].mxu0
        %v5481 = vadd.f32 0.0, %v5480
        %v5482 = vpop.f32.mrb[0].mxu0
        %5483 = vdwg.mxu0
        %v5485 = vsel %vm4357, %v4340, 0
        %v5487 = vsel %vm4361, %v1715, 0
        %5489 = vmatprep.subr.mxu0 0.0
        %5490 = vmatpush1.msra.mxu0 %v5487
        %5491 = vmatprep.subr.mxu0 0.0
        %5492 = vmatpush1.msra.mxu0 0.0
        %5493 = vmatprep.subr.mxu0 0.0
        %5494 = vmatpush1.msra.mxu0 0.0
        %5495 = vmatprep.subr.mxu0 0.0
        %5496 = vmatpush1.msra.mxu0 0.0
        %5497 = vmatprep.subr.mxu0 0.0
        %5498 = vmatpush1.msra.mxu0 0.0
        %5499 = vmatprep.subr.mxu0 0.0
        %5500 = vmatpush1.msra.mxu0 0.0
        %5501 = vmatprep.subr.mxu0 0.0
        %5502 = vmatpush1.msra.mxu0 0.0
        %5503 = vmatprep.subr.mxu0 0.0
        %5504 = vmatpush1.msra.mxu0 0.0
        %5505 = vmatprep.subr.mxu0 0.0
        %5506 = vmatpush1.msra.mxu0 0.0
        %5507 = vmatprep.subr.mxu0 0.0
        %5508 = vmatpush1.msra.mxu0 0.0
        %5509 = vmatprep.subr.mxu0 0.0
        %5510 = vmatpush1.msra.mxu0 0.0
        %5511 = vmatprep.subr.mxu0 0.0
        %5512 = vmatpush1.msra.mxu0 0.0
        %5513 = vmatprep.subr.mxu0 0.0
        %5514 = vmatpush1.msra.mxu0 0.0
        %5515 = vmatprep.subr.mxu0 0.0
        %5516 = vmatpush1.msra.mxu0 0.0
        %5517 = vmatprep.subr.mxu0 0.0
        %5518 = vmatpush1.msra.mxu0 0.0
        %5519 = vmatprep.subr.mxu0 0.0
        %5520 = vmatpush1.msra.mxu0 0.0
        %5521 = vmatprep.subr.mxu0 0.0
        %5522 = vmatpush1.msra.mxu0 0.0
        %5523 = vmatprep.subr.mxu0 0.0
        %5524 = vmatpush1.msra.mxu0 0.0
        %5525 = vmatprep.subr.mxu0 0.0
        %5526 = vmatpush1.msra.mxu0 0.0
        %5527 = vmatprep.subr.mxu0 0.0
        %5528 = vmatpush1.msra.mxu0 0.0
        %5529 = vmatprep.subr.mxu0 0.0
        %5530 = vmatpush1.msra.mxu0 0.0
        %5531 = vmatprep.subr.mxu0 0.0
        %5532 = vmatpush1.msra.mxu0 0.0
        %5533 = vmatprep.subr.mxu0 0.0
        %5534 = vmatpush1.msra.mxu0 0.0
        %5535 = vmatprep.subr.mxu0 0.0
        %5536 = vmatpush1.msra.mxu0 0.0
        %5537 = vmatprep.subr.mxu0 0.0
        %5538 = vmatpush1.msra.mxu0 0.0
        %5539 = vmatprep.subr.mxu0 0.0
        %5540 = vmatpush1.msra.mxu0 0.0
        %5541 = vmatprep.subr.mxu0 0.0
        %5542 = vmatpush1.msra.mxu0 0.0
        %5543 = vmatprep.subr.mxu0 0.0
        %5544 = vmatpush1.msra.mxu0 0.0
        %5545 = vmatprep.subr.mxu0 0.0
        %5546 = vmatpush1.msra.mxu0 0.0
        %5547 = vmatprep.subr.mxu0 0.0
        %5548 = vmatpush1.msra.mxu0 0.0
        %5549 = vmatprep.subr.mxu0 0.0
        %5550 = vmatpush1.msra.mxu0 0.0
        %5551 = vmatprep.subr.mxu0 0.0
        %5552 = vmatpush1.msra.mxu0 0.0
        %5553 = vmatprep.mubr.f32.mxu0 0.0
        %5554 = vmatmul.mubr.f32.gmra.mrb[0].mxu0 %v5485
        %v5555 = vpop.f32.mrb[0].mxu0
        %v5556 = vadd.f32 0.0, %v5555
        %v5557 = vpop.f32.mrb[0].mxu0
        %5558 = vdwg.mxu0
        %v5560 = vsel %vm4357, %v4341, 0
        %v5562 = vsel %vm4361, %v1586, 0
        %5564 = vmatprep.subr.mxu0 0.0
        %5565 = vmatpush1.msra.mxu0 %v5562
        %5566 = vmatprep.subr.mxu0 0.0
        %5567 = vmatpush1.msra.mxu0 0.0
        %5568 = vmatprep.subr.mxu0 0.0
        %5569 = vmatpush1.msra.mxu0 0.0
        %5570 = vmatprep.subr.mxu0 0.0
        %5571 = vmatpush1.msra.mxu0 0.0
        %5572 = vmatprep.subr.mxu0 0.0
        %5573 = vmatpush1.msra.mxu0 0.0
        %5574 = vmatprep.subr.mxu0 0.0
        %5575 = vmatpush1.msra.mxu0 0.0
        %5576 = vmatprep.subr.mxu0 0.0
        %5577 = vmatpush1.msra.mxu0 0.0
        %5578 = vmatprep.subr.mxu0 0.0
        %5579 = vmatpush1.msra.mxu0 0.0
        %5580 = vmatprep.subr.mxu0 0.0
        %5581 = vmatpush1.msra.mxu0 0.0
        %5582 = vmatprep.subr.mxu0 0.0
        %5583 = vmatpush1.msra.mxu0 0.0
        %5584 = vmatprep.subr.mxu0 0.0
        %5585 = vmatpush1.msra.mxu0 0.0
        %5586 = vmatprep.subr.mxu0 0.0
        %5587 = vmatpush1.msra.mxu0 0.0
        %5588 = vmatprep.subr.mxu0 0.0
        %5589 = vmatpush1.msra.mxu0 0.0
        %5590 = vmatprep.subr.mxu0 0.0
        %5591 = vmatpush1.msra.mxu0 0.0
        %5592 = vmatprep.subr.mxu0 0.0
        %5593 = vmatpush1.msra.mxu0 0.0
        %5594 = vmatprep.subr.mxu0 0.0
        %5595 = vmatpush1.msra.mxu0 0.0
        %5596 = vmatprep.subr.mxu0 0.0
        %5597 = vmatpush1.msra.mxu0 0.0
        %5598 = vmatprep.subr.mxu0 0.0
        %5599 = vmatpush1.msra.mxu0 0.0
        %5600 = vmatprep.subr.mxu0 0.0
        %5601 = vmatpush1.msra.mxu0 0.0
        %5602 = vmatprep.subr.mxu0 0.0
        %5603 = vmatpush1.msra.mxu0 0.0
        %5604 = vmatprep.subr.mxu0 0.0
        %5605 = vmatpush1.msra.mxu0 0.0
        %5606 = vmatprep.subr.mxu0 0.0
        %5607 = vmatpush1.msra.mxu0 0.0
        %5608 = vmatprep.subr.mxu0 0.0
        %5609 = vmatpush1.msra.mxu0 0.0
        %5610 = vmatprep.subr.mxu0 0.0
        %5611 = vmatpush1.msra.mxu0 0.0
        %5612 = vmatprep.subr.mxu0 0.0
        %5613 = vmatpush1.msra.mxu0 0.0
        %5614 = vmatprep.subr.mxu0 0.0
        %5615 = vmatpush1.msra.mxu0 0.0
        %5616 = vmatprep.subr.mxu0 0.0
        %5617 = vmatpush1.msra.mxu0 0.0
        %5618 = vmatprep.subr.mxu0 0.0
        %5619 = vmatpush1.msra.mxu0 0.0
        %5620 = vmatprep.subr.mxu0 0.0
        %5621 = vmatpush1.msra.mxu0 0.0
        %5622 = vmatprep.subr.mxu0 0.0
        %5623 = vmatpush1.msra.mxu0 0.0
        %5624 = vmatprep.subr.mxu0 0.0
        %5625 = vmatpush1.msra.mxu0 0.0
        %5626 = vmatprep.subr.mxu0 0.0
        %5627 = vmatpush1.msra.mxu0 0.0
        %5628 = vmatprep.mubr.f32.mxu0 0.0
        %5629 = vmatmul.mubr.f32.gmra.mrb[0].mxu0 %v5560
        %v5630 = vpop.f32.mrb[0].mxu0
        %v5631 = vadd.f32 0.0, %v5630
        %v5632 = vpop.f32.mrb[0].mxu0
        %5633 = vdwg.mxu0
        %v5635 = vsel %vm4357, %v4342, 0
        %v5637 = vsel %vm4361, %v1720, 0
        %5639 = vmatprep.subr.mxu0 0.0
        %5640 = vmatpush1.msra.mxu0 %v5637
        %5641 = vmatprep.subr.mxu0 0.0
        %5642 = vmatpush1.msra.mxu0 0.0
        %5643 = vmatprep.subr.mxu0 0.0
        %5644 = vmatpush1.msra.mxu0 0.0
        %5645 = vmatprep.subr.mxu0 0.0
        %5646 = vmatpush1.msra.mxu0 0.0
        %5647 = vmatprep.subr.mxu0 0.0
        %5648 = vmatpush1.msra.mxu0 0.0
        %5649 = vmatprep.subr.mxu0 0.0
        %5650 = vmatpush1.msra.mxu0 0.0
        %5651 = vmatprep.subr.mxu0 0.0
        %5652 = vmatpush1.msra.mxu0 0.0
        %5653 = vmatprep.subr.mxu0 0.0
        %5654 = vmatpush1.msra.mxu0 0.0
        %5655 = vmatprep.subr.mxu0 0.0
        %5656 = vmatpush1.msra.mxu0 0.0
        %5657 = vmatprep.subr.mxu0 0.0
        %5658 = vmatpush1.msra.mxu0 0.0
        %5659 = vmatprep.subr.mxu0 0.0
        %5660 = vmatpush1.msra.mxu0 0.0
        %5661 = vmatprep.subr.mxu0 0.0
        %5662 = vmatpush1.msra.mxu0 0.0
        %5663 = vmatprep.subr.mxu0 0.0
        %5664 = vmatpush1.msra.mxu0 0.0
        %5665 = vmatprep.subr.mxu0 0.0
        %5666 = vmatpush1.msra.mxu0 0.0
        %5667 = vmatprep.subr.mxu0 0.0
        %5668 = vmatpush1.msra.mxu0 0.0
        %5669 = vmatprep.subr.mxu0 0.0
        %5670 = vmatpush1.msra.mxu0 0.0
        %5671 = vmatprep.subr.mxu0 0.0
        %5672 = vmatpush1.msra.mxu0 0.0
        %5673 = vmatprep.subr.mxu0 0.0
        %5674 = vmatpush1.msra.mxu0 0.0
        %5675 = vmatprep.subr.mxu0 0.0
        %5676 = vmatpush1.msra.mxu0 0.0
        %5677 = vmatprep.subr.mxu0 0.0
        %5678 = vmatpush1.msra.mxu0 0.0
        %5679 = vmatprep.subr.mxu0 0.0
        %5680 = vmatpush1.msra.mxu0 0.0
        %5681 = vmatprep.subr.mxu0 0.0
        %5682 = vmatpush1.msra.mxu0 0.0
        %5683 = vmatprep.subr.mxu0 0.0
        %5684 = vmatpush1.msra.mxu0 0.0
        %5685 = vmatprep.subr.mxu0 0.0
        %5686 = vmatpush1.msra.mxu0 0.0
        %5687 = vmatprep.subr.mxu0 0.0
        %5688 = vmatpush1.msra.mxu0 0.0
        %5689 = vmatprep.subr.mxu0 0.0
        %5690 = vmatpush1.msra.mxu0 0.0
        %5691 = vmatprep.subr.mxu0 0.0
        %5692 = vmatpush1.msra.mxu0 0.0
        %5693 = vmatprep.subr.mxu0 0.0
        %5694 = vmatpush1.msra.mxu0 0.0
        %5695 = vmatprep.subr.mxu0 0.0
        %5696 = vmatpush1.msra.mxu0 0.0
        %5697 = vmatprep.subr.mxu0 0.0
        %5698 = vmatpush1.msra.mxu0 0.0
        %5699 = vmatprep.subr.mxu0 0.0
        %5700 = vmatpush1.msra.mxu0 0.0
        %5701 = vmatprep.subr.mxu0 0.0
        %5702 = vmatpush1.msra.mxu0 0.0
        %5703 = vmatprep.mubr.f32.mxu0 0.0
        %5704 = vmatmul.mubr.f32.gmra.mrb[0].mxu0 %v5635
        %v5705 = vpop.f32.mrb[0].mxu0
        %v5706 = vadd.f32 0.0, %v5705
        %v5707 = vpop.f32.mrb[0].mxu0
        %5708 = vdwg.mxu0
        %v5710 = vsel %vm4357, %v4343, 0
        %v5712 = vsel %vm4361, %v1590, 0
        %5714 = vmatprep.subr.mxu0 0.0
        %5715 = vmatpush1.msra.mxu0 %v5712
        %5716 = vmatprep.subr.mxu0 0.0
        %5717 = vmatpush1.msra.mxu0 0.0
        %5718 = vmatprep.subr.mxu0 0.0
        %5719 = vmatpush1.msra.mxu0 0.0
        %5720 = vmatprep.subr.mxu0 0.0
        %5721 = vmatpush1.msra.mxu0 0.0
        %5722 = vmatprep.subr.mxu0 0.0
        %5723 = vmatpush1.msra.mxu0 0.0
        %5724 = vmatprep.subr.mxu0 0.0
        %5725 = vmatpush1.msra.mxu0 0.0
        %5726 = vmatprep.subr.mxu0 0.0
        %5727 = vmatpush1.msra.mxu0 0.0
        %5728 = vmatprep.subr.mxu0 0.0
        %5729 = vmatpush1.msra.mxu0 0.0
        %5730 = vmatprep.subr.mxu0 0.0
        %5731 = vmatpush1.msra.mxu0 0.0
        %5732 = vmatprep.subr.mxu0 0.0
        %5733 = vmatpush1.msra.mxu0 0.0
        %5734 = vmatprep.subr.mxu0 0.0
        %5735 = vmatpush1.msra.mxu0 0.0
        %5736 = vmatprep.subr.mxu0 0.0
        %5737 = vmatpush1.msra.mxu0 0.0
        %5738 = vmatprep.subr.mxu0 0.0
        %5739 = vmatpush1.msra.mxu0 0.0
        %5740 = vmatprep.subr.mxu0 0.0
        %5741 = vmatpush1.msra.mxu0 0.0
        %5742 = vmatprep.subr.mxu0 0.0
        %5743 = vmatpush1.msra.mxu0 0.0
        %5744 = vmatprep.subr.mxu0 0.0
        %5745 = vmatpush1.msra.mxu0 0.0
        %5746 = vmatprep.subr.mxu0 0.0
        %5747 = vmatpush1.msra.mxu0 0.0
        %5748 = vmatprep.subr.mxu0 0.0
        %5749 = vmatpush1.msra.mxu0 0.0
        %5750 = vmatprep.subr.mxu0 0.0
        %5751 = vmatpush1.msra.mxu0 0.0
        %5752 = vmatprep.subr.mxu0 0.0
        %5753 = vmatpush1.msra.mxu0 0.0
        %5754 = vmatprep.subr.mxu0 0.0
        %5755 = vmatpush1.msra.mxu0 0.0
        %5756 = vmatprep.subr.mxu0 0.0
        %5757 = vmatpush1.msra.mxu0 0.0
        %5758 = vmatprep.subr.mxu0 0.0
        %5759 = vmatpush1.msra.mxu0 0.0
        %5760 = vmatprep.subr.mxu0 0.0
        %5761 = vmatpush1.msra.mxu0 0.0
        %5762 = vmatprep.subr.mxu0 0.0
        %5763 = vmatpush1.msra.mxu0 0.0
        %5764 = vmatprep.subr.mxu0 0.0
        %5765 = vmatpush1.msra.mxu0 0.0
        %5766 = vmatprep.subr.mxu0 0.0
        %5767 = vmatpush1.msra.mxu0 0.0
        %5768 = vmatprep.subr.mxu0 0.0
        %5769 = vmatpush1.msra.mxu0 0.0
        %5770 = vmatprep.subr.mxu0 0.0
        %5771 = vmatpush1.msra.mxu0 0.0
        %5772 = vmatprep.subr.mxu0 0.0
        %5773 = vmatpush1.msra.mxu0 0.0
        %5774 = vmatprep.subr.mxu0 0.0
        %5775 = vmatpush1.msra.mxu0 0.0
        %5776 = vmatprep.subr.mxu0 0.0
        %5777 = vmatpush1.msra.mxu0 0.0
        %5778 = vmatprep.mubr.f32.mxu0 0.0
        %5779 = vmatmul.mubr.f32.gmra.mrb[0].mxu0 %v5710
        %v5780 = vpop.f32.mrb[0].mxu0
        %v5781 = vadd.f32 0.0, %v5780
        %v5782 = vpop.f32.mrb[0].mxu0
        %5783 = vdwg.mxu0
        %v5785 = vsel %vm4357, %v4344, 0
        %v5787 = vsel %vm4361, %v1721, 0
        %5789 = vmatprep.subr.mxu0 0.0
        %5790 = vmatpush1.msra.mxu0 %v5787
        %5791 = vmatprep.subr.mxu0 0.0
        %5792 = vmatpush1.msra.mxu0 0.0
        %5793 = vmatprep.subr.mxu0 0.0
        %5794 = vmatpush1.msra.mxu0 0.0
        %5795 = vmatprep.subr.mxu0 0.0
        %5796 = vmatpush1.msra.mxu0 0.0
        %5797 = vmatprep.subr.mxu0 0.0
        %5798 = vmatpush1.msra.mxu0 0.0
        %5799 = vmatprep.subr.mxu0 0.0
        %5800 = vmatpush1.msra.mxu0 0.0
        %5801 = vmatprep.subr.mxu0 0.0
        %5802 = vmatpush1.msra.mxu0 0.0
        %5803 = vmatprep.subr.mxu0 0.0
        %5804 = vmatpush1.msra.mxu0 0.0
        %5805 = vmatprep.subr.mxu0 0.0
        %5806 = vmatpush1.msra.mxu0 0.0
        %5807 = vmatprep.subr.mxu0 0.0
        %5808 = vmatpush1.msra.mxu0 0.0
        %5809 = vmatprep.subr.mxu0 0.0
        %5810 = vmatpush1.msra.mxu0 0.0
        %5811 = vmatprep.subr.mxu0 0.0
        %5812 = vmatpush1.msra.mxu0 0.0
        %5813 = vmatprep.subr.mxu0 0.0
        %5814 = vmatpush1.msra.mxu0 0.0
        %5815 = vmatprep.subr.mxu0 0.0
        %5816 = vmatpush1.msra.mxu0 0.0
        %5817 = vmatprep.subr.mxu0 0.0
        %5818 = vmatpush1.msra.mxu0 0.0
        %5819 = vmatprep.subr.mxu0 0.0
        %5820 = vmatpush1.msra.mxu0 0.0
        %5821 = vmatprep.subr.mxu0 0.0
        %5822 = vmatpush1.msra.mxu0 0.0
        %5823 = vmatprep.subr.mxu0 0.0
        %5824 = vmatpush1.msra.mxu0 0.0
        %5825 = vmatprep.subr.mxu0 0.0
        %5826 = vmatpush1.msra.mxu0 0.0
        %5827 = vmatprep.subr.mxu0 0.0
        %5828 = vmatpush1.msra.mxu0 0.0
        %5829 = vmatprep.subr.mxu0 0.0
        %5830 = vmatpush1.msra.mxu0 0.0
        %5831 = vmatprep.subr.mxu0 0.0
        %5832 = vmatpush1.msra.mxu0 0.0
        %5833 = vmatprep.subr.mxu0 0.0
        %5834 = vmatpush1.msra.mxu0 0.0
        %5835 = vmatprep.subr.mxu0 0.0
        %5836 = vmatpush1.msra.mxu0 0.0
        %5837 = vmatprep.subr.mxu0 0.0
        %5838 = vmatpush1.msra.mxu0 0.0
        %5839 = vmatprep.subr.mxu0 0.0
        %5840 = vmatpush1.msra.mxu0 0.0
        %5841 = vmatprep.subr.mxu0 0.0
        %5842 = vmatpush1.msra.mxu0 0.0
        %5843 = vmatprep.subr.mxu0 0.0
        %5844 = vmatpush1.msra.mxu0 0.0
        %5845 = vmatprep.subr.mxu0 0.0
        %5846 = vmatpush1.msra.mxu0 0.0
        %5847 = vmatprep.subr.mxu0 0.0
        %5848 = vmatpush1.msra.mxu0 0.0
        %5849 = vmatprep.subr.mxu0 0.0
        %5850 = vmatpush1.msra.mxu0 0.0
        %5851 = vmatprep.subr.mxu0 0.0
        %5852 = vmatpush1.msra.mxu0 0.0
        %5853 = vmatprep.mubr.f32.mxu0 0.0
        %5854 = vmatmul.mubr.f32.gmra.mrb[0].mxu0 %v5785
        %v5855 = vpop.f32.mrb[0].mxu0
        %v5856 = vadd.f32 0.0, %v5855
        %v5857 = vpop.f32.mrb[0].mxu0
        %5858 = vdwg.mxu0
        %v5860 = vsel %vm4357, %v4345, 0
        %v5862 = vsel %vm4361, %v1596, 0
        %5864 = vmatprep.subr.mxu0 0.0
        %5865 = vmatpush1.msra.mxu0 %v5862
        %5866 = vmatprep.subr.mxu0 0.0
        %5867 = vmatpush1.msra.mxu0 0.0
        %5868 = vmatprep.subr.mxu0 0.0
        %5869 = vmatpush1.msra.mxu0 0.0
        %5870 = vmatprep.subr.mxu0 0.0
        %5871 = vmatpush1.msra.mxu0 0.0
        %5872 = vmatprep.subr.mxu0 0.0
        %5873 = vmatpush1.msra.mxu0 0.0
        %5874 = vmatprep.subr.mxu0 0.0
        %5875 = vmatpush1.msra.mxu0 0.0
        %5876 = vmatprep.subr.mxu0 0.0
        %5877 = vmatpush1.msra.mxu0 0.0
        %5878 = vmatprep.subr.mxu0 0.0
        %5879 = vmatpush1.msra.mxu0 0.0
        %5880 = vmatprep.subr.mxu0 0.0
        %5881 = vmatpush1.msra.mxu0 0.0
        %5882 = vmatprep.subr.mxu0 0.0
        %5883 = vmatpush1.msra.mxu0 0.0
        %5884 = vmatprep.subr.mxu0 0.0
        %5885 = vmatpush1.msra.mxu0 0.0
        %5886 = vmatprep.subr.mxu0 0.0
        %5887 = vmatpush1.msra.mxu0 0.0
        %5888 = vmatprep.subr.mxu0 0.0
        %5889 = vmatpush1.msra.mxu0 0.0
        %5890 = vmatprep.subr.mxu0 0.0
        %5891 = vmatpush1.msra.mxu0 0.0
        %5892 = vmatprep.subr.mxu0 0.0
        %5893 = vmatpush1.msra.mxu0 0.0
        %5894 = vmatprep.subr.mxu0 0.0
        %5895 = vmatpush1.msra.mxu0 0.0
        %5896 = vmatprep.subr.mxu0 0.0
        %5897 = vmatpush1.msra.mxu0 0.0
        %5898 = vmatprep.subr.mxu0 0.0
        %5899 = vmatpush1.msra.mxu0 0.0
        %5900 = vmatprep.subr.mxu0 0.0
        %5901 = vmatpush1.msra.mxu0 0.0
        %5902 = vmatprep.subr.mxu0 0.0
        %5903 = vmatpush1.msra.mxu0 0.0
        %5904 = vmatprep.subr.mxu0 0.0
        %5905 = vmatpush1.msra.mxu0 0.0
        %5906 = vmatprep.subr.mxu0 0.0
        %5907 = vmatpush1.msra.mxu0 0.0
        %5908 = vmatprep.subr.mxu0 0.0
        %5909 = vmatpush1.msra.mxu0 0.0
        %5910 = vmatprep.subr.mxu0 0.0
        %5911 = vmatpush1.msra.mxu0 0.0
        %5912 = vmatprep.subr.mxu0 0.0
        %5913 = vmatpush1.msra.mxu0 0.0
        %5914 = vmatprep.subr.mxu0 0.0
        %5915 = vmatpush1.msra.mxu0 0.0
        %5916 = vmatprep.subr.mxu0 0.0
        %5917 = vmatpush1.msra.mxu0 0.0
        %5918 = vmatprep.subr.mxu0 0.0
        %5919 = vmatpush1.msra.mxu0 0.0
        %5920 = vmatprep.subr.mxu0 0.0
        %5921 = vmatpush1.msra.mxu0 0.0
        %5922 = vmatprep.subr.mxu0 0.0
        %5923 = vmatpush1.msra.mxu0 0.0
        %5924 = vmatprep.subr.mxu0 0.0
        %5925 = vmatpush1.msra.mxu0 0.0
        %5926 = vmatprep.subr.mxu0 0.0
        %5927 = vmatpush1.msra.mxu0 0.0
        %5928 = vmatprep.mubr.f32.mxu0 0.0
        %5929 = vmatmul.mubr.f32.gmra.mrb[0].mxu0 %v5860
        %v5930 = vpop.f32.mrb[0].mxu0
        %v5931 = vadd.f32 0.0, %v5930
        %v5932 = vpop.f32.mrb[0].mxu0
        %5933 = vdwg.mxu0
        %v5935 = vsel %vm4357, %v4346, 0
        %v5937 = vsel %vm4361, %v1722, 0
        %5939 = vmatprep.subr.mxu0 0.0
        %5940 = vmatpush1.msra.mxu0 %v5937
        %5941 = vmatprep.subr.mxu0 0.0
        %5942 = vmatpush1.msra.mxu0 0.0
        %5943 = vmatprep.subr.mxu0 0.0
        %5944 = vmatpush1.msra.mxu0 0.0
        %5945 = vmatprep.subr.mxu0 0.0
        %5946 = vmatpush1.msra.mxu0 0.0
        %5947 = vmatprep.subr.mxu0 0.0
        %5948 = vmatpush1.msra.mxu0 0.0
        %5949 = vmatprep.subr.mxu0 0.0
        %5950 = vmatpush1.msra.mxu0 0.0
        %5951 = vmatprep.subr.mxu0 0.0
        %5952 = vmatpush1.msra.mxu0 0.0
        %5953 = vmatprep.subr.mxu0 0.0
        %5954 = vmatpush1.msra.mxu0 0.0
        %5955 = vmatprep.subr.mxu0 0.0
        %5956 = vmatpush1.msra.mxu0 0.0
        %5957 = vmatprep.subr.mxu0 0.0
        %5958 = vmatpush1.msra.mxu0 0.0
        %5959 = vmatprep.subr.mxu0 0.0
        %5960 = vmatpush1.msra.mxu0 0.0
        %5961 = vmatprep.subr.mxu0 0.0
        %5962 = vmatpush1.msra.mxu0 0.0
        %5963 = vmatprep.subr.mxu0 0.0
        %5964 = vmatpush1.msra.mxu0 0.0
        %5965 = vmatprep.subr.mxu0 0.0
        %5966 = vmatpush1.msra.mxu0 0.0
        %5967 = vmatprep.subr.mxu0 0.0
        %5968 = vmatpush1.msra.mxu0 0.0
        %5969 = vmatprep.subr.mxu0 0.0
        %5970 = vmatpush1.msra.mxu0 0.0
        %5971 = vmatprep.subr.mxu0 0.0
        %5972 = vmatpush1.msra.mxu0 0.0
        %5973 = vmatprep.subr.mxu0 0.0
        %5974 = vmatpush1.msra.mxu0 0.0
        %5975 = vmatprep.subr.mxu0 0.0
        %5976 = vmatpush1.msra.mxu0 0.0
        %5977 = vmatprep.subr.mxu0 0.0
        %5978 = vmatpush1.msra.mxu0 0.0
        %5979 = vmatprep.subr.mxu0 0.0
        %5980 = vmatpush1.msra.mxu0 0.0
        %5981 = vmatprep.subr.mxu0 0.0
        %5982 = vmatpush1.msra.mxu0 0.0
        %5983 = vmatprep.subr.mxu0 0.0
        %5984 = vmatpush1.msra.mxu0 0.0
        %5985 = vmatprep.subr.mxu0 0.0
        %5986 = vmatpush1.msra.mxu0 0.0
        %5987 = vmatprep.subr.mxu0 0.0
        %5988 = vmatpush1.msra.mxu0 0.0
        %5989 = vmatprep.subr.mxu0 0.0
        %5990 = vmatpush1.msra.mxu0 0.0
        %5991 = vmatprep.subr.mxu0 0.0
        %5992 = vmatpush1.msra.mxu0 0.0
        %5993 = vmatprep.subr.mxu0 0.0
        %5994 = vmatpush1.msra.mxu0 0.0
        %5995 = vmatprep.subr.mxu0 0.0
        %5996 = vmatpush1.msra.mxu0 0.0
        %5997 = vmatprep.subr.mxu0 0.0
        %5998 = vmatpush1.msra.mxu0 0.0
        %5999 = vmatprep.subr.mxu0 0.0
        %6000 = vmatpush1.msra.mxu0 0.0
        %6001 = vmatprep.subr.mxu0 0.0
        %6002 = vmatpush1.msra.mxu0 0.0
        %6003 = vmatprep.mubr.f32.mxu0 0.0
        %6004 = vmatmul.mubr.f32.gmra.mrb[0].mxu0 %v5935
        %v6005 = vpop.f32.mrb[0].mxu0
        %v6006 = vadd.f32 0.0, %v6005
        %v6007 = vpop.f32.mrb[0].mxu0
        %6008 = vdwg.mxu0
        %v6010 = vsel %vm4357, %v4347, 0
        %v6012 = vsel %vm4361, %v1600, 0
        %6014 = vmatprep.subr.mxu0 0.0
        %6015 = vmatpush1.msra.mxu0 %v6012
        %6016 = vmatprep.subr.mxu0 0.0
        %6017 = vmatpush1.msra.mxu0 0.0
        %6018 = vmatprep.subr.mxu0 0.0
        %6019 = vmatpush1.msra.mxu0 0.0
        %6020 = vmatprep.subr.mxu0 0.0
        %6021 = vmatpush1.msra.mxu0 0.0
        %6022 = vmatprep.subr.mxu0 0.0
        %6023 = vmatpush1.msra.mxu0 0.0
        %6024 = vmatprep.subr.mxu0 0.0
        %6025 = vmatpush1.msra.mxu0 0.0
        %6026 = vmatprep.subr.mxu0 0.0
        %6027 = vmatpush1.msra.mxu0 0.0
        %6028 = vmatprep.subr.mxu0 0.0
        %6029 = vmatpush1.msra.mxu0 0.0
        %6030 = vmatprep.subr.mxu0 0.0
        %6031 = vmatpush1.msra.mxu0 0.0
        %6032 = vmatprep.subr.mxu0 0.0
        %6033 = vmatpush1.msra.mxu0 0.0
        %6034 = vmatprep.subr.mxu0 0.0
        %6035 = vmatpush1.msra.mxu0 0.0
        %6036 = vmatprep.subr.mxu0 0.0
        %6037 = vmatpush1.msra.mxu0 0.0
        %6038 = vmatprep.subr.mxu0 0.0
        %6039 = vmatpush1.msra.mxu0 0.0
        %6040 = vmatprep.subr.mxu0 0.0
        %6041 = vmatpush1.msra.mxu0 0.0
        %6042 = vmatprep.subr.mxu0 0.0
        %6043 = vmatpush1.msra.mxu0 0.0
        %6044 = vmatprep.subr.mxu0 0.0
        %6045 = vmatpush1.msra.mxu0 0.0
        %6046 = vmatprep.subr.mxu0 0.0
        %6047 = vmatpush1.msra.mxu0 0.0
        %6048 = vmatprep.subr.mxu0 0.0
        %6049 = vmatpush1.msra.mxu0 0.0
        %6050 = vmatprep.subr.mxu0 0.0
        %6051 = vmatpush1.msra.mxu0 0.0
        %6052 = vmatprep.subr.mxu0 0.0
        %6053 = vmatpush1.msra.mxu0 0.0
        %6054 = vmatprep.subr.mxu0 0.0
        %6055 = vmatpush1.msra.mxu0 0.0
        %6056 = vmatprep.subr.mxu0 0.0
        %6057 = vmatpush1.msra.mxu0 0.0
        %6058 = vmatprep.subr.mxu0 0.0
        %6059 = vmatpush1.msra.mxu0 0.0
        %6060 = vmatprep.subr.mxu0 0.0
        %6061 = vmatpush1.msra.mxu0 0.0
        %6062 = vmatprep.subr.mxu0 0.0
        %6063 = vmatpush1.msra.mxu0 0.0
        %6064 = vmatprep.subr.mxu0 0.0
        %6065 = vmatpush1.msra.mxu0 0.0
        %6066 = vmatprep.subr.mxu0 0.0
        %6067 = vmatpush1.msra.mxu0 0.0
        %6068 = vmatprep.subr.mxu0 0.0
        %6069 = vmatpush1.msra.mxu0 0.0
        %6070 = vmatprep.subr.mxu0 0.0
        %6071 = vmatpush1.msra.mxu0 0.0
        %6072 = vmatprep.subr.mxu0 0.0
        %6073 = vmatpush1.msra.mxu0 0.0
        %6074 = vmatprep.subr.mxu0 0.0
        %6075 = vmatpush1.msra.mxu0 0.0
        %6076 = vmatprep.subr.mxu0 0.0
        %6077 = vmatpush1.msra.mxu0 0.0
        %6078 = vmatprep.mubr.f32.mxu0 0.0
        %6079 = vmatmul.mubr.f32.gmra.mrb[0].mxu0 %v6010
        %v6080 = vpop.f32.mrb[0].mxu0
        %v6081 = vadd.f32 0.0, %v6080
        %v6082 = vpop.f32.mrb[0].mxu0
        %6083 = vdwg.mxu0
        %v6085 = vsel %vm4357, %v4348, 0
        %v6087 = vsel %vm4361, %v1723, 0
        %6089 = vmatprep.subr.mxu0 0.0
        %6090 = vmatpush1.msra.mxu0 %v6087
        %6091 = vmatprep.subr.mxu0 0.0
        %6092 = vmatpush1.msra.mxu0 0.0
        %6093 = vmatprep.subr.mxu0 0.0
        %6094 = vmatpush1.msra.mxu0 0.0
        %6095 = vmatprep.subr.mxu0 0.0
        %6096 = vmatpush1.msra.mxu0 0.0
        %6097 = vmatprep.subr.mxu0 0.0
        %6098 = vmatpush1.msra.mxu0 0.0
        %6099 = vmatprep.subr.mxu0 0.0
        %6100 = vmatpush1.msra.mxu0 0.0
        %6101 = vmatprep.subr.mxu0 0.0
        %6102 = vmatpush1.msra.mxu0 0.0
        %6103 = vmatprep.subr.mxu0 0.0
        %6104 = vmatpush1.msra.mxu0 0.0
        %6105 = vmatprep.subr.mxu0 0.0
        %6106 = vmatpush1.msra.mxu0 0.0
        %6107 = vmatprep.subr.mxu0 0.0
        %6108 = vmatpush1.msra.mxu0 0.0
        %6109 = vmatprep.subr.mxu0 0.0
        %6110 = vmatpush1.msra.mxu0 0.0
        %6111 = vmatprep.subr.mxu0 0.0
        %6112 = vmatpush1.msra.mxu0 0.0
        %6113 = vmatprep.subr.mxu0 0.0
        %6114 = vmatpush1.msra.mxu0 0.0
        %6115 = vmatprep.subr.mxu0 0.0
        %6116 = vmatpush1.msra.mxu0 0.0
        %6117 = vmatprep.subr.mxu0 0.0
        %6118 = vmatpush1.msra.mxu0 0.0
        %6119 = vmatprep.subr.mxu0 0.0
        %6120 = vmatpush1.msra.mxu0 0.0
        %6121 = vmatprep.subr.mxu0 0.0
        %6122 = vmatpush1.msra.mxu0 0.0
        %6123 = vmatprep.subr.mxu0 0.0
        %6124 = vmatpush1.msra.mxu0 0.0
        %6125 = vmatprep.subr.mxu0 0.0
        %6126 = vmatpush1.msra.mxu0 0.0
        %6127 = vmatprep.subr.mxu0 0.0
        %6128 = vmatpush1.msra.mxu0 0.0
        %6129 = vmatprep.subr.mxu0 0.0
        %6130 = vmatpush1.msra.mxu0 0.0
        %6131 = vmatprep.subr.mxu0 0.0
        %6132 = vmatpush1.msra.mxu0 0.0
        %6133 = vmatprep.subr.mxu0 0.0
        %6134 = vmatpush1.msra.mxu0 0.0
        %6135 = vmatprep.subr.mxu0 0.0
        %6136 = vmatpush1.msra.mxu0 0.0
        %6137 = vmatprep.subr.mxu0 0.0
        %6138 = vmatpush1.msra.mxu0 0.0
        %6139 = vmatprep.subr.mxu0 0.0
        %6140 = vmatpush1.msra.mxu0 0.0
        %6141 = vmatprep.subr.mxu0 0.0
        %6142 = vmatpush1.msra.mxu0 0.0
        %6143 = vmatprep.subr.mxu0 0.0
        %6144 = vmatpush1.msra.mxu0 0.0
        %6145 = vmatprep.subr.mxu0 0.0
        %6146 = vmatpush1.msra.mxu0 0.0
        %6147 = vmatprep.subr.mxu0 0.0
        %6148 = vmatpush1.msra.mxu0 0.0
        %6149 = vmatprep.subr.mxu0 0.0
        %6150 = vmatpush1.msra.mxu0 0.0
        %6151 = vmatprep.subr.mxu0 0.0
        %6152 = vmatpush1.msra.mxu0 0.0
        %6153 = vmatprep.mubr.f32.mxu0 0.0
        %6154 = vmatmul.mubr.f32.gmra.mrb[0].mxu0 %v6085
        %v6155 = vpop.f32.mrb[0].mxu0
        %v6156 = vadd.f32 0.0, %v6155
        %v6157 = vpop.f32.mrb[0].mxu0
        %6158 = vdwg.mxu0
        %v6160 = vsel %vm4357, %v4349, 0
        %v6162 = vsel %vm4361, %v1588, 0
        %6164 = vmatprep.subr.mxu0 0.0
        %6165 = vmatpush1.msra.mxu0 %v6162
        %6166 = vmatprep.subr.mxu0 0.0
        %6167 = vmatpush1.msra.mxu0 0.0
        %6168 = vmatprep.subr.mxu0 0.0
        %6169 = vmatpush1.msra.mxu0 0.0
        %6170 = vmatprep.subr.mxu0 0.0
        %6171 = vmatpush1.msra.mxu0 0.0
        %6172 = vmatprep.subr.mxu0 0.0
        %6173 = vmatpush1.msra.mxu0 0.0
        %6174 = vmatprep.subr.mxu0 0.0
        %6175 = vmatpush1.msra.mxu0 0.0
        %6176 = vmatprep.subr.mxu0 0.0
        %6177 = vmatpush1.msra.mxu0 0.0
        %6178 = vmatprep.subr.mxu0 0.0
        %6179 = vmatpush1.msra.mxu0 0.0
        %6180 = vmatprep.subr.mxu0 0.0
        %6181 = vmatpush1.msra.mxu0 0.0
        %6182 = vmatprep.subr.mxu0 0.0
        %6183 = vmatpush1.msra.mxu0 0.0
        %6184 = vmatprep.subr.mxu0 0.0
        %6185 = vmatpush1.msra.mxu0 0.0
        %6186 = vmatprep.subr.mxu0 0.0
        %6187 = vmatpush1.msra.mxu0 0.0
        %6188 = vmatprep.subr.mxu0 0.0
        %6189 = vmatpush1.msra.mxu0 0.0
        %6190 = vmatprep.subr.mxu0 0.0
        %6191 = vmatpush1.msra.mxu0 0.0
        %6192 = vmatprep.subr.mxu0 0.0
        %6193 = vmatpush1.msra.mxu0 0.0
        %6194 = vmatprep.subr.mxu0 0.0
        %6195 = vmatpush1.msra.mxu0 0.0
        %6196 = vmatprep.subr.mxu0 0.0
        %6197 = vmatpush1.msra.mxu0 0.0
        %6198 = vmatprep.subr.mxu0 0.0
        %6199 = vmatpush1.msra.mxu0 0.0
        %6200 = vmatprep.subr.mxu0 0.0
        %6201 = vmatpush1.msra.mxu0 0.0
        %6202 = vmatprep.subr.mxu0 0.0
        %6203 = vmatpush1.msra.mxu0 0.0
        %6204 = vmatprep.subr.mxu0 0.0
        %6205 = vmatpush1.msra.mxu0 0.0
        %6206 = vmatprep.subr.mxu0 0.0
        %6207 = vmatpush1.msra.mxu0 0.0
        %6208 = vmatprep.subr.mxu0 0.0
        %6209 = vmatpush1.msra.mxu0 0.0
        %6210 = vmatprep.subr.mxu0 0.0
        %6211 = vmatpush1.msra.mxu0 0.0
        %6212 = vmatprep.subr.mxu0 0.0
        %6213 = vmatpush1.msra.mxu0 0.0
        %6214 = vmatprep.subr.mxu0 0.0
        %6215 = vmatpush1.msra.mxu0 0.0
        %6216 = vmatprep.subr.mxu0 0.0
        %6217 = vmatpush1.msra.mxu0 0.0
        %6218 = vmatprep.subr.mxu0 0.0
        %6219 = vmatpush1.msra.mxu0 0.0
        %6220 = vmatprep.subr.mxu0 0.0
        %6221 = vmatpush1.msra.mxu0 0.0
        %6222 = vmatprep.subr.mxu0 0.0
        %6223 = vmatpush1.msra.mxu0 0.0
        %6224 = vmatprep.subr.mxu0 0.0
        %6225 = vmatpush1.msra.mxu0 0.0
        %6226 = vmatprep.subr.mxu0 0.0
        %6227 = vmatpush1.msra.mxu0 0.0
        %6228 = vmatprep.mubr.f32.mxu0 0.0
        %6229 = vmatmul.mubr.f32.gmra.mrb[0].mxu0 %v6160
        %v6230 = vpop.f32.mrb[0].mxu0
        %v6231 = vadd.f32 0.0, %v6230
        %v6232 = vpop.f32.mrb[0].mxu0
        %6233 = vdwg.mxu0
        %v6235 = vsel %vm4357, %v4350, 0
        %v6237 = vsel %vm4361, %v1728, 0
        %6239 = vmatprep.subr.mxu0 0.0
        %6240 = vmatpush1.msra.mxu0 %v6237
        %6241 = vmatprep.subr.mxu0 0.0
        %6242 = vmatpush1.msra.mxu0 0.0
        %6243 = vmatprep.subr.mxu0 0.0
        %6244 = vmatpush1.msra.mxu0 0.0
        %6245 = vmatprep.subr.mxu0 0.0
        %6246 = vmatpush1.msra.mxu0 0.0
        %6247 = vmatprep.subr.mxu0 0.0
        %6248 = vmatpush1.msra.mxu0 0.0
        %6249 = vmatprep.subr.mxu0 0.0
        %6250 = vmatpush1.msra.mxu0 0.0
        %6251 = vmatprep.subr.mxu0 0.0
        %6252 = vmatpush1.msra.mxu0 0.0
        %6253 = vmatprep.subr.mxu0 0.0
        %6254 = vmatpush1.msra.mxu0 0.0
        %6255 = vmatprep.subr.mxu0 0.0
        %6256 = vmatpush1.msra.mxu0 0.0
        %6257 = vmatprep.subr.mxu0 0.0
        %6258 = vmatpush1.msra.mxu0 0.0
        %6259 = vmatprep.subr.mxu0 0.0
        %6260 = vmatpush1.msra.mxu0 0.0
        %6261 = vmatprep.subr.mxu0 0.0
        %6262 = vmatpush1.msra.mxu0 0.0
        %6263 = vmatprep.subr.mxu0 0.0
        %6264 = vmatpush1.msra.mxu0 0.0
        %6265 = vmatprep.subr.mxu0 0.0
        %6266 = vmatpush1.msra.mxu0 0.0
        %6267 = vmatprep.subr.mxu0 0.0
        %6268 = vmatpush1.msra.mxu0 0.0
        %6269 = vmatprep.subr.mxu0 0.0
        %6270 = vmatpush1.msra.mxu0 0.0
        %6271 = vmatprep.subr.mxu0 0.0
        %6272 = vmatpush1.msra.mxu0 0.0
        %6273 = vmatprep.subr.mxu0 0.0
        %6274 = vmatpush1.msra.mxu0 0.0
        %6275 = vmatprep.subr.mxu0 0.0
        %6276 = vmatpush1.msra.mxu0 0.0
        %6277 = vmatprep.subr.mxu0 0.0
        %6278 = vmatpush1.msra.mxu0 0.0
        %6279 = vmatprep.subr.mxu0 0.0
        %6280 = vmatpush1.msra.mxu0 0.0
        %6281 = vmatprep.subr.mxu0 0.0
        %6282 = vmatpush1.msra.mxu0 0.0
        %6283 = vmatprep.subr.mxu0 0.0
        %6284 = vmatpush1.msra.mxu0 0.0
        %6285 = vmatprep.subr.mxu0 0.0
        %6286 = vmatpush1.msra.mxu0 0.0
        %6287 = vmatprep.subr.mxu0 0.0
        %6288 = vmatpush1.msra.mxu0 0.0
        %6289 = vmatprep.subr.mxu0 0.0
        %6290 = vmatpush1.msra.mxu0 0.0
        %6291 = vmatprep.subr.mxu0 0.0
        %6292 = vmatpush1.msra.mxu0 0.0
        %6293 = vmatprep.subr.mxu0 0.0
        %6294 = vmatpush1.msra.mxu0 0.0
        %6295 = vmatprep.subr.mxu0 0.0
        %6296 = vmatpush1.msra.mxu0 0.0
        %6297 = vmatprep.subr.mxu0 0.0
        %6298 = vmatpush1.msra.mxu0 0.0
        %6299 = vmatprep.subr.mxu0 0.0
        %6300 = vmatpush1.msra.mxu0 0.0
        %6301 = vmatprep.subr.mxu0 0.0
        %6302 = vmatpush1.msra.mxu0 0.0
        %6303 = vmatprep.mubr.f32.mxu0 0.0
        %6304 = vmatmul.mubr.f32.gmra.mrb[0].mxu0 %v6235
        %v6305 = vpop.f32.mrb[0].mxu0
        %v6306 = vadd.f32 0.0, %v6305
        %v6307 = vpop.f32.mrb[0].mxu0
        %6308 = vdwg.mxu0
        %v6310 = vsel %vm4357, %v4351, 0
        %v6312 = vsel %vm4361, %v1592, 0
        %6314 = vmatprep.subr.mxu0 0.0
        %6315 = vmatpush1.msra.mxu0 %v6312
        %6316 = vmatprep.subr.mxu0 0.0
        %6317 = vmatpush1.msra.mxu0 0.0
        %6318 = vmatprep.subr.mxu0 0.0
        %6319 = vmatpush1.msra.mxu0 0.0
        %6320 = vmatprep.subr.mxu0 0.0
        %6321 = vmatpush1.msra.mxu0 0.0
        %6322 = vmatprep.subr.mxu0 0.0
        %6323 = vmatpush1.msra.mxu0 0.0
        %6324 = vmatprep.subr.mxu0 0.0
        %6325 = vmatpush1.msra.mxu0 0.0
        %6326 = vmatprep.subr.mxu0 0.0
        %6327 = vmatpush1.msra.mxu0 0.0
        %6328 = vmatprep.subr.mxu0 0.0
        %6329 = vmatpush1.msra.mxu0 0.0
        %6330 = vmatprep.subr.mxu0 0.0
        %6331 = vmatpush1.msra.mxu0 0.0
        %6332 = vmatprep.subr.mxu0 0.0
        %6333 = vmatpush1.msra.mxu0 0.0
        %6334 = vmatprep.subr.mxu0 0.0
        %6335 = vmatpush1.msra.mxu0 0.0
        %6336 = vmatprep.subr.mxu0 0.0
        %6337 = vmatpush1.msra.mxu0 0.0
        %6338 = vmatprep.subr.mxu0 0.0
        %6339 = vmatpush1.msra.mxu0 0.0
        %6340 = vmatprep.subr.mxu0 0.0
        %6341 = vmatpush1.msra.mxu0 0.0
        %6342 = vmatprep.subr.mxu0 0.0
        %6343 = vmatpush1.msra.mxu0 0.0
        %6344 = vmatprep.subr.mxu0 0.0
        %6345 = vmatpush1.msra.mxu0 0.0
        %6346 = vmatprep.subr.mxu0 0.0
        %6347 = vmatpush1.msra.mxu0 0.0
        %6348 = vmatprep.subr.mxu0 0.0
        %6349 = vmatpush1.msra.mxu0 0.0
        %6350 = vmatprep.subr.mxu0 0.0
        %6351 = vmatpush1.msra.mxu0 0.0
        %6352 = vmatprep.subr.mxu0 0.0
        %6353 = vmatpush1.msra.mxu0 0.0
        %6354 = vmatprep.subr.mxu0 0.0
        %6355 = vmatpush1.msra.mxu0 0.0
        %6356 = vmatprep.subr.mxu0 0.0
        %6357 = vmatpush1.msra.mxu0 0.0
        %6358 = vmatprep.subr.mxu0 0.0
        %6359 = vmatpush1.msra.mxu0 0.0
        %6360 = vmatprep.subr.mxu0 0.0
        %6361 = vmatpush1.msra.mxu0 0.0
        %6362 = vmatprep.subr.mxu0 0.0
        %6363 = vmatpush1.msra.mxu0 0.0
        %6364 = vmatprep.subr.mxu0 0.0
        %6365 = vmatpush1.msra.mxu0 0.0
        %6366 = vmatprep.subr.mxu0 0.0
        %6367 = vmatpush1.msra.mxu0 0.0
        %6368 = vmatprep.subr.mxu0 0.0
        %6369 = vmatpush1.msra.mxu0 0.0
        %6370 = vmatprep.subr.mxu0 0.0
        %6371 = vmatpush1.msra.mxu0 0.0
        %6372 = vmatprep.subr.mxu0 0.0
        %6373 = vmatpush1.msra.mxu0 0.0
        %6374 = vmatprep.subr.mxu0 0.0
        %6375 = vmatpush1.msra.mxu0 0.0
        %6376 = vmatprep.subr.mxu0 0.0
        %6377 = vmatpush1.msra.mxu0 0.0
        %6378 = vmatprep.mubr.f32.mxu0 0.0
        %6379 = vmatmul.mubr.f32.gmra.mrb[0].mxu0 %v6310
        %v6380 = vpop.f32.mrb[0].mxu0
        %v6381 = vadd.f32 0.0, %v6380
        %v6382 = vpop.f32.mrb[0].mxu0
        %6383 = vdwg.mxu0
        %v6385 = vsel %vm4357, %v4352, 0
        %v6387 = vsel %vm4361, %v1729, 0
        %6389 = vmatprep.subr.mxu0 0.0
        %6390 = vmatpush1.msra.mxu0 %v6387
        %6391 = vmatprep.subr.mxu0 0.0
        %6392 = vmatpush1.msra.mxu0 0.0
        %6393 = vmatprep.subr.mxu0 0.0
        %6394 = vmatpush1.msra.mxu0 0.0
        %6395 = vmatprep.subr.mxu0 0.0
        %6396 = vmatpush1.msra.mxu0 0.0
        %6397 = vmatprep.subr.mxu0 0.0
        %6398 = vmatpush1.msra.mxu0 0.0
        %6399 = vmatprep.subr.mxu0 0.0
        %6400 = vmatpush1.msra.mxu0 0.0
        %6401 = vmatprep.subr.mxu0 0.0
        %6402 = vmatpush1.msra.mxu0 0.0
        %6403 = vmatprep.subr.mxu0 0.0
        %6404 = vmatpush1.msra.mxu0 0.0
        %6405 = vmatprep.subr.mxu0 0.0
        %6406 = vmatpush1.msra.mxu0 0.0
        %6407 = vmatprep.subr.mxu0 0.0
        %6408 = vmatpush1.msra.mxu0 0.0
        %6409 = vmatprep.subr.mxu0 0.0
        %6410 = vmatpush1.msra.mxu0 0.0
        %6411 = vmatprep.subr.mxu0 0.0
        %6412 = vmatpush1.msra.mxu0 0.0
        %6413 = vmatprep.subr.mxu0 0.0
        %6414 = vmatpush1.msra.mxu0 0.0
        %6415 = vmatprep.subr.mxu0 0.0
        %6416 = vmatpush1.msra.mxu0 0.0
        %6417 = vmatprep.subr.mxu0 0.0
        %6418 = vmatpush1.msra.mxu0 0.0
        %6419 = vmatprep.subr.mxu0 0.0
        %6420 = vmatpush1.msra.mxu0 0.0
        %6421 = vmatprep.subr.mxu0 0.0
        %6422 = vmatpush1.msra.mxu0 0.0
        %6423 = vmatprep.subr.mxu0 0.0
        %6424 = vmatpush1.msra.mxu0 0.0
        %6425 = vmatprep.subr.mxu0 0.0
        %6426 = vmatpush1.msra.mxu0 0.0
        %6427 = vmatprep.subr.mxu0 0.0
        %6428 = vmatpush1.msra.mxu0 0.0
        %6429 = vmatprep.subr.mxu0 0.0
        %6430 = vmatpush1.msra.mxu0 0.0
        %6431 = vmatprep.subr.mxu0 0.0
        %6432 = vmatpush1.msra.mxu0 0.0
        %6433 = vmatprep.subr.mxu0 0.0
        %6434 = vmatpush1.msra.mxu0 0.0
        %6435 = vmatprep.subr.mxu0 0.0
        %6436 = vmatpush1.msra.mxu0 0.0
        %6437 = vmatprep.subr.mxu0 0.0
        %6438 = vmatpush1.msra.mxu0 0.0
        %6439 = vmatprep.subr.mxu0 0.0
        %6440 = vmatpush1.msra.mxu0 0.0
        %6441 = vmatprep.subr.mxu0 0.0
        %6442 = vmatpush1.msra.mxu0 0.0
        %6443 = vmatprep.subr.mxu0 0.0
        %6444 = vmatpush1.msra.mxu0 0.0
        %6445 = vmatprep.subr.mxu0 0.0
        %6446 = vmatpush1.msra.mxu0 0.0
        %6447 = vmatprep.subr.mxu0 0.0
        %6448 = vmatpush1.msra.mxu0 0.0
        %6449 = vmatprep.subr.mxu0 0.0
        %6450 = vmatpush1.msra.mxu0 0.0
        %6451 = vmatprep.subr.mxu0 0.0
        %6452 = vmatpush1.msra.mxu0 0.0
        %6453 = vmatprep.mubr.f32.mxu0 0.0
        %6454 = vmatmul.mubr.f32.gmra.mrb[0].mxu0 %v6385
        %v6455 = vpop.f32.mrb[0].mxu0
        %v6456 = vadd.f32 0.0, %v6455
        %v6457 = vpop.f32.mrb[0].mxu0
        %6458 = vdwg.mxu0
        %v6460 = vsel %vm4357, %v4353, 0
        %v6462 = vsel %vm4361, %v1598, 0
        %6464 = vmatprep.subr.mxu0 0.0
        %6465 = vmatpush1.msra.mxu0 %v6462
        %6466 = vmatprep.subr.mxu0 0.0
        %6467 = vmatpush1.msra.mxu0 0.0
        %6468 = vmatprep.subr.mxu0 0.0
        %6469 = vmatpush1.msra.mxu0 0.0
        %6470 = vmatprep.subr.mxu0 0.0
        %6471 = vmatpush1.msra.mxu0 0.0
        %6472 = vmatprep.subr.mxu0 0.0
        %6473 = vmatpush1.msra.mxu0 0.0
        %6474 = vmatprep.subr.mxu0 0.0
        %6475 = vmatpush1.msra.mxu0 0.0
        %6476 = vmatprep.subr.mxu0 0.0
        %6477 = vmatpush1.msra.mxu0 0.0
        %6478 = vmatprep.subr.mxu0 0.0
        %6479 = vmatpush1.msra.mxu0 0.0
        %6480 = vmatprep.subr.mxu0 0.0
        %6481 = vmatpush1.msra.mxu0 0.0
        %6482 = vmatprep.subr.mxu0 0.0
        %6483 = vmatpush1.msra.mxu0 0.0
        %6484 = vmatprep.subr.mxu0 0.0
        %6485 = vmatpush1.msra.mxu0 0.0
        %6486 = vmatprep.subr.mxu0 0.0
        %6487 = vmatpush1.msra.mxu0 0.0
        %6488 = vmatprep.subr.mxu0 0.0
        %6489 = vmatpush1.msra.mxu0 0.0
        %6490 = vmatprep.subr.mxu0 0.0
        %6491 = vmatpush1.msra.mxu0 0.0
        %6492 = vmatprep.subr.mxu0 0.0
        %6493 = vmatpush1.msra.mxu0 0.0
        %6494 = vmatprep.subr.mxu0 0.0
        %6495 = vmatpush1.msra.mxu0 0.0
        %6496 = vmatprep.subr.mxu0 0.0
        %6497 = vmatpush1.msra.mxu0 0.0
        %6498 = vmatprep.subr.mxu0 0.0
        %6499 = vmatpush1.msra.mxu0 0.0
        %6500 = vmatprep.subr.mxu0 0.0
        %6501 = vmatpush1.msra.mxu0 0.0
        %6502 = vmatprep.subr.mxu0 0.0
        %6503 = vmatpush1.msra.mxu0 0.0
        %6504 = vmatprep.subr.mxu0 0.0
        %6505 = vmatpush1.msra.mxu0 0.0
        %6506 = vmatprep.subr.mxu0 0.0
        %6507 = vmatpush1.msra.mxu0 0.0
        %6508 = vmatprep.subr.mxu0 0.0
        %6509 = vmatpush1.msra.mxu0 0.0
        %6510 = vmatprep.subr.mxu0 0.0
        %6511 = vmatpush1.msra.mxu0 0.0
        %6512 = vmatprep.subr.mxu0 0.0
        %6513 = vmatpush1.msra.mxu0 0.0
        %6514 = vmatprep.subr.mxu0 0.0
        %6515 = vmatpush1.msra.mxu0 0.0
        %6516 = vmatprep.subr.mxu0 0.0
        %6517 = vmatpush1.msra.mxu0 0.0
        %6518 = vmatprep.subr.mxu0 0.0
        %6519 = vmatpush1.msra.mxu0 0.0
        %6520 = vmatprep.subr.mxu0 0.0
        %6521 = vmatpush1.msra.mxu0 0.0
        %6522 = vmatprep.subr.mxu0 0.0
        %6523 = vmatpush1.msra.mxu0 0.0
        %6524 = vmatprep.subr.mxu0 0.0
        %6525 = vmatpush1.msra.mxu0 0.0
        %6526 = vmatprep.subr.mxu0 0.0
        %6527 = vmatpush1.msra.mxu0 0.0
        %6528 = vmatprep.mubr.f32.mxu0 0.0
        %6529 = vmatmul.mubr.f32.gmra.mrb[0].mxu0 %v6460
        %v6530 = vpop.f32.mrb[0].mxu0
        %v6531 = vadd.f32 0.0, %v6530
        %v6532 = vpop.f32.mrb[0].mxu0
        %6533 = vdwg.mxu0
        %v6535 = vsel %vm4357, %v4354, 0
        %v6537 = vsel %vm4361, %v1730, 0
        %6539 = vmatprep.subr.mxu0 0.0
        %6540 = vmatpush1.msra.mxu0 %v6537
        %6541 = vmatprep.subr.mxu0 0.0
        %6542 = vmatpush1.msra.mxu0 0.0
        %6543 = vmatprep.subr.mxu0 0.0
        %6544 = vmatpush1.msra.mxu0 0.0
        %6545 = vmatprep.subr.mxu0 0.0
        %6546 = vmatpush1.msra.mxu0 0.0
        %6547 = vmatprep.subr.mxu0 0.0
        %6548 = vmatpush1.msra.mxu0 0.0
        %6549 = vmatprep.subr.mxu0 0.0
        %6550 = vmatpush1.msra.mxu0 0.0
        %6551 = vmatprep.subr.mxu0 0.0
        %6552 = vmatpush1.msra.mxu0 0.0
        %6553 = vmatprep.subr.mxu0 0.0
        %6554 = vmatpush1.msra.mxu0 0.0
        %6555 = vmatprep.subr.mxu0 0.0
        %6556 = vmatpush1.msra.mxu0 0.0
        %6557 = vmatprep.subr.mxu0 0.0
        %6558 = vmatpush1.msra.mxu0 0.0
        %6559 = vmatprep.subr.mxu0 0.0
        %6560 = vmatpush1.msra.mxu0 0.0
        %6561 = vmatprep.subr.mxu0 0.0
        %6562 = vmatpush1.msra.mxu0 0.0
        %6563 = vmatprep.subr.mxu0 0.0
        %6564 = vmatpush1.msra.mxu0 0.0
        %6565 = vmatprep.subr.mxu0 0.0
        %6566 = vmatpush1.msra.mxu0 0.0
        %6567 = vmatprep.subr.mxu0 0.0
        %6568 = vmatpush1.msra.mxu0 0.0
        %6569 = vmatprep.subr.mxu0 0.0
        %6570 = vmatpush1.msra.mxu0 0.0
        %6571 = vmatprep.subr.mxu0 0.0
        %6572 = vmatpush1.msra.mxu0 0.0
        %6573 = vmatprep.subr.mxu0 0.0
        %6574 = vmatpush1.msra.mxu0 0.0
        %6575 = vmatprep.subr.mxu0 0.0
        %6576 = vmatpush1.msra.mxu0 0.0
        %6577 = vmatprep.subr.mxu0 0.0
        %6578 = vmatpush1.msra.mxu0 0.0
        %6579 = vmatprep.subr.mxu0 0.0
        %6580 = vmatpush1.msra.mxu0 0.0
        %6581 = vmatprep.subr.mxu0 0.0
        %6582 = vmatpush1.msra.mxu0 0.0
        %6583 = vmatprep.subr.mxu0 0.0
        %6584 = vmatpush1.msra.mxu0 0.0
        %6585 = vmatprep.subr.mxu0 0.0
        %6586 = vmatpush1.msra.mxu0 0.0
        %6587 = vmatprep.subr.mxu0 0.0
        %6588 = vmatpush1.msra.mxu0 0.0
        %6589 = vmatprep.subr.mxu0 0.0
        %6590 = vmatpush1.msra.mxu0 0.0
        %6591 = vmatprep.subr.mxu0 0.0
        %6592 = vmatpush1.msra.mxu0 0.0
        %6593 = vmatprep.subr.mxu0 0.0
        %6594 = vmatpush1.msra.mxu0 0.0
        %6595 = vmatprep.subr.mxu0 0.0
        %6596 = vmatpush1.msra.mxu0 0.0
        %6597 = vmatprep.subr.mxu0 0.0
        %6598 = vmatpush1.msra.mxu0 0.0
        %6599 = vmatprep.subr.mxu0 0.0
        %6600 = vmatpush1.msra.mxu0 0.0
        %6601 = vmatprep.subr.mxu0 0.0
        %6602 = vmatpush1.msra.mxu0 0.0
        %6603 = vmatprep.mubr.f32.mxu0 0.0
        %6604 = vmatmul.mubr.f32.gmra.mrb[0].mxu0 %v6535
        %v6605 = vpop.f32.mrb[0].mxu0
        %v6606 = vadd.f32 0.0, %v6605
        %v6607 = vpop.f32.mrb[0].mxu0
        %6608 = vdwg.mxu0
        %v6610 = vsel %vm4357, %v4355, 0
        %v6612 = vsel %vm4361, %v1602, 0
        %6614 = vmatprep.subr.mxu0 0.0
        %6615 = vmatpush1.msra.mxu0 %v6612
        %6616 = vmatprep.subr.mxu0 0.0
        %6617 = vmatpush1.msra.mxu0 0.0
        %6618 = vmatprep.subr.mxu0 0.0
        %6619 = vmatpush1.msra.mxu0 0.0
        %6620 = vmatprep.subr.mxu0 0.0
        %6621 = vmatpush1.msra.mxu0 0.0
        %6622 = vmatprep.subr.mxu0 0.0
        %6623 = vmatpush1.msra.mxu0 0.0
        %6624 = vmatprep.subr.mxu0 0.0
        %6625 = vmatpush1.msra.mxu0 0.0
        %6626 = vmatprep.subr.mxu0 0.0
        %6627 = vmatpush1.msra.mxu0 0.0
        %6628 = vmatprep.subr.mxu0 0.0
        %6629 = vmatpush1.msra.mxu0 0.0
        %6630 = vmatprep.subr.mxu0 0.0
        %6631 = vmatpush1.msra.mxu0 0.0
        %6632 = vmatprep.subr.mxu0 0.0
        %6633 = vmatpush1.msra.mxu0 0.0
        %6634 = vmatprep.subr.mxu0 0.0
        %6635 = vmatpush1.msra.mxu0 0.0
        %6636 = vmatprep.subr.mxu0 0.0
        %6637 = vmatpush1.msra.mxu0 0.0
        %6638 = vmatprep.subr.mxu0 0.0
        %6639 = vmatpush1.msra.mxu0 0.0
        %6640 = vmatprep.subr.mxu0 0.0
        %6641 = vmatpush1.msra.mxu0 0.0
        %6642 = vmatprep.subr.mxu0 0.0
        %6643 = vmatpush1.msra.mxu0 0.0
        %6644 = vmatprep.subr.mxu0 0.0
        %6645 = vmatpush1.msra.mxu0 0.0
        %6646 = vmatprep.subr.mxu0 0.0
        %6647 = vmatpush1.msra.mxu0 0.0
        %6648 = vmatprep.subr.mxu0 0.0
        %6649 = vmatpush1.msra.mxu0 0.0
        %6650 = vmatprep.subr.mxu0 0.0
        %6651 = vmatpush1.msra.mxu0 0.0
        %6652 = vmatprep.subr.mxu0 0.0
        %6653 = vmatpush1.msra.mxu0 0.0
        %6654 = vmatprep.subr.mxu0 0.0
        %6655 = vmatpush1.msra.mxu0 0.0
        %6656 = vmatprep.subr.mxu0 0.0
        %6657 = vmatpush1.msra.mxu0 0.0
        %6658 = vmatprep.subr.mxu0 0.0
        %6659 = vmatpush1.msra.mxu0 0.0
        %6660 = vmatprep.subr.mxu0 0.0
        %6661 = vmatpush1.msra.mxu0 0.0
        %6662 = vmatprep.subr.mxu0 0.0
        %6663 = vmatpush1.msra.mxu0 0.0
        %6664 = vmatprep.subr.mxu0 0.0
        %6665 = vmatpush1.msra.mxu0 0.0
        %6666 = vmatprep.subr.mxu0 0.0
        %6667 = vmatpush1.msra.mxu0 0.0
        %6668 = vmatprep.subr.mxu0 0.0
        %6669 = vmatpush1.msra.mxu0 0.0
        %6670 = vmatprep.subr.mxu0 0.0
        %6671 = vmatpush1.msra.mxu0 0.0
        %6672 = vmatprep.subr.mxu0 0.0
        %6673 = vmatpush1.msra.mxu0 0.0
        %6674 = vmatprep.subr.mxu0 0.0
        %6675 = vmatpush1.msra.mxu0 0.0
        %6676 = vmatprep.subr.mxu0 0.0
        %6677 = vmatpush1.msra.mxu0 0.0
        %6678 = vmatprep.mubr.f32.mxu0 0.0
        %6679 = vmatmul.mubr.f32.gmra.mrb[0].mxu0 %v6610
        %v6680 = vpop.f32.mrb[0].mxu0
        %v6681 = vadd.f32 0.0, %v6680
        %v6682 = vpop.f32.mrb[0].mxu0
        %6683 = vdwg.mxu0
        %v6685 = vsel %vm4357, %v4356, 0
        %v6687 = vsel %vm4361, %v1731, 0
        %6689 = vmatprep.subr.mxu0 0.0
        %6690 = vmatpush1.msra.mxu0 %v6687
        %6691 = vmatprep.subr.mxu0 0.0
        %6692 = vmatpush1.msra.mxu0 0.0
        %6693 = vmatprep.subr.mxu0 0.0
        %6694 = vmatpush1.msra.mxu0 0.0
        %6695 = vmatprep.subr.mxu0 0.0
        %6696 = vmatpush1.msra.mxu0 0.0
        %6697 = vmatprep.subr.mxu0 0.0
        %6698 = vmatpush1.msra.mxu0 0.0
        %6699 = vmatprep.subr.mxu0 0.0
        %6700 = vmatpush1.msra.mxu0 0.0
        %6701 = vmatprep.subr.mxu0 0.0
        %6702 = vmatpush1.msra.mxu0 0.0
        %6703 = vmatprep.subr.mxu0 0.0
        %6704 = vmatpush1.msra.mxu0 0.0
        %6705 = vmatprep.subr.mxu0 0.0
        %6706 = vmatpush1.msra.mxu0 0.0
        %6707 = vmatprep.subr.mxu0 0.0
        %6708 = vmatpush1.msra.mxu0 0.0
        %6709 = vmatprep.subr.mxu0 0.0
        %6710 = vmatpush1.msra.mxu0 0.0
        %6711 = vmatprep.subr.mxu0 0.0
        %6712 = vmatpush1.msra.mxu0 0.0
        %6713 = vmatprep.subr.mxu0 0.0
        %6714 = vmatpush1.msra.mxu0 0.0
        %6715 = vmatprep.subr.mxu0 0.0
        %6716 = vmatpush1.msra.mxu0 0.0
        %6717 = vmatprep.subr.mxu0 0.0
        %6718 = vmatpush1.msra.mxu0 0.0
        %6719 = vmatprep.subr.mxu0 0.0
        %6720 = vmatpush1.msra.mxu0 0.0
        %6721 = vmatprep.subr.mxu0 0.0
        %6722 = vmatpush1.msra.mxu0 0.0
        %6723 = vmatprep.subr.mxu0 0.0
        %6724 = vmatpush1.msra.mxu0 0.0
        %6725 = vmatprep.subr.mxu0 0.0
        %6726 = vmatpush1.msra.mxu0 0.0
        %6727 = vmatprep.subr.mxu0 0.0
        %6728 = vmatpush1.msra.mxu0 0.0
        %6729 = vmatprep.subr.mxu0 0.0
        %6730 = vmatpush1.msra.mxu0 0.0
        %6731 = vmatprep.subr.mxu0 0.0
        %6732 = vmatpush1.msra.mxu0 0.0
        %6733 = vmatprep.subr.mxu0 0.0
        %6734 = vmatpush1.msra.mxu0 0.0
        %6735 = vmatprep.subr.mxu0 0.0
        %6736 = vmatpush1.msra.mxu0 0.0
        %6737 = vmatprep.subr.mxu0 0.0
        %6738 = vmatpush1.msra.mxu0 0.0
        %6739 = vmatprep.subr.mxu0 0.0
        %6740 = vmatpush1.msra.mxu0 0.0
        %6741 = vmatprep.subr.mxu0 0.0
        %6742 = vmatpush1.msra.mxu0 0.0
        %6743 = vmatprep.subr.mxu0 0.0
        %6744 = vmatpush1.msra.mxu0 0.0
        %6745 = vmatprep.subr.mxu0 0.0
        %6746 = vmatpush1.msra.mxu0 0.0
        %6747 = vmatprep.subr.mxu0 0.0
        %6748 = vmatpush1.msra.mxu0 0.0
        %6749 = vmatprep.subr.mxu0 0.0
        %6750 = vmatpush1.msra.mxu0 0.0
        %6751 = vmatprep.subr.mxu0 0.0
        %6752 = vmatpush1.msra.mxu0 0.0
        %6753 = vmatprep.mubr.f32.mxu0 0.0
        %6754 = vmatmul.mubr.f32.gmra.mrb[0].mxu0 %v6685
        %v6755 = vpop.f32.mrb[0].mxu0
        %v6756 = vadd.f32 0.0, %v6755
        %v6757 = vpop.f32.mrb[0].mxu0
        %6758 = vdwg.mxu0
        %v6791 = vcombine.low %v4431, %v5031
        %v6792 = vcombine.low %v5631, %v6231
        %v6793 = vcombine.low %v4506, %v5106
        %v6794 = vcombine.low %v5706, %v6306
        %v6795 = vcombine.low %v4581, %v5181
        %v6796 = vcombine.low %v5781, %v6381
        %v6797 = vcombine.low %v4656, %v5256
        %v6798 = vcombine.low %v5856, %v6456
        %v6799 = vcombine.low %v4731, %v5331
        %v6800 = vcombine.low %v5931, %v6531
        %v6801 = vcombine.low %v4806, %v5406
        %v6802 = vcombine.low %v6006, %v6606
        %v6803 = vcombine.low %v4881, %v5481
        %v6804 = vcombine.low %v6081, %v6681
        %v6805 = vcombine.low %v4956, %v5556
        %v6806 = vcombine.low %v6156, %v6756
        %v6807 = vcombine.low %v6791, %v6793
        %v6808 = vcombine.high %v6791, %v6793
        %v6809 = vcombine.low %v6792, %v6794
        %v6810 = vcombine.high %v6792, %v6794
        %v6811 = vcombine.low %v6795, %v6797
        %v6812 = vcombine.high %v6795, %v6797
        %v6813 = vcombine.low %v6796, %v6798
        %v6814 = vcombine.high %v6796, %v6798
        %v6815 = vcombine.low %v6799, %v6801
        %v6816 = vcombine.high %v6799, %v6801
        %v6817 = vcombine.low %v6800, %v6802
        %v6818 = vcombine.high %v6800, %v6802
        %v6819 = vcombine.low %v6803, %v6805
        %v6820 = vcombine.high %v6803, %v6805
        %v6821 = vcombine.low %v6804, %v6806
        %v6822 = vcombine.high %v6804, %v6806
        %v6839 = vpack.c.bf16 %v6811, %v6807
        %v6840 = vpack.c.bf16 %v6812, %v6808
        %v6841 = vpack.c.bf16 %v6813, %v6809
        %v6842 = vpack.c.bf16 %v6814, %v6810
        %v6843 = vpack.c.bf16 %v6819, %v6815
        %v6844 = vpack.c.bf16 %v6820, %v6816
        %v6845 = vpack.c.bf16 %v6821, %v6817
        %v6846 = vpack.c.bf16 %v6822, %v6818
        %v6847 = vld [vmem:[#allocation8] sm:$0xf]
        %v6848 = vld [vmem:[#allocation8 + $0x4] sm:$0xf]
        %v6849 = vld [vmem:[#allocation8 + $0x8] sm:$0xf]
        %v6850 = vld [vmem:[#allocation8 + $0xc] sm:$0xf]
        %v6851 = vld [vmem:[#allocation8 + $0x10] sm:$0xf]
        %v6852 = vld [vmem:[#allocation8 + $0x14] sm:$0xf]
        %v6853 = vld [vmem:[#allocation8 + $0x18] sm:$0xf]
        %v6854 = vld [vmem:[#allocation8 + $0x1c] sm:$0xf]
        %v6855 = vld [vmem:[#allocation8 + $0x20] sm:$0xf]
        %v6856 = vld [vmem:[#allocation8 + $0x24] sm:$0xf]
        %v6857 = vld [vmem:[#allocation8 + $0x28] sm:$0xf]
        %v6858 = vld [vmem:[#allocation8 + $0x2c] sm:$0xf]
        %v6859 = vld [vmem:[#allocation8 + $0x30] sm:$0xf]
        %v6860 = vld [vmem:[#allocation8 + $0x34] sm:$0xf]
        %v6861 = vld [vmem:[#allocation8 + $0x38] sm:$0xf]
        %v6862 = vld [vmem:[#allocation8 + $0x3c] sm:$0xf]
        %v6863 = vld [vmem:[#allocation8 + $0x40] sm:$0xf]
        %v6864 = vld [vmem:[#allocation8 + $0x44] sm:$0xf]
        %v6865 = vld [vmem:[#allocation8 + $0x48] sm:$0xf]
        %v6866 = vld [vmem:[#allocation8 + $0x4c] sm:$0xf]
        %v6867 = vld [vmem:[#allocation8 + $0x50] sm:$0xf]
        %v6868 = vld [vmem:[#allocation8 + $0x54] sm:$0xf]
        %v6869 = vld [vmem:[#allocation8 + $0x58] sm:$0xf]
        %v6870 = vld [vmem:[#allocation8 + $0x5c] sm:$0xf]
        %v6871 = vld [vmem:[#allocation8 + $0x60] sm:$0xf]
        %v6872 = vld [vmem:[#allocation8 + $0x64] sm:$0xf]
        %v6873 = vld [vmem:[#allocation8 + $0x68] sm:$0xf]
        %v6874 = vld [vmem:[#allocation8 + $0x6c] sm:$0xf]
        %v6875 = vld [vmem:[#allocation8 + $0x70] sm:$0xf]
        %v6876 = vld [vmem:[#allocation8 + $0x74] sm:$0xf]
        %v6877 = vld [vmem:[#allocation8 + $0x78] sm:$0xf]
        %v6878 = vld [vmem:[#allocation8 + $0x7c] sm:$0xf]
        %v6879 = vld [vmem:[#allocation8 + $0x80] sm:$0xf]
        %v6880 = vld [vmem:[#allocation8 + $0x84] sm:$0xf]
        %v6881 = vld [vmem:[#allocation8 + $0x88] sm:$0xf]
        %v6882 = vld [vmem:[#allocation8 + $0x8c] sm:$0xf]
        %v6883 = vld [vmem:[#allocation8 + $0x90] sm:$0xf]
        %v6884 = vld [vmem:[#allocation8 + $0x94] sm:$0xf]
        %v6885 = vld [vmem:[#allocation8 + $0x98] sm:$0xf]
        %v6886 = vld [vmem:[#allocation8 + $0x9c] sm:$0xf]
        %v6887 = vld [vmem:[#allocation8 + $0xa0] sm:$0xf]
        %v6888 = vld [vmem:[#allocation8 + $0xa4] sm:$0xf]
        %v6889 = vld [vmem:[#allocation8 + $0xa8] sm:$0xf]
        %v6890 = vld [vmem:[#allocation8 + $0xac] sm:$0xf]
        %v6891 = vld [vmem:[#allocation8 + $0xb0] sm:$0xf]
        %v6892 = vld [vmem:[#allocation8 + $0xb4] sm:$0xf]
        %v6893 = vld [vmem:[#allocation8 + $0xb8] sm:$0xf]
        %v6894 = vld [vmem:[#allocation8 + $0xbc] sm:$0xf]
        %v6895 = vld [vmem:[#allocation8 + $0xc0] sm:$0xf]
        %v6896 = vld [vmem:[#allocation8 + $0xc4] sm:$0xf]
        %v6897 = vld [vmem:[#allocation8 + $0xc8] sm:$0xf]
        %v6898 = vld [vmem:[#allocation8 + $0xcc] sm:$0xf]
        %v6899 = vld [vmem:[#allocation8 + $0xd0] sm:$0xf]
        %v6900 = vld [vmem:[#allocation8 + $0xd4] sm:$0xf]
        %v6901 = vld [vmem:[#allocation8 + $0xd8] sm:$0xf]
        %v6902 = vld [vmem:[#allocation8 + $0xdc] sm:$0xf]
        %v6903 = vld [vmem:[#allocation8 + $0xe0] sm:$0xf]
        %v6904 = vld [vmem:[#allocation8 + $0xe4] sm:$0xf]
        %v6905 = vld [vmem:[#allocation8 + $0xe8] sm:$0xf]
        %v6906 = vld [vmem:[#allocation8 + $0xec] sm:$0xf]
        %v6907 = vld [vmem:[#allocation8 + $0xf0] sm:$0xf]
        %v6908 = vld [vmem:[#allocation8 + $0xf4] sm:$0xf]
        %v6909 = vld [vmem:[#allocation8 + $0xf8] sm:$0xf]
        %v6910 = vld [vmem:[#allocation8 + $0xfc] sm:$0xf]
        %v6911 = vld [vmem:[#allocation10] sm:$0x1]
        %v6913 = vlaneseq
        %v6914 = vshrl.u32 %v6913, 7
        %v6915 = vsub.s32 0, %v6914
        %v6916 = vrot.slane %v6911, %v6915
        %v6982 = vunpack.c.l.b16 %v6847
        %v6983 = vunpack.c.l.b16 %v6848
        %v6984 = vunpack.c.l.b16 %v6849
        %v6985 = vunpack.c.l.b16 %v6850
        %v6986 = vunpack.c.l.b16 %v6851
        %v6987 = vunpack.c.l.b16 %v6852
        %v6988 = vunpack.c.l.b16 %v6853
        %v6989 = vunpack.c.l.b16 %v6854
        %v6990 = vunpack.c.l.b16 %v6855
        %v6991 = vunpack.c.l.b16 %v6856
        %v6992 = vunpack.c.l.b16 %v6857
        %v6993 = vunpack.c.l.b16 %v6858
        %v6994 = vunpack.c.l.b16 %v6859
        %v6995 = vunpack.c.l.b16 %v6860
        %v6996 = vunpack.c.l.b16 %v6861
        %v6997 = vunpack.c.l.b16 %v6862
        %v6998 = vunpack.c.l.b16 %v6863
        %v6999 = vunpack.c.l.b16 %v6864
        %v7000 = vunpack.c.l.b16 %v6865
        %v7001 = vunpack.c.l.b16 %v6866
        %v7002 = vunpack.c.l.b16 %v6867
        %v7003 = vunpack.c.l.b16 %v6868
        %v7004 = vunpack.c.l.b16 %v6869
        %v7005 = vunpack.c.l.b16 %v6870
        %v7006 = vunpack.c.l.b16 %v6871
        %v7007 = vunpack.c.l.b16 %v6872
        %v7008 = vunpack.c.l.b16 %v6873
        %v7009 = vunpack.c.l.b16 %v6874
        %v7010 = vunpack.c.l.b16 %v6875
        %v7011 = vunpack.c.l.b16 %v6876
        %v7012 = vunpack.c.l.b16 %v6877
        %v7013 = vunpack.c.l.b16 %v6878
        %v7014 = vunpack.c.l.b16 %v6879
        %v7015 = vunpack.c.l.b16 %v6880
        %v7016 = vunpack.c.l.b16 %v6881
        %v7017 = vunpack.c.l.b16 %v6882
        %v7018 = vunpack.c.l.b16 %v6883
        %v7019 = vunpack.c.l.b16 %v6884
        %v7020 = vunpack.c.l.b16 %v6885
        %v7021 = vunpack.c.l.b16 %v6886
        %v7022 = vunpack.c.l.b16 %v6887
        %v7023 = vunpack.c.l.b16 %v6888
        %v7024 = vunpack.c.l.b16 %v6889
        %v7025 = vunpack.c.l.b16 %v6890
        %v7026 = vunpack.c.l.b16 %v6891
        %v7027 = vunpack.c.l.b16 %v6892
        %v7028 = vunpack.c.l.b16 %v6893
        %v7029 = vunpack.c.l.b16 %v6894
        %v7030 = vunpack.c.l.b16 %v6895
        %v7031 = vunpack.c.l.b16 %v6896
        %v7032 = vunpack.c.l.b16 %v6897
        %v7033 = vunpack.c.l.b16 %v6898
        %v7034 = vunpack.c.l.b16 %v6899
        %v7035 = vunpack.c.l.b16 %v6900
        %v7036 = vunpack.c.l.b16 %v6901
        %v7037 = vunpack.c.l.b16 %v6902
        %v7038 = vunpack.c.l.b16 %v6903
        %v7039 = vunpack.c.l.b16 %v6904
        %v7040 = vunpack.c.l.b16 %v6905
        %v7041 = vunpack.c.l.b16 %v6906
        %v7042 = vunpack.c.l.b16 %v6907
        %v7043 = vunpack.c.l.b16 %v6908
        %v7044 = vunpack.c.l.b16 %v6909
        %v7045 = vunpack.c.l.b16 %v6910
        %v7046 = vpack.c.b16 %v6983, %v6982
        %v7047 = vpack.c.b16 %v6985, %v6984
        %v7048 = vpack.c.b16 %v6987, %v6986
        %v7049 = vpack.c.b16 %v6989, %v6988
        %v7050 = vpack.c.b16 %v6991, %v6990
        %v7051 = vpack.c.b16 %v6993, %v6992
        %v7052 = vpack.c.b16 %v6995, %v6994
        %v7053 = vpack.c.b16 %v6997, %v6996
        %v7054 = vpack.c.b16 %v6999, %v6998
        %v7055 = vpack.c.b16 %v7001, %v7000
        %v7056 = vpack.c.b16 %v7003, %v7002
        %v7057 = vpack.c.b16 %v7005, %v7004
        %v7058 = vpack.c.b16 %v7007, %v7006
        %v7059 = vpack.c.b16 %v7009, %v7008
        %v7060 = vpack.c.b16 %v7011, %v7010
        %v7061 = vpack.c.b16 %v7013, %v7012
        %v7062 = vpack.c.b16 %v7015, %v7014
        %v7063 = vpack.c.b16 %v7017, %v7016
        %v7064 = vpack.c.b16 %v7019, %v7018
        %v7065 = vpack.c.b16 %v7021, %v7020
        %v7066 = vpack.c.b16 %v7023, %v7022
        %v7067 = vpack.c.b16 %v7025, %v7024
        %v7068 = vpack.c.b16 %v7027, %v7026
        %v7069 = vpack.c.b16 %v7029, %v7028
        %v7070 = vpack.c.b16 %v7031, %v7030
        %v7071 = vpack.c.b16 %v7033, %v7032
        %v7072 = vpack.c.b16 %v7035, %v7034
        %v7073 = vpack.c.b16 %v7037, %v7036
        %v7074 = vpack.c.b16 %v7039, %v7038
        %v7075 = vpack.c.b16 %v7041, %v7040
        %v7076 = vpack.c.b16 %v7043, %v7042
        %v7077 = vpack.c.b16 %v7045, %v7044
        %7110 = vmatprep.subr.bf16.mxu0 0
        %7111 = vmatpush1.bf16.msra.mxu0 %v7046
        %7112 = vmatprep.subr.bf16.mxu0 0
        %7113 = vmatpush1.bf16.msra.mxu0 %v7047
        %7114 = vmatprep.subr.bf16.mxu0 0
        %7115 = vmatpush1.bf16.msra.mxu0 %v7048
        %7116 = vmatprep.subr.bf16.mxu0 0
        %7117 = vmatpush1.bf16.msra.mxu0 %v7049
        %7118 = vmatprep.subr.bf16.mxu0 0
        %7119 = vmatpush1.bf16.msra.mxu0 %v7050
        %7120 = vmatprep.subr.bf16.mxu0 0
        %7121 = vmatpush1.bf16.msra.mxu0 %v7051
        %7122 = vmatprep.subr.bf16.mxu0 0
        %7123 = vmatpush1.bf16.msra.mxu0 %v7052
        %7124 = vmatprep.subr.bf16.mxu0 0
        %7125 = vmatpush1.bf16.msra.mxu0 %v7053
        %7126 = vmatprep.subr.bf16.mxu0 0
        %7127 = vmatpush1.bf16.msra.mxu0 %v7054
        %7128 = vmatprep.subr.bf16.mxu0 0
        %7129 = vmatpush1.bf16.msra.mxu0 %v7055
        %7130 = vmatprep.subr.bf16.mxu0 0
        %7131 = vmatpush1.bf16.msra.mxu0 %v7056
        %7132 = vmatprep.subr.bf16.mxu0 0
        %7133 = vmatpush1.bf16.msra.mxu0 %v7057
        %7134 = vmatprep.subr.bf16.mxu0 0
        %7135 = vmatpush1.bf16.msra.mxu0 %v7058
        %7136 = vmatprep.subr.bf16.mxu0 0
        %7137 = vmatpush1.bf16.msra.mxu0 %v7059
        %7138 = vmatprep.subr.bf16.mxu0 0
        %7139 = vmatpush1.bf16.msra.mxu0 %v7060
        %7140 = vmatprep.subr.bf16.mxu0 0
        %7141 = vmatpush1.bf16.msra.mxu0 %v7061
        %7142 = vmatprep.mubr.bf16.mxu0 %v6840
        %7143 = vmatmul.mubr.bf16.gmra.mrb[0].mxu0 %v6839
        %v7144 = vpop.f32.mrb[0].mxu0
        %v7145 = vadd.f32 %v6916, %v7144
        %v7146 = vpop.f32.mrb[0].mxu0
        %v7147 = vpop.f32.mrb[0].mxu0
        %v7148 = vadd.f32 %v6916, %v7147
        %v7149 = vpop.f32.mrb[0].mxu0
        %7150 = vmatprep.mubr.bf16.mxu0 %v6844
        %7151 = vmatmul.mubr.bf16.gmra.mrb[0].mxu0 %v6843
        %v7152 = vpop.f32.mrb[0].mxu0
        %v7153 = vadd.f32 %v6916, %v7152
        %v7154 = vpop.f32.mrb[0].mxu0
        %v7155 = vpop.f32.mrb[0].mxu0
        %v7156 = vadd.f32 %v6916, %v7155
        %v7157 = vpop.f32.mrb[0].mxu0
        %7158 = vdwg.mxu0
        %7159 = vmatprep.subr.bf16.mxu0 0
        %7160 = vmatpush1.bf16.msra.mxu0 %v7062
        %7161 = vmatprep.subr.bf16.mxu0 0
        %7162 = vmatpush1.bf16.msra.mxu0 %v7063
        %7163 = vmatprep.subr.bf16.mxu0 0
        %7164 = vmatpush1.bf16.msra.mxu0 %v7064
        %7165 = vmatprep.subr.bf16.mxu0 0
        %7166 = vmatpush1.bf16.msra.mxu0 %v7065
        %7167 = vmatprep.subr.bf16.mxu0 0
        %7168 = vmatpush1.bf16.msra.mxu0 %v7066
        %7169 = vmatprep.subr.bf16.mxu0 0
        %7170 = vmatpush1.bf16.msra.mxu0 %v7067
        %7171 = vmatprep.subr.bf16.mxu0 0
        %7172 = vmatpush1.bf16.msra.mxu0 %v7068
        %7173 = vmatprep.subr.bf16.mxu0 0
        %7174 = vmatpush1.bf16.msra.mxu0 %v7069
        %7175 = vmatprep.subr.bf16.mxu0 0
        %7176 = vmatpush1.bf16.msra.mxu0 %v7070
        %7177 = vmatprep.subr.bf16.mxu0 0
        %7178 = vmatpush1.bf16.msra.mxu0 %v7071
        %7179 = vmatprep.subr.bf16.mxu0 0
        %7180 = vmatpush1.bf16.msra.mxu0 %v7072
        %7181 = vmatprep.subr.bf16.mxu0 0
        %7182 = vmatpush1.bf16.msra.mxu0 %v7073
        %7183 = vmatprep.subr.bf16.mxu0 0
        %7184 = vmatpush1.bf16.msra.mxu0 %v7074
        %7185 = vmatprep.subr.bf16.mxu0 0
        %7186 = vmatpush1.bf16.msra.mxu0 %v7075
        %7187 = vmatprep.subr.bf16.mxu0 0
        %7188 = vmatpush1.bf16.msra.mxu0 %v7076
        %7189 = vmatprep.subr.bf16.mxu0 0
        %7190 = vmatpush1.bf16.msra.mxu0 %v7077
        %7191 = vmatprep.mubr.bf16.mxu0 %v6842
        %7192 = vmatmul.mubr.bf16.gmra.mrb[0].mxu0 %v6841
        %v7193 = vpop.f32.mrb[0].mxu0
        %v7194 = vadd.f32 %v7145, %v7193
        %v7195 = vpop.f32.mrb[0].mxu0
        %v7196 = vpop.f32.mrb[0].mxu0
        %v7197 = vadd.f32 %v7148, %v7196
        %v7198 = vpop.f32.mrb[0].mxu0
        %7199 = vmatprep.mubr.bf16.mxu0 %v6846
        %7200 = vmatmul.mubr.bf16.gmra.mrb[0].mxu0 %v6845
        %v7201 = vpop.f32.mrb[0].mxu0
        %v7202 = vadd.f32 %v7153, %v7201
        %v7203 = vpop.f32.mrb[0].mxu0
        %v7204 = vpop.f32.mrb[0].mxu0
        %v7205 = vadd.f32 %v7156, %v7204
        %v7206 = vpop.f32.mrb[0].mxu0
        %7207 = vdwg.mxu0
        %v7208 = vlaneseq
        %v7209 = vand.u32 %v7208, 127
        %vm7210 = vcmp.lt.s32.totalorder %v7209, 32
        %v7211 = vsel %vm7210, 1, 0
        %v7212 = vcvt.s32.f32 %v7211
        %v7217 = vcombine.high %v7194, %v7194
        %v7218 = vcombine.high %v7197, %v7197
        %v7219 = vcombine.high %v7202, %v7202
        %v7220 = vcombine.high %v7205, %v7205
        %v7225 = vadd.f32 %v620, %v7194
        %v7226 = vadd.f32 %v621, %v7217
        %v7227 = vadd.f32 %v622, %v7197
        %v7228 = vadd.f32 %v623, %v7218
        %v7229 = vadd.f32 %v624, %v7202
        %v7230 = vadd.f32 %v625, %v7219
        %v7231 = vadd.f32 %v626, %v7205
        %v7232 = vadd.f32 %v627, %v7220
        %v7233 = vld [vmem:[#allocation11] sm:$0x1]
        %v7234 = vld [vmem:[#allocation13] sm:$0x1]
        %v7243 = vcombine.low %v7225, %v7226
        %v7244 = vcombine.low %v7227, %v7228
        %v7245 = vcombine.low %v7229, %v7230
        %v7246 = vcombine.low %v7231, %v7232
        %7251 = vadd.xlane.f32.xlu0 %v7243
        %v7252 = vpop.xlane.xlu0 %7251
        %7253 = vadd.xlane.f32.xlu0 %v7244
        %v7254 = vpop.xlane.xlu0 %7253
        %7255 = vadd.xlane.f32.xlu0 %v7245
        %v7256 = vpop.xlane.xlu0 %7255
        %7257 = vadd.xlane.f32.xlu0 %v7246
        %v7258 = vpop.xlane.xlu0 %7257
        %v7259 = vmul.f32 %v7252, 0.03125
        %v7260 = vmul.f32 %v7254, 0.03125
        %v7261 = vmul.f32 %v7256, 0.03125
        %v7262 = vmul.f32 %v7258, 0.03125
        %v7268 = vunpack.c.l.s4 839922192
        %v7269 = vunpack.c.0.s8 %v7268
        %v7270 = vlaneseq
        %v7271 = vshrl.u32 %v7270, 7
        %v7272 = vsub.s32 %v7269, %v7271
        %v7273 = vrot.slane %v7259, %v7272
        %v7275 = vunpack.c.l.s4 1985246804
        %v7276 = vunpack.c.0.s8 %v7275
        %v7277 = vlaneseq
        %v7278 = vshrl.u32 %v7277, 7
        %v7279 = vsub.s32 %v7276, %v7278
        %v7280 = vrot.slane %v7259, %v7279
        %v7282 = vunpack.c.l.s4 839922192
        %v7283 = vunpack.c.0.s8 %v7282
        %v7284 = vlaneseq
        %v7285 = vshrl.u32 %v7284, 7
        %v7286 = vsub.s32 %v7283, %v7285
        %v7287 = vrot.slane %v7260, %v7286
        %v7289 = vunpack.c.l.s4 1985246804
        %v7290 = vunpack.c.0.s8 %v7289
        %v7291 = vlaneseq
        %v7292 = vshrl.u32 %v7291, 7
        %v7293 = vsub.s32 %v7290, %v7292
        %v7294 = vrot.slane %v7260, %v7293
        %v7296 = vunpack.c.l.s4 839922192
        %v7297 = vunpack.c.0.s8 %v7296
        %v7298 = vlaneseq
        %v7299 = vshrl.u32 %v7298, 7
        %v7300 = vsub.s32 %v7297, %v7299
        %v7301 = vrot.slane %v7261, %v7300
        %v7303 = vunpack.c.l.s4 1985246804
        %v7304 = vunpack.c.0.s8 %v7303
        %v7305 = vlaneseq
        %v7306 = vshrl.u32 %v7305, 7
        %v7307 = vsub.s32 %v7304, %v7306
        %v7308 = vrot.slane %v7261, %v7307
        %v7310 = vunpack.c.l.s4 839922192
        %v7311 = vunpack.c.0.s8 %v7310
        %v7312 = vlaneseq
        %v7313 = vshrl.u32 %v7312, 7
        %v7314 = vsub.s32 %v7311, %v7313
        %v7315 = vrot.slane %v7262, %v7314
        %v7317 = vunpack.c.l.s4 1985246804
        %v7318 = vunpack.c.0.s8 %v7317
        %v7319 = vlaneseq
        %v7320 = vshrl.u32 %v7319, 7
        %v7321 = vsub.s32 %v7318, %v7320
        %v7322 = vrot.slane %v7262, %v7321
        %v7331 = vsub.f32 %v7225, %v7273
        %v7332 = vsub.f32 %v7226, %v7280
        %v7333 = vsub.f32 %v7227, %v7287
        %v7334 = vsub.f32 %v7228, %v7294
        %v7335 = vsub.f32 %v7229, %v7301
        %v7336 = vsub.f32 %v7230, %v7308
        %v7337 = vsub.f32 %v7231, %v7315
        %v7338 = vsub.f32 %v7232, %v7322
        %v7340 = vcombine.high %v7212, %v7212
        %v7342 = vmul.f32 %v7331, %v7212
        %v7343 = vmul.f32 %v7332, %v7340
        %v7344 = vmul.f32 %v7333, %v7212
        %v7345 = vmul.f32 %v7334, %v7340
        %v7346 = vmul.f32 %v7335, %v7212
        %v7347 = vmul.f32 %v7336, %v7340
        %v7348 = vmul.f32 %v7337, %v7212
        %v7349 = vmul.f32 %v7338, %v7340
        %v7350 = vmul.f32 %v7342, %v7342
        %v7351 = vmul.f32 %v7343, %v7343
        %v7352 = vmul.f32 %v7344, %v7344
        %v7353 = vmul.f32 %v7345, %v7345
        %v7354 = vmul.f32 %v7346, %v7346
        %v7355 = vmul.f32 %v7347, %v7347
        %v7356 = vmul.f32 %v7348, %v7348
        %v7357 = vmul.f32 %v7349, %v7349
        %v7366 = vcombine.low %v7350, %v7351
        %v7367 = vcombine.low %v7352, %v7353
        %v7368 = vcombine.low %v7354, %v7355
        %v7369 = vcombine.low %v7356, %v7357
        %7374 = vadd.xlane.f32.xlu0 %v7366
        %v7375 = vpop.xlane.xlu0 %7374
        %7376 = vadd.xlane.f32.xlu0 %v7367
        %v7377 = vpop.xlane.xlu0 %7376
        %7378 = vadd.xlane.f32.xlu0 %v7368
        %v7379 = vpop.xlane.xlu0 %7378
        %7380 = vadd.xlane.f32.xlu0 %v7369
        %v7381 = vpop.xlane.xlu0 %7380
        %v7382 = vmul.f32 %v7375, 0.03125
        %v7383 = vmul.f32 %v7377, 0.03125
        %v7384 = vmul.f32 %v7379, 0.03125
        %v7385 = vmul.f32 %v7381, 0.03125
        %v7386 = vadd.f32 %v7382, 1e-05
        %v7387 = vadd.f32 %v7383, 1e-05
        %v7388 = vadd.f32 %v7384, 1e-05
        %v7389 = vadd.f32 %v7385, 1e-05
        %v7390 = vrsqrt.pop %v7386
        %v7391 = vrsqrt.pop %v7387
        %v7392 = vrsqrt.pop %v7388
        %v7393 = vrsqrt.pop %v7389
        %v7399 = vunpack.c.l.s4 839922192
        %v7400 = vunpack.c.0.s8 %v7399
        %v7401 = vlaneseq
        %v7402 = vshrl.u32 %v7401, 7
        %v7403 = vsub.s32 %v7400, %v7402
        %v7404 = vrot.slane %v7390, %v7403
        %v7406 = vunpack.c.l.s4 1985246804
        %v7407 = vunpack.c.0.s8 %v7406
        %v7408 = vlaneseq
        %v7409 = vshrl.u32 %v7408, 7
        %v7410 = vsub.s32 %v7407, %v7409
        %v7411 = vrot.slane %v7390, %v7410
        %v7413 = vunpack.c.l.s4 839922192
        %v7414 = vunpack.c.0.s8 %v7413
        %v7415 = vlaneseq
        %v7416 = vshrl.u32 %v7415, 7
        %v7417 = vsub.s32 %v7414, %v7416
        %v7418 = vrot.slane %v7391, %v7417
        %v7420 = vunpack.c.l.s4 1985246804
        %v7421 = vunpack.c.0.s8 %v7420
        %v7422 = vlaneseq
        %v7423 = vshrl.u32 %v7422, 7
        %v7424 = vsub.s32 %v7421, %v7423
        %v7425 = vrot.slane %v7391, %v7424
        %v7427 = vunpack.c.l.s4 839922192
        %v7428 = vunpack.c.0.s8 %v7427
        %v7429 = vlaneseq
        %v7430 = vshrl.u32 %v7429, 7
        %v7431 = vsub.s32 %v7428, %v7430
        %v7432 = vrot.slane %v7392, %v7431
        %v7434 = vunpack.c.l.s4 1985246804
        %v7435 = vunpack.c.0.s8 %v7434
        %v7436 = vlaneseq
        %v7437 = vshrl.u32 %v7436, 7
        %v7438 = vsub.s32 %v7435, %v7437
        %v7439 = vrot.slane %v7392, %v7438
        %v7441 = vunpack.c.l.s4 839922192
        %v7442 = vunpack.c.0.s8 %v7441
        %v7443 = vlaneseq
        %v7444 = vshrl.u32 %v7443, 7
        %v7445 = vsub.s32 %v7442, %v7444
        %v7446 = vrot.slane %v7393, %v7445
        %v7448 = vunpack.c.l.s4 1985246804
        %v7449 = vunpack.c.0.s8 %v7448
        %v7450 = vlaneseq
        %v7451 = vshrl.u32 %v7450, 7
        %v7452 = vsub.s32 %v7449, %v7451
        %v7453 = vrot.slane %v7393, %v7452
        %v7462 = vmul.f32 %v7331, %v7404
        %v7463 = vmul.f32 %v7332, %v7411
        %v7464 = vmul.f32 %v7333, %v7418
        %v7465 = vmul.f32 %v7334, %v7425
        %v7466 = vmul.f32 %v7335, %v7432
        %v7467 = vmul.f32 %v7336, %v7439
        %v7468 = vmul.f32 %v7337, %v7446
        %v7469 = vmul.f32 %v7338, %v7453
        %v7471 = vlaneseq
        %v7472 = vshrl.u32 %v7471, 7
        %v7473 = vsub.s32 0, %v7472
        %v7474 = vrot.slane %v7233, %v7473
        %v7476 = vcombine.high %v7474, %v7474
        %v7478 = vmul.f32 %v7462, %v7474
        %v7479 = vmul.f32 %v7463, %v7476
        %v7480 = vmul.f32 %v7464, %v7474
        %v7481 = vmul.f32 %v7465, %v7476
        %v7482 = vmul.f32 %v7466, %v7474
        %v7483 = vmul.f32 %v7467, %v7476
        %v7484 = vmul.f32 %v7468, %v7474
        %v7485 = vmul.f32 %v7469, %v7476
        %v7487 = vlaneseq
        %v7488 = vshrl.u32 %v7487, 7
        %v7489 = vsub.s32 0, %v7488
        %v7490 = vrot.slane %v7234, %v7489
        %v7492 = vcombine.high %v7490, %v7490
        %v7494 = vadd.f32 %v7478, %v7490
        %v7495 = vadd.f32 %v7479, %v7492
        %v7496 = vadd.f32 %v7480, %v7490
        %v7497 = vadd.f32 %v7481, %v7492
        %v7498 = vadd.f32 %v7482, %v7490
        %v7499 = vadd.f32 %v7483, %v7492
        %v7500 = vadd.f32 %v7484, %v7490
        %v7501 = vadd.f32 %v7485, %v7492
        %v7510 = vcombine.low %v7494, %v7495
        %v7511 = vcombine.low %v7496, %v7497
        %v7512 = vcombine.low %v7498, %v7499
        %v7513 = vcombine.low %v7500, %v7501
        %v7518 = vpack.c.bf16 %v7511, %v7510
        %v7519 = vpack.c.bf16 %v7513, %v7512
        %v7520 = vld [vmem:[#allocation14] sm:$0xf]
        %v7521 = vld [vmem:[#allocation14 + $0x4] sm:$0xf]
        %v7522 = vld [vmem:[#allocation14 + $0x8] sm:$0xf]
        %v7523 = vld [vmem:[#allocation14 + $0xc] sm:$0xf]
        %v7524 = vld [vmem:[#allocation14 + $0x10] sm:$0xf]
        %v7525 = vld [vmem:[#allocation14 + $0x14] sm:$0xf]
        %v7526 = vld [vmem:[#allocation14 + $0x18] sm:$0xf]
        %v7527 = vld [vmem:[#allocation14 + $0x1c] sm:$0xf]
        %v7528 = vld [vmem:[#allocation14 + $0x20] sm:$0xf]
        %v7529 = vld [vmem:[#allocation14 + $0x24] sm:$0xf]
        %v7530 = vld [vmem:[#allocation14 + $0x28] sm:$0xf]
        %v7531 = vld [vmem:[#allocation14 + $0x2c] sm:$0xf]
        %v7532 = vld [vmem:[#allocation14 + $0x30] sm:$0xf]
        %v7533 = vld [vmem:[#allocation14 + $0x34] sm:$0xf]
        %v7534 = vld [vmem:[#allocation14 + $0x38] sm:$0xf]
        %v7535 = vld [vmem:[#allocation14 + $0x3c] sm:$0xf]
        %v7536 = vld [vmem:[#allocation16] sm:$0x1]
        %v7538 = vlaneseq
        %v7539 = vshrl.u32 %v7538, 7
        %v7540 = vsub.s32 0, %v7539
        %v7541 = vrot.slane %v7536, %v7540
        %v7559 = vunpack.c.l.b16 %v7520
        %v7560 = vunpack.c.l.b16 %v7521
        %v7561 = vunpack.c.l.b16 %v7522
        %v7562 = vunpack.c.l.b16 %v7523
        %v7563 = vunpack.c.l.b16 %v7524
        %v7564 = vunpack.c.l.b16 %v7525
        %v7565 = vunpack.c.l.b16 %v7526
        %v7566 = vunpack.c.l.b16 %v7527
        %v7567 = vunpack.c.l.b16 %v7528
        %v7568 = vunpack.c.l.b16 %v7529
        %v7569 = vunpack.c.l.b16 %v7530
        %v7570 = vunpack.c.l.b16 %v7531
        %v7571 = vunpack.c.l.b16 %v7532
        %v7572 = vunpack.c.l.b16 %v7533
        %v7573 = vunpack.c.l.b16 %v7534
        %v7574 = vunpack.c.l.b16 %v7535
        %v7575 = vpack.c.b16 %v7560, %v7559
        %v7576 = vpack.c.b16 %v7562, %v7561
        %v7577 = vpack.c.b16 %v7564, %v7563
        %v7578 = vpack.c.b16 %v7566, %v7565
        %v7579 = vpack.c.b16 %v7568, %v7567
        %v7580 = vpack.c.b16 %v7570, %v7569
        %v7581 = vpack.c.b16 %v7572, %v7571
        %v7582 = vpack.c.b16 %v7574, %v7573
        %7591 = vmatprep.subr.bf16.mxu0 0
        %7592 = vmatpush1.bf16.msra.mxu0 %v7575
        %7593 = vmatprep.subr.bf16.mxu0 0
        %7594 = vmatpush1.bf16.msra.mxu0 %v7576
        %7595 = vmatprep.subr.bf16.mxu0 0
        %7596 = vmatpush1.bf16.msra.mxu0 %v7577
        %7597 = vmatprep.subr.bf16.mxu0 0
        %7598 = vmatpush1.bf16.msra.mxu0 %v7578
        %7599 = vmatprep.subr.bf16.mxu0 0
        %7600 = vmatpush1.bf16.msra.mxu0 %v7579
        %7601 = vmatprep.subr.bf16.mxu0 0
        %7602 = vmatpush1.bf16.msra.mxu0 %v7580
        %7603 = vmatprep.subr.bf16.mxu0 0
        %7604 = vmatpush1.bf16.msra.mxu0 %v7581
        %7605 = vmatprep.subr.bf16.mxu0 0
        %7606 = vmatpush1.bf16.msra.mxu0 %v7582
        %7607 = vmatprep.subr.bf16.mxu0 0
        %7608 = vmatpush1.bf16.msra.mxu0 0
        %7609 = vmatprep.subr.bf16.mxu0 0
        %7610 = vmatpush1.bf16.msra.mxu0 0
        %7611 = vmatprep.subr.bf16.mxu0 0
        %7612 = vmatpush1.bf16.msra.mxu0 0
        %7613 = vmatprep.subr.bf16.mxu0 0
        %7614 = vmatpush1.bf16.msra.mxu0 0
        %7615 = vmatprep.subr.bf16.mxu0 0
        %7616 = vmatpush1.bf16.msra.mxu0 0
        %7617 = vmatprep.subr.bf16.mxu0 0
        %7618 = vmatpush1.bf16.msra.mxu0 0
        %7619 = vmatprep.subr.bf16.mxu0 0
        %7620 = vmatpush1.bf16.msra.mxu0 0
        %7621 = vmatprep.subr.bf16.mxu0 0
        %7622 = vmatpush1.bf16.msra.mxu0 0
        %7623 = vmatprep.mubr.bf16.mxu0 0
        %7624 = vmatmul.mubr.bf16.gmra.mrb[0].mxu0 %v7518
        %v7625 = vpop.f32.mrb[0].mxu0
        %v7626 = vadd.f32 %v7541, %v7625
        %v7627 = vpop.f32.mrb[0].mxu0
        %v7628 = vpop.f32.mrb[0].mxu0
        %v7629 = vadd.f32 %v7541, %v7628
        %v7630 = vpop.f32.mrb[0].mxu0
        %7631 = vmatprep.mubr.bf16.mxu0 0
        %7632 = vmatmul.mubr.bf16.gmra.mrb[0].mxu0 %v7519
        %v7633 = vpop.f32.mrb[0].mxu0
        %v7634 = vadd.f32 %v7541, %v7633
        %v7635 = vpop.f32.mrb[0].mxu0
        %v7636 = vpop.f32.mrb[0].mxu0
        %v7637 = vadd.f32 %v7541, %v7636
        %v7638 = vpop.f32.mrb[0].mxu0
        %7639 = vdwg.mxu0
        %v7640 = vmax.f32 %v7626, 0.0
        %v7641 = vmax.f32 %v7629, 0.0
        %v7642 = vmax.f32 %v7634, 0.0
        %v7643 = vmax.f32 %v7637, 0.0
        %v7644 = vpack.c.bf16 %v7641, %v7640
        %v7645 = vpack.c.bf16 %v7643, %v7642
        %v7646 = vld [vmem:[#allocation17] sm:$0xf]
        %v7647 = vld [vmem:[#allocation17 + $0x4] sm:$0xf]
        %v7648 = vld [vmem:[#allocation17 + $0x8] sm:$0xf]
        %v7649 = vld [vmem:[#allocation17 + $0xc] sm:$0xf]
        %v7650 = vld [vmem:[#allocation17 + $0x10] sm:$0xf]
        %v7651 = vld [vmem:[#allocation17 + $0x14] sm:$0xf]
        %v7652 = vld [vmem:[#allocation17 + $0x18] sm:$0xf]
        %v7653 = vld [vmem:[#allocation17 + $0x1c] sm:$0xf]
        %v7654 = vld [vmem:[#allocation17 + $0x20] sm:$0xf]
        %v7655 = vld [vmem:[#allocation17 + $0x24] sm:$0xf]
        %v7656 = vld [vmem:[#allocation17 + $0x28] sm:$0xf]
        %v7657 = vld [vmem:[#allocation17 + $0x2c] sm:$0xf]
        %v7658 = vld [vmem:[#allocation17 + $0x30] sm:$0xf]
        %v7659 = vld [vmem:[#allocation17 + $0x34] sm:$0xf]
        %v7660 = vld [vmem:[#allocation17 + $0x38] sm:$0xf]
        %v7661 = vld [vmem:[#allocation17 + $0x3c] sm:$0xf]
        %v7662 = vld [vmem:[#allocation19] sm:$0x1]
        %v7664 = vlaneseq
        %v7665 = vshrl.u32 %v7664, 7
        %v7666 = vsub.s32 0, %v7665
        %v7667 = vrot.slane %v7662, %v7666
        %v7685 = vunpack.c.l.b16 %v7646
        %v7686 = vunpack.c.l.b16 %v7647
        %v7687 = vunpack.c.l.b16 %v7648
        %v7688 = vunpack.c.l.b16 %v7649
        %v7689 = vunpack.c.l.b16 %v7650
        %v7690 = vunpack.c.l.b16 %v7651
        %v7691 = vunpack.c.l.b16 %v7652
        %v7692 = vunpack.c.l.b16 %v7653
        %v7693 = vunpack.c.l.b16 %v7654
        %v7694 = vunpack.c.l.b16 %v7655
        %v7695 = vunpack.c.l.b16 %v7656
        %v7696 = vunpack.c.l.b16 %v7657
        %v7697 = vunpack.c.l.b16 %v7658
        %v7698 = vunpack.c.l.b16 %v7659
        %v7699 = vunpack.c.l.b16 %v7660
        %v7700 = vunpack.c.l.b16 %v7661
        %v7701 = vpack.c.b16 %v7686, %v7685
        %v7702 = vpack.c.b16 %v7688, %v7687
        %v7703 = vpack.c.b16 %v7690, %v7689
        %v7704 = vpack.c.b16 %v7692, %v7691
        %v7705 = vpack.c.b16 %v7694, %v7693
        %v7706 = vpack.c.b16 %v7696, %v7695
        %v7707 = vpack.c.b16 %v7698, %v7697
        %v7708 = vpack.c.b16 %v7700, %v7699
        %7717 = vmatprep.subr.bf16.mxu0 0
        %7718 = vmatpush1.bf16.msra.mxu0 %v7701
        %7719 = vmatprep.subr.bf16.mxu0 0
        %7720 = vmatpush1.bf16.msra.mxu0 %v7702
        %7721 = vmatprep.subr.bf16.mxu0 0
        %7722 = vmatpush1.bf16.msra.mxu0 %v7703
        %7723 = vmatprep.subr.bf16.mxu0 0
        %7724 = vmatpush1.bf16.msra.mxu0 %v7704
        %7725 = vmatprep.subr.bf16.mxu0 0
        %7726 = vmatpush1.bf16.msra.mxu0 %v7705
        %7727 = vmatprep.subr.bf16.mxu0 0
        %7728 = vmatpush1.bf16.msra.mxu0 %v7706
        %7729 = vmatprep.subr.bf16.mxu0 0
        %7730 = vmatpush1.bf16.msra.mxu0 %v7707
        %7731 = vmatprep.subr.bf16.mxu0 0
        %7732 = vmatpush1.bf16.msra.mxu0 %v7708
        %7733 = vmatprep.subr.bf16.mxu0 0
        %7734 = vmatpush1.bf16.msra.mxu0 0
        %7735 = vmatprep.subr.bf16.mxu0 0
        %7736 = vmatpush1.bf16.msra.mxu0 0
        %7737 = vmatprep.subr.bf16.mxu0 0
        %7738 = vmatpush1.bf16.msra.mxu0 0
        %7739 = vmatprep.subr.bf16.mxu0 0
        %7740 = vmatpush1.bf16.msra.mxu0 0
        %7741 = vmatprep.subr.bf16.mxu0 0
        %7742 = vmatpush1.bf16.msra.mxu0 0
        %7743 = vmatprep.subr.bf16.mxu0 0
        %7744 = vmatpush1.bf16.msra.mxu0 0
        %7745 = vmatprep.subr.bf16.mxu0 0
        %7746 = vmatpush1.bf16.msra.mxu0 0
        %7747 = vmatprep.subr.bf16.mxu0 0
        %7748 = vmatpush1.bf16.msra.mxu0 0
        %7749 = vmatprep.mubr.bf16.mxu0 0
        %7750 = vmatmul.mubr.bf16.gmra.mrb[0].mxu0 %v7644
        %v7751 = vpop.f32.mrb[0].mxu0
        %v7752 = vadd.f32 %v7667, %v7751
        %v7753 = vpop.f32.mrb[0].mxu0
        %v7754 = vpop.f32.mrb[0].mxu0
        %v7755 = vadd.f32 %v7667, %v7754
        %v7756 = vpop.f32.mrb[0].mxu0
        %7757 = vmatprep.mubr.bf16.mxu0 0
        %7758 = vmatmul.mubr.bf16.gmra.mrb[0].mxu0 %v7645
        %v7759 = vpop.f32.mrb[0].mxu0
        %v7760 = vadd.f32 %v7667, %v7759
        %v7761 = vpop.f32.mrb[0].mxu0
        %v7762 = vpop.f32.mrb[0].mxu0
        %v7763 = vadd.f32 %v7667, %v7762
        %v7764 = vpop.f32.mrb[0].mxu0
        %7765 = vdwg.mxu0
        %v7770 = vcombine.high %v7752, %v7752
        %v7771 = vcombine.high %v7755, %v7755
        %v7772 = vcombine.high %v7760, %v7760
        %v7773 = vcombine.high %v7763, %v7763
        %v7778 = vadd.f32 %v7494, %v7752
        %v7779 = vadd.f32 %v7495, %v7770
        %v7780 = vadd.f32 %v7496, %v7755
        %v7781 = vadd.f32 %v7497, %v7771
        %v7782 = vadd.f32 %v7498, %v7760
        %v7783 = vadd.f32 %v7499, %v7772
        %v7784 = vadd.f32 %v7500, %v7763
        %v7785 = vadd.f32 %v7501, %v7773
        %v7786 = vld [vmem:[#allocation20] sm:$0x1]
        %v7787 = vld [vmem:[#allocation22] sm:$0x1]
        %v7796 = vcombine.low %v7778, %v7779
        %v7797 = vcombine.low %v7780, %v7781
        %v7798 = vcombine.low %v7782, %v7783
        %v7799 = vcombine.low %v7784, %v7785
        %7804 = vadd.xlane.f32.xlu0 %v7796
        %v7805 = vpop.xlane.xlu0 %7804
        %7806 = vadd.xlane.f32.xlu0 %v7797
        %v7807 = vpop.xlane.xlu0 %7806
        %7808 = vadd.xlane.f32.xlu0 %v7798
        %v7809 = vpop.xlane.xlu0 %7808
        %7810 = vadd.xlane.f32.xlu0 %v7799
        %v7811 = vpop.xlane.xlu0 %7810
        %v7812 = vmul.f32 %v7805, 0.03125
        %v7813 = vmul.f32 %v7807, 0.03125
        %v7814 = vmul.f32 %v7809, 0.03125
        %v7815 = vmul.f32 %v7811, 0.03125
        %v7821 = vunpack.c.l.s4 839922192
        %v7822 = vunpack.c.0.s8 %v7821
        %v7823 = vlaneseq
        %v7824 = vshrl.u32 %v7823, 7
        %v7825 = vsub.s32 %v7822, %v7824
        %v7826 = vrot.slane %v7812, %v7825
        %v7828 = vunpack.c.l.s4 1985246804
        %v7829 = vunpack.c.0.s8 %v7828
        %v7830 = vlaneseq
        %v7831 = vshrl.u32 %v7830, 7
        %v7832 = vsub.s32 %v7829, %v7831
        %v7833 = vrot.slane %v7812, %v7832
        %v7835 = vunpack.c.l.s4 839922192
        %v7836 = vunpack.c.0.s8 %v7835
        %v7837 = vlaneseq
        %v7838 = vshrl.u32 %v7837, 7
        %v7839 = vsub.s32 %v7836, %v7838
        %v7840 = vrot.slane %v7813, %v7839
        %v7842 = vunpack.c.l.s4 1985246804
        %v7843 = vunpack.c.0.s8 %v7842
        %v7844 = vlaneseq
        %v7845 = vshrl.u32 %v7844, 7
        %v7846 = vsub.s32 %v7843, %v7845
        %v7847 = vrot.slane %v7813, %v7846
        %v7849 = vunpack.c.l.s4 839922192
        %v7850 = vunpack.c.0.s8 %v7849
        %v7851 = vlaneseq
        %v7852 = vshrl.u32 %v7851, 7
        %v7853 = vsub.s32 %v7850, %v7852
        %v7854 = vrot.slane %v7814, %v7853
        %v7856 = vunpack.c.l.s4 1985246804
        %v7857 = vunpack.c.0.s8 %v7856
        %v7858 = vlaneseq
        %v7859 = vshrl.u32 %v7858, 7
        %v7860 = vsub.s32 %v7857, %v7859
        %v7861 = vrot.slane %v7814, %v7860
        %v7863 = vunpack.c.l.s4 839922192
        %v7864 = vunpack.c.0.s8 %v7863
        %v7865 = vlaneseq
        %v7866 = vshrl.u32 %v7865, 7
        %v7867 = vsub.s32 %v7864, %v7866
        %v7868 = vrot.slane %v7815, %v7867
        %v7870 = vunpack.c.l.s4 1985246804
        %v7871 = vunpack.c.0.s8 %v7870
        %v7872 = vlaneseq
        %v7873 = vshrl.u32 %v7872, 7
        %v7874 = vsub.s32 %v7871, %v7873
        %v7875 = vrot.slane %v7815, %v7874
        %v7884 = vsub.f32 %v7778, %v7826
        %v7885 = vsub.f32 %v7779, %v7833
        %v7886 = vsub.f32 %v7780, %v7840
        %v7887 = vsub.f32 %v7781, %v7847
        %v7888 = vsub.f32 %v7782, %v7854
        %v7889 = vsub.f32 %v7783, %v7861
        %v7890 = vsub.f32 %v7784, %v7868
        %v7891 = vsub.f32 %v7785, %v7875
        %v7892 = vmul.f32 %v7884, %v7212
        %v7893 = vmul.f32 %v7885, %v7340
        %v7894 = vmul.f32 %v7886, %v7212
        %v7895 = vmul.f32 %v7887, %v7340
        %v7896 = vmul.f32 %v7888, %v7212
        %v7897 = vmul.f32 %v7889, %v7340
        %v7898 = vmul.f32 %v7890, %v7212
        %v7899 = vmul.f32 %v7891, %v7340
        %v7900 = vmul.f32 %v7892, %v7892
        %v7901 = vmul.f32 %v7893, %v7893
        %v7902 = vmul.f32 %v7894, %v7894
        %v7903 = vmul.f32 %v7895, %v7895
        %v7904 = vmul.f32 %v7896, %v7896
        %v7905 = vmul.f32 %v7897, %v7897
        %v7906 = vmul.f32 %v7898, %v7898
        %v7907 = vmul.f32 %v7899, %v7899
        %v7916 = vcombine.low %v7900, %v7901
        %v7917 = vcombine.low %v7902, %v7903
        %v7918 = vcombine.low %v7904, %v7905
        %v7919 = vcombine.low %v7906, %v7907
        %7924 = vadd.xlane.f32.xlu0 %v7916
        %v7925 = vpop.xlane.xlu0 %7924
        %7926 = vadd.xlane.f32.xlu0 %v7917
        %v7927 = vpop.xlane.xlu0 %7926
        %7928 = vadd.xlane.f32.xlu0 %v7918
        %v7929 = vpop.xlane.xlu0 %7928
        %7930 = vadd.xlane.f32.xlu0 %v7919
        %v7931 = vpop.xlane.xlu0 %7930
        %v7932 = vmul.f32 %v7925, 0.03125
        %v7933 = vmul.f32 %v7927, 0.03125
        %v7934 = vmul.f32 %v7929, 0.03125
        %v7935 = vmul.f32 %v7931, 0.03125
        %v7936 = vadd.f32 %v7932, 1e-05
        %v7937 = vadd.f32 %v7933, 1e-05
        %v7938 = vadd.f32 %v7934, 1e-05
        %v7939 = vadd.f32 %v7935, 1e-05
        %v7940 = vrsqrt.pop %v7936
        %v7941 = vrsqrt.pop %v7937
        %v7942 = vrsqrt.pop %v7938
        %v7943 = vrsqrt.pop %v7939
        %v7949 = vunpack.c.l.s4 839922192
        %v7950 = vunpack.c.0.s8 %v7949
        %v7951 = vlaneseq
        %v7952 = vshrl.u32 %v7951, 7
        %v7953 = vsub.s32 %v7950, %v7952
        %v7954 = vrot.slane %v7940, %v7953
        %v7956 = vunpack.c.l.s4 1985246804
        %v7957 = vunpack.c.0.s8 %v7956
        %v7958 = vlaneseq
        %v7959 = vshrl.u32 %v7958, 7
        %v7960 = vsub.s32 %v7957, %v7959
        %v7961 = vrot.slane %v7940, %v7960
        %v7963 = vunpack.c.l.s4 839922192
        %v7964 = vunpack.c.0.s8 %v7963
        %v7965 = vlaneseq
        %v7966 = vshrl.u32 %v7965, 7
        %v7967 = vsub.s32 %v7964, %v7966
        %v7968 = vrot.slane %v7941, %v7967
        %v7970 = vunpack.c.l.s4 1985246804
        %v7971 = vunpack.c.0.s8 %v7970
        %v7972 = vlaneseq
        %v7973 = vshrl.u32 %v7972, 7
        %v7974 = vsub.s32 %v7971, %v7973
        %v7975 = vrot.slane %v7941, %v7974
        %v7977 = vunpack.c.l.s4 839922192
        %v7978 = vunpack.c.0.s8 %v7977
        %v7979 = vlaneseq
        %v7980 = vshrl.u32 %v7979, 7
        %v7981 = vsub.s32 %v7978, %v7980
        %v7982 = vrot.slane %v7942, %v7981
        %v7984 = vunpack.c.l.s4 1985246804
        %v7985 = vunpack.c.0.s8 %v7984
        %v7986 = vlaneseq
        %v7987 = vshrl.u32 %v7986, 7
        %v7988 = vsub.s32 %v7985, %v7987
        %v7989 = vrot.slane %v7942, %v7988
        %v7991 = vunpack.c.l.s4 839922192
        %v7992 = vunpack.c.0.s8 %v7991
        %v7993 = vlaneseq
        %v7994 = vshrl.u32 %v7993, 7
        %v7995 = vsub.s32 %v7992, %v7994
        %v7996 = vrot.slane %v7943, %v7995
        %v7998 = vunpack.c.l.s4 1985246804
        %v7999 = vunpack.c.0.s8 %v7998
        %v8000 = vlaneseq
        %v8001 = vshrl.u32 %v8000, 7
        %v8002 = vsub.s32 %v7999, %v8001
        %v8003 = vrot.slane %v7943, %v8002
        %v8012 = vmul.f32 %v7884, %v7954
        %v8013 = vmul.f32 %v7885, %v7961
        %v8014 = vmul.f32 %v7886, %v7968
        %v8015 = vmul.f32 %v7887, %v7975
        %v8016 = vmul.f32 %v7888, %v7982
        %v8017 = vmul.f32 %v7889, %v7989
        %v8018 = vmul.f32 %v7890, %v7996
        %v8019 = vmul.f32 %v7891, %v8003
        %v8021 = vlaneseq
        %v8022 = vshrl.u32 %v8021, 7
        %v8023 = vsub.s32 0, %v8022
        %v8024 = vrot.slane %v7786, %v8023
        %v8026 = vcombine.high %v8024, %v8024
        %v8028 = vmul.f32 %v8012, %v8024
        %v8029 = vmul.f32 %v8013, %v8026
        %v8030 = vmul.f32 %v8014, %v8024
        %v8031 = vmul.f32 %v8015, %v8026
        %v8032 = vmul.f32 %v8016, %v8024
        %v8033 = vmul.f32 %v8017, %v8026
        %v8034 = vmul.f32 %v8018, %v8024
        %v8035 = vmul.f32 %v8019, %v8026
        %v8037 = vlaneseq
        %v8038 = vshrl.u32 %v8037, 7
        %v8039 = vsub.s32 0, %v8038
        %v8040 = vrot.slane %v7787, %v8039
        %v8042 = vcombine.high %v8040, %v8040
        %v8044 = vadd.f32 %v8028, %v8040
        %v8045 = vadd.f32 %v8029, %v8042
        %v8046 = vadd.f32 %v8030, %v8040
        %v8047 = vadd.f32 %v8031, %v8042
        %v8048 = vadd.f32 %v8032, %v8040
        %v8049 = vadd.f32 %v8033, %v8042
        %v8050 = vadd.f32 %v8034, %v8040
        %v8051 = vadd.f32 %v8035, %v8042
        %8052 = vst [vmem:[%s616] sm:$0xf] %v8044
        %8053 = vst [vmem:[%s616 + $0x4] sm:$0xf] %v8045
        %8054 = vst [vmem:[%s616 + $0x8] sm:$0xf] %v8046
        %8055 = vst [vmem:[%s616 + $0xc] sm:$0xf] %v8047
        %8056 = vst [vmem:[%s616 + $0x10] sm:$0xf] %v8048
        %8057 = vst [vmem:[%s616 + $0x14] sm:$0xf] %v8049
        %8058 = vst [vmem:[%s616 + $0x18] sm:$0xf] %v8050
        %8059 = vst [vmem:[%s616 + $0x1c] sm:$0xf] %v8051
        %s8060 = sand.u32 %s322, 1
        %s8061 = scalar_lea.sflag [#allocation4], %s8060
        %s8062 = sand.u32 %s322, 1
        %s8063 = smul.addr %s8062, 32
        %s8064 = scalar_lea.vmem [#allocation23], %s8063
        // Predicated region
        $region125: #{forward.4} parent=71 // pred_check
          %p8065 = pneg %p332
        $region126: #{forward.4} parent=71 // pred_check_branch
          %8067 = sbr.rel (%p8065) target = $region128
        $region127: #{forward.4} parent=71 // pred_region
          %s8068 = smul.u32 8, %s36
          %s8070 = ssub.s32 512, 512
          %8071 = vsyncadd %s8061, %s8070
          %s8072 = smul.addr %s8068, 64
          %s8073 = scalar_lea.hbm %s13, %s8072
          %s8074 = sshll.u32 %s8064, 4
          %s8075 = int_to_ptr.vmem [resolvable:$true] %s8074
          %8080 = dma.vmem_to_hbm [thread:$0]  %s8075, 512, %s8073, %s8061, 64, 64, 4
        $region128: #{forward.4} parent=71 // pred_fallthru
          _
      $region72: #{forward.4} parent=5 // pred_fallthru
        _
      %p8081 = scmp.le.s32.totalorder 2, %s31
      // Predicated region
      $region129: #{forward.4} parent=5 // pred_check
        %p8082 = pneg %p8081
      $region130: #{forward.4} parent=5 // pred_check_branch
        %8084 = sbr.rel (%p8082) target = $region132
      $region131: #{forward.4} parent=5 // pred_region
        %s8085 = ssub.s32 %s31, 2
        // Predicated region
        $region133: #{forward.4} parent=131 // pred_check
          %p8086 = pneg %p338
        $region134: #{forward.4} parent=131 // pred_check_branch
          %8088 = sbr.rel (%p8086) target = $region136
        $region135: #{forward.4} parent=131 // pred_region
          %s8089 = sand.u32 %s323, 1
          %s8090 = scalar_lea.sflag [#allocation4], %s8089
          %s8091 = sand.u32 %s323, 1
          %s8092 = smul.addr %s8091, 32
          %s8093 = scalar_lea.vmem [#allocation23], %s8092
          %8094 = dma.done %s8090, 512
        $region136: #{forward.4} parent=131 // pred_fallthru
          _
      $region132: #{forward.4} parent=5 // pred_fallthru
        _
    $region6: #{forward.4} parent=1 // loop_footer
      %s35 = sadd.s32 1, %s31
    $region7: #{forward.4} parent=1 // loop_footer_branch
      %30 = sbr.rel target = $region3
    $region8: #{forward.4} parent=1 // loop_exit
      _
    %8095 = vsyncpa [#allocation3], 1
    %s8096 = scalar_lea.sflag [#allocation3], 1
    %8097 = vsyncpa %s8096, 1
    %8098 = vsyncpa [#allocation6], 1
    %8099 = vsyncpa [#allocation9], 1
    %8100 = vsyncpa [#allocation12], 1
    %8101 = vsyncpa [#allocation15], 1
    %8102 = vsyncpa [#allocation18], 1
    %8103 = vsyncpa [#allocation21], 1
    %8104 = vsyncpa [#allocation4], 1
    %s8105 = scalar_lea.sflag [#allocation4], 1
    %8106 = vsyncpa %s8105, 1

</llo_original>
